<compile_context>
chip_gen: v5e
topology: v5e:2x2
jax: 0.10.0
libtpu: 0.0.40
codegen_flags: <defaults>
</compile_context>

<pallas_src>
import math
import numpy as np
import jax
import jax.numpy as jnp
from jax.experimental import pallas as pl
from jax.experimental.pallas import tpu as pltpu

BN_EPS = 1e-5
OUT_LEN = 9

# ---------------------------------------------------------------------------
# host-side constant matrices (tiny, built once with numpy)
# ---------------------------------------------------------------------------

def _maxpool_select(l_in):
    """(Lout, l_in-2) selector: MaxPool1d(3,2) output j = sliding-max row 2*j."""
    l_out = (l_in - 3) // 2 + 1
    m = np.zeros((l_out, l_in - 2), np.float32)
    m[np.arange(l_out), 2 * np.arange(l_out)] = 1.0
    return m


def _maxpool_select_padded(l_in):
    """Selector with an extra zero row top/bottom -> output is already
    zero-padded (padding=1) for the next conv layer."""
    sel = _maxpool_select(l_in)
    out = np.zeros((sel.shape[0] + 2, sel.shape[1]), np.float32)
    out[1:-1] = sel
    return out


def _pad_matrix(l):
    """(l+2, l): zero-pads a length-l sequence by one row on each side."""
    out = np.zeros((l + 2, l), np.float32)
    out[1:-1] = np.eye(l, dtype=np.float32)
    return out


def _adaptive_pool_matrix(lin, lout):
    """(lout, lin) PyTorch AdaptiveAvgPool1d bin-average matrix."""
    p = np.zeros((lout, lin), np.float32)
    for i in range(lout):
        s = (i * lin) // lout
        e = -(-((i + 1) * lin) // lout)  # ceil
        p[i, s:e] = 1.0 / (e - s)
    return p


# ---------------------------------------------------------------------------
# in-kernel building blocks (traced inside the single fused kernel)
# ---------------------------------------------------------------------------

def _slide_max3(y, l):
    # sliding max over a window of 3 along the length (sublane) axis
    return jnp.maximum(jnp.maximum(y[0:l - 2, :], y[1:l - 1, :]), y[2:l, :])


def _conv_bn_relu(h_list, w_ref, p_ref, l, first_layer=False):
    """h_list: per-sample (l+2, Cin) zero-padded activations (values).
    Returns per-sample (l, Cout) conv+bias -> train-mode BN -> ReLU values.
    BN statistics are taken over all N*l positions, one-pass moments."""
    bias = p_ref[0:1, :]
    gamma = p_ref[1:2, :]
    beta = p_ref[2:3, :]
    ys = []
    for hp in h_list:
        if first_layer:
            # Cin == 1: three broadcast FMAs on the VPU (avoid a K=1 MXU dot).
            y = (hp[0:l, :] * w_ref[0]
                 + hp[1:l + 1, :] * w_ref[1]
                 + hp[2:l + 2, :] * w_ref[2])
        else:
            # im2col-in-kernel: three shifted dots over the padded view.
            y = (jnp.dot(hp[0:l, :], w_ref[0], preferred_element_type=jnp.float32)
                 + jnp.dot(hp[1:l + 1, :], w_ref[1], preferred_element_type=jnp.float32)
                 + jnp.dot(hp[2:l + 2, :], w_ref[2], preferred_element_type=jnp.float32))
        ys.append(y + bias)

    inv_m = 1.0 / float(len(ys) * l)
    s = ys[0].sum(axis=0, keepdims=True)
    ss = (ys[0] * ys[0]).sum(axis=0, keepdims=True)
    for y in ys[1:]:
        s = s + y.sum(axis=0, keepdims=True)
        ss = ss + (y * y).sum(axis=0, keepdims=True)
    mean = s * inv_m
    var = jnp.maximum(ss * inv_m - mean * mean, 0.0)      # one-pass, biased, clamped
    scale = gamma * jax.lax.rsqrt(var + BN_EPS)
    shift = beta - mean * scale
    return [jnp.maximum(y * scale + shift, 0.0) for y in ys]


def alexnet1d_kernel(xp_ref, w1_ref, p1_ref, w2_ref, p2_ref, w3_ref, p3_ref,
                     w4_ref, p4_ref, w5_ref, p5_ref, s1_ref, s2_ref, e_ref,
                     a_ref, o_ref):
    n = xp_ref.shape[0]
    l1 = xp_ref.shape[1] - 2          # e.g. 99
    l2 = s1_ref.shape[0] - 2          # e.g. 49
    l3 = s2_ref.shape[0] - 2          # e.g. 24

    s1 = s1_ref[...]
    s2 = s2_ref[...]
    e = e_ref[...]
    a = a_ref[...]

    # stage 1: conv(1->64)+BN+ReLU, fused maxpool(3,2) + re-pad via S1 matmul
    h = [xp_ref[i] for i in range(n)]
    h = _conv_bn_relu(h, w1_ref, p1_ref, l1, first_layer=True)
    h = [jnp.dot(s1, _slide_max3(y, l1), preferred_element_type=jnp.float32) for y in h]

    # stage 2: conv(64->192)+BN+ReLU, fused maxpool + re-pad via S2
    h = _conv_bn_relu(h, w2_ref, p2_ref, l2)
    h = [jnp.dot(s2, _slide_max3(y, l2), preferred_element_type=jnp.float32) for y in h]

    # stage 3 & 4: conv(192->384), conv(384->256); re-pad via E matmul
    h = _conv_bn_relu(h, w3_ref, p3_ref, l3)
    h = [jnp.dot(e, y, preferred_element_type=jnp.float32) for y in h]
    h = _conv_bn_relu(h, w4_ref, p4_ref, l3)
    h = [jnp.dot(e, y, preferred_element_type=jnp.float32) for y in h]

    # stage 5: conv(256->256)+BN+ReLU, fused maxpool(3,2)+AdaptiveAvgPool1d(9)
    h = _conv_bn_relu(h, w5_ref, p5_ref, l3)
    for i in range(n):
        o_ref[i] = jnp.dot(a, _slide_max3(h[i], l3),
                           preferred_element_type=jnp.float32)


# ---------------------------------------------------------------------------
# model wrapper
# ---------------------------------------------------------------------------

_CONV_SPECS = [(64, 1), (192, 64), (384, 192), (256, 384), (256, 256)]


def init_params(key):
    """Deterministic init matching PyTorch Conv1d defaults (uniform +-1/sqrt(fan_in))
    and BatchNorm1d defaults (gamma=1, beta=0)."""
    params = []
    for cout, cin in _CONV_SPECS:
        key, kw, kb = jax.random.split(key, 3)
        fan_in = cin * 3
        bound = 1.0 / math.sqrt(fan_in)
        w = jax.random.uniform(kw, (cout, cin, 3), jnp.float32, -bound, bound)
        b = jax.random.uniform(kb, (cout,), jnp.float32, -bound, bound)
        gamma = jnp.ones((cout,), jnp.float32)
        beta = jnp.zeros((cout,), jnp.float32)
        params.append((w, b, gamma, beta))
    return params


def alexnet_1d_forward(x, params):
    """x: (N, L) -> (N, 256, 9) float32 (PyTorch NCL layout)."""
    n, l1 = x.shape
    l2 = (l1 - 3) // 2 + 1
    l3 = (l2 - 3) // 2 + 1
    l4 = (l3 - 3) // 2 + 1

    # zero-padded channels-last input (N, L+2, 1)  (== unsqueeze(1) + padding=1)
    xp = jnp.pad(x.astype(jnp.float32), ((0, 0), (1, 1)))[:, :, None]

    # repack parameters: conv weight -> (3, Cin, Cout); (bias, gamma, beta) -> (3, Cout)
    flat = []
    for w, b, g, be in params:
        flat.append(jnp.transpose(w, (2, 1, 0)).astype(jnp.float32))
        flat.append(jnp.stack([b, g, be]).astype(jnp.float32))

    # constant pooling / padding matrices
    s1 = jnp.asarray(_maxpool_select_padded(l1))                       # (l2+2, l1-2)
    s2 = jnp.asarray(_maxpool_select_padded(l2))                       # (l3+2, l2-2)
    e = jnp.asarray(_pad_matrix(l3))                                   # (l3+2, l3)
    a = jnp.asarray(_adaptive_pool_matrix(l4, OUT_LEN) @ _maxpool_select(l3))  # (9, l3-2)

    vmem = pl.BlockSpec(memory_space=pltpu.MemorySpace.VMEM)
    out = pl.pallas_call(
        alexnet1d_kernel,
        out_shape=jax.ShapeDtypeStruct((n, OUT_LEN, 256), jnp.float32),
        in_specs=[vmem] * 15,
        out_specs=vmem,
    )(xp, *flat, s1, s2, e, a)

    return jnp.transpose(out, (0, 2, 1))                               # (N, 256, 9)


# ---------------------------------------------------------------------------
# pure-JAX (XLA) reference for correctness checking
# ---------------------------------------------------------------------------

def _reference_forward(x, params):
    """NCL-layout reference of AlexNet_1D.forward (train-mode BN)."""
    h = x[:, None, :].astype(jnp.float32)                              # (N, 1, L)

    def conv_bn_relu(h, w, b, g, be):
        l = h.shape[2]
        hp = jnp.pad(h, ((0, 0), (0, 0), (1, 1)))
        y = b[None, :, None] + sum(
            jnp.einsum("ncl,oc->nol", hp[:, :, k:k + l], w[:, :, k],
                       precision=jax.lax.Precision.HIGHEST)
            for k in range(3))
        mean = y.mean(axis=(0, 2), keepdims=True)
        var = ((y - mean) ** 2).mean(axis=(0, 2), keepdims=True)
        y = (y - mean) * jax.lax.rsqrt(var + BN_EPS)
        y = y * g[None, :, None] + be[None, :, None]
        return jnp.maximum(y, 0.0)

    def maxpool3_2(h):
        l = h.shape[2]
        sm = jnp.maximum(jnp.maximum(h[:, :, 0:l - 2], h[:, :, 1:l - 1]),
                         h[:, :, 2:l])
        return sm[:, :, ::2]

    h = maxpool3_2(conv_bn_relu(h, *params[0]))
    h = maxpool3_2(conv_bn_relu(h, *params[1]))
    h = conv_bn_relu(h, *params[2])
    h = conv_bn_relu(h, *params[3])
    h = maxpool3_2(conv_bn_relu(h, *params[4]))
    a = jnp.asarray(_adaptive_pool_matrix(h.shape[2], OUT_LEN))        # (9, L')
    return jnp.einsum("ncl,ol->nco", h, a, precision=jax.lax.Precision.HIGHEST)


if __name__ == "__main__":
    key = jax.random.PRNGKey(0)
    kx, kp = jax.random.split(key)
    N, L = 2, 99                                   # L=99 -> 49 -> 24 -> 11 -> avgpool 9
    x = jax.random.normal(kx, (N, L), jnp.float32)
    params = init_params(kp)

    out = jax.jit(alexnet_1d_forward)(x, params)
    out = jax.block_until_ready(out)
    assert out.shape == (N, 256, 9), out.shape
    assert bool(jnp.all(jnp.isfinite(out)))

    ref = jax.block_until_ready(_reference_forward(x, params))
    np.testing.assert_allclose(np.asarray(out), np.asarray(ref),
                               rtol=2e-2, atol=2e-2)
    print("KERNEL_OK")
</pallas_src>

<mosaic_0001>
module attributes {stable_mosaic.version = 11 : i64} {
  func.func @alexnet1d_kernel(%arg0: memref<2x101x1xf32, #tpu.memory_space<vmem>>, %arg1: memref<3x1x64xf32, #tpu.memory_space<vmem>>, %arg2: memref<3x64xf32, #tpu.memory_space<vmem>>, %arg3: memref<3x64x192xf32, #tpu.memory_space<vmem>>, %arg4: memref<3x192xf32, #tpu.memory_space<vmem>>, %arg5: memref<3x192x384xf32, #tpu.memory_space<vmem>>, %arg6: memref<3x384xf32, #tpu.memory_space<vmem>>, %arg7: memref<3x384x256xf32, #tpu.memory_space<vmem>>, %arg8: memref<3x256xf32, #tpu.memory_space<vmem>>, %arg9: memref<3x256x256xf32, #tpu.memory_space<vmem>>, %arg10: memref<3x256xf32, #tpu.memory_space<vmem>>, %arg11: memref<51x97xf32, #tpu.memory_space<vmem>>, %arg12: memref<26x47xf32, #tpu.memory_space<vmem>>, %arg13: memref<26x24xf32, #tpu.memory_space<vmem>>, %arg14: memref<9x22xf32, #tpu.memory_space<vmem>>, %arg15: memref<2x9x256xf32, #tpu.memory_space<vmem>>) attributes {dimension_semantics = [], scalar_prefetch = 0 : i64, scratch_operands = 0 : i64, tpu.core_type = #tpu.core_type<tc>} {
    %c0 = arith.constant 0 : index
    %c0_0 = arith.constant 0 : index
    %0 = vector.load %arg11[%c0, %c0_0] : memref<51x97xf32, #tpu.memory_space<vmem>>, vector<51x97xf32>
    %c0_1 = arith.constant 0 : index
    %c0_2 = arith.constant 0 : index
    %1 = vector.load %arg12[%c0_1, %c0_2] : memref<26x47xf32, #tpu.memory_space<vmem>>, vector<26x47xf32>
    %c0_3 = arith.constant 0 : index
    %c0_4 = arith.constant 0 : index
    %2 = vector.load %arg13[%c0_3, %c0_4] : memref<26x24xf32, #tpu.memory_space<vmem>>, vector<26x24xf32>
    %c0_5 = arith.constant 0 : index
    %c0_6 = arith.constant 0 : index
    %3 = vector.load %arg14[%c0_5, %c0_6] : memref<9x22xf32, #tpu.memory_space<vmem>>, vector<9x22xf32>
    %c0_7 = arith.constant 0 : index
    %c0_8 = arith.constant 0 : index
    %c0_9 = arith.constant 0 : index
    %4 = vector.load %arg0[%c0_7, %c0_8, %c0_9] : memref<2x101x1xf32, #tpu.memory_space<vmem>>, vector<1x101x1xf32>
    %5 = vector.shape_cast %4 : vector<1x101x1xf32> to vector<101x1xf32>
    %c1 = arith.constant 1 : index
    %c0_10 = arith.constant 0 : index
    %c0_11 = arith.constant 0 : index
    %6 = vector.load %arg0[%c1, %c0_10, %c0_11] : memref<2x101x1xf32, #tpu.memory_space<vmem>>, vector<1x101x1xf32>
    %7 = vector.shape_cast %6 : vector<1x101x1xf32> to vector<101x1xf32>
    %c0_12 = arith.constant 0 : index
    %c0_13 = arith.constant 0 : index
    %8 = vector.load %arg2[%c0_12, %c0_13] : memref<3x64xf32, #tpu.memory_space<vmem>>, vector<1x64xf32>
    %c1_14 = arith.constant 1 : index
    %c0_15 = arith.constant 0 : index
    %9 = vector.load %arg2[%c1_14, %c0_15] : memref<3x64xf32, #tpu.memory_space<vmem>>, vector<1x64xf32>
    %c2 = arith.constant 2 : index
    %c0_16 = arith.constant 0 : index
    %10 = vector.load %arg2[%c2, %c0_16] : memref<3x64xf32, #tpu.memory_space<vmem>>, vector<1x64xf32>
    %11 = vector.extract_strided_slice %5 {offsets = [0, 0], sizes = [99, 1], strides = [1, 1]} : vector<101x1xf32> to vector<99x1xf32>
    %c0_17 = arith.constant 0 : index
    %c0_18 = arith.constant 0 : index
    %c0_19 = arith.constant 0 : index
    %12 = vector.load %arg1[%c0_17, %c0_18, %c0_19] : memref<3x1x64xf32, #tpu.memory_space<vmem>>, vector<1x1x64xf32>
    %13 = vector.shape_cast %12 : vector<1x1x64xf32> to vector<1x64xf32>
    %14 = vector.broadcast %11 : vector<99x1xf32> to vector<99x64xf32>
    %15 = vector.broadcast %13 : vector<1x64xf32> to vector<99x64xf32>
    %16 = arith.mulf %14, %15 : vector<99x64xf32>
    %17 = vector.extract_strided_slice %5 {offsets = [1, 0], sizes = [99, 1], strides = [1, 1]} : vector<101x1xf32> to vector<99x1xf32>
    %c1_20 = arith.constant 1 : index
    %c0_21 = arith.constant 0 : index
    %c0_22 = arith.constant 0 : index
    %18 = vector.load %arg1[%c1_20, %c0_21, %c0_22] : memref<3x1x64xf32, #tpu.memory_space<vmem>>, vector<1x1x64xf32>
    %19 = vector.shape_cast %18 : vector<1x1x64xf32> to vector<1x64xf32>
    %20 = vector.broadcast %17 : vector<99x1xf32> to vector<99x64xf32>
    %21 = vector.broadcast %19 : vector<1x64xf32> to vector<99x64xf32>
    %22 = arith.mulf %20, %21 : vector<99x64xf32>
    %23 = arith.addf %16, %22 : vector<99x64xf32>
    %24 = vector.extract_strided_slice %5 {offsets = [2, 0], sizes = [99, 1], strides = [1, 1]} : vector<101x1xf32> to vector<99x1xf32>
    %c2_23 = arith.constant 2 : index
    %c0_24 = arith.constant 0 : index
    %c0_25 = arith.constant 0 : index
    %25 = vector.load %arg1[%c2_23, %c0_24, %c0_25] : memref<3x1x64xf32, #tpu.memory_space<vmem>>, vector<1x1x64xf32>
    %26 = vector.shape_cast %25 : vector<1x1x64xf32> to vector<1x64xf32>
    %27 = vector.broadcast %24 : vector<99x1xf32> to vector<99x64xf32>
    %28 = vector.broadcast %26 : vector<1x64xf32> to vector<99x64xf32>
    %29 = arith.mulf %27, %28 : vector<99x64xf32>
    %30 = arith.addf %23, %29 : vector<99x64xf32>
    %31 = vector.broadcast %8 : vector<1x64xf32> to vector<99x64xf32>
    %32 = arith.addf %30, %31 : vector<99x64xf32>
    %33 = vector.extract_strided_slice %7 {offsets = [0, 0], sizes = [99, 1], strides = [1, 1]} : vector<101x1xf32> to vector<99x1xf32>
    %c0_26 = arith.constant 0 : index
    %c0_27 = arith.constant 0 : index
    %c0_28 = arith.constant 0 : index
    %34 = vector.load %arg1[%c0_26, %c0_27, %c0_28] : memref<3x1x64xf32, #tpu.memory_space<vmem>>, vector<1x1x64xf32>
    %35 = vector.shape_cast %34 : vector<1x1x64xf32> to vector<1x64xf32>
    %36 = vector.broadcast %33 : vector<99x1xf32> to vector<99x64xf32>
    %37 = vector.broadcast %35 : vector<1x64xf32> to vector<99x64xf32>
    %38 = arith.mulf %36, %37 : vector<99x64xf32>
    %39 = vector.extract_strided_slice %7 {offsets = [1, 0], sizes = [99, 1], strides = [1, 1]} : vector<101x1xf32> to vector<99x1xf32>
    %c1_29 = arith.constant 1 : index
    %c0_30 = arith.constant 0 : index
    %c0_31 = arith.constant 0 : index
    %40 = vector.load %arg1[%c1_29, %c0_30, %c0_31] : memref<3x1x64xf32, #tpu.memory_space<vmem>>, vector<1x1x64xf32>
    %41 = vector.shape_cast %40 : vector<1x1x64xf32> to vector<1x64xf32>
    %42 = vector.broadcast %39 : vector<99x1xf32> to vector<99x64xf32>
    %43 = vector.broadcast %41 : vector<1x64xf32> to vector<99x64xf32>
    %44 = arith.mulf %42, %43 : vector<99x64xf32>
    %45 = arith.addf %38, %44 : vector<99x64xf32>
    %46 = vector.extract_strided_slice %7 {offsets = [2, 0], sizes = [99, 1], strides = [1, 1]} : vector<101x1xf32> to vector<99x1xf32>
    %c2_32 = arith.constant 2 : index
    %c0_33 = arith.constant 0 : index
    %c0_34 = arith.constant 0 : index
    %47 = vector.load %arg1[%c2_32, %c0_33, %c0_34] : memref<3x1x64xf32, #tpu.memory_space<vmem>>, vector<1x1x64xf32>
    %48 = vector.shape_cast %47 : vector<1x1x64xf32> to vector<1x64xf32>
    %49 = vector.broadcast %46 : vector<99x1xf32> to vector<99x64xf32>
    %50 = vector.broadcast %48 : vector<1x64xf32> to vector<99x64xf32>
    %51 = arith.mulf %49, %50 : vector<99x64xf32>
    %52 = arith.addf %45, %51 : vector<99x64xf32>
    %53 = vector.broadcast %8 : vector<1x64xf32> to vector<99x64xf32>
    %54 = arith.addf %52, %53 : vector<99x64xf32>
    %cst = arith.constant dense<0.000000e+00> : vector<64xf32>
    %55 = vector.multi_reduction <add>, %32, %cst [0] : vector<99x64xf32> to vector<64xf32>
    %56 = vector.shape_cast %55 : vector<64xf32> to vector<1x64xf32>
    %57 = arith.mulf %32, %32 : vector<99x64xf32>
    %cst_35 = arith.constant dense<0.000000e+00> : vector<64xf32>
    %58 = vector.multi_reduction <add>, %57, %cst_35 [0] : vector<99x64xf32> to vector<64xf32>
    %59 = vector.shape_cast %58 : vector<64xf32> to vector<1x64xf32>
    %cst_36 = arith.constant dense<0.000000e+00> : vector<64xf32>
    %60 = vector.multi_reduction <add>, %54, %cst_36 [0] : vector<99x64xf32> to vector<64xf32>
    %61 = vector.shape_cast %60 : vector<64xf32> to vector<1x64xf32>
    %62 = arith.addf %56, %61 : vector<1x64xf32>
    %63 = arith.mulf %54, %54 : vector<99x64xf32>
    %cst_37 = arith.constant dense<0.000000e+00> : vector<64xf32>
    %64 = vector.multi_reduction <add>, %63, %cst_37 [0] : vector<99x64xf32> to vector<64xf32>
    %65 = vector.shape_cast %64 : vector<64xf32> to vector<1x64xf32>
    %66 = arith.addf %59, %65 : vector<1x64xf32>
    %cst_38 = arith.constant 0.00505050505 : f32
    %67 = vector.broadcast %cst_38 : f32 to vector<1x64xf32>
    %68 = arith.mulf %62, %67 : vector<1x64xf32>
    %cst_39 = arith.constant 0.00505050505 : f32
    %69 = vector.broadcast %cst_39 : f32 to vector<1x64xf32>
    %70 = arith.mulf %66, %69 : vector<1x64xf32>
    %71 = arith.mulf %68, %68 : vector<1x64xf32>
    %72 = arith.subf %70, %71 : vector<1x64xf32>
    %cst_40 = arith.constant 0.000000e+00 : f32
    %73 = vector.broadcast %cst_40 : f32 to vector<1x64xf32>
    %74 = arith.maximumf %72, %73 : vector<1x64xf32>
    %cst_41 = arith.constant 9.99999974E-6 : f32
    %75 = vector.broadcast %cst_41 : f32 to vector<1x64xf32>
    %76 = arith.addf %74, %75 : vector<1x64xf32>
    %77 = math.rsqrt %76 : vector<1x64xf32>
    %78 = arith.mulf %9, %77 : vector<1x64xf32>
    %79 = arith.mulf %68, %78 : vector<1x64xf32>
    %80 = arith.subf %10, %79 : vector<1x64xf32>
    %81 = vector.broadcast %78 : vector<1x64xf32> to vector<99x64xf32>
    %82 = arith.mulf %32, %81 : vector<99x64xf32>
    %83 = vector.broadcast %80 : vector<1x64xf32> to vector<99x64xf32>
    %84 = arith.addf %82, %83 : vector<99x64xf32>
    %cst_42 = arith.constant 0.000000e+00 : f32
    %85 = vector.broadcast %cst_42 : f32 to vector<99x64xf32>
    %86 = arith.maximumf %84, %85 : vector<99x64xf32>
    %87 = vector.broadcast %78 : vector<1x64xf32> to vector<99x64xf32>
    %88 = arith.mulf %54, %87 : vector<99x64xf32>
    %89 = vector.broadcast %80 : vector<1x64xf32> to vector<99x64xf32>
    %90 = arith.addf %88, %89 : vector<99x64xf32>
    %cst_43 = arith.constant 0.000000e+00 : f32
    %91 = vector.broadcast %cst_43 : f32 to vector<99x64xf32>
    %92 = arith.maximumf %90, %91 : vector<99x64xf32>
    %93 = vector.extract_strided_slice %86 {offsets = [0, 0], sizes = [97, 64], strides = [1, 1]} : vector<99x64xf32> to vector<97x64xf32>
    %94 = vector.extract_strided_slice %86 {offsets = [1, 0], sizes = [97, 64], strides = [1, 1]} : vector<99x64xf32> to vector<97x64xf32>
    %95 = arith.maximumf %93, %94 : vector<97x64xf32>
    %96 = vector.extract_strided_slice %86 {offsets = [2, 0], sizes = [97, 64], strides = [1, 1]} : vector<99x64xf32> to vector<97x64xf32>
    %97 = arith.maximumf %95, %96 : vector<97x64xf32>
    %cst_44 = arith.constant dense<0.000000e+00> : vector<51x64xf32>
    %98 = tpu.matmul %0, %97, %cst_44 {dimension_numbers = #tpu.dot_dimension_numbers<[1], [0], [0], [1], [0, 0, 1, 1], [], []>} : vector<51x97xf32>, vector<97x64xf32>, vector<51x64xf32> -> vector<51x64xf32>
    %99 = vector.extract_strided_slice %92 {offsets = [0, 0], sizes = [97, 64], strides = [1, 1]} : vector<99x64xf32> to vector<97x64xf32>
    %100 = vector.extract_strided_slice %92 {offsets = [1, 0], sizes = [97, 64], strides = [1, 1]} : vector<99x64xf32> to vector<97x64xf32>
    %101 = arith.maximumf %99, %100 : vector<97x64xf32>
    %102 = vector.extract_strided_slice %92 {offsets = [2, 0], sizes = [97, 64], strides = [1, 1]} : vector<99x64xf32> to vector<97x64xf32>
    %103 = arith.maximumf %101, %102 : vector<97x64xf32>
    %cst_45 = arith.constant dense<0.000000e+00> : vector<51x64xf32>
    %104 = tpu.matmul %0, %103, %cst_45 {dimension_numbers = #tpu.dot_dimension_numbers<[1], [0], [0], [1], [0, 0, 1, 1], [], []>} : vector<51x97xf32>, vector<97x64xf32>, vector<51x64xf32> -> vector<51x64xf32>
    %c0_46 = arith.constant 0 : index
    %c0_47 = arith.constant 0 : index
    %105 = vector.load %arg4[%c0_46, %c0_47] : memref<3x192xf32, #tpu.memory_space<vmem>>, vector<1x192xf32>
    %c1_48 = arith.constant 1 : index
    %c0_49 = arith.constant 0 : index
    %106 = vector.load %arg4[%c1_48, %c0_49] : memref<3x192xf32, #tpu.memory_space<vmem>>, vector<1x192xf32>
    %c2_50 = arith.constant 2 : index
    %c0_51 = arith.constant 0 : index
    %107 = vector.load %arg4[%c2_50, %c0_51] : memref<3x192xf32, #tpu.memory_space<vmem>>, vector<1x192xf32>
    %108 = vector.extract_strided_slice %98 {offsets = [0, 0], sizes = [49, 64], strides = [1, 1]} : vector<51x64xf32> to vector<49x64xf32>
    %c0_52 = arith.constant 0 : index
    %c0_53 = arith.constant 0 : index
    %c0_54 = arith.constant 0 : index
    %109 = vector.load %arg3[%c0_52, %c0_53, %c0_54] : memref<3x64x192xf32, #tpu.memory_space<vmem>>, vector<1x64x192xf32>
    %110 = vector.shape_cast %109 : vector<1x64x192xf32> to vector<64x192xf32>
    %cst_55 = arith.constant dense<0.000000e+00> : vector<49x192xf32>
    %111 = tpu.matmul %108, %110, %cst_55 {dimension_numbers = #tpu.dot_dimension_numbers<[1], [0], [0], [1], [0, 0, 1, 1], [], []>} : vector<49x64xf32>, vector<64x192xf32>, vector<49x192xf32> -> vector<49x192xf32>
    %112 = vector.extract_strided_slice %98 {offsets = [1, 0], sizes = [49, 64], strides = [1, 1]} : vector<51x64xf32> to vector<49x64xf32>
    %c1_56 = arith.constant 1 : index
    %c0_57 = arith.constant 0 : index
    %c0_58 = arith.constant 0 : index
    %113 = vector.load %arg3[%c1_56, %c0_57, %c0_58] : memref<3x64x192xf32, #tpu.memory_space<vmem>>, vector<1x64x192xf32>
    %114 = vector.shape_cast %113 : vector<1x64x192xf32> to vector<64x192xf32>
    %cst_59 = arith.constant dense<0.000000e+00> : vector<49x192xf32>
    %115 = tpu.matmul %112, %114, %cst_59 {dimension_numbers = #tpu.dot_dimension_numbers<[1], [0], [0], [1], [0, 0, 1, 1], [], []>} : vector<49x64xf32>, vector<64x192xf32>, vector<49x192xf32> -> vector<49x192xf32>
    %116 = arith.addf %111, %115 : vector<49x192xf32>
    %117 = vector.extract_strided_slice %98 {offsets = [2, 0], sizes = [49, 64], strides = [1, 1]} : vector<51x64xf32> to vector<49x64xf32>
    %c2_60 = arith.constant 2 : index
    %c0_61 = arith.constant 0 : index
    %c0_62 = arith.constant 0 : index
    %118 = vector.load %arg3[%c2_60, %c0_61, %c0_62] : memref<3x64x192xf32, #tpu.memory_space<vmem>>, vector<1x64x192xf32>
    %119 = vector.shape_cast %118 : vector<1x64x192xf32> to vector<64x192xf32>
    %cst_63 = arith.constant dense<0.000000e+00> : vector<49x192xf32>
    %120 = tpu.matmul %117, %119, %cst_63 {dimension_numbers = #tpu.dot_dimension_numbers<[1], [0], [0], [1], [0, 0, 1, 1], [], []>} : vector<49x64xf32>, vector<64x192xf32>, vector<49x192xf32> -> vector<49x192xf32>
    %121 = arith.addf %116, %120 : vector<49x192xf32>
    %122 = vector.broadcast %105 : vector<1x192xf32> to vector<49x192xf32>
    %123 = arith.addf %121, %122 : vector<49x192xf32>
    %124 = vector.extract_strided_slice %104 {offsets = [0, 0], sizes = [49, 64], strides = [1, 1]} : vector<51x64xf32> to vector<49x64xf32>
    %c0_64 = arith.constant 0 : index
    %c0_65 = arith.constant 0 : index
    %c0_66 = arith.constant 0 : index
    %125 = vector.load %arg3[%c0_64, %c0_65, %c0_66] : memref<3x64x192xf32, #tpu.memory_space<vmem>>, vector<1x64x192xf32>
    %126 = vector.shape_cast %125 : vector<1x64x192xf32> to vector<64x192xf32>
    %cst_67 = arith.constant dense<0.000000e+00> : vector<49x192xf32>
    %127 = tpu.matmul %124, %126, %cst_67 {dimension_numbers = #tpu.dot_dimension_numbers<[1], [0], [0], [1], [0, 0, 1, 1], [], []>} : vector<49x64xf32>, vector<64x192xf32>, vector<49x192xf32> -> vector<49x192xf32>
    %128 = vector.extract_strided_slice %104 {offsets = [1, 0], sizes = [49, 64], strides = [1, 1]} : vector<51x64xf32> to vector<49x64xf32>
    %c1_68 = arith.constant 1 : index
    %c0_69 = arith.constant 0 : index
    %c0_70 = arith.constant 0 : index
    %129 = vector.load %arg3[%c1_68, %c0_69, %c0_70] : memref<3x64x192xf32, #tpu.memory_space<vmem>>, vector<1x64x192xf32>
    %130 = vector.shape_cast %129 : vector<1x64x192xf32> to vector<64x192xf32>
    %cst_71 = arith.constant dense<0.000000e+00> : vector<49x192xf32>
    %131 = tpu.matmul %128, %130, %cst_71 {dimension_numbers = #tpu.dot_dimension_numbers<[1], [0], [0], [1], [0, 0, 1, 1], [], []>} : vector<49x64xf32>, vector<64x192xf32>, vector<49x192xf32> -> vector<49x192xf32>
    %132 = arith.addf %127, %131 : vector<49x192xf32>
    %133 = vector.extract_strided_slice %104 {offsets = [2, 0], sizes = [49, 64], strides = [1, 1]} : vector<51x64xf32> to vector<49x64xf32>
    %c2_72 = arith.constant 2 : index
    %c0_73 = arith.constant 0 : index
    %c0_74 = arith.constant 0 : index
    %134 = vector.load %arg3[%c2_72, %c0_73, %c0_74] : memref<3x64x192xf32, #tpu.memory_space<vmem>>, vector<1x64x192xf32>
    %135 = vector.shape_cast %134 : vector<1x64x192xf32> to vector<64x192xf32>
    %cst_75 = arith.constant dense<0.000000e+00> : vector<49x192xf32>
    %136 = tpu.matmul %133, %135, %cst_75 {dimension_numbers = #tpu.dot_dimension_numbers<[1], [0], [0], [1], [0, 0, 1, 1], [], []>} : vector<49x64xf32>, vector<64x192xf32>, vector<49x192xf32> -> vector<49x192xf32>
    %137 = arith.addf %132, %136 : vector<49x192xf32>
    %138 = vector.broadcast %105 : vector<1x192xf32> to vector<49x192xf32>
    %139 = arith.addf %137, %138 : vector<49x192xf32>
    %cst_76 = arith.constant dense<0.000000e+00> : vector<192xf32>
    %140 = vector.multi_reduction <add>, %123, %cst_76 [0] : vector<49x192xf32> to vector<192xf32>
    %141 = vector.shape_cast %140 : vector<192xf32> to vector<1x192xf32>
    %142 = arith.mulf %123, %123 : vector<49x192xf32>
    %cst_77 = arith.constant dense<0.000000e+00> : vector<192xf32>
    %143 = vector.multi_reduction <add>, %142, %cst_77 [0] : vector<49x192xf32> to vector<192xf32>
    %144 = vector.shape_cast %143 : vector<192xf32> to vector<1x192xf32>
    %cst_78 = arith.constant dense<0.000000e+00> : vector<192xf32>
    %145 = vector.multi_reduction <add>, %139, %cst_78 [0] : vector<49x192xf32> to vector<192xf32>
    %146 = vector.shape_cast %145 : vector<192xf32> to vector<1x192xf32>
    %147 = arith.addf %141, %146 : vector<1x192xf32>
    %148 = arith.mulf %139, %139 : vector<49x192xf32>
    %cst_79 = arith.constant dense<0.000000e+00> : vector<192xf32>
    %149 = vector.multi_reduction <add>, %148, %cst_79 [0] : vector<49x192xf32> to vector<192xf32>
    %150 = vector.shape_cast %149 : vector<192xf32> to vector<1x192xf32>
    %151 = arith.addf %144, %150 : vector<1x192xf32>
    %cst_80 = arith.constant 0.0102040814 : f32
    %152 = vector.broadcast %cst_80 : f32 to vector<1x192xf32>
    %153 = arith.mulf %147, %152 : vector<1x192xf32>
    %cst_81 = arith.constant 0.0102040814 : f32
    %154 = vector.broadcast %cst_81 : f32 to vector<1x192xf32>
    %155 = arith.mulf %151, %154 : vector<1x192xf32>
    %156 = arith.mulf %153, %153 : vector<1x192xf32>
    %157 = arith.subf %155, %156 : vector<1x192xf32>
    %cst_82 = arith.constant 0.000000e+00 : f32
    %158 = vector.broadcast %cst_82 : f32 to vector<1x192xf32>
    %159 = arith.maximumf %157, %158 : vector<1x192xf32>
    %cst_83 = arith.constant 9.99999974E-6 : f32
    %160 = vector.broadcast %cst_83 : f32 to vector<1x192xf32>
    %161 = arith.addf %159, %160 : vector<1x192xf32>
    %162 = math.rsqrt %161 : vector<1x192xf32>
    %163 = arith.mulf %106, %162 : vector<1x192xf32>
    %164 = arith.mulf %153, %163 : vector<1x192xf32>
    %165 = arith.subf %107, %164 : vector<1x192xf32>
    %166 = vector.broadcast %163 : vector<1x192xf32> to vector<49x192xf32>
    %167 = arith.mulf %123, %166 : vector<49x192xf32>
    %168 = vector.broadcast %165 : vector<1x192xf32> to vector<49x192xf32>
    %169 = arith.addf %167, %168 : vector<49x192xf32>
    %cst_84 = arith.constant 0.000000e+00 : f32
    %170 = vector.broadcast %cst_84 : f32 to vector<49x192xf32>
    %171 = arith.maximumf %169, %170 : vector<49x192xf32>
    %172 = vector.broadcast %163 : vector<1x192xf32> to vector<49x192xf32>
    %173 = arith.mulf %139, %172 : vector<49x192xf32>
    %174 = vector.broadcast %165 : vector<1x192xf32> to vector<49x192xf32>
    %175 = arith.addf %173, %174 : vector<49x192xf32>
    %cst_85 = arith.constant 0.000000e+00 : f32
    %176 = vector.broadcast %cst_85 : f32 to vector<49x192xf32>
    %177 = arith.maximumf %175, %176 : vector<49x192xf32>
    %178 = vector.extract_strided_slice %171 {offsets = [0, 0], sizes = [47, 192], strides = [1, 1]} : vector<49x192xf32> to vector<47x192xf32>
    %179 = vector.extract_strided_slice %171 {offsets = [1, 0], sizes = [47, 192], strides = [1, 1]} : vector<49x192xf32> to vector<47x192xf32>
    %180 = arith.maximumf %178, %179 : vector<47x192xf32>
    %181 = vector.extract_strided_slice %171 {offsets = [2, 0], sizes = [47, 192], strides = [1, 1]} : vector<49x192xf32> to vector<47x192xf32>
    %182 = arith.maximumf %180, %181 : vector<47x192xf32>
    %cst_86 = arith.constant dense<0.000000e+00> : vector<26x192xf32>
    %183 = tpu.matmul %1, %182, %cst_86 {dimension_numbers = #tpu.dot_dimension_numbers<[1], [0], [0], [1], [0, 0, 1, 1], [], []>} : vector<26x47xf32>, vector<47x192xf32>, vector<26x192xf32> -> vector<26x192xf32>
    %184 = vector.extract_strided_slice %177 {offsets = [0, 0], sizes = [47, 192], strides = [1, 1]} : vector<49x192xf32> to vector<47x192xf32>
    %185 = vector.extract_strided_slice %177 {offsets = [1, 0], sizes = [47, 192], strides = [1, 1]} : vector<49x192xf32> to vector<47x192xf32>
    %186 = arith.maximumf %184, %185 : vector<47x192xf32>
    %187 = vector.extract_strided_slice %177 {offsets = [2, 0], sizes = [47, 192], strides = [1, 1]} : vector<49x192xf32> to vector<47x192xf32>
    %188 = arith.maximumf %186, %187 : vector<47x192xf32>
    %cst_87 = arith.constant dense<0.000000e+00> : vector<26x192xf32>
    %189 = tpu.matmul %1, %188, %cst_87 {dimension_numbers = #tpu.dot_dimension_numbers<[1], [0], [0], [1], [0, 0, 1, 1], [], []>} : vector<26x47xf32>, vector<47x192xf32>, vector<26x192xf32> -> vector<26x192xf32>
    %c0_88 = arith.constant 0 : index
    %c0_89 = arith.constant 0 : index
    %190 = vector.load %arg6[%c0_88, %c0_89] : memref<3x384xf32, #tpu.memory_space<vmem>>, vector<1x384xf32>
    %c1_90 = arith.constant 1 : index
    %c0_91 = arith.constant 0 : index
    %191 = vector.load %arg6[%c1_90, %c0_91] : memref<3x384xf32, #tpu.memory_space<vmem>>, vector<1x384xf32>
    %c2_92 = arith.constant 2 : index
    %c0_93 = arith.constant 0 : index
    %192 = vector.load %arg6[%c2_92, %c0_93] : memref<3x384xf32, #tpu.memory_space<vmem>>, vector<1x384xf32>
    %193 = vector.extract_strided_slice %183 {offsets = [0, 0], sizes = [24, 192], strides = [1, 1]} : vector<26x192xf32> to vector<24x192xf32>
    %c0_94 = arith.constant 0 : index
    %c0_95 = arith.constant 0 : index
    %c0_96 = arith.constant 0 : index
    %194 = vector.load %arg5[%c0_94, %c0_95, %c0_96] : memref<3x192x384xf32, #tpu.memory_space<vmem>>, vector<1x192x384xf32>
    %195 = vector.shape_cast %194 : vector<1x192x384xf32> to vector<192x384xf32>
    %cst_97 = arith.constant dense<0.000000e+00> : vector<24x384xf32>
    %196 = tpu.matmul %193, %195, %cst_97 {dimension_numbers = #tpu.dot_dimension_numbers<[1], [0], [0], [1], [0, 0, 1, 1], [], []>} : vector<24x192xf32>, vector<192x384xf32>, vector<24x384xf32> -> vector<24x384xf32>
    %197 = vector.extract_strided_slice %183 {offsets = [1, 0], sizes = [24, 192], strides = [1, 1]} : vector<26x192xf32> to vector<24x192xf32>
    %c1_98 = arith.constant 1 : index
    %c0_99 = arith.constant 0 : index
    %c0_100 = arith.constant 0 : index
    %198 = vector.load %arg5[%c1_98, %c0_99, %c0_100] : memref<3x192x384xf32, #tpu.memory_space<vmem>>, vector<1x192x384xf32>
    %199 = vector.shape_cast %198 : vector<1x192x384xf32> to vector<192x384xf32>
    %cst_101 = arith.constant dense<0.000000e+00> : vector<24x384xf32>
    %200 = tpu.matmul %197, %199, %cst_101 {dimension_numbers = #tpu.dot_dimension_numbers<[1], [0], [0], [1], [0, 0, 1, 1], [], []>} : vector<24x192xf32>, vector<192x384xf32>, vector<24x384xf32> -> vector<24x384xf32>
    %201 = arith.addf %196, %200 : vector<24x384xf32>
    %202 = vector.extract_strided_slice %183 {offsets = [2, 0], sizes = [24, 192], strides = [1, 1]} : vector<26x192xf32> to vector<24x192xf32>
    %c2_102 = arith.constant 2 : index
    %c0_103 = arith.constant 0 : index
    %c0_104 = arith.constant 0 : index
    %203 = vector.load %arg5[%c2_102, %c0_103, %c0_104] : memref<3x192x384xf32, #tpu.memory_space<vmem>>, vector<1x192x384xf32>
    %204 = vector.shape_cast %203 : vector<1x192x384xf32> to vector<192x384xf32>
    %cst_105 = arith.constant dense<0.000000e+00> : vector<24x384xf32>
    %205 = tpu.matmul %202, %204, %cst_105 {dimension_numbers = #tpu.dot_dimension_numbers<[1], [0], [0], [1], [0, 0, 1, 1], [], []>} : vector<24x192xf32>, vector<192x384xf32>, vector<24x384xf32> -> vector<24x384xf32>
    %206 = arith.addf %201, %205 : vector<24x384xf32>
    %207 = vector.broadcast %190 : vector<1x384xf32> to vector<24x384xf32>
    %208 = arith.addf %206, %207 : vector<24x384xf32>
    %209 = vector.extract_strided_slice %189 {offsets = [0, 0], sizes = [24, 192], strides = [1, 1]} : vector<26x192xf32> to vector<24x192xf32>
    %c0_106 = arith.constant 0 : index
    %c0_107 = arith.constant 0 : index
    %c0_108 = arith.constant 0 : index
    %210 = vector.load %arg5[%c0_106, %c0_107, %c0_108] : memref<3x192x384xf32, #tpu.memory_space<vmem>>, vector<1x192x384xf32>
    %211 = vector.shape_cast %210 : vector<1x192x384xf32> to vector<192x384xf32>
    %cst_109 = arith.constant dense<0.000000e+00> : vector<24x384xf32>
    %212 = tpu.matmul %209, %211, %cst_109 {dimension_numbers = #tpu.dot_dimension_numbers<[1], [0], [0], [1], [0, 0, 1, 1], [], []>} : vector<24x192xf32>, vector<192x384xf32>, vector<24x384xf32> -> vector<24x384xf32>
    %213 = vector.extract_strided_slice %189 {offsets = [1, 0], sizes = [24, 192], strides = [1, 1]} : vector<26x192xf32> to vector<24x192xf32>
    %c1_110 = arith.constant 1 : index
    %c0_111 = arith.constant 0 : index
    %c0_112 = arith.constant 0 : index
    %214 = vector.load %arg5[%c1_110, %c0_111, %c0_112] : memref<3x192x384xf32, #tpu.memory_space<vmem>>, vector<1x192x384xf32>
    %215 = vector.shape_cast %214 : vector<1x192x384xf32> to vector<192x384xf32>
    %cst_113 = arith.constant dense<0.000000e+00> : vector<24x384xf32>
    %216 = tpu.matmul %213, %215, %cst_113 {dimension_numbers = #tpu.dot_dimension_numbers<[1], [0], [0], [1], [0, 0, 1, 1], [], []>} : vector<24x192xf32>, vector<192x384xf32>, vector<24x384xf32> -> vector<24x384xf32>
    %217 = arith.addf %212, %216 : vector<24x384xf32>
    %218 = vector.extract_strided_slice %189 {offsets = [2, 0], sizes = [24, 192], strides = [1, 1]} : vector<26x192xf32> to vector<24x192xf32>
    %c2_114 = arith.constant 2 : index
    %c0_115 = arith.constant 0 : index
    %c0_116 = arith.constant 0 : index
    %219 = vector.load %arg5[%c2_114, %c0_115, %c0_116] : memref<3x192x384xf32, #tpu.memory_space<vmem>>, vector<1x192x384xf32>
    %220 = vector.shape_cast %219 : vector<1x192x384xf32> to vector<192x384xf32>
    %cst_117 = arith.constant dense<0.000000e+00> : vector<24x384xf32>
    %221 = tpu.matmul %218, %220, %cst_117 {dimension_numbers = #tpu.dot_dimension_numbers<[1], [0], [0], [1], [0, 0, 1, 1], [], []>} : vector<24x192xf32>, vector<192x384xf32>, vector<24x384xf32> -> vector<24x384xf32>
    %222 = arith.addf %217, %221 : vector<24x384xf32>
    %223 = vector.broadcast %190 : vector<1x384xf32> to vector<24x384xf32>
    %224 = arith.addf %222, %223 : vector<24x384xf32>
    %cst_118 = arith.constant dense<0.000000e+00> : vector<384xf32>
    %225 = vector.multi_reduction <add>, %208, %cst_118 [0] : vector<24x384xf32> to vector<384xf32>
    %226 = vector.shape_cast %225 : vector<384xf32> to vector<1x384xf32>
    %227 = arith.mulf %208, %208 : vector<24x384xf32>
    %cst_119 = arith.constant dense<0.000000e+00> : vector<384xf32>
    %228 = vector.multi_reduction <add>, %227, %cst_119 [0] : vector<24x384xf32> to vector<384xf32>
    %229 = vector.shape_cast %228 : vector<384xf32> to vector<1x384xf32>
    %cst_120 = arith.constant dense<0.000000e+00> : vector<384xf32>
    %230 = vector.multi_reduction <add>, %224, %cst_120 [0] : vector<24x384xf32> to vector<384xf32>
    %231 = vector.shape_cast %230 : vector<384xf32> to vector<1x384xf32>
    %232 = arith.addf %226, %231 : vector<1x384xf32>
    %233 = arith.mulf %224, %224 : vector<24x384xf32>
    %cst_121 = arith.constant dense<0.000000e+00> : vector<384xf32>
    %234 = vector.multi_reduction <add>, %233, %cst_121 [0] : vector<24x384xf32> to vector<384xf32>
    %235 = vector.shape_cast %234 : vector<384xf32> to vector<1x384xf32>
    %236 = arith.addf %229, %235 : vector<1x384xf32>
    %cst_122 = arith.constant 0.020833334 : f32
    %237 = vector.broadcast %cst_122 : f32 to vector<1x384xf32>
    %238 = arith.mulf %232, %237 : vector<1x384xf32>
    %cst_123 = arith.constant 0.020833334 : f32
    %239 = vector.broadcast %cst_123 : f32 to vector<1x384xf32>
    %240 = arith.mulf %236, %239 : vector<1x384xf32>
    %241 = arith.mulf %238, %238 : vector<1x384xf32>
    %242 = arith.subf %240, %241 : vector<1x384xf32>
    %cst_124 = arith.constant 0.000000e+00 : f32
    %243 = vector.broadcast %cst_124 : f32 to vector<1x384xf32>
    %244 = arith.maximumf %242, %243 : vector<1x384xf32>
    %cst_125 = arith.constant 9.99999974E-6 : f32
    %245 = vector.broadcast %cst_125 : f32 to vector<1x384xf32>
    %246 = arith.addf %244, %245 : vector<1x384xf32>
    %247 = math.rsqrt %246 : vector<1x384xf32>
    %248 = arith.mulf %191, %247 : vector<1x384xf32>
    %249 = arith.mulf %238, %248 : vector<1x384xf32>
    %250 = arith.subf %192, %249 : vector<1x384xf32>
    %251 = vector.broadcast %248 : vector<1x384xf32> to vector<24x384xf32>
    %252 = arith.mulf %208, %251 : vector<24x384xf32>
    %253 = vector.broadcast %250 : vector<1x384xf32> to vector<24x384xf32>
    %254 = arith.addf %252, %253 : vector<24x384xf32>
    %cst_126 = arith.constant 0.000000e+00 : f32
    %255 = vector.broadcast %cst_126 : f32 to vector<24x384xf32>
    %256 = arith.maximumf %254, %255 : vector<24x384xf32>
    %257 = vector.broadcast %248 : vector<1x384xf32> to vector<24x384xf32>
    %258 = arith.mulf %224, %257 : vector<24x384xf32>
    %259 = vector.broadcast %250 : vector<1x384xf32> to vector<24x384xf32>
    %260 = arith.addf %258, %259 : vector<24x384xf32>
    %cst_127 = arith.constant 0.000000e+00 : f32
    %261 = vector.broadcast %cst_127 : f32 to vector<24x384xf32>
    %262 = arith.maximumf %260, %261 : vector<24x384xf32>
    %cst_128 = arith.constant dense<0.000000e+00> : vector<26x384xf32>
    %263 = tpu.matmul %2, %256, %cst_128 {dimension_numbers = #tpu.dot_dimension_numbers<[1], [0], [0], [1], [0, 0, 1, 1], [], []>} : vector<26x24xf32>, vector<24x384xf32>, vector<26x384xf32> -> vector<26x384xf32>
    %cst_129 = arith.constant dense<0.000000e+00> : vector<26x384xf32>
    %264 = tpu.matmul %2, %262, %cst_129 {dimension_numbers = #tpu.dot_dimension_numbers<[1], [0], [0], [1], [0, 0, 1, 1], [], []>} : vector<26x24xf32>, vector<24x384xf32>, vector<26x384xf32> -> vector<26x384xf32>
    %c0_130 = arith.constant 0 : index
    %c0_131 = arith.constant 0 : index
    %265 = vector.load %arg8[%c0_130, %c0_131] : memref<3x256xf32, #tpu.memory_space<vmem>>, vector<1x256xf32>
    %c1_132 = arith.constant 1 : index
    %c0_133 = arith.constant 0 : index
    %266 = vector.load %arg8[%c1_132, %c0_133] : memref<3x256xf32, #tpu.memory_space<vmem>>, vector<1x256xf32>
    %c2_134 = arith.constant 2 : index
    %c0_135 = arith.constant 0 : index
    %267 = vector.load %arg8[%c2_134, %c0_135] : memref<3x256xf32, #tpu.memory_space<vmem>>, vector<1x256xf32>
    %268 = vector.extract_strided_slice %263 {offsets = [0, 0], sizes = [24, 384], strides = [1, 1]} : vector<26x384xf32> to vector<24x384xf32>
    %c0_136 = arith.constant 0 : index
    %c0_137 = arith.constant 0 : index
    %c0_138 = arith.constant 0 : index
    %269 = vector.load %arg7[%c0_136, %c0_137, %c0_138] : memref<3x384x256xf32, #tpu.memory_space<vmem>>, vector<1x384x256xf32>
    %270 = vector.shape_cast %269 : vector<1x384x256xf32> to vector<384x256xf32>
    %cst_139 = arith.constant dense<0.000000e+00> : vector<24x256xf32>
    %271 = tpu.matmul %268, %270, %cst_139 {dimension_numbers = #tpu.dot_dimension_numbers<[1], [0], [0], [1], [0, 0, 1, 1], [], []>} : vector<24x384xf32>, vector<384x256xf32>, vector<24x256xf32> -> vector<24x256xf32>
    %272 = vector.extract_strided_slice %263 {offsets = [1, 0], sizes = [24, 384], strides = [1, 1]} : vector<26x384xf32> to vector<24x384xf32>
    %c1_140 = arith.constant 1 : index
    %c0_141 = arith.constant 0 : index
    %c0_142 = arith.constant 0 : index
    %273 = vector.load %arg7[%c1_140, %c0_141, %c0_142] : memref<3x384x256xf32, #tpu.memory_space<vmem>>, vector<1x384x256xf32>
    %274 = vector.shape_cast %273 : vector<1x384x256xf32> to vector<384x256xf32>
    %cst_143 = arith.constant dense<0.000000e+00> : vector<24x256xf32>
    %275 = tpu.matmul %272, %274, %cst_143 {dimension_numbers = #tpu.dot_dimension_numbers<[1], [0], [0], [1], [0, 0, 1, 1], [], []>} : vector<24x384xf32>, vector<384x256xf32>, vector<24x256xf32> -> vector<24x256xf32>
    %276 = arith.addf %271, %275 : vector<24x256xf32>
    %277 = vector.extract_strided_slice %263 {offsets = [2, 0], sizes = [24, 384], strides = [1, 1]} : vector<26x384xf32> to vector<24x384xf32>
    %c2_144 = arith.constant 2 : index
    %c0_145 = arith.constant 0 : index
    %c0_146 = arith.constant 0 : index
    %278 = vector.load %arg7[%c2_144, %c0_145, %c0_146] : memref<3x384x256xf32, #tpu.memory_space<vmem>>, vector<1x384x256xf32>
    %279 = vector.shape_cast %278 : vector<1x384x256xf32> to vector<384x256xf32>
    %cst_147 = arith.constant dense<0.000000e+00> : vector<24x256xf32>
    %280 = tpu.matmul %277, %279, %cst_147 {dimension_numbers = #tpu.dot_dimension_numbers<[1], [0], [0], [1], [0, 0, 1, 1], [], []>} : vector<24x384xf32>, vector<384x256xf32>, vector<24x256xf32> -> vector<24x256xf32>
    %281 = arith.addf %276, %280 : vector<24x256xf32>
    %282 = vector.broadcast %265 : vector<1x256xf32> to vector<24x256xf32>
    %283 = arith.addf %281, %282 : vector<24x256xf32>
    %284 = vector.extract_strided_slice %264 {offsets = [0, 0], sizes = [24, 384], strides = [1, 1]} : vector<26x384xf32> to vector<24x384xf32>
    %c0_148 = arith.constant 0 : index
    %c0_149 = arith.constant 0 : index
    %c0_150 = arith.constant 0 : index
    %285 = vector.load %arg7[%c0_148, %c0_149, %c0_150] : memref<3x384x256xf32, #tpu.memory_space<vmem>>, vector<1x384x256xf32>
    %286 = vector.shape_cast %285 : vector<1x384x256xf32> to vector<384x256xf32>
    %cst_151 = arith.constant dense<0.000000e+00> : vector<24x256xf32>
    %287 = tpu.matmul %284, %286, %cst_151 {dimension_numbers = #tpu.dot_dimension_numbers<[1], [0], [0], [1], [0, 0, 1, 1], [], []>} : vector<24x384xf32>, vector<384x256xf32>, vector<24x256xf32> -> vector<24x256xf32>
    %288 = vector.extract_strided_slice %264 {offsets = [1, 0], sizes = [24, 384], strides = [1, 1]} : vector<26x384xf32> to vector<24x384xf32>
    %c1_152 = arith.constant 1 : index
    %c0_153 = arith.constant 0 : index
    %c0_154 = arith.constant 0 : index
    %289 = vector.load %arg7[%c1_152, %c0_153, %c0_154] : memref<3x384x256xf32, #tpu.memory_space<vmem>>, vector<1x384x256xf32>
    %290 = vector.shape_cast %289 : vector<1x384x256xf32> to vector<384x256xf32>
    %cst_155 = arith.constant dense<0.000000e+00> : vector<24x256xf32>
    %291 = tpu.matmul %288, %290, %cst_155 {dimension_numbers = #tpu.dot_dimension_numbers<[1], [0], [0], [1], [0, 0, 1, 1], [], []>} : vector<24x384xf32>, vector<384x256xf32>, vector<24x256xf32> -> vector<24x256xf32>
    %292 = arith.addf %287, %291 : vector<24x256xf32>
    %293 = vector.extract_strided_slice %264 {offsets = [2, 0], sizes = [24, 384], strides = [1, 1]} : vector<26x384xf32> to vector<24x384xf32>
    %c2_156 = arith.constant 2 : index
    %c0_157 = arith.constant 0 : index
    %c0_158 = arith.constant 0 : index
    %294 = vector.load %arg7[%c2_156, %c0_157, %c0_158] : memref<3x384x256xf32, #tpu.memory_space<vmem>>, vector<1x384x256xf32>
    %295 = vector.shape_cast %294 : vector<1x384x256xf32> to vector<384x256xf32>
    %cst_159 = arith.constant dense<0.000000e+00> : vector<24x256xf32>
    %296 = tpu.matmul %293, %295, %cst_159 {dimension_numbers = #tpu.dot_dimension_numbers<[1], [0], [0], [1], [0, 0, 1, 1], [], []>} : vector<24x384xf32>, vector<384x256xf32>, vector<24x256xf32> -> vector<24x256xf32>
    %297 = arith.addf %292, %296 : vector<24x256xf32>
    %298 = vector.broadcast %265 : vector<1x256xf32> to vector<24x256xf32>
    %299 = arith.addf %297, %298 : vector<24x256xf32>
    %cst_160 = arith.constant dense<0.000000e+00> : vector<256xf32>
    %300 = vector.multi_reduction <add>, %283, %cst_160 [0] : vector<24x256xf32> to vector<256xf32>
    %301 = vector.shape_cast %300 : vector<256xf32> to vector<1x256xf32>
    %302 = arith.mulf %283, %283 : vector<24x256xf32>
    %cst_161 = arith.constant dense<0.000000e+00> : vector<256xf32>
    %303 = vector.multi_reduction <add>, %302, %cst_161 [0] : vector<24x256xf32> to vector<256xf32>
    %304 = vector.shape_cast %303 : vector<256xf32> to vector<1x256xf32>
    %cst_162 = arith.constant dense<0.000000e+00> : vector<256xf32>
    %305 = vector.multi_reduction <add>, %299, %cst_162 [0] : vector<24x256xf32> to vector<256xf32>
    %306 = vector.shape_cast %305 : vector<256xf32> to vector<1x256xf32>
    %307 = arith.addf %301, %306 : vector<1x256xf32>
    %308 = arith.mulf %299, %299 : vector<24x256xf32>
    %cst_163 = arith.constant dense<0.000000e+00> : vector<256xf32>
    %309 = vector.multi_reduction <add>, %308, %cst_163 [0] : vector<24x256xf32> to vector<256xf32>
    %310 = vector.shape_cast %309 : vector<256xf32> to vector<1x256xf32>
    %311 = arith.addf %304, %310 : vector<1x256xf32>
    %cst_164 = arith.constant 0.020833334 : f32
    %312 = vector.broadcast %cst_164 : f32 to vector<1x256xf32>
    %313 = arith.mulf %307, %312 : vector<1x256xf32>
    %cst_165 = arith.constant 0.020833334 : f32
    %314 = vector.broadcast %cst_165 : f32 to vector<1x256xf32>
    %315 = arith.mulf %311, %314 : vector<1x256xf32>
    %316 = arith.mulf %313, %313 : vector<1x256xf32>
    %317 = arith.subf %315, %316 : vector<1x256xf32>
    %cst_166 = arith.constant 0.000000e+00 : f32
    %318 = vector.broadcast %cst_166 : f32 to vector<1x256xf32>
    %319 = arith.maximumf %317, %318 : vector<1x256xf32>
    %cst_167 = arith.constant 9.99999974E-6 : f32
    %320 = vector.broadcast %cst_167 : f32 to vector<1x256xf32>
    %321 = arith.addf %319, %320 : vector<1x256xf32>
    %322 = math.rsqrt %321 : vector<1x256xf32>
    %323 = arith.mulf %266, %322 : vector<1x256xf32>
    %324 = arith.mulf %313, %323 : vector<1x256xf32>
    %325 = arith.subf %267, %324 : vector<1x256xf32>
    %326 = vector.broadcast %323 : vector<1x256xf32> to vector<24x256xf32>
    %327 = arith.mulf %283, %326 : vector<24x256xf32>
    %328 = vector.broadcast %325 : vector<1x256xf32> to vector<24x256xf32>
    %329 = arith.addf %327, %328 : vector<24x256xf32>
    %cst_168 = arith.constant 0.000000e+00 : f32
    %330 = vector.broadcast %cst_168 : f32 to vector<24x256xf32>
    %331 = arith.maximumf %329, %330 : vector<24x256xf32>
    %332 = vector.broadcast %323 : vector<1x256xf32> to vector<24x256xf32>
    %333 = arith.mulf %299, %332 : vector<24x256xf32>
    %334 = vector.broadcast %325 : vector<1x256xf32> to vector<24x256xf32>
    %335 = arith.addf %333, %334 : vector<24x256xf32>
    %cst_169 = arith.constant 0.000000e+00 : f32
    %336 = vector.broadcast %cst_169 : f32 to vector<24x256xf32>
    %337 = arith.maximumf %335, %336 : vector<24x256xf32>
    %cst_170 = arith.constant dense<0.000000e+00> : vector<26x256xf32>
    %338 = tpu.matmul %2, %331, %cst_170 {dimension_numbers = #tpu.dot_dimension_numbers<[1], [0], [0], [1], [0, 0, 1, 1], [], []>} : vector<26x24xf32>, vector<24x256xf32>, vector<26x256xf32> -> vector<26x256xf32>
    %cst_171 = arith.constant dense<0.000000e+00> : vector<26x256xf32>
    %339 = tpu.matmul %2, %337, %cst_171 {dimension_numbers = #tpu.dot_dimension_numbers<[1], [0], [0], [1], [0, 0, 1, 1], [], []>} : vector<26x24xf32>, vector<24x256xf32>, vector<26x256xf32> -> vector<26x256xf32>
    %c0_172 = arith.constant 0 : index
    %c0_173 = arith.constant 0 : index
    %340 = vector.load %arg10[%c0_172, %c0_173] : memref<3x256xf32, #tpu.memory_space<vmem>>, vector<1x256xf32>
    %c1_174 = arith.constant 1 : index
    %c0_175 = arith.constant 0 : index
    %341 = vector.load %arg10[%c1_174, %c0_175] : memref<3x256xf32, #tpu.memory_space<vmem>>, vector<1x256xf32>
    %c2_176 = arith.constant 2 : index
    %c0_177 = arith.constant 0 : index
    %342 = vector.load %arg10[%c2_176, %c0_177] : memref<3x256xf32, #tpu.memory_space<vmem>>, vector<1x256xf32>
    %343 = vector.extract_strided_slice %338 {offsets = [0, 0], sizes = [24, 256], strides = [1, 1]} : vector<26x256xf32> to vector<24x256xf32>
    %c0_178 = arith.constant 0 : index
    %c0_179 = arith.constant 0 : index
    %c0_180 = arith.constant 0 : index
    %344 = vector.load %arg9[%c0_178, %c0_179, %c0_180] : memref<3x256x256xf32, #tpu.memory_space<vmem>>, vector<1x256x256xf32>
    %345 = vector.shape_cast %344 : vector<1x256x256xf32> to vector<256x256xf32>
    %cst_181 = arith.constant dense<0.000000e+00> : vector<24x256xf32>
    %346 = tpu.matmul %343, %345, %cst_181 {dimension_numbers = #tpu.dot_dimension_numbers<[1], [0], [0], [1], [0, 0, 1, 1], [], []>} : vector<24x256xf32>, vector<256x256xf32>, vector<24x256xf32> -> vector<24x256xf32>
    %347 = vector.extract_strided_slice %338 {offsets = [1, 0], sizes = [24, 256], strides = [1, 1]} : vector<26x256xf32> to vector<24x256xf32>
    %c1_182 = arith.constant 1 : index
    %c0_183 = arith.constant 0 : index
    %c0_184 = arith.constant 0 : index
    %348 = vector.load %arg9[%c1_182, %c0_183, %c0_184] : memref<3x256x256xf32, #tpu.memory_space<vmem>>, vector<1x256x256xf32>
    %349 = vector.shape_cast %348 : vector<1x256x256xf32> to vector<256x256xf32>
    %cst_185 = arith.constant dense<0.000000e+00> : vector<24x256xf32>
    %350 = tpu.matmul %347, %349, %cst_185 {dimension_numbers = #tpu.dot_dimension_numbers<[1], [0], [0], [1], [0, 0, 1, 1], [], []>} : vector<24x256xf32>, vector<256x256xf32>, vector<24x256xf32> -> vector<24x256xf32>
    %351 = arith.addf %346, %350 : vector<24x256xf32>
    %352 = vector.extract_strided_slice %338 {offsets = [2, 0], sizes = [24, 256], strides = [1, 1]} : vector<26x256xf32> to vector<24x256xf32>
    %c2_186 = arith.constant 2 : index
    %c0_187 = arith.constant 0 : index
    %c0_188 = arith.constant 0 : index
    %353 = vector.load %arg9[%c2_186, %c0_187, %c0_188] : memref<3x256x256xf32, #tpu.memory_space<vmem>>, vector<1x256x256xf32>
    %354 = vector.shape_cast %353 : vector<1x256x256xf32> to vector<256x256xf32>
    %cst_189 = arith.constant dense<0.000000e+00> : vector<24x256xf32>
    %355 = tpu.matmul %352, %354, %cst_189 {dimension_numbers = #tpu.dot_dimension_numbers<[1], [0], [0], [1], [0, 0, 1, 1], [], []>} : vector<24x256xf32>, vector<256x256xf32>, vector<24x256xf32> -> vector<24x256xf32>
    %356 = arith.addf %351, %355 : vector<24x256xf32>
    %357 = vector.broadcast %340 : vector<1x256xf32> to vector<24x256xf32>
    %358 = arith.addf %356, %357 : vector<24x256xf32>
    %359 = vector.extract_strided_slice %339 {offsets = [0, 0], sizes = [24, 256], strides = [1, 1]} : vector<26x256xf32> to vector<24x256xf32>
    %c0_190 = arith.constant 0 : index
    %c0_191 = arith.constant 0 : index
    %c0_192 = arith.constant 0 : index
    %360 = vector.load %arg9[%c0_190, %c0_191, %c0_192] : memref<3x256x256xf32, #tpu.memory_space<vmem>>, vector<1x256x256xf32>
    %361 = vector.shape_cast %360 : vector<1x256x256xf32> to vector<256x256xf32>
    %cst_193 = arith.constant dense<0.000000e+00> : vector<24x256xf32>
    %362 = tpu.matmul %359, %361, %cst_193 {dimension_numbers = #tpu.dot_dimension_numbers<[1], [0], [0], [1], [0, 0, 1, 1], [], []>} : vector<24x256xf32>, vector<256x256xf32>, vector<24x256xf32> -> vector<24x256xf32>
    %363 = vector.extract_strided_slice %339 {offsets = [1, 0], sizes = [24, 256], strides = [1, 1]} : vector<26x256xf32> to vector<24x256xf32>
    %c1_194 = arith.constant 1 : index
    %c0_195 = arith.constant 0 : index
    %c0_196 = arith.constant 0 : index
    %364 = vector.load %arg9[%c1_194, %c0_195, %c0_196] : memref<3x256x256xf32, #tpu.memory_space<vmem>>, vector<1x256x256xf32>
    %365 = vector.shape_cast %364 : vector<1x256x256xf32> to vector<256x256xf32>
    %cst_197 = arith.constant dense<0.000000e+00> : vector<24x256xf32>
    %366 = tpu.matmul %363, %365, %cst_197 {dimension_numbers = #tpu.dot_dimension_numbers<[1], [0], [0], [1], [0, 0, 1, 1], [], []>} : vector<24x256xf32>, vector<256x256xf32>, vector<24x256xf32> -> vector<24x256xf32>
    %367 = arith.addf %362, %366 : vector<24x256xf32>
    %368 = vector.extract_strided_slice %339 {offsets = [2, 0], sizes = [24, 256], strides = [1, 1]} : vector<26x256xf32> to vector<24x256xf32>
    %c2_198 = arith.constant 2 : index
    %c0_199 = arith.constant 0 : index
    %c0_200 = arith.constant 0 : index
    %369 = vector.load %arg9[%c2_198, %c0_199, %c0_200] : memref<3x256x256xf32, #tpu.memory_space<vmem>>, vector<1x256x256xf32>
    %370 = vector.shape_cast %369 : vector<1x256x256xf32> to vector<256x256xf32>
    %cst_201 = arith.constant dense<0.000000e+00> : vector<24x256xf32>
    %371 = tpu.matmul %368, %370, %cst_201 {dimension_numbers = #tpu.dot_dimension_numbers<[1], [0], [0], [1], [0, 0, 1, 1], [], []>} : vector<24x256xf32>, vector<256x256xf32>, vector<24x256xf32> -> vector<24x256xf32>
    %372 = arith.addf %367, %371 : vector<24x256xf32>
    %373 = vector.broadcast %340 : vector<1x256xf32> to vector<24x256xf32>
    %374 = arith.addf %372, %373 : vector<24x256xf32>
    %cst_202 = arith.constant dense<0.000000e+00> : vector<256xf32>
    %375 = vector.multi_reduction <add>, %358, %cst_202 [0] : vector<24x256xf32> to vector<256xf32>
    %376 = vector.shape_cast %375 : vector<256xf32> to vector<1x256xf32>
    %377 = arith.mulf %358, %358 : vector<24x256xf32>
    %cst_203 = arith.constant dense<0.000000e+00> : vector<256xf32>
    %378 = vector.multi_reduction <add>, %377, %cst_203 [0] : vector<24x256xf32> to vector<256xf32>
    %379 = vector.shape_cast %378 : vector<256xf32> to vector<1x256xf32>
    %cst_204 = arith.constant dense<0.000000e+00> : vector<256xf32>
    %380 = vector.multi_reduction <add>, %374, %cst_204 [0] : vector<24x256xf32> to vector<256xf32>
    %381 = vector.shape_cast %380 : vector<256xf32> to vector<1x256xf32>
    %382 = arith.addf %376, %381 : vector<1x256xf32>
    %383 = arith.mulf %374, %374 : vector<24x256xf32>
    %cst_205 = arith.constant dense<0.000000e+00> : vector<256xf32>
    %384 = vector.multi_reduction <add>, %383, %cst_205 [0] : vector<24x256xf32> to vector<256xf32>
    %385 = vector.shape_cast %384 : vector<256xf32> to vector<1x256xf32>
    %386 = arith.addf %379, %385 : vector<1x256xf32>
    %cst_206 = arith.constant 0.020833334 : f32
    %387 = vector.broadcast %cst_206 : f32 to vector<1x256xf32>
    %388 = arith.mulf %382, %387 : vector<1x256xf32>
    %cst_207 = arith.constant 0.020833334 : f32
    %389 = vector.broadcast %cst_207 : f32 to vector<1x256xf32>
    %390 = arith.mulf %386, %389 : vector<1x256xf32>
    %391 = arith.mulf %388, %388 : vector<1x256xf32>
    %392 = arith.subf %390, %391 : vector<1x256xf32>
    %cst_208 = arith.constant 0.000000e+00 : f32
    %393 = vector.broadcast %cst_208 : f32 to vector<1x256xf32>
    %394 = arith.maximumf %392, %393 : vector<1x256xf32>
    %cst_209 = arith.constant 9.99999974E-6 : f32
    %395 = vector.broadcast %cst_209 : f32 to vector<1x256xf32>
    %396 = arith.addf %394, %395 : vector<1x256xf32>
    %397 = math.rsqrt %396 : vector<1x256xf32>
    %398 = arith.mulf %341, %397 : vector<1x256xf32>
    %399 = arith.mulf %388, %398 : vector<1x256xf32>
    %400 = arith.subf %342, %399 : vector<1x256xf32>
    %401 = vector.broadcast %398 : vector<1x256xf32> to vector<24x256xf32>
    %402 = arith.mulf %358, %401 : vector<24x256xf32>
    %403 = vector.broadcast %400 : vector<1x256xf32> to vector<24x256xf32>
    %404 = arith.addf %402, %403 : vector<24x256xf32>
    %cst_210 = arith.constant 0.000000e+00 : f32
    %405 = vector.broadcast %cst_210 : f32 to vector<24x256xf32>
    %406 = arith.maximumf %404, %405 : vector<24x256xf32>
    %407 = vector.broadcast %398 : vector<1x256xf32> to vector<24x256xf32>
    %408 = arith.mulf %374, %407 : vector<24x256xf32>
    %409 = vector.broadcast %400 : vector<1x256xf32> to vector<24x256xf32>
    %410 = arith.addf %408, %409 : vector<24x256xf32>
    %cst_211 = arith.constant 0.000000e+00 : f32
    %411 = vector.broadcast %cst_211 : f32 to vector<24x256xf32>
    %412 = arith.maximumf %410, %411 : vector<24x256xf32>
    %413 = vector.extract_strided_slice %406 {offsets = [0, 0], sizes = [22, 256], strides = [1, 1]} : vector<24x256xf32> to vector<22x256xf32>
    %414 = vector.extract_strided_slice %406 {offsets = [1, 0], sizes = [22, 256], strides = [1, 1]} : vector<24x256xf32> to vector<22x256xf32>
    %415 = arith.maximumf %413, %414 : vector<22x256xf32>
    %416 = vector.extract_strided_slice %406 {offsets = [2, 0], sizes = [22, 256], strides = [1, 1]} : vector<24x256xf32> to vector<22x256xf32>
    %417 = arith.maximumf %415, %416 : vector<22x256xf32>
    %cst_212 = arith.constant dense<0.000000e+00> : vector<9x256xf32>
    %418 = tpu.matmul %3, %417, %cst_212 {dimension_numbers = #tpu.dot_dimension_numbers<[1], [0], [0], [1], [0, 0, 1, 1], [], []>} : vector<9x22xf32>, vector<22x256xf32>, vector<9x256xf32> -> vector<9x256xf32>
    %c0_213 = arith.constant 0 : index
    %c0_214 = arith.constant 0 : index
    %c0_215 = arith.constant 0 : index
    %419 = vector.load %arg15[%c0_213, %c0_214, %c0_215] : memref<2x9x256xf32, #tpu.memory_space<vmem>>, vector<1x9x256xf32>
    %420 = vector.shape_cast %419 : vector<1x9x256xf32> to vector<9x256xf32>
    %421 = vector.shape_cast %418 : vector<9x256xf32> to vector<1x9x256xf32>
    tpu.vector_store %arg15[%c0_213, %c0_214, %c0_215], %421 {strides = array<i32>} : memref<2x9x256xf32, #tpu.memory_space<vmem>>, vector<1x9x256xf32>,
    %422 = vector.extract_strided_slice %412 {offsets = [0, 0], sizes = [22, 256], strides = [1, 1]} : vector<24x256xf32> to vector<22x256xf32>
    %423 = vector.extract_strided_slice %412 {offsets = [1, 0], sizes = [22, 256], strides = [1, 1]} : vector<24x256xf32> to vector<22x256xf32>
    %424 = arith.maximumf %422, %423 : vector<22x256xf32>
    %425 = vector.extract_strided_slice %412 {offsets = [2, 0], sizes = [22, 256], strides = [1, 1]} : vector<24x256xf32> to vector<22x256xf32>
    %426 = arith.maximumf %424, %425 : vector<22x256xf32>
    %cst_216 = arith.constant dense<0.000000e+00> : vector<9x256xf32>
    %427 = tpu.matmul %3, %426, %cst_216 {dimension_numbers = #tpu.dot_dimension_numbers<[1], [0], [0], [1], [0, 0, 1, 1], [], []>} : vector<9x22xf32>, vector<22x256xf32>, vector<9x256xf32> -> vector<9x256xf32>
    %c1_217 = arith.constant 1 : index
    %c0_218 = arith.constant 0 : index
    %c0_219 = arith.constant 0 : index
    %428 = vector.load %arg15[%c1_217, %c0_218, %c0_219] : memref<2x9x256xf32, #tpu.memory_space<vmem>>, vector<1x9x256xf32>
    %429 = vector.shape_cast %428 : vector<1x9x256xf32> to vector<9x256xf32>
    %430 = vector.shape_cast %427 : vector<9x256xf32> to vector<1x9x256xf32>
    tpu.vector_store %arg15[%c1_217, %c0_218, %c0_219], %430 {strides = array<i32>} : memref<2x9x256xf32, #tpu.memory_space<vmem>>, vector<1x9x256xf32>,
    return
  }
}

</mosaic_0001>

<llo_original>
// kernel: alexnet_1d_forward.1
$region0: #{alexnet_1d_forward.1}
  #allocation0 [shape = 'u32[]', space=smem, size = 0x4, offset = 0x4, fixed_abs, tag = 'smem constant byte address 0x4 - core index']
  #allocation1 [shape = 'u32[72,128]{1,0:T(1,128)}', space=vmem, size = 0x9000, scoped, tag = 'internal scratch']
  %s0 = inlined_call_operand.vmem [shape: f32[2,101,1], index: 0, kind: input, shape index: {}]
  %s1 = inlined_call_operand.vmem [shape: f32[3,1,64], index: 1, kind: input, shape index: {}]
  %s2 = inlined_call_operand.vmem [shape: f32[3,64], index: 2, kind: input, shape index: {}]
  %s3 = inlined_call_operand.vmem [shape: f32[3,64,192], index: 3, kind: input, shape index: {}]
  %s4 = inlined_call_operand.vmem [shape: f32[3,192], index: 4, kind: input, shape index: {}]
  %s5 = inlined_call_operand.vmem [shape: f32[3,192,384], index: 5, kind: input, shape index: {}]
  %s6 = inlined_call_operand.vmem [shape: f32[3,384], index: 6, kind: input, shape index: {}]
  %s7 = inlined_call_operand.vmem [shape: f32[3,384,256], index: 7, kind: input, shape index: {}]
  %s8 = inlined_call_operand.vmem [shape: f32[3,256], index: 8, kind: input, shape index: {}]
  %s9 = inlined_call_operand.vmem [shape: f32[3,256,256], index: 9, kind: input, shape index: {}]
  %s10 = inlined_call_operand.vmem [shape: f32[3,256], index: 10, kind: input, shape index: {}]
  %s11 = inlined_call_operand.vmem [shape: f32[51,97], index: 11, kind: input, shape index: {}]
  %s12 = inlined_call_operand.vmem [shape: f32[26,47], index: 12, kind: input, shape index: {}]
  %s13 = inlined_call_operand.vmem [shape: f32[26,24], index: 13, kind: input, shape index: {}]
  %s14 = inlined_call_operand.vmem [shape: f32[9,22], index: 14, kind: input, shape index: {}]
  %s15 = inlined_call_operand.vmem [shape: f32[2,9,256], index: 15, kind: output, shape index: {}]
  %s16 = sld [smem:[#allocation0]]
  $region70: #{alexnet_1d_forward.1} parent=0
    _
  %s18 = ssub.s32 1, %s16
  %s19 = scalar_select 0, %s18, %s16
  // Predicated region
  $region2: #{alexnet_1d_forward.1} parent=0 // pred_check
    _
  $region3: #{alexnet_1d_forward.1} parent=0 // pred_check_branch
    %21 = sbr.rel (0) target = $region5
  $region4: #{alexnet_1d_forward.1} parent=0 // pred_region
    _
  $region5: #{alexnet_1d_forward.1} parent=0 // pred_fallthru
    _
  // Predicated region
  $region6: #{alexnet_1d_forward.1} parent=0 // pred_check
    _
  $region7: #{alexnet_1d_forward.1} parent=0 // pred_check_branch
    %23 = sbr.rel (0) target = $region9
  $region8: #{alexnet_1d_forward.1} parent=0 // pred_region
    _
  $region9: #{alexnet_1d_forward.1} parent=0 // pred_fallthru
    _
  // Predicated region
  $region10: #{alexnet_1d_forward.1} parent=0 // pred_check
    _
  $region11: #{alexnet_1d_forward.1} parent=0 // pred_check_branch
    %25 = sbr.rel (0) target = $region13
  $region12: #{alexnet_1d_forward.1} parent=0 // pred_region
    _
  $region13: #{alexnet_1d_forward.1} parent=0 // pred_fallthru
    _
  // Predicated region
  $region14: #{alexnet_1d_forward.1} parent=0 // pred_check
    _
  $region15: #{alexnet_1d_forward.1} parent=0 // pred_check_branch
    %27 = sbr.rel (0) target = $region17
  $region16: #{alexnet_1d_forward.1} parent=0 // pred_region
    _
  $region17: #{alexnet_1d_forward.1} parent=0 // pred_fallthru
    _
  // Predicated region
  $region18: #{alexnet_1d_forward.1} parent=0 // pred_check
    _
  $region19: #{alexnet_1d_forward.1} parent=0 // pred_check_branch
    %29 = sbr.rel (0) target = $region21
  $region20: #{alexnet_1d_forward.1} parent=0 // pred_region
    _
  $region21: #{alexnet_1d_forward.1} parent=0 // pred_fallthru
    _
  // Predicated region
  $region22: #{alexnet_1d_forward.1} parent=0 // pred_check
    _
  $region23: #{alexnet_1d_forward.1} parent=0 // pred_check_branch
    %31 = sbr.rel (0) target = $region25
  $region24: #{alexnet_1d_forward.1} parent=0 // pred_region
    _
  $region25: #{alexnet_1d_forward.1} parent=0 // pred_fallthru
    _
  // Predicated region
  $region26: #{alexnet_1d_forward.1} parent=0 // pred_check
    _
  $region27: #{alexnet_1d_forward.1} parent=0 // pred_check_branch
    %33 = sbr.rel (0) target = $region29
  $region28: #{alexnet_1d_forward.1} parent=0 // pred_region
    _
  $region29: #{alexnet_1d_forward.1} parent=0 // pred_fallthru
    _
  // Predicated region
  $region30: #{alexnet_1d_forward.1} parent=0 // pred_check
    _
  $region31: #{alexnet_1d_forward.1} parent=0 // pred_check_branch
    %35 = sbr.rel (0) target = $region33
  $region32: #{alexnet_1d_forward.1} parent=0 // pred_region
    _
  $region33: #{alexnet_1d_forward.1} parent=0 // pred_fallthru
    _
  // Predicated region
  $region34: #{alexnet_1d_forward.1} parent=0 // pred_check
    _
  $region35: #{alexnet_1d_forward.1} parent=0 // pred_check_branch
    %37 = sbr.rel (0) target = $region37
  $region36: #{alexnet_1d_forward.1} parent=0 // pred_region
    _
  $region37: #{alexnet_1d_forward.1} parent=0 // pred_fallthru
    _
  // Predicated region
  $region38: #{alexnet_1d_forward.1} parent=0 // pred_check
    _
  $region39: #{alexnet_1d_forward.1} parent=0 // pred_check_branch
    %39 = sbr.rel (0) target = $region41
  $region40: #{alexnet_1d_forward.1} parent=0 // pred_region
    _
  $region41: #{alexnet_1d_forward.1} parent=0 // pred_fallthru
    _
  // Predicated region
  $region42: #{alexnet_1d_forward.1} parent=0 // pred_check
    _
  $region43: #{alexnet_1d_forward.1} parent=0 // pred_check_branch
    %41 = sbr.rel (0) target = $region45
  $region44: #{alexnet_1d_forward.1} parent=0 // pred_region
    _
  $region45: #{alexnet_1d_forward.1} parent=0 // pred_fallthru
    _
  // Predicated region
  $region46: #{alexnet_1d_forward.1} parent=0 // pred_check
    _
  $region47: #{alexnet_1d_forward.1} parent=0 // pred_check_branch
    %43 = sbr.rel (0) target = $region49
  $region48: #{alexnet_1d_forward.1} parent=0 // pred_region
    _
  $region49: #{alexnet_1d_forward.1} parent=0 // pred_fallthru
    _
  // Predicated region
  $region50: #{alexnet_1d_forward.1} parent=0 // pred_check
    _
  $region51: #{alexnet_1d_forward.1} parent=0 // pred_check_branch
    %45 = sbr.rel (0) target = $region53
  $region52: #{alexnet_1d_forward.1} parent=0 // pred_region
    _
  $region53: #{alexnet_1d_forward.1} parent=0 // pred_fallthru
    _
  // Predicated region
  $region54: #{alexnet_1d_forward.1} parent=0 // pred_check
    _
  $region55: #{alexnet_1d_forward.1} parent=0 // pred_check_branch
    %47 = sbr.rel (0) target = $region57
  $region56: #{alexnet_1d_forward.1} parent=0 // pred_region
    _
  $region57: #{alexnet_1d_forward.1} parent=0 // pred_fallthru
    _
  // Predicated region
  $region58: #{alexnet_1d_forward.1} parent=0 // pred_check
    _
  $region59: #{alexnet_1d_forward.1} parent=0 // pred_check_branch
    %49 = sbr.rel (0) target = $region61
  $region60: #{alexnet_1d_forward.1} parent=0 // pred_region
    _
  $region61: #{alexnet_1d_forward.1} parent=0 // pred_fallthru
    _
  %v50 = vld [vmem:[%s11] sm:$0xff]
  %v51 = vld [vmem:[%s11 + $0x8] sm:$0xff]
  %v52 = vld [vmem:[%s11 + $0x10] sm:$0xff]
  %v53 = vld [vmem:[%s11 + $0x18] sm:$0xff]
  %v54 = vld [vmem:[%s11 + $0x20] sm:$0xff]
  %v55 = vld [vmem:[%s11 + $0x28] sm:$0xff]
  %v56 = vld [vmem:[%s11 + $0x30] sm:$0x7]
  %v57 = vld [vmem:[%s12] sm:$0xff]
  %v58 = vld [vmem:[%s12 + $0x8] sm:$0xff]
  %v59 = vld [vmem:[%s12 + $0x10] sm:$0xff]
  %v60 = vld [vmem:[%s12 + $0x18] sm:$0x3]
  %v61 = vld [vmem:[%s13] sm:$0xff]
  %v62 = vld [vmem:[%s13 + $0x8] sm:$0xff]
  %v63 = vld [vmem:[%s13 + $0x10] sm:$0xff]
  %v64 = vld [vmem:[%s13 + $0x18] sm:$0x3]
  %v65 = vld [vmem:[%s14] sm:$0xff]
  %v66 = vld [vmem:[%s14 + $0x8] sm:$0x1]
  %v67 = vld [vmem:[%s0] sm:$0xff]
  %v68 = vld [vmem:[%s0 + $0x8] sm:$0xff]
  %v69 = vld [vmem:[%s0 + $0x10] sm:$0xff]
  %v70 = vld [vmem:[%s0 + $0x18] sm:$0xff]
  %v71 = vld [vmem:[%s0 + $0x20] sm:$0xff]
  %v72 = vld [vmem:[%s0 + $0x28] sm:$0xff]
  %v73 = vld [vmem:[%s0 + $0x30] sm:$0xff]
  %v74 = vld [vmem:[%s0 + $0x38] sm:$0xff]
  %v75 = vld [vmem:[%s0 + $0x40] sm:$0xff]
  %v76 = vld [vmem:[%s0 + $0x48] sm:$0xff]
  %v77 = vld [vmem:[%s0 + $0x50] sm:$0xff]
  %v78 = vld [vmem:[%s0 + $0x58] sm:$0xff]
  %v79 = vld [vmem:[%s0 + $0x60] sm:$0x1f]
  %s80 = scalar_lea.vmem %s0, 104
  %v81 = vld [vmem:[%s80] sm:$0xff]
  %v82 = vld [vmem:[%s80 + $0x8] sm:$0xff]
  %v83 = vld [vmem:[%s80 + $0x10] sm:$0xff]
  %v84 = vld [vmem:[%s80 + $0x18] sm:$0xff]
  %v85 = vld [vmem:[%s80 + $0x20] sm:$0xff]
  %v86 = vld [vmem:[%s80 + $0x28] sm:$0xff]
  %v87 = vld [vmem:[%s80 + $0x30] sm:$0xff]
  %v88 = vld [vmem:[%s80 + $0x38] sm:$0xff]
  %v89 = vld [vmem:[%s80 + $0x40] sm:$0xff]
  %v90 = vld [vmem:[%s80 + $0x48] sm:$0xff]
  %v91 = vld [vmem:[%s80 + $0x50] sm:$0xff]
  %v92 = vld [vmem:[%s80 + $0x58] sm:$0xff]
  %v93 = vld [vmem:[%s80 + $0x60] sm:$0x1f]
  %v94 = vld [vmem:[%s2] sm:$0x1]
  %v95 = vld [vmem:[%s2 + $0x1] sm:$0x1]
  %v96 = vld [vmem:[%s2 + $0x2] sm:$0x1]
  %v97 = vld [vmem:[%s1] sm:$0x1]
  %99 = vset.pattern.permute.xlu0 0
  %100 = vperm.xlu0 %99, %v67
  %v101 = vpop.permute.xlu0 %100
  %104 = vset.pattern.permute.xlu0 0
  %105 = vperm.xlu0 %104, %v68
  %v106 = vpop.permute.xlu0 %105
  %109 = vset.pattern.permute.xlu0 0
  %110 = vperm.xlu0 %109, %v69
  %v111 = vpop.permute.xlu0 %110
  %114 = vset.pattern.permute.xlu0 0
  %115 = vperm.xlu0 %114, %v70
  %v116 = vpop.permute.xlu0 %115
  %119 = vset.pattern.permute.xlu0 0
  %120 = vperm.xlu0 %119, %v71
  %v121 = vpop.permute.xlu0 %120
  %124 = vset.pattern.permute.xlu0 0
  %125 = vperm.xlu0 %124, %v72
  %v126 = vpop.permute.xlu0 %125
  %129 = vset.pattern.permute.xlu0 0
  %130 = vperm.xlu0 %129, %v73
  %v131 = vpop.permute.xlu0 %130
  %134 = vset.pattern.permute.xlu0 0
  %135 = vperm.xlu0 %134, %v74
  %v136 = vpop.permute.xlu0 %135
  %139 = vset.pattern.permute.xlu0 0
  %140 = vperm.xlu0 %139, %v75
  %v141 = vpop.permute.xlu0 %140
  %144 = vset.pattern.permute.xlu0 0
  %145 = vperm.xlu0 %144, %v76
  %v146 = vpop.permute.xlu0 %145
  %149 = vset.pattern.permute.xlu0 0
  %150 = vperm.xlu0 %149, %v77
  %v151 = vpop.permute.xlu0 %150
  %154 = vset.pattern.permute.xlu0 0
  %155 = vperm.xlu0 %154, %v78
  %v156 = vpop.permute.xlu0 %155
  %159 = vset.pattern.permute.xlu0 0
  %160 = vperm.xlu0 %159, %v79
  %v161 = vpop.permute.xlu0 %160
  %v164 = vperm.slane %v97, 0
  %v166 = vmul.f32 %v101, %v164
  %v167 = vmul.f32 %v106, %v164
  %v168 = vmul.f32 %v111, %v164
  %v169 = vmul.f32 %v116, %v164
  %v170 = vmul.f32 %v121, %v164
  %v171 = vmul.f32 %v126, %v164
  %v172 = vmul.f32 %v131, %v164
  %v173 = vmul.f32 %v136, %v164
  %v174 = vmul.f32 %v141, %v164
  %v175 = vmul.f32 %v146, %v164
  %v176 = vmul.f32 %v151, %v164
  %v177 = vmul.f32 %v156, %v164
  %v178 = vmul.f32 %v161, %v164
  %s179 = scalar_lea.vmem %s1, 1
  %v180 = vld [vmem:[%s179] sm:$0x1]
  %v182 = vperm.slane %v180, 0
  %v184 = vmul.f32 %v101, %v182
  %v185 = vmul.f32 %v106, %v182
  %v186 = vmul.f32 %v111, %v182
  %v187 = vmul.f32 %v116, %v182
  %v188 = vmul.f32 %v121, %v182
  %v189 = vmul.f32 %v126, %v182
  %v190 = vmul.f32 %v131, %v182
  %v191 = vmul.f32 %v136, %v182
  %v192 = vmul.f32 %v141, %v182
  %v193 = vmul.f32 %v146, %v182
  %v194 = vmul.f32 %v151, %v182
  %v195 = vmul.f32 %v156, %v182
  %v196 = vmul.f32 %v161, %v182
  %vm210 = vcmask 1046528
  %v211 = vrot.slane %v184, 1
  %v212 = vrot.slane %v185, 1
  %v213 = vsel %vm210, %v211, %v212
  %v214 = vrot.slane %v186, 1
  %v215 = vsel %vm210, %v212, %v214
  %v216 = vrot.slane %v187, 1
  %v217 = vsel %vm210, %v214, %v216
  %v218 = vrot.slane %v188, 1
  %v219 = vsel %vm210, %v216, %v218
  %v220 = vrot.slane %v189, 1
  %v221 = vsel %vm210, %v218, %v220
  %v222 = vrot.slane %v190, 1
  %v223 = vsel %vm210, %v220, %v222
  %v224 = vrot.slane %v191, 1
  %v225 = vsel %vm210, %v222, %v224
  %v226 = vrot.slane %v192, 1
  %v227 = vsel %vm210, %v224, %v226
  %v228 = vrot.slane %v193, 1
  %v229 = vsel %vm210, %v226, %v228
  %v230 = vrot.slane %v194, 1
  %v231 = vsel %vm210, %v228, %v230
  %v232 = vrot.slane %v195, 1
  %v233 = vsel %vm210, %v230, %v232
  %v234 = vrot.slane %v196, 1
  %v235 = vsel %vm210, %v232, %v234
  %v249 = vadd.f32 %v166, %v213
  %v250 = vadd.f32 %v167, %v215
  %v251 = vadd.f32 %v168, %v217
  %v252 = vadd.f32 %v169, %v219
  %v253 = vadd.f32 %v170, %v221
  %v254 = vadd.f32 %v171, %v223
  %v255 = vadd.f32 %v172, %v225
  %v256 = vadd.f32 %v173, %v227
  %v257 = vadd.f32 %v174, %v229
  %v258 = vadd.f32 %v175, %v231
  %v259 = vadd.f32 %v176, %v233
  %v260 = vadd.f32 %v177, %v235
  %v261 = vadd.f32 %v178, %v234
  %s262 = scalar_lea.vmem %s1, 2
  %v263 = vld [vmem:[%s262] sm:$0x1]
  %v265 = vperm.slane %v263, 0
  %v267 = vmul.f32 %v101, %v265
  %v268 = vmul.f32 %v106, %v265
  %v269 = vmul.f32 %v111, %v265
  %v270 = vmul.f32 %v116, %v265
  %v271 = vmul.f32 %v121, %v265
  %v272 = vmul.f32 %v126, %v265
  %v273 = vmul.f32 %v131, %v265
  %v274 = vmul.f32 %v136, %v265
  %v275 = vmul.f32 %v141, %v265
  %v276 = vmul.f32 %v146, %v265
  %v277 = vmul.f32 %v151, %v265
  %v278 = vmul.f32 %v156, %v265
  %v279 = vmul.f32 %v161, %v265
  %vm293 = vcmask 1045504
  %v294 = vrot.slane %v267, 2
  %v295 = vrot.slane %v268, 2
  %v296 = vsel %vm293, %v294, %v295
  %v297 = vrot.slane %v269, 2
  %v298 = vsel %vm293, %v295, %v297
  %v299 = vrot.slane %v270, 2
  %v300 = vsel %vm293, %v297, %v299
  %v301 = vrot.slane %v271, 2
  %v302 = vsel %vm293, %v299, %v301
  %v303 = vrot.slane %v272, 2
  %v304 = vsel %vm293, %v301, %v303
  %v305 = vrot.slane %v273, 2
  %v306 = vsel %vm293, %v303, %v305
  %v307 = vrot.slane %v274, 2
  %v308 = vsel %vm293, %v305, %v307
  %v309 = vrot.slane %v275, 2
  %v310 = vsel %vm293, %v307, %v309
  %v311 = vrot.slane %v276, 2
  %v312 = vsel %vm293, %v309, %v311
  %v313 = vrot.slane %v277, 2
  %v314 = vsel %vm293, %v311, %v313
  %v315 = vrot.slane %v278, 2
  %v316 = vsel %vm293, %v313, %v315
  %v317 = vrot.slane %v279, 2
  %v318 = vsel %vm293, %v315, %v317
  %v332 = vadd.f32 %v249, %v296
  %v333 = vadd.f32 %v250, %v298
  %v334 = vadd.f32 %v251, %v300
  %v335 = vadd.f32 %v252, %v302
  %v336 = vadd.f32 %v253, %v304
  %v337 = vadd.f32 %v254, %v306
  %v338 = vadd.f32 %v255, %v308
  %v339 = vadd.f32 %v256, %v310
  %v340 = vadd.f32 %v257, %v312
  %v341 = vadd.f32 %v258, %v314
  %v342 = vadd.f32 %v259, %v316
  %v343 = vadd.f32 %v260, %v318
  %v344 = vadd.f32 %v261, %v317
  %v345 = vperm.slane %v94, 0
  %v346 = vadd.f32 %v332, %v345
  %v347 = vadd.f32 %v333, %v345
  %v348 = vadd.f32 %v334, %v345
  %v349 = vadd.f32 %v335, %v345
  %v350 = vadd.f32 %v336, %v345
  %v351 = vadd.f32 %v337, %v345
  %v352 = vadd.f32 %v338, %v345
  %v353 = vadd.f32 %v339, %v345
  %v354 = vadd.f32 %v340, %v345
  %v355 = vadd.f32 %v341, %v345
  %v356 = vadd.f32 %v342, %v345
  %v357 = vadd.f32 %v343, %v345
  %v358 = vadd.f32 %v344, %v345
  %360 = vset.pattern.permute.xlu0 0
  %361 = vperm.xlu0 %360, %v81
  %v362 = vpop.permute.xlu0 %361
  %365 = vset.pattern.permute.xlu0 0
  %366 = vperm.xlu0 %365, %v82
  %v367 = vpop.permute.xlu0 %366
  %370 = vset.pattern.permute.xlu0 0
  %371 = vperm.xlu0 %370, %v83
  %v372 = vpop.permute.xlu0 %371
  %375 = vset.pattern.permute.xlu0 0
  %376 = vperm.xlu0 %375, %v84
  %v377 = vpop.permute.xlu0 %376
  %380 = vset.pattern.permute.xlu0 0
  %381 = vperm.xlu0 %380, %v85
  %v382 = vpop.permute.xlu0 %381
  %385 = vset.pattern.permute.xlu0 0
  %386 = vperm.xlu0 %385, %v86
  %v387 = vpop.permute.xlu0 %386
  %390 = vset.pattern.permute.xlu0 0
  %391 = vperm.xlu0 %390, %v87
  %v392 = vpop.permute.xlu0 %391
  %395 = vset.pattern.permute.xlu0 0
  %396 = vperm.xlu0 %395, %v88
  %v397 = vpop.permute.xlu0 %396
  %400 = vset.pattern.permute.xlu0 0
  %401 = vperm.xlu0 %400, %v89
  %v402 = vpop.permute.xlu0 %401
  %405 = vset.pattern.permute.xlu0 0
  %406 = vperm.xlu0 %405, %v90
  %v407 = vpop.permute.xlu0 %406
  %410 = vset.pattern.permute.xlu0 0
  %411 = vperm.xlu0 %410, %v91
  %v412 = vpop.permute.xlu0 %411
  %415 = vset.pattern.permute.xlu0 0
  %416 = vperm.xlu0 %415, %v92
  %v417 = vpop.permute.xlu0 %416
  %420 = vset.pattern.permute.xlu0 0
  %421 = vperm.xlu0 %420, %v93
  %v422 = vpop.permute.xlu0 %421
  %v424 = vmul.f32 %v362, %v164
  %v425 = vmul.f32 %v367, %v164
  %v426 = vmul.f32 %v372, %v164
  %v427 = vmul.f32 %v377, %v164
  %v428 = vmul.f32 %v382, %v164
  %v429 = vmul.f32 %v387, %v164
  %v430 = vmul.f32 %v392, %v164
  %v431 = vmul.f32 %v397, %v164
  %v432 = vmul.f32 %v402, %v164
  %v433 = vmul.f32 %v407, %v164
  %v434 = vmul.f32 %v412, %v164
  %v435 = vmul.f32 %v417, %v164
  %v436 = vmul.f32 %v422, %v164
  %v437 = vmul.f32 %v362, %v182
  %v438 = vmul.f32 %v367, %v182
  %v439 = vmul.f32 %v372, %v182
  %v440 = vmul.f32 %v377, %v182
  %v441 = vmul.f32 %v382, %v182
  %v442 = vmul.f32 %v387, %v182
  %v443 = vmul.f32 %v392, %v182
  %v444 = vmul.f32 %v397, %v182
  %v445 = vmul.f32 %v402, %v182
  %v446 = vmul.f32 %v407, %v182
  %v447 = vmul.f32 %v412, %v182
  %v448 = vmul.f32 %v417, %v182
  %v449 = vmul.f32 %v422, %v182
  %v463 = vrot.slane %v437, 1
  %v464 = vrot.slane %v438, 1
  %v465 = vsel %vm210, %v463, %v464
  %v466 = vrot.slane %v439, 1
  %v467 = vsel %vm210, %v464, %v466
  %v468 = vrot.slane %v440, 1
  %v469 = vsel %vm210, %v466, %v468
  %v470 = vrot.slane %v441, 1
  %v471 = vsel %vm210, %v468, %v470
  %v472 = vrot.slane %v442, 1
  %v473 = vsel %vm210, %v470, %v472
  %v474 = vrot.slane %v443, 1
  %v475 = vsel %vm210, %v472, %v474
  %v476 = vrot.slane %v444, 1
  %v477 = vsel %vm210, %v474, %v476
  %v478 = vrot.slane %v445, 1
  %v479 = vsel %vm210, %v476, %v478
  %v480 = vrot.slane %v446, 1
  %v481 = vsel %vm210, %v478, %v480
  %v482 = vrot.slane %v447, 1
  %v483 = vsel %vm210, %v480, %v482
  %v484 = vrot.slane %v448, 1
  %v485 = vsel %vm210, %v482, %v484
  %v486 = vrot.slane %v449, 1
  %v487 = vsel %vm210, %v484, %v486
  %v501 = vadd.f32 %v424, %v465
  %v502 = vadd.f32 %v425, %v467
  %v503 = vadd.f32 %v426, %v469
  %v504 = vadd.f32 %v427, %v471
  %v505 = vadd.f32 %v428, %v473
  %v506 = vadd.f32 %v429, %v475
  %v507 = vadd.f32 %v430, %v477
  %v508 = vadd.f32 %v431, %v479
  %v509 = vadd.f32 %v432, %v481
  %v510 = vadd.f32 %v433, %v483
  %v511 = vadd.f32 %v434, %v485
  %v512 = vadd.f32 %v435, %v487
  %v513 = vadd.f32 %v436, %v486
  %v514 = vmul.f32 %v362, %v265
  %v515 = vmul.f32 %v367, %v265
  %v516 = vmul.f32 %v372, %v265
  %v517 = vmul.f32 %v377, %v265
  %v518 = vmul.f32 %v382, %v265
  %v519 = vmul.f32 %v387, %v265
  %v520 = vmul.f32 %v392, %v265
  %v521 = vmul.f32 %v397, %v265
  %v522 = vmul.f32 %v402, %v265
  %v523 = vmul.f32 %v407, %v265
  %v524 = vmul.f32 %v412, %v265
  %v525 = vmul.f32 %v417, %v265
  %v526 = vmul.f32 %v422, %v265
  %v540 = vrot.slane %v514, 2
  %v541 = vrot.slane %v515, 2
  %v542 = vsel %vm293, %v540, %v541
  %v543 = vrot.slane %v516, 2
  %v544 = vsel %vm293, %v541, %v543
  %v545 = vrot.slane %v517, 2
  %v546 = vsel %vm293, %v543, %v545
  %v547 = vrot.slane %v518, 2
  %v548 = vsel %vm293, %v545, %v547
  %v549 = vrot.slane %v519, 2
  %v550 = vsel %vm293, %v547, %v549
  %v551 = vrot.slane %v520, 2
  %v552 = vsel %vm293, %v549, %v551
  %v553 = vrot.slane %v521, 2
  %v554 = vsel %vm293, %v551, %v553
  %v555 = vrot.slane %v522, 2
  %v556 = vsel %vm293, %v553, %v555
  %v557 = vrot.slane %v523, 2
  %v558 = vsel %vm293, %v555, %v557
  %v559 = vrot.slane %v524, 2
  %v560 = vsel %vm293, %v557, %v559
  %v561 = vrot.slane %v525, 2
  %v562 = vsel %vm293, %v559, %v561
  %v563 = vrot.slane %v526, 2
  %v564 = vsel %vm293, %v561, %v563
  %v578 = vadd.f32 %v501, %v542
  %v579 = vadd.f32 %v502, %v544
  %v580 = vadd.f32 %v503, %v546
  %v581 = vadd.f32 %v504, %v548
  %v582 = vadd.f32 %v505, %v550
  %v583 = vadd.f32 %v506, %v552
  %v584 = vadd.f32 %v507, %v554
  %v585 = vadd.f32 %v508, %v556
  %v586 = vadd.f32 %v509, %v558
  %v587 = vadd.f32 %v510, %v560
  %v588 = vadd.f32 %v511, %v562
  %v589 = vadd.f32 %v512, %v564
  %v590 = vadd.f32 %v513, %v563
  %v591 = vadd.f32 %v578, %v345
  %v592 = vadd.f32 %v579, %v345
  %v593 = vadd.f32 %v580, %v345
  %v594 = vadd.f32 %v581, %v345
  %v595 = vadd.f32 %v582, %v345
  %v596 = vadd.f32 %v583, %v345
  %v597 = vadd.f32 %v584, %v345
  %v598 = vadd.f32 %v585, %v345
  %v599 = vadd.f32 %v586, %v345
  %v600 = vadd.f32 %v587, %v345
  %v601 = vadd.f32 %v588, %v345
  %v602 = vadd.f32 %v589, %v345
  %v603 = vadd.f32 %v590, %v345
  %vm604 = vcmask 523264
  %v605 = vsel %vm604, %v346, 0.0
  %v606 = vsel %vm604, %v347, 0.0
  %v607 = vadd.f32 %v605, %v606
  %v608 = vsel %vm604, %v348, 0.0
  %v609 = vadd.f32 %v607, %v608
  %v610 = vsel %vm604, %v349, 0.0
  %v611 = vadd.f32 %v609, %v610
  %v612 = vsel %vm604, %v350, 0.0
  %v613 = vadd.f32 %v611, %v612
  %v614 = vsel %vm604, %v351, 0.0
  %v615 = vadd.f32 %v613, %v614
  %v616 = vsel %vm604, %v352, 0.0
  %v617 = vadd.f32 %v615, %v616
  %v618 = vsel %vm604, %v353, 0.0
  %v619 = vadd.f32 %v617, %v618
  %v620 = vsel %vm604, %v354, 0.0
  %v621 = vadd.f32 %v619, %v620
  %v622 = vsel %vm604, %v355, 0.0
  %v623 = vadd.f32 %v621, %v622
  %v624 = vsel %vm604, %v356, 0.0
  %v625 = vadd.f32 %v623, %v624
  %v626 = vsel %vm604, %v357, 0.0
  %v627 = vadd.f32 %v625, %v626
  %vm628 = vcmask 518144
  %v629 = vsel %vm628, %v358, 0.0
  %v630 = vadd.f32 %v627, %v629
  %v631 = vrot.slane %v630, 4
  %v632 = vadd.f32 %v630, %v631
  %v633 = vrot.slane %v632, 2
  %v634 = vadd.f32 %v632, %v633
  %v635 = vrot.slane %v634, 1
  %v636 = vadd.f32 %v634, %v635
  %v637 = vmul.f32 %v346, %v346
  %v638 = vmul.f32 %v347, %v347
  %v639 = vmul.f32 %v348, %v348
  %v640 = vmul.f32 %v349, %v349
  %v641 = vmul.f32 %v350, %v350
  %v642 = vmul.f32 %v351, %v351
  %v643 = vmul.f32 %v352, %v352
  %v644 = vmul.f32 %v353, %v353
  %v645 = vmul.f32 %v354, %v354
  %v646 = vmul.f32 %v355, %v355
  %v647 = vmul.f32 %v356, %v356
  %v648 = vmul.f32 %v357, %v357
  %v649 = vmul.f32 %v358, %v358
  %v650 = vsel %vm604, %v637, 0.0
  %v651 = vsel %vm604, %v638, 0.0
  %v652 = vadd.f32 %v650, %v651
  %v653 = vsel %vm604, %v639, 0.0
  %v654 = vadd.f32 %v652, %v653
  %v655 = vsel %vm604, %v640, 0.0
  %v656 = vadd.f32 %v654, %v655
  %v657 = vsel %vm604, %v641, 0.0
  %v658 = vadd.f32 %v656, %v657
  %v659 = vsel %vm604, %v642, 0.0
  %v660 = vadd.f32 %v658, %v659
  %v661 = vsel %vm604, %v643, 0.0
  %v662 = vadd.f32 %v660, %v661
  %v663 = vsel %vm604, %v644, 0.0
  %v664 = vadd.f32 %v662, %v663
  %v665 = vsel %vm604, %v645, 0.0
  %v666 = vadd.f32 %v664, %v665
  %v667 = vsel %vm604, %v646, 0.0
  %v668 = vadd.f32 %v666, %v667
  %v669 = vsel %vm604, %v647, 0.0
  %v670 = vadd.f32 %v668, %v669
  %v671 = vsel %vm604, %v648, 0.0
  %v672 = vadd.f32 %v670, %v671
  %v673 = vsel %vm628, %v649, 0.0
  %v674 = vadd.f32 %v672, %v673
  %v675 = vrot.slane %v674, 4
  %v676 = vadd.f32 %v674, %v675
  %v677 = vrot.slane %v676, 2
  %v678 = vadd.f32 %v676, %v677
  %v679 = vrot.slane %v678, 1
  %v680 = vadd.f32 %v678, %v679
  %v681 = vsel %vm604, %v591, 0.0
  %v682 = vsel %vm604, %v592, 0.0
  %v683 = vadd.f32 %v681, %v682
  %v684 = vsel %vm604, %v593, 0.0
  %v685 = vadd.f32 %v683, %v684
  %v686 = vsel %vm604, %v594, 0.0
  %v687 = vadd.f32 %v685, %v686
  %v688 = vsel %vm604, %v595, 0.0
  %v689 = vadd.f32 %v687, %v688
  %v690 = vsel %vm604, %v596, 0.0
  %v691 = vadd.f32 %v689, %v690
  %v692 = vsel %vm604, %v597, 0.0
  %v693 = vadd.f32 %v691, %v692
  %v694 = vsel %vm604, %v598, 0.0
  %v695 = vadd.f32 %v693, %v694
  %v696 = vsel %vm604, %v599, 0.0
  %v697 = vadd.f32 %v695, %v696
  %v698 = vsel %vm604, %v600, 0.0
  %v699 = vadd.f32 %v697, %v698
  %v700 = vsel %vm604, %v601, 0.0
  %v701 = vadd.f32 %v699, %v700
  %v702 = vsel %vm604, %v602, 0.0
  %v703 = vadd.f32 %v701, %v702
  %v704 = vsel %vm628, %v603, 0.0
  %v705 = vadd.f32 %v703, %v704
  %v706 = vrot.slane %v705, 4
  %v707 = vadd.f32 %v705, %v706
  %v708 = vrot.slane %v707, 2
  %v709 = vadd.f32 %v707, %v708
  %v710 = vrot.slane %v709, 1
  %v711 = vadd.f32 %v709, %v710
  %v712 = vadd.f32 %v636, %v711
  %v713 = vmul.f32 %v591, %v591
  %v714 = vmul.f32 %v592, %v592
  %v715 = vmul.f32 %v593, %v593
  %v716 = vmul.f32 %v594, %v594
  %v717 = vmul.f32 %v595, %v595
  %v718 = vmul.f32 %v596, %v596
  %v719 = vmul.f32 %v597, %v597
  %v720 = vmul.f32 %v598, %v598
  %v721 = vmul.f32 %v599, %v599
  %v722 = vmul.f32 %v600, %v600
  %v723 = vmul.f32 %v601, %v601
  %v724 = vmul.f32 %v602, %v602
  %v725 = vmul.f32 %v603, %v603
  %v726 = vsel %vm604, %v713, 0.0
  %v727 = vsel %vm604, %v714, 0.0
  %v728 = vadd.f32 %v726, %v727
  %v729 = vsel %vm604, %v715, 0.0
  %v730 = vadd.f32 %v728, %v729
  %v731 = vsel %vm604, %v716, 0.0
  %v732 = vadd.f32 %v730, %v731
  %v733 = vsel %vm604, %v717, 0.0
  %v734 = vadd.f32 %v732, %v733
  %v735 = vsel %vm604, %v718, 0.0
  %v736 = vadd.f32 %v734, %v735
  %v737 = vsel %vm604, %v719, 0.0
  %v738 = vadd.f32 %v736, %v737
  %v739 = vsel %vm604, %v720, 0.0
  %v740 = vadd.f32 %v738, %v739
  %v741 = vsel %vm604, %v721, 0.0
  %v742 = vadd.f32 %v740, %v741
  %v743 = vsel %vm604, %v722, 0.0
  %v744 = vadd.f32 %v742, %v743
  %v745 = vsel %vm604, %v723, 0.0
  %v746 = vadd.f32 %v744, %v745
  %v747 = vsel %vm604, %v724, 0.0
  %v748 = vadd.f32 %v746, %v747
  %v749 = vsel %vm628, %v725, 0.0
  %v750 = vadd.f32 %v748, %v749
  %v751 = vrot.slane %v750, 4
  %v752 = vadd.f32 %v750, %v751
  %v753 = vrot.slane %v752, 2
  %v754 = vadd.f32 %v752, %v753
  %v755 = vrot.slane %v754, 1
  %v756 = vadd.f32 %v754, %v755
  %v757 = vadd.f32 %v680, %v756
  %v758 = vmul.f32 %v712, 0.005050505
  %v759 = vmul.f32 %v757, 0.005050505
  %v760 = vmul.f32 %v758, %v758
  %v761 = vsub.f32 %v759, %v760
  %v762 = vmax.f32 %v761, 0.0
  %v763 = vadd.f32 %v762, 1e-05
  %v764 = vrsqrt.pop %v763
  %v765 = vmul.f32 %v764, %v763
  %v766 = vmul.f32 %v765, %v764
  %v767 = vmul.f32 0.5, %v766
  %v768 = vsub.f32 1.5, %v767
  %v769 = vmul.f32 %v764, %v768
  %vm770 = vweird.f32 %v763
  %vm771 = vweird.f32 %v764
  %vm772 = vmor %vm770, %vm771
  %v773 = vsel %vm772, %v764, %v769
  %v774 = vmul.f32 %v95, %v773
  %v775 = vmul.f32 %v758, %v774
  %v776 = vsub.f32 %v96, %v775
  %v777 = vperm.slane %v774, 0
  %v778 = vmul.f32 %v346, %v777
  %v779 = vmul.f32 %v347, %v777
  %v780 = vmul.f32 %v348, %v777
  %v781 = vmul.f32 %v349, %v777
  %v782 = vmul.f32 %v350, %v777
  %v783 = vmul.f32 %v351, %v777
  %v784 = vmul.f32 %v352, %v777
  %v785 = vmul.f32 %v353, %v777
  %v786 = vmul.f32 %v354, %v777
  %v787 = vmul.f32 %v355, %v777
  %v788 = vmul.f32 %v356, %v777
  %v789 = vmul.f32 %v357, %v777
  %v790 = vmul.f32 %v358, %v777
  %v791 = vperm.slane %v776, 0
  %v792 = vadd.f32 %v778, %v791
  %v793 = vadd.f32 %v779, %v791
  %v794 = vadd.f32 %v780, %v791
  %v795 = vadd.f32 %v781, %v791
  %v796 = vadd.f32 %v782, %v791
  %v797 = vadd.f32 %v783, %v791
  %v798 = vadd.f32 %v784, %v791
  %v799 = vadd.f32 %v785, %v791
  %v800 = vadd.f32 %v786, %v791
  %v801 = vadd.f32 %v787, %v791
  %v802 = vadd.f32 %v788, %v791
  %v803 = vadd.f32 %v789, %v791
  %v804 = vadd.f32 %v790, %v791
  %v805 = vmax.f32 %v792, 0.0
  %v806 = vmax.f32 %v793, 0.0
  %v807 = vmax.f32 %v794, 0.0
  %v808 = vmax.f32 %v795, 0.0
  %v809 = vmax.f32 %v796, 0.0
  %v810 = vmax.f32 %v797, 0.0
  %v811 = vmax.f32 %v798, 0.0
  %v812 = vmax.f32 %v799, 0.0
  %v813 = vmax.f32 %v800, 0.0
  %v814 = vmax.f32 %v801, 0.0
  %v815 = vmax.f32 %v802, 0.0
  %v816 = vmax.f32 %v803, 0.0
  %v817 = vmax.f32 %v804, 0.0
  %v818 = vmul.f32 %v591, %v777
  %v819 = vmul.f32 %v592, %v777
  %v820 = vmul.f32 %v593, %v777
  %v821 = vmul.f32 %v594, %v777
  %v822 = vmul.f32 %v595, %v777
  %v823 = vmul.f32 %v596, %v777
  %v824 = vmul.f32 %v597, %v777
  %v825 = vmul.f32 %v598, %v777
  %v826 = vmul.f32 %v599, %v777
  %v827 = vmul.f32 %v600, %v777
  %v828 = vmul.f32 %v601, %v777
  %v829 = vmul.f32 %v602, %v777
  %v830 = vmul.f32 %v603, %v777
  %v831 = vadd.f32 %v818, %v791
  %v832 = vadd.f32 %v819, %v791
  %v833 = vadd.f32 %v820, %v791
  %v834 = vadd.f32 %v821, %v791
  %v835 = vadd.f32 %v822, %v791
  %v836 = vadd.f32 %v823, %v791
  %v837 = vadd.f32 %v824, %v791
  %v838 = vadd.f32 %v825, %v791
  %v839 = vadd.f32 %v826, %v791
  %v840 = vadd.f32 %v827, %v791
  %v841 = vadd.f32 %v828, %v791
  %v842 = vadd.f32 %v829, %v791
  %v843 = vadd.f32 %v830, %v791
  %v844 = vmax.f32 %v831, 0.0
  %v845 = vmax.f32 %v832, 0.0
  %v846 = vmax.f32 %v833, 0.0
  %v847 = vmax.f32 %v834, 0.0
  %v848 = vmax.f32 %v835, 0.0
  %v849 = vmax.f32 %v836, 0.0
  %v850 = vmax.f32 %v837, 0.0
  %v851 = vmax.f32 %v838, 0.0
  %v852 = vmax.f32 %v839, 0.0
  %v853 = vmax.f32 %v840, 0.0
  %v854 = vmax.f32 %v841, 0.0
  %v855 = vmax.f32 %v842, 0.0
  %v856 = vmax.f32 %v843, 0.0
  %v870 = vrot.slane %v805, 1
  %v871 = vrot.slane %v806, 1
  %v872 = vsel %vm210, %v870, %v871
  %v873 = vrot.slane %v807, 1
  %v874 = vsel %vm210, %v871, %v873
  %v875 = vrot.slane %v808, 1
  %v876 = vsel %vm210, %v873, %v875
  %v877 = vrot.slane %v809, 1
  %v878 = vsel %vm210, %v875, %v877
  %v879 = vrot.slane %v810, 1
  %v880 = vsel %vm210, %v877, %v879
  %v881 = vrot.slane %v811, 1
  %v882 = vsel %vm210, %v879, %v881
  %v883 = vrot.slane %v812, 1
  %v884 = vsel %vm210, %v881, %v883
  %v885 = vrot.slane %v813, 1
  %v886 = vsel %vm210, %v883, %v885
  %v887 = vrot.slane %v814, 1
  %v888 = vsel %vm210, %v885, %v887
  %v889 = vrot.slane %v815, 1
  %v890 = vsel %vm210, %v887, %v889
  %v891 = vrot.slane %v816, 1
  %v892 = vsel %vm210, %v889, %v891
  %v893 = vrot.slane %v817, 1
  %v894 = vsel %vm210, %v891, %v893
  %v908 = vmax.f32 %v805, %v872
  %v909 = vmax.f32 %v806, %v874
  %v910 = vmax.f32 %v807, %v876
  %v911 = vmax.f32 %v808, %v878
  %v912 = vmax.f32 %v809, %v880
  %v913 = vmax.f32 %v810, %v882
  %v914 = vmax.f32 %v811, %v884
  %v915 = vmax.f32 %v812, %v886
  %v916 = vmax.f32 %v813, %v888
  %v917 = vmax.f32 %v814, %v890
  %v918 = vmax.f32 %v815, %v892
  %v919 = vmax.f32 %v816, %v894
  %v920 = vmax.f32 %v817, %v893
  %v921 = vrot.slane %v805, 2
  %v922 = vrot.slane %v806, 2
  %v923 = vsel %vm293, %v921, %v922
  %v924 = vrot.slane %v807, 2
  %v925 = vsel %vm293, %v922, %v924
  %v926 = vrot.slane %v808, 2
  %v927 = vsel %vm293, %v924, %v926
  %v928 = vrot.slane %v809, 2
  %v929 = vsel %vm293, %v926, %v928
  %v930 = vrot.slane %v810, 2
  %v931 = vsel %vm293, %v928, %v930
  %v932 = vrot.slane %v811, 2
  %v933 = vsel %vm293, %v930, %v932
  %v934 = vrot.slane %v812, 2
  %v935 = vsel %vm293, %v932, %v934
  %v936 = vrot.slane %v813, 2
  %v937 = vsel %vm293, %v934, %v936
  %v938 = vrot.slane %v814, 2
  %v939 = vsel %vm293, %v936, %v938
  %v940 = vrot.slane %v815, 2
  %v941 = vsel %vm293, %v938, %v940
  %v942 = vrot.slane %v816, 2
  %v943 = vsel %vm293, %v940, %v942
  %v944 = vrot.slane %v817, 2
  %v945 = vsel %vm293, %v942, %v944
  %v959 = vmax.f32 %v908, %v923
  %v960 = vmax.f32 %v909, %v925
  %v961 = vmax.f32 %v910, %v927
  %v962 = vmax.f32 %v911, %v929
  %v963 = vmax.f32 %v912, %v931
  %v964 = vmax.f32 %v913, %v933
  %v965 = vmax.f32 %v914, %v935
  %v966 = vmax.f32 %v915, %v937
  %v967 = vmax.f32 %v916, %v939
  %v968 = vmax.f32 %v917, %v941
  %v969 = vmax.f32 %v918, %v943
  %v970 = vmax.f32 %v919, %v945
  %v971 = vmax.f32 %v920, %v944
  %vm972 = vcmask 793600
  %v974 = vsel %vm972, %v50, 0
  %v977 = vsel %vm972, %v51, 0
  %v980 = vsel %vm972, %v52, 0
  %v983 = vsel %vm972, %v53, 0
  %v986 = vsel %vm972, %v54, 0
  %v989 = vsel %vm972, %v55, 0
  %v992 = vsel %vm972, %v56, 0
  %vm994 = vcmask 1040384
  %v996 = vsel %vm994, %v971, 0
  %998 = vmatpush.msra.mxu0 0.0
  %999 = vmatpush.msra.mxu0 0.0
  %1000 = vmatpush.msra.mxu0 0.0
  %1001 = vmatpush.msra.mxu0 %v996
  %1002 = vmatpush.msra.mxu0 %v970
  %1003 = vmatpush.msra.mxu0 %v969
  %1004 = vmatpush.msra.mxu0 %v968
  %1005 = vmatpush.msra.mxu0 %v967
  %1006 = vmatpush.msra.mxu0 %v966
  %1007 = vmatpush.msra.mxu0 %v965
  %1008 = vmatpush.msra.mxu0 %v964
  %1009 = vmatpush.msra.mxu0 %v963
  %1010 = vmatpush.msra.mxu0 %v962
  %1011 = vmatpush.msra.mxu0 %v961
  %1012 = vmatpush.msra.mxu0 %v960
  %1013 = vmatpush.msra.mxu0 %v959
  %1014 = vmatmul.f32.gmra.mxu0 %v974
  %v1015 = vpop.f32.mrf.mxu0
  %v1016 = vadd.f32 0.0, %v1015
  %1017 = vmatmul.f32.gmra.mxu0 %v977
  %v1018 = vpop.f32.mrf.mxu0
  %v1019 = vadd.f32 0.0, %v1018
  %1020 = vmatmul.f32.gmra.mxu0 %v980
  %v1021 = vpop.f32.mrf.mxu0
  %v1022 = vadd.f32 0.0, %v1021
  %1023 = vmatmul.f32.gmra.mxu0 %v983
  %v1024 = vpop.f32.mrf.mxu0
  %v1025 = vadd.f32 0.0, %v1024
  %1026 = vmatmul.f32.gmra.mxu0 %v986
  %v1027 = vpop.f32.mrf.mxu0
  %v1028 = vadd.f32 0.0, %v1027
  %1029 = vmatmul.f32.gmra.mxu0 %v989
  %v1030 = vpop.f32.mrf.mxu0
  %v1031 = vadd.f32 0.0, %v1030
  %1032 = vmatmul.f32.gmra.mxu0 %v992
  %v1033 = vpop.f32.mrf.mxu0
  %v1034 = vadd.f32 0.0, %v1033
  %1035 = vdwg.mxu0
  %v1049 = vrot.slane %v844, 1
  %v1050 = vrot.slane %v845, 1
  %v1051 = vsel %vm210, %v1049, %v1050
  %v1052 = vrot.slane %v846, 1
  %v1053 = vsel %vm210, %v1050, %v1052
  %v1054 = vrot.slane %v847, 1
  %v1055 = vsel %vm210, %v1052, %v1054
  %v1056 = vrot.slane %v848, 1
  %v1057 = vsel %vm210, %v1054, %v1056
  %v1058 = vrot.slane %v849, 1
  %v1059 = vsel %vm210, %v1056, %v1058
  %v1060 = vrot.slane %v850, 1
  %v1061 = vsel %vm210, %v1058, %v1060
  %v1062 = vrot.slane %v851, 1
  %v1063 = vsel %vm210, %v1060, %v1062
  %v1064 = vrot.slane %v852, 1
  %v1065 = vsel %vm210, %v1062, %v1064
  %v1066 = vrot.slane %v853, 1
  %v1067 = vsel %vm210, %v1064, %v1066
  %v1068 = vrot.slane %v854, 1
  %v1069 = vsel %vm210, %v1066, %v1068
  %v1070 = vrot.slane %v855, 1
  %v1071 = vsel %vm210, %v1068, %v1070
  %v1072 = vrot.slane %v856, 1
  %v1073 = vsel %vm210, %v1070, %v1072
  %v1087 = vmax.f32 %v844, %v1051
  %v1088 = vmax.f32 %v845, %v1053
  %v1089 = vmax.f32 %v846, %v1055
  %v1090 = vmax.f32 %v847, %v1057
  %v1091 = vmax.f32 %v848, %v1059
  %v1092 = vmax.f32 %v849, %v1061
  %v1093 = vmax.f32 %v850, %v1063
  %v1094 = vmax.f32 %v851, %v1065
  %v1095 = vmax.f32 %v852, %v1067
  %v1096 = vmax.f32 %v853, %v1069
  %v1097 = vmax.f32 %v854, %v1071
  %v1098 = vmax.f32 %v855, %v1073
  %v1099 = vmax.f32 %v856, %v1072
  %v1100 = vrot.slane %v844, 2
  %v1101 = vrot.slane %v845, 2
  %v1102 = vsel %vm293, %v1100, %v1101
  %v1103 = vrot.slane %v846, 2
  %v1104 = vsel %vm293, %v1101, %v1103
  %v1105 = vrot.slane %v847, 2
  %v1106 = vsel %vm293, %v1103, %v1105
  %v1107 = vrot.slane %v848, 2
  %v1108 = vsel %vm293, %v1105, %v1107
  %v1109 = vrot.slane %v849, 2
  %v1110 = vsel %vm293, %v1107, %v1109
  %v1111 = vrot.slane %v850, 2
  %v1112 = vsel %vm293, %v1109, %v1111
  %v1113 = vrot.slane %v851, 2
  %v1114 = vsel %vm293, %v1111, %v1113
  %v1115 = vrot.slane %v852, 2
  %v1116 = vsel %vm293, %v1113, %v1115
  %v1117 = vrot.slane %v853, 2
  %v1118 = vsel %vm293, %v1115, %v1117
  %v1119 = vrot.slane %v854, 2
  %v1120 = vsel %vm293, %v1117, %v1119
  %v1121 = vrot.slane %v855, 2
  %v1122 = vsel %vm293, %v1119, %v1121
  %v1123 = vrot.slane %v856, 2
  %v1124 = vsel %vm293, %v1121, %v1123
  %v1138 = vmax.f32 %v1087, %v1102
  %v1139 = vmax.f32 %v1088, %v1104
  %v1140 = vmax.f32 %v1089, %v1106
  %v1141 = vmax.f32 %v1090, %v1108
  %v1142 = vmax.f32 %v1091, %v1110
  %v1143 = vmax.f32 %v1092, %v1112
  %v1144 = vmax.f32 %v1093, %v1114
  %v1145 = vmax.f32 %v1094, %v1116
  %v1146 = vmax.f32 %v1095, %v1118
  %v1147 = vmax.f32 %v1096, %v1120
  %v1148 = vmax.f32 %v1097, %v1122
  %v1149 = vmax.f32 %v1098, %v1124
  %v1150 = vmax.f32 %v1099, %v1123
  %v1152 = vsel %vm994, %v1150, 0
  %1154 = vmatpush.msra.mxu0 0.0
  %1155 = vmatpush.msra.mxu0 0.0
  %1156 = vmatpush.msra.mxu0 0.0
  %1157 = vmatpush.msra.mxu0 %v1152
  %1158 = vmatpush.msra.mxu0 %v1149
  %1159 = vmatpush.msra.mxu0 %v1148
  %1160 = vmatpush.msra.mxu0 %v1147
  %1161 = vmatpush.msra.mxu0 %v1146
  %1162 = vmatpush.msra.mxu0 %v1145
  %1163 = vmatpush.msra.mxu0 %v1144
  %1164 = vmatpush.msra.mxu0 %v1143
  %1165 = vmatpush.msra.mxu0 %v1142
  %1166 = vmatpush.msra.mxu0 %v1141
  %1167 = vmatpush.msra.mxu0 %v1140
  %1168 = vmatpush.msra.mxu0 %v1139
  %1169 = vmatpush.msra.mxu0 %v1138
  %1170 = vmatmul.f32.gmra.mxu0 %v974
  %v1171 = vpop.f32.mrf.mxu0
  %v1172 = vadd.f32 0.0, %v1171
  %1173 = vmatmul.f32.gmra.mxu0 %v977
  %v1174 = vpop.f32.mrf.mxu0
  %v1175 = vadd.f32 0.0, %v1174
  %1176 = vmatmul.f32.gmra.mxu0 %v980
  %v1177 = vpop.f32.mrf.mxu0
  %v1178 = vadd.f32 0.0, %v1177
  %1179 = vmatmul.f32.gmra.mxu0 %v983
  %v1180 = vpop.f32.mrf.mxu0
  %v1181 = vadd.f32 0.0, %v1180
  %1182 = vmatmul.f32.gmra.mxu0 %v986
  %v1183 = vpop.f32.mrf.mxu0
  %v1184 = vadd.f32 0.0, %v1183
  %1185 = vmatmul.f32.gmra.mxu0 %v989
  %v1186 = vpop.f32.mrf.mxu0
  %v1187 = vadd.f32 0.0, %v1186
  %1188 = vmatmul.f32.gmra.mxu0 %v992
  %v1189 = vpop.f32.mrf.mxu0
  %v1190 = vadd.f32 0.0, %v1189
  %1191 = vdwg.mxu0
  %v1192 = vld [vmem:[%s4] ss:$4 sm:$0x3]
  %s1193 = scalar_lea.vmem %s4, 1
  %v1194 = vld [vmem:[%s1193] ss:$4 sm:$0x3]
  %s1195 = scalar_lea.vmem %s4, 2
  %v1196 = vld [vmem:[%s1195] ss:$4 sm:$0x3]
  %v1197 = vld [vmem:[%s3] sm:$0xff]
  %v1198 = vld [vmem:[%s3 + $0x8] sm:$0xff]
  %v1199 = vld [vmem:[%s3 + $0x10] sm:$0xff]
  %v1200 = vld [vmem:[%s3 + $0x18] sm:$0xff]
  %v1201 = vld [vmem:[%s3 + $0x20] sm:$0xff]
  %v1202 = vld [vmem:[%s3 + $0x28] sm:$0xff]
  %v1203 = vld [vmem:[%s3 + $0x30] sm:$0xff]
  %v1204 = vld [vmem:[%s3 + $0x38] sm:$0xff]
  %v1205 = vld [vmem:[%s3 + $0x40] sm:$0xff]
  %v1206 = vld [vmem:[%s3 + $0x48] sm:$0xff]
  %v1207 = vld [vmem:[%s3 + $0x50] sm:$0xff]
  %v1208 = vld [vmem:[%s3 + $0x58] sm:$0xff]
  %v1209 = vld [vmem:[%s3 + $0x60] sm:$0xff]
  %v1210 = vld [vmem:[%s3 + $0x68] sm:$0xff]
  %v1211 = vld [vmem:[%s3 + $0x70] sm:$0xff]
  %v1212 = vld [vmem:[%s3 + $0x78] sm:$0xff]
  %s1213 = scalar_lea.vmem %s3, 128
  %v1214 = vld [vmem:[%s1213] sm:$0xff]
  %v1215 = vld [vmem:[%s1213 + $0x8] sm:$0xff]
  %v1216 = vld [vmem:[%s1213 + $0x10] sm:$0xff]
  %v1217 = vld [vmem:[%s1213 + $0x18] sm:$0xff]
  %v1218 = vld [vmem:[%s1213 + $0x20] sm:$0xff]
  %v1219 = vld [vmem:[%s1213 + $0x28] sm:$0xff]
  %v1220 = vld [vmem:[%s1213 + $0x30] sm:$0xff]
  %v1221 = vld [vmem:[%s1213 + $0x38] sm:$0xff]
  %v1222 = vld [vmem:[%s1213 + $0x40] sm:$0xff]
  %v1223 = vld [vmem:[%s1213 + $0x48] sm:$0xff]
  %v1224 = vld [vmem:[%s1213 + $0x50] sm:$0xff]
  %v1225 = vld [vmem:[%s1213 + $0x58] sm:$0xff]
  %v1226 = vld [vmem:[%s1213 + $0x60] sm:$0xff]
  %v1227 = vld [vmem:[%s1213 + $0x68] sm:$0xff]
  %v1228 = vld [vmem:[%s1213 + $0x70] sm:$0xff]
  %v1229 = vld [vmem:[%s1213 + $0x78] sm:$0xff]
  %v1237 = vrot.slane %v1016, 1
  %v1238 = vrot.slane %v1019, 1
  %v1239 = vsel %vm210, %v1237, %v1238
  %v1240 = vrot.slane %v1022, 1
  %v1241 = vsel %vm210, %v1238, %v1240
  %v1242 = vrot.slane %v1025, 1
  %v1243 = vsel %vm210, %v1240, %v1242
  %v1244 = vrot.slane %v1028, 1
  %v1245 = vsel %vm210, %v1242, %v1244
  %v1246 = vrot.slane %v1031, 1
  %v1247 = vsel %vm210, %v1244, %v1246
  %v1248 = vrot.slane %v1034, 1
  %v1249 = vsel %vm210, %v1246, %v1248
  %v1250 = vsel %vm604, %v1239, 0
  %v1252 = vsel %vm604, %v1241, 0
  %v1254 = vsel %vm604, %v1243, 0
  %v1256 = vsel %vm604, %v1245, 0
  %v1258 = vsel %vm604, %v1247, 0
  %v1260 = vsel %vm604, %v1249, 0
  %v1262 = vsel %vm604, %v1248, 0
  %1264 = vmatpush.msra.mxu0 0.0
  %1265 = vmatpush.msra.mxu0 0.0
  %1266 = vmatpush.msra.mxu0 0.0
  %1267 = vmatpush.msra.mxu0 0.0
  %1268 = vmatpush.msra.mxu0 0.0
  %1269 = vmatpush.msra.mxu0 0.0
  %1270 = vmatpush.msra.mxu0 0.0
  %1271 = vmatpush.msra.mxu0 0.0
  %1272 = vmatpush.msra.mxu0 %v1228
  %1273 = vmatpush.msra.mxu0 %v1226
  %1274 = vmatpush.msra.mxu0 %v1224
  %1275 = vmatpush.msra.mxu0 %v1222
  %1276 = vmatpush.msra.mxu0 %v1220
  %1277 = vmatpush.msra.mxu0 %v1218
  %1278 = vmatpush.msra.mxu0 %v1216
  %1279 = vmatpush.msra.mxu0 %v1214
  %1280 = vmatmul.f32.gmra.mxu0 %v1250
  %v1281 = vpop.f32.mrf.mxu0
  %v1282 = vadd.f32 0.0, %v1281
  %1283 = vmatmul.f32.gmra.mxu0 %v1252
  %v1284 = vpop.f32.mrf.mxu0
  %v1285 = vadd.f32 0.0, %v1284
  %1286 = vmatmul.f32.gmra.mxu0 %v1254
  %v1287 = vpop.f32.mrf.mxu0
  %v1288 = vadd.f32 0.0, %v1287
  %1289 = vmatmul.f32.gmra.mxu0 %v1256
  %v1290 = vpop.f32.mrf.mxu0
  %v1291 = vadd.f32 0.0, %v1290
  %1292 = vmatmul.f32.gmra.mxu0 %v1258
  %v1293 = vpop.f32.mrf.mxu0
  %v1294 = vadd.f32 0.0, %v1293
  %1295 = vmatmul.f32.gmra.mxu0 %v1260
  %v1296 = vpop.f32.mrf.mxu0
  %v1297 = vadd.f32 0.0, %v1296
  %1298 = vmatmul.f32.gmra.mxu0 %v1262
  %v1299 = vpop.f32.mrf.mxu0
  %v1300 = vadd.f32 0.0, %v1299
  %1301 = vdwg.mxu0
  %1302 = vmatpush.msra.mxu0 0.0
  %1303 = vmatpush.msra.mxu0 0.0
  %1304 = vmatpush.msra.mxu0 0.0
  %1305 = vmatpush.msra.mxu0 0.0
  %1306 = vmatpush.msra.mxu0 0.0
  %1307 = vmatpush.msra.mxu0 0.0
  %1308 = vmatpush.msra.mxu0 0.0
  %1309 = vmatpush.msra.mxu0 0.0
  %1310 = vmatpush.msra.mxu0 %v1229
  %1311 = vmatpush.msra.mxu0 %v1227
  %1312 = vmatpush.msra.mxu0 %v1225
  %1313 = vmatpush.msra.mxu0 %v1223
  %1314 = vmatpush.msra.mxu0 %v1221
  %1315 = vmatpush.msra.mxu0 %v1219
  %1316 = vmatpush.msra.mxu0 %v1217
  %1317 = vmatpush.msra.mxu0 %v1215
  %1318 = vmatmul.f32.gmra.mxu0 %v1250
  %v1319 = vpop.f32.mrf.mxu0
  %v1320 = vadd.f32 0.0, %v1319
  %1321 = vmatmul.f32.gmra.mxu0 %v1252
  %v1322 = vpop.f32.mrf.mxu0
  %v1323 = vadd.f32 0.0, %v1322
  %1324 = vmatmul.f32.gmra.mxu0 %v1254
  %v1325 = vpop.f32.mrf.mxu0
  %v1326 = vadd.f32 0.0, %v1325
  %1327 = vmatmul.f32.gmra.mxu0 %v1256
  %v1328 = vpop.f32.mrf.mxu0
  %v1329 = vadd.f32 0.0, %v1328
  %1330 = vmatmul.f32.gmra.mxu0 %v1258
  %v1331 = vpop.f32.mrf.mxu0
  %v1332 = vadd.f32 0.0, %v1331
  %1333 = vmatmul.f32.gmra.mxu0 %v1260
  %v1334 = vpop.f32.mrf.mxu0
  %v1335 = vadd.f32 0.0, %v1334
  %1336 = vmatmul.f32.gmra.mxu0 %v1262
  %v1337 = vpop.f32.mrf.mxu0
  %v1338 = vadd.f32 0.0, %v1337
  %1339 = vdwg.mxu0
  %v1340 = vsel %vm604, %v1016, 0
  %v1342 = vsel %vm604, %v1019, 0
  %v1344 = vsel %vm604, %v1022, 0
  %v1346 = vsel %vm604, %v1025, 0
  %v1348 = vsel %vm604, %v1028, 0
  %v1350 = vsel %vm604, %v1031, 0
  %v1352 = vsel %vm604, %v1034, 0
  %1354 = vmatpush.msra.mxu0 0.0
  %1355 = vmatpush.msra.mxu0 0.0
  %1356 = vmatpush.msra.mxu0 0.0
  %1357 = vmatpush.msra.mxu0 0.0
  %1358 = vmatpush.msra.mxu0 0.0
  %1359 = vmatpush.msra.mxu0 0.0
  %1360 = vmatpush.msra.mxu0 0.0
  %1361 = vmatpush.msra.mxu0 0.0
  %1362 = vmatpush.msra.mxu0 %v1211
  %1363 = vmatpush.msra.mxu0 %v1209
  %1364 = vmatpush.msra.mxu0 %v1207
  %1365 = vmatpush.msra.mxu0 %v1205
  %1366 = vmatpush.msra.mxu0 %v1203
  %1367 = vmatpush.msra.mxu0 %v1201
  %1368 = vmatpush.msra.mxu0 %v1199
  %1369 = vmatpush.msra.mxu0 %v1197
  %1370 = vmatmul.f32.gmra.mxu0 %v1340
  %v1371 = vpop.f32.mrf.mxu0
  %v1372 = vadd.f32 %v1282, %v1371
  %1373 = vmatmul.f32.gmra.mxu0 %v1342
  %v1374 = vpop.f32.mrf.mxu0
  %v1375 = vadd.f32 %v1285, %v1374
  %1376 = vmatmul.f32.gmra.mxu0 %v1344
  %v1377 = vpop.f32.mrf.mxu0
  %v1378 = vadd.f32 %v1288, %v1377
  %1379 = vmatmul.f32.gmra.mxu0 %v1346
  %v1380 = vpop.f32.mrf.mxu0
  %v1381 = vadd.f32 %v1291, %v1380
  %1382 = vmatmul.f32.gmra.mxu0 %v1348
  %v1383 = vpop.f32.mrf.mxu0
  %v1384 = vadd.f32 %v1294, %v1383
  %1385 = vmatmul.f32.gmra.mxu0 %v1350
  %v1386 = vpop.f32.mrf.mxu0
  %v1387 = vadd.f32 %v1297, %v1386
  %1388 = vmatmul.f32.gmra.mxu0 %v1352
  %v1389 = vpop.f32.mrf.mxu0
  %v1390 = vadd.f32 %v1300, %v1389
  %1391 = vdwg.mxu0
  %1392 = vmatpush.msra.mxu0 0.0
  %1393 = vmatpush.msra.mxu0 0.0
  %1394 = vmatpush.msra.mxu0 0.0
  %1395 = vmatpush.msra.mxu0 0.0
  %1396 = vmatpush.msra.mxu0 0.0
  %1397 = vmatpush.msra.mxu0 0.0
  %1398 = vmatpush.msra.mxu0 0.0
  %1399 = vmatpush.msra.mxu0 0.0
  %1400 = vmatpush.msra.mxu0 %v1212
  %1401 = vmatpush.msra.mxu0 %v1210
  %1402 = vmatpush.msra.mxu0 %v1208
  %1403 = vmatpush.msra.mxu0 %v1206
  %1404 = vmatpush.msra.mxu0 %v1204
  %1405 = vmatpush.msra.mxu0 %v1202
  %1406 = vmatpush.msra.mxu0 %v1200
  %1407 = vmatpush.msra.mxu0 %v1198
  %1408 = vmatmul.f32.gmra.mxu0 %v1340
  %v1409 = vpop.f32.mrf.mxu0
  %v1410 = vadd.f32 %v1320, %v1409
  %1411 = vmatmul.f32.gmra.mxu0 %v1342
  %v1412 = vpop.f32.mrf.mxu0
  %v1413 = vadd.f32 %v1323, %v1412
  %1414 = vmatmul.f32.gmra.mxu0 %v1344
  %v1415 = vpop.f32.mrf.mxu0
  %v1416 = vadd.f32 %v1326, %v1415
  %1417 = vmatmul.f32.gmra.mxu0 %v1346
  %v1418 = vpop.f32.mrf.mxu0
  %v1419 = vadd.f32 %v1329, %v1418
  %1420 = vmatmul.f32.gmra.mxu0 %v1348
  %v1421 = vpop.f32.mrf.mxu0
  %v1422 = vadd.f32 %v1332, %v1421
  %1423 = vmatmul.f32.gmra.mxu0 %v1350
  %v1424 = vpop.f32.mrf.mxu0
  %v1425 = vadd.f32 %v1335, %v1424
  %1426 = vmatmul.f32.gmra.mxu0 %v1352
  %v1427 = vpop.f32.mrf.mxu0
  %v1428 = vadd.f32 %v1338, %v1427
  %1429 = vdwg.mxu0
  %s1430 = scalar_lea.vmem %s3, 256
  %v1431 = vld [vmem:[%s1430] sm:$0xff]
  %v1432 = vld [vmem:[%s1430 + $0x8] sm:$0xff]
  %v1433 = vld [vmem:[%s1430 + $0x10] sm:$0xff]
  %v1434 = vld [vmem:[%s1430 + $0x18] sm:$0xff]
  %v1435 = vld [vmem:[%s1430 + $0x20] sm:$0xff]
  %v1436 = vld [vmem:[%s1430 + $0x28] sm:$0xff]
  %v1437 = vld [vmem:[%s1430 + $0x30] sm:$0xff]
  %v1438 = vld [vmem:[%s1430 + $0x38] sm:$0xff]
  %v1439 = vld [vmem:[%s1430 + $0x40] sm:$0xff]
  %v1440 = vld [vmem:[%s1430 + $0x48] sm:$0xff]
  %v1441 = vld [vmem:[%s1430 + $0x50] sm:$0xff]
  %v1442 = vld [vmem:[%s1430 + $0x58] sm:$0xff]
  %v1443 = vld [vmem:[%s1430 + $0x60] sm:$0xff]
  %v1444 = vld [vmem:[%s1430 + $0x68] sm:$0xff]
  %v1445 = vld [vmem:[%s1430 + $0x70] sm:$0xff]
  %v1446 = vld [vmem:[%s1430 + $0x78] sm:$0xff]
  %v1447 = vrot.slane %v1016, 2
  %v1448 = vrot.slane %v1019, 2
  %v1449 = vsel %vm293, %v1447, %v1448
  %v1450 = vrot.slane %v1022, 2
  %v1451 = vsel %vm293, %v1448, %v1450
  %v1452 = vrot.slane %v1025, 2
  %v1453 = vsel %vm293, %v1450, %v1452
  %v1454 = vrot.slane %v1028, 2
  %v1455 = vsel %vm293, %v1452, %v1454
  %v1456 = vrot.slane %v1031, 2
  %v1457 = vsel %vm293, %v1454, %v1456
  %v1458 = vrot.slane %v1034, 2
  %v1459 = vsel %vm293, %v1456, %v1458
  %v1460 = vsel %vm604, %v1449, 0
  %v1462 = vsel %vm604, %v1451, 0
  %v1464 = vsel %vm604, %v1453, 0
  %v1466 = vsel %vm604, %v1455, 0
  %v1468 = vsel %vm604, %v1457, 0
  %v1470 = vsel %vm604, %v1459, 0
  %v1472 = vsel %vm604, %v1458, 0
  %1474 = vmatpush.msra.mxu0 0.0
  %1475 = vmatpush.msra.mxu0 0.0
  %1476 = vmatpush.msra.mxu0 0.0
  %1477 = vmatpush.msra.mxu0 0.0
  %1478 = vmatpush.msra.mxu0 0.0
  %1479 = vmatpush.msra.mxu0 0.0
  %1480 = vmatpush.msra.mxu0 0.0
  %1481 = vmatpush.msra.mxu0 0.0
  %1482 = vmatpush.msra.mxu0 %v1445
  %1483 = vmatpush.msra.mxu0 %v1443
  %1484 = vmatpush.msra.mxu0 %v1441
  %1485 = vmatpush.msra.mxu0 %v1439
  %1486 = vmatpush.msra.mxu0 %v1437
  %1487 = vmatpush.msra.mxu0 %v1435
  %1488 = vmatpush.msra.mxu0 %v1433
  %1489 = vmatpush.msra.mxu0 %v1431
  %1490 = vmatmul.f32.gmra.mxu0 %v1460
  %v1491 = vpop.f32.mrf.mxu0
  %v1492 = vadd.f32 0.0, %v1491
  %1493 = vmatmul.f32.gmra.mxu0 %v1462
  %v1494 = vpop.f32.mrf.mxu0
  %v1495 = vadd.f32 0.0, %v1494
  %1496 = vmatmul.f32.gmra.mxu0 %v1464
  %v1497 = vpop.f32.mrf.mxu0
  %v1498 = vadd.f32 0.0, %v1497
  %1499 = vmatmul.f32.gmra.mxu0 %v1466
  %v1500 = vpop.f32.mrf.mxu0
  %v1501 = vadd.f32 0.0, %v1500
  %1502 = vmatmul.f32.gmra.mxu0 %v1468
  %v1503 = vpop.f32.mrf.mxu0
  %v1504 = vadd.f32 0.0, %v1503
  %1505 = vmatmul.f32.gmra.mxu0 %v1470
  %v1506 = vpop.f32.mrf.mxu0
  %v1507 = vadd.f32 0.0, %v1506
  %1508 = vmatmul.f32.gmra.mxu0 %v1472
  %v1509 = vpop.f32.mrf.mxu0
  %v1510 = vadd.f32 0.0, %v1509
  %1511 = vdwg.mxu0
  %1512 = vmatpush.msra.mxu0 0.0
  %1513 = vmatpush.msra.mxu0 0.0
  %1514 = vmatpush.msra.mxu0 0.0
  %1515 = vmatpush.msra.mxu0 0.0
  %1516 = vmatpush.msra.mxu0 0.0
  %1517 = vmatpush.msra.mxu0 0.0
  %1518 = vmatpush.msra.mxu0 0.0
  %1519 = vmatpush.msra.mxu0 0.0
  %1520 = vmatpush.msra.mxu0 %v1446
  %1521 = vmatpush.msra.mxu0 %v1444
  %1522 = vmatpush.msra.mxu0 %v1442
  %1523 = vmatpush.msra.mxu0 %v1440
  %1524 = vmatpush.msra.mxu0 %v1438
  %1525 = vmatpush.msra.mxu0 %v1436
  %1526 = vmatpush.msra.mxu0 %v1434
  %1527 = vmatpush.msra.mxu0 %v1432
  %1528 = vmatmul.f32.gmra.mxu0 %v1460
  %v1529 = vpop.f32.mrf.mxu0
  %v1530 = vadd.f32 0.0, %v1529
  %1531 = vmatmul.f32.gmra.mxu0 %v1462
  %v1532 = vpop.f32.mrf.mxu0
  %v1533 = vadd.f32 0.0, %v1532
  %1534 = vmatmul.f32.gmra.mxu0 %v1464
  %v1535 = vpop.f32.mrf.mxu0
  %v1536 = vadd.f32 0.0, %v1535
  %1537 = vmatmul.f32.gmra.mxu0 %v1466
  %v1538 = vpop.f32.mrf.mxu0
  %v1539 = vadd.f32 0.0, %v1538
  %1540 = vmatmul.f32.gmra.mxu0 %v1468
  %v1541 = vpop.f32.mrf.mxu0
  %v1542 = vadd.f32 0.0, %v1541
  %1543 = vmatmul.f32.gmra.mxu0 %v1470
  %v1544 = vpop.f32.mrf.mxu0
  %v1545 = vadd.f32 0.0, %v1544
  %1546 = vmatmul.f32.gmra.mxu0 %v1472
  %v1547 = vpop.f32.mrf.mxu0
  %v1548 = vadd.f32 0.0, %v1547
  %1549 = vdwg.mxu0
  %v1550 = vadd.f32 %v1372, %v1492
  %v1551 = vadd.f32 %v1410, %v1530
  %v1552 = vadd.f32 %v1375, %v1495
  %v1553 = vadd.f32 %v1413, %v1533
  %v1554 = vadd.f32 %v1378, %v1498
  %v1555 = vadd.f32 %v1416, %v1536
  %v1556 = vadd.f32 %v1381, %v1501
  %v1557 = vadd.f32 %v1419, %v1539
  %v1558 = vadd.f32 %v1384, %v1504
  %v1559 = vadd.f32 %v1422, %v1542
  %v1560 = vadd.f32 %v1387, %v1507
  %v1561 = vadd.f32 %v1425, %v1545
  %v1562 = vadd.f32 %v1390, %v1510
  %v1563 = vadd.f32 %v1428, %v1548
  %v1565 = vperm.slane %v1192, 0
  %v1566 = vperm.slane %v1192, 1
  %v1569 = vadd.f32 %v1550, %v1565
  %v1570 = vadd.f32 %v1551, %v1566
  %v1571 = vadd.f32 %v1552, %v1565
  %v1572 = vadd.f32 %v1553, %v1566
  %v1573 = vadd.f32 %v1554, %v1565
  %v1574 = vadd.f32 %v1555, %v1566
  %v1575 = vadd.f32 %v1556, %v1565
  %v1576 = vadd.f32 %v1557, %v1566
  %v1577 = vadd.f32 %v1558, %v1565
  %v1578 = vadd.f32 %v1559, %v1566
  %v1579 = vadd.f32 %v1560, %v1565
  %v1580 = vadd.f32 %v1561, %v1566
  %v1581 = vadd.f32 %v1562, %v1565
  %v1582 = vadd.f32 %v1563, %v1566
  %v1590 = vrot.slane %v1172, 1
  %v1591 = vrot.slane %v1175, 1
  %v1592 = vsel %vm210, %v1590, %v1591
  %v1593 = vrot.slane %v1178, 1
  %v1594 = vsel %vm210, %v1591, %v1593
  %v1595 = vrot.slane %v1181, 1
  %v1596 = vsel %vm210, %v1593, %v1595
  %v1597 = vrot.slane %v1184, 1
  %v1598 = vsel %vm210, %v1595, %v1597
  %v1599 = vrot.slane %v1187, 1
  %v1600 = vsel %vm210, %v1597, %v1599
  %v1601 = vrot.slane %v1190, 1
  %v1602 = vsel %vm210, %v1599, %v1601
  %v1603 = vsel %vm604, %v1592, 0
  %v1605 = vsel %vm604, %v1594, 0
  %v1607 = vsel %vm604, %v1596, 0
  %v1609 = vsel %vm604, %v1598, 0
  %v1611 = vsel %vm604, %v1600, 0
  %v1613 = vsel %vm604, %v1602, 0
  %v1615 = vsel %vm604, %v1601, 0
  %1617 = vmatpush.msra.mxu0 0.0
  %1618 = vmatpush.msra.mxu0 0.0
  %1619 = vmatpush.msra.mxu0 0.0
  %1620 = vmatpush.msra.mxu0 0.0
  %1621 = vmatpush.msra.mxu0 0.0
  %1622 = vmatpush.msra.mxu0 0.0
  %1623 = vmatpush.msra.mxu0 0.0
  %1624 = vmatpush.msra.mxu0 0.0
  %1625 = vmatpush.msra.mxu0 %v1228
  %1626 = vmatpush.msra.mxu0 %v1226
  %1627 = vmatpush.msra.mxu0 %v1224
  %1628 = vmatpush.msra.mxu0 %v1222
  %1629 = vmatpush.msra.mxu0 %v1220
  %1630 = vmatpush.msra.mxu0 %v1218
  %1631 = vmatpush.msra.mxu0 %v1216
  %1632 = vmatpush.msra.mxu0 %v1214
  %1633 = vmatmul.f32.gmra.mxu0 %v1603
  %v1634 = vpop.f32.mrf.mxu0
  %v1635 = vadd.f32 0.0, %v1634
  %1636 = vmatmul.f32.gmra.mxu0 %v1605
  %v1637 = vpop.f32.mrf.mxu0
  %v1638 = vadd.f32 0.0, %v1637
  %1639 = vmatmul.f32.gmra.mxu0 %v1607
  %v1640 = vpop.f32.mrf.mxu0
  %v1641 = vadd.f32 0.0, %v1640
  %1642 = vmatmul.f32.gmra.mxu0 %v1609
  %v1643 = vpop.f32.mrf.mxu0
  %v1644 = vadd.f32 0.0, %v1643
  %1645 = vmatmul.f32.gmra.mxu0 %v1611
  %v1646 = vpop.f32.mrf.mxu0
  %v1647 = vadd.f32 0.0, %v1646
  %1648 = vmatmul.f32.gmra.mxu0 %v1613
  %v1649 = vpop.f32.mrf.mxu0
  %v1650 = vadd.f32 0.0, %v1649
  %1651 = vmatmul.f32.gmra.mxu0 %v1615
  %v1652 = vpop.f32.mrf.mxu0
  %v1653 = vadd.f32 0.0, %v1652
  %1654 = vdwg.mxu0
  %1655 = vmatpush.msra.mxu0 0.0
  %1656 = vmatpush.msra.mxu0 0.0
  %1657 = vmatpush.msra.mxu0 0.0
  %1658 = vmatpush.msra.mxu0 0.0
  %1659 = vmatpush.msra.mxu0 0.0
  %1660 = vmatpush.msra.mxu0 0.0
  %1661 = vmatpush.msra.mxu0 0.0
  %1662 = vmatpush.msra.mxu0 0.0
  %1663 = vmatpush.msra.mxu0 %v1229
  %1664 = vmatpush.msra.mxu0 %v1227
  %1665 = vmatpush.msra.mxu0 %v1225
  %1666 = vmatpush.msra.mxu0 %v1223
  %1667 = vmatpush.msra.mxu0 %v1221
  %1668 = vmatpush.msra.mxu0 %v1219
  %1669 = vmatpush.msra.mxu0 %v1217
  %1670 = vmatpush.msra.mxu0 %v1215
  %1671 = vmatmul.f32.gmra.mxu0 %v1603
  %v1672 = vpop.f32.mrf.mxu0
  %v1673 = vadd.f32 0.0, %v1672
  %1674 = vmatmul.f32.gmra.mxu0 %v1605
  %v1675 = vpop.f32.mrf.mxu0
  %v1676 = vadd.f32 0.0, %v1675
  %1677 = vmatmul.f32.gmra.mxu0 %v1607
  %v1678 = vpop.f32.mrf.mxu0
  %v1679 = vadd.f32 0.0, %v1678
  %1680 = vmatmul.f32.gmra.mxu0 %v1609
  %v1681 = vpop.f32.mrf.mxu0
  %v1682 = vadd.f32 0.0, %v1681
  %1683 = vmatmul.f32.gmra.mxu0 %v1611
  %v1684 = vpop.f32.mrf.mxu0
  %v1685 = vadd.f32 0.0, %v1684
  %1686 = vmatmul.f32.gmra.mxu0 %v1613
  %v1687 = vpop.f32.mrf.mxu0
  %v1688 = vadd.f32 0.0, %v1687
  %1689 = vmatmul.f32.gmra.mxu0 %v1615
  %v1690 = vpop.f32.mrf.mxu0
  %v1691 = vadd.f32 0.0, %v1690
  %1692 = vdwg.mxu0
  %v1693 = vsel %vm604, %v1172, 0
  %v1695 = vsel %vm604, %v1175, 0
  %v1697 = vsel %vm604, %v1178, 0
  %v1699 = vsel %vm604, %v1181, 0
  %v1701 = vsel %vm604, %v1184, 0
  %v1703 = vsel %vm604, %v1187, 0
  %v1705 = vsel %vm604, %v1190, 0
  %1707 = vmatpush.msra.mxu0 0.0
  %1708 = vmatpush.msra.mxu0 0.0
  %1709 = vmatpush.msra.mxu0 0.0
  %1710 = vmatpush.msra.mxu0 0.0
  %1711 = vmatpush.msra.mxu0 0.0
  %1712 = vmatpush.msra.mxu0 0.0
  %1713 = vmatpush.msra.mxu0 0.0
  %1714 = vmatpush.msra.mxu0 0.0
  %1715 = vmatpush.msra.mxu0 %v1211
  %1716 = vmatpush.msra.mxu0 %v1209
  %1717 = vmatpush.msra.mxu0 %v1207
  %1718 = vmatpush.msra.mxu0 %v1205
  %1719 = vmatpush.msra.mxu0 %v1203
  %1720 = vmatpush.msra.mxu0 %v1201
  %1721 = vmatpush.msra.mxu0 %v1199
  %1722 = vmatpush.msra.mxu0 %v1197
  %1723 = vmatmul.f32.gmra.mxu0 %v1693
  %v1724 = vpop.f32.mrf.mxu0
  %v1725 = vadd.f32 %v1635, %v1724
  %1726 = vmatmul.f32.gmra.mxu0 %v1695
  %v1727 = vpop.f32.mrf.mxu0
  %v1728 = vadd.f32 %v1638, %v1727
  %1729 = vmatmul.f32.gmra.mxu0 %v1697
  %v1730 = vpop.f32.mrf.mxu0
  %v1731 = vadd.f32 %v1641, %v1730
  %1732 = vmatmul.f32.gmra.mxu0 %v1699
  %v1733 = vpop.f32.mrf.mxu0
  %v1734 = vadd.f32 %v1644, %v1733
  %1735 = vmatmul.f32.gmra.mxu0 %v1701
  %v1736 = vpop.f32.mrf.mxu0
  %v1737 = vadd.f32 %v1647, %v1736
  %1738 = vmatmul.f32.gmra.mxu0 %v1703
  %v1739 = vpop.f32.mrf.mxu0
  %v1740 = vadd.f32 %v1650, %v1739
  %1741 = vmatmul.f32.gmra.mxu0 %v1705
  %v1742 = vpop.f32.mrf.mxu0
  %v1743 = vadd.f32 %v1653, %v1742
  %1744 = vdwg.mxu0
  %1745 = vmatpush.msra.mxu0 0.0
  %1746 = vmatpush.msra.mxu0 0.0
  %1747 = vmatpush.msra.mxu0 0.0
  %1748 = vmatpush.msra.mxu0 0.0
  %1749 = vmatpush.msra.mxu0 0.0
  %1750 = vmatpush.msra.mxu0 0.0
  %1751 = vmatpush.msra.mxu0 0.0
  %1752 = vmatpush.msra.mxu0 0.0
  %1753 = vmatpush.msra.mxu0 %v1212
  %1754 = vmatpush.msra.mxu0 %v1210
  %1755 = vmatpush.msra.mxu0 %v1208
  %1756 = vmatpush.msra.mxu0 %v1206
  %1757 = vmatpush.msra.mxu0 %v1204
  %1758 = vmatpush.msra.mxu0 %v1202
  %1759 = vmatpush.msra.mxu0 %v1200
  %1760 = vmatpush.msra.mxu0 %v1198
  %1761 = vmatmul.f32.gmra.mxu0 %v1693
  %v1762 = vpop.f32.mrf.mxu0
  %v1763 = vadd.f32 %v1673, %v1762
  %1764 = vmatmul.f32.gmra.mxu0 %v1695
  %v1765 = vpop.f32.mrf.mxu0
  %v1766 = vadd.f32 %v1676, %v1765
  %1767 = vmatmul.f32.gmra.mxu0 %v1697
  %v1768 = vpop.f32.mrf.mxu0
  %v1769 = vadd.f32 %v1679, %v1768
  %1770 = vmatmul.f32.gmra.mxu0 %v1699
  %v1771 = vpop.f32.mrf.mxu0
  %v1772 = vadd.f32 %v1682, %v1771
  %1773 = vmatmul.f32.gmra.mxu0 %v1701
  %v1774 = vpop.f32.mrf.mxu0
  %v1775 = vadd.f32 %v1685, %v1774
  %1776 = vmatmul.f32.gmra.mxu0 %v1703
  %v1777 = vpop.f32.mrf.mxu0
  %v1778 = vadd.f32 %v1688, %v1777
  %1779 = vmatmul.f32.gmra.mxu0 %v1705
  %v1780 = vpop.f32.mrf.mxu0
  %v1781 = vadd.f32 %v1691, %v1780
  %1782 = vdwg.mxu0
  %v1783 = vrot.slane %v1172, 2
  %v1784 = vrot.slane %v1175, 2
  %v1785 = vsel %vm293, %v1783, %v1784
  %v1786 = vrot.slane %v1178, 2
  %v1787 = vsel %vm293, %v1784, %v1786
  %v1788 = vrot.slane %v1181, 2
  %v1789 = vsel %vm293, %v1786, %v1788
  %v1790 = vrot.slane %v1184, 2
  %v1791 = vsel %vm293, %v1788, %v1790
  %v1792 = vrot.slane %v1187, 2
  %v1793 = vsel %vm293, %v1790, %v1792
  %v1794 = vrot.slane %v1190, 2
  %v1795 = vsel %vm293, %v1792, %v1794
  %v1796 = vsel %vm604, %v1785, 0
  %v1798 = vsel %vm604, %v1787, 0
  %v1800 = vsel %vm604, %v1789, 0
  %v1802 = vsel %vm604, %v1791, 0
  %v1804 = vsel %vm604, %v1793, 0
  %v1806 = vsel %vm604, %v1795, 0
  %v1808 = vsel %vm604, %v1794, 0
  %1810 = vmatpush.msra.mxu0 0.0
  %1811 = vmatpush.msra.mxu0 0.0
  %1812 = vmatpush.msra.mxu0 0.0
  %1813 = vmatpush.msra.mxu0 0.0
  %1814 = vmatpush.msra.mxu0 0.0
  %1815 = vmatpush.msra.mxu0 0.0
  %1816 = vmatpush.msra.mxu0 0.0
  %1817 = vmatpush.msra.mxu0 0.0
  %1818 = vmatpush.msra.mxu0 %v1445
  %1819 = vmatpush.msra.mxu0 %v1443
  %1820 = vmatpush.msra.mxu0 %v1441
  %1821 = vmatpush.msra.mxu0 %v1439
  %1822 = vmatpush.msra.mxu0 %v1437
  %1823 = vmatpush.msra.mxu0 %v1435
  %1824 = vmatpush.msra.mxu0 %v1433
  %1825 = vmatpush.msra.mxu0 %v1431
  %1826 = vmatmul.f32.gmra.mxu0 %v1796
  %v1827 = vpop.f32.mrf.mxu0
  %v1828 = vadd.f32 0.0, %v1827
  %1829 = vmatmul.f32.gmra.mxu0 %v1798
  %v1830 = vpop.f32.mrf.mxu0
  %v1831 = vadd.f32 0.0, %v1830
  %1832 = vmatmul.f32.gmra.mxu0 %v1800
  %v1833 = vpop.f32.mrf.mxu0
  %v1834 = vadd.f32 0.0, %v1833
  %1835 = vmatmul.f32.gmra.mxu0 %v1802
  %v1836 = vpop.f32.mrf.mxu0
  %v1837 = vadd.f32 0.0, %v1836
  %1838 = vmatmul.f32.gmra.mxu0 %v1804
  %v1839 = vpop.f32.mrf.mxu0
  %v1840 = vadd.f32 0.0, %v1839
  %1841 = vmatmul.f32.gmra.mxu0 %v1806
  %v1842 = vpop.f32.mrf.mxu0
  %v1843 = vadd.f32 0.0, %v1842
  %1844 = vmatmul.f32.gmra.mxu0 %v1808
  %v1845 = vpop.f32.mrf.mxu0
  %v1846 = vadd.f32 0.0, %v1845
  %1847 = vdwg.mxu0
  %1848 = vmatpush.msra.mxu0 0.0
  %1849 = vmatpush.msra.mxu0 0.0
  %1850 = vmatpush.msra.mxu0 0.0
  %1851 = vmatpush.msra.mxu0 0.0
  %1852 = vmatpush.msra.mxu0 0.0
  %1853 = vmatpush.msra.mxu0 0.0
  %1854 = vmatpush.msra.mxu0 0.0
  %1855 = vmatpush.msra.mxu0 0.0
  %1856 = vmatpush.msra.mxu0 %v1446
  %1857 = vmatpush.msra.mxu0 %v1444
  %1858 = vmatpush.msra.mxu0 %v1442
  %1859 = vmatpush.msra.mxu0 %v1440
  %1860 = vmatpush.msra.mxu0 %v1438
  %1861 = vmatpush.msra.mxu0 %v1436
  %1862 = vmatpush.msra.mxu0 %v1434
  %1863 = vmatpush.msra.mxu0 %v1432
  %1864 = vmatmul.f32.gmra.mxu0 %v1796
  %v1865 = vpop.f32.mrf.mxu0
  %v1866 = vadd.f32 0.0, %v1865
  %1867 = vmatmul.f32.gmra.mxu0 %v1798
  %v1868 = vpop.f32.mrf.mxu0
  %v1869 = vadd.f32 0.0, %v1868
  %1870 = vmatmul.f32.gmra.mxu0 %v1800
  %v1871 = vpop.f32.mrf.mxu0
  %v1872 = vadd.f32 0.0, %v1871
  %1873 = vmatmul.f32.gmra.mxu0 %v1802
  %v1874 = vpop.f32.mrf.mxu0
  %v1875 = vadd.f32 0.0, %v1874
  %1876 = vmatmul.f32.gmra.mxu0 %v1804
  %v1877 = vpop.f32.mrf.mxu0
  %v1878 = vadd.f32 0.0, %v1877
  %1879 = vmatmul.f32.gmra.mxu0 %v1806
  %v1880 = vpop.f32.mrf.mxu0
  %v1881 = vadd.f32 0.0, %v1880
  %1882 = vmatmul.f32.gmra.mxu0 %v1808
  %v1883 = vpop.f32.mrf.mxu0
  %v1884 = vadd.f32 0.0, %v1883
  %1885 = vdwg.mxu0
  %v1886 = vadd.f32 %v1725, %v1828
  %v1887 = vadd.f32 %v1763, %v1866
  %v1888 = vadd.f32 %v1728, %v1831
  %v1889 = vadd.f32 %v1766, %v1869
  %v1890 = vadd.f32 %v1731, %v1834
  %v1891 = vadd.f32 %v1769, %v1872
  %v1892 = vadd.f32 %v1734, %v1837
  %v1893 = vadd.f32 %v1772, %v1875
  %v1894 = vadd.f32 %v1737, %v1840
  %v1895 = vadd.f32 %v1775, %v1878
  %v1896 = vadd.f32 %v1740, %v1843
  %v1897 = vadd.f32 %v1778, %v1881
  %v1898 = vadd.f32 %v1743, %v1846
  %v1899 = vadd.f32 %v1781, %v1884
  %v1900 = vadd.f32 %v1886, %v1565
  %v1901 = vadd.f32 %v1887, %v1566
  %v1902 = vadd.f32 %v1888, %v1565
  %v1903 = vadd.f32 %v1889, %v1566
  %v1904 = vadd.f32 %v1890, %v1565
  %v1905 = vadd.f32 %v1891, %v1566
  %v1906 = vadd.f32 %v1892, %v1565
  %v1907 = vadd.f32 %v1893, %v1566
  %v1908 = vadd.f32 %v1894, %v1565
  %v1909 = vadd.f32 %v1895, %v1566
  %v1910 = vadd.f32 %v1896, %v1565
  %v1911 = vadd.f32 %v1897, %v1566
  %v1912 = vadd.f32 %v1898, %v1565
  %v1913 = vadd.f32 %v1899, %v1566
  %v1914 = vadd.f32 %v1569, %v1571
  %v1915 = vadd.f32 %v1914, %v1573
  %v1916 = vadd.f32 %v1915, %v1575
  %v1917 = vadd.f32 %v1916, %v1577
  %v1918 = vadd.f32 %v1917, %v1579
  %v1919 = vsel %vm994, %v1581, 0.0
  %v1920 = vadd.f32 %v1918, %v1919
  %v1921 = vrot.slane %v1920, 4
  %v1922 = vadd.f32 %v1920, %v1921
  %v1923 = vrot.slane %v1922, 2
  %v1924 = vadd.f32 %v1922, %v1923
  %v1925 = vrot.slane %v1924, 1
  %v1926 = vadd.f32 %v1924, %v1925
  %v1927 = vsel %vm604, %v1570, 0.0
  %v1928 = vsel %vm604, %v1572, 0.0
  %v1929 = vadd.f32 %v1927, %v1928
  %v1930 = vsel %vm604, %v1574, 0.0
  %v1931 = vadd.f32 %v1929, %v1930
  %v1932 = vsel %vm604, %v1576, 0.0
  %v1933 = vadd.f32 %v1931, %v1932
  %v1934 = vsel %vm604, %v1578, 0.0
  %v1935 = vadd.f32 %v1933, %v1934
  %v1936 = vsel %vm604, %v1580, 0.0
  %v1937 = vadd.f32 %v1935, %v1936
  %vm1938 = vcmask 516096
  %v1939 = vsel %vm1938, %v1582, 0.0
  %v1940 = vadd.f32 %v1937, %v1939
  %v1941 = vrot.slane %v1940, 4
  %v1942 = vadd.f32 %v1940, %v1941
  %v1943 = vrot.slane %v1942, 2
  %v1944 = vadd.f32 %v1942, %v1943
  %v1945 = vrot.slane %v1944, 1
  %v1946 = vadd.f32 %v1944, %v1945
  %v1947 = vmul.f32 %v1569, %v1569
  %v1948 = vmul.f32 %v1570, %v1570
  %v1949 = vmul.f32 %v1571, %v1571
  %v1950 = vmul.f32 %v1572, %v1572
  %v1951 = vmul.f32 %v1573, %v1573
  %v1952 = vmul.f32 %v1574, %v1574
  %v1953 = vmul.f32 %v1575, %v1575
  %v1954 = vmul.f32 %v1576, %v1576
  %v1955 = vmul.f32 %v1577, %v1577
  %v1956 = vmul.f32 %v1578, %v1578
  %v1957 = vmul.f32 %v1579, %v1579
  %v1958 = vmul.f32 %v1580, %v1580
  %v1959 = vmul.f32 %v1581, %v1581
  %v1960 = vmul.f32 %v1582, %v1582
  %v1961 = vadd.f32 %v1947, %v1949
  %v1962 = vadd.f32 %v1961, %v1951
  %v1963 = vadd.f32 %v1962, %v1953
  %v1964 = vadd.f32 %v1963, %v1955
  %v1965 = vadd.f32 %v1964, %v1957
  %v1966 = vsel %vm994, %v1959, 0.0
  %v1967 = vadd.f32 %v1965, %v1966
  %v1968 = vrot.slane %v1967, 4
  %v1969 = vadd.f32 %v1967, %v1968
  %v1970 = vrot.slane %v1969, 2
  %v1971 = vadd.f32 %v1969, %v1970
  %v1972 = vrot.slane %v1971, 1
  %v1973 = vadd.f32 %v1971, %v1972
  %v1974 = vsel %vm604, %v1948, 0.0
  %v1975 = vsel %vm604, %v1950, 0.0
  %v1976 = vadd.f32 %v1974, %v1975
  %v1977 = vsel %vm604, %v1952, 0.0
  %v1978 = vadd.f32 %v1976, %v1977
  %v1979 = vsel %vm604, %v1954, 0.0
  %v1980 = vadd.f32 %v1978, %v1979
  %v1981 = vsel %vm604, %v1956, 0.0
  %v1982 = vadd.f32 %v1980, %v1981
  %v1983 = vsel %vm604, %v1958, 0.0
  %v1984 = vadd.f32 %v1982, %v1983
  %v1985 = vsel %vm1938, %v1960, 0.0
  %v1986 = vadd.f32 %v1984, %v1985
  %v1987 = vrot.slane %v1986, 4
  %v1988 = vadd.f32 %v1986, %v1987
  %v1989 = vrot.slane %v1988, 2
  %v1990 = vadd.f32 %v1988, %v1989
  %v1991 = vrot.slane %v1990, 1
  %v1992 = vadd.f32 %v1990, %v1991
  %v1993 = vadd.f32 %v1900, %v1902
  %v1994 = vadd.f32 %v1993, %v1904
  %v1995 = vadd.f32 %v1994, %v1906
  %v1996 = vadd.f32 %v1995, %v1908
  %v1997 = vadd.f32 %v1996, %v1910
  %v1998 = vsel %vm994, %v1912, 0.0
  %v1999 = vadd.f32 %v1997, %v1998
  %v2000 = vrot.slane %v1999, 4
  %v2001 = vadd.f32 %v1999, %v2000
  %v2002 = vrot.slane %v2001, 2
  %v2003 = vadd.f32 %v2001, %v2002
  %v2004 = vrot.slane %v2003, 1
  %v2005 = vadd.f32 %v2003, %v2004
  %v2006 = vsel %vm604, %v1901, 0.0
  %v2007 = vsel %vm604, %v1903, 0.0
  %v2008 = vadd.f32 %v2006, %v2007
  %v2009 = vsel %vm604, %v1905, 0.0
  %v2010 = vadd.f32 %v2008, %v2009
  %v2011 = vsel %vm604, %v1907, 0.0
  %v2012 = vadd.f32 %v2010, %v2011
  %v2013 = vsel %vm604, %v1909, 0.0
  %v2014 = vadd.f32 %v2012, %v2013
  %v2015 = vsel %vm604, %v1911, 0.0
  %v2016 = vadd.f32 %v2014, %v2015
  %v2017 = vsel %vm1938, %v1913, 0.0
  %v2018 = vadd.f32 %v2016, %v2017
  %v2019 = vrot.slane %v2018, 4
  %v2020 = vadd.f32 %v2018, %v2019
  %v2021 = vrot.slane %v2020, 2
  %v2022 = vadd.f32 %v2020, %v2021
  %v2023 = vrot.slane %v2022, 1
  %v2024 = vadd.f32 %v2022, %v2023
  %v2025 = vadd.f32 %v1926, %v2005
  %v2026 = vadd.f32 %v1946, %v2024
  %v2027 = vmul.f32 %v1900, %v1900
  %v2028 = vmul.f32 %v1901, %v1901
  %v2029 = vmul.f32 %v1902, %v1902
  %v2030 = vmul.f32 %v1903, %v1903
  %v2031 = vmul.f32 %v1904, %v1904
  %v2032 = vmul.f32 %v1905, %v1905
  %v2033 = vmul.f32 %v1906, %v1906
  %v2034 = vmul.f32 %v1907, %v1907
  %v2035 = vmul.f32 %v1908, %v1908
  %v2036 = vmul.f32 %v1909, %v1909
  %v2037 = vmul.f32 %v1910, %v1910
  %v2038 = vmul.f32 %v1911, %v1911
  %v2039 = vmul.f32 %v1912, %v1912
  %v2040 = vmul.f32 %v1913, %v1913
  %v2041 = vadd.f32 %v2027, %v2029
  %v2042 = vadd.f32 %v2041, %v2031
  %v2043 = vadd.f32 %v2042, %v2033
  %v2044 = vadd.f32 %v2043, %v2035
  %v2045 = vadd.f32 %v2044, %v2037
  %v2046 = vsel %vm994, %v2039, 0.0
  %v2047 = vadd.f32 %v2045, %v2046
  %v2048 = vrot.slane %v2047, 4
  %v2049 = vadd.f32 %v2047, %v2048
  %v2050 = vrot.slane %v2049, 2
  %v2051 = vadd.f32 %v2049, %v2050
  %v2052 = vrot.slane %v2051, 1
  %v2053 = vadd.f32 %v2051, %v2052
  %v2054 = vsel %vm604, %v2028, 0.0
  %v2055 = vsel %vm604, %v2030, 0.0
  %v2056 = vadd.f32 %v2054, %v2055
  %v2057 = vsel %vm604, %v2032, 0.0
  %v2058 = vadd.f32 %v2056, %v2057
  %v2059 = vsel %vm604, %v2034, 0.0
  %v2060 = vadd.f32 %v2058, %v2059
  %v2061 = vsel %vm604, %v2036, 0.0
  %v2062 = vadd.f32 %v2060, %v2061
  %v2063 = vsel %vm604, %v2038, 0.0
  %v2064 = vadd.f32 %v2062, %v2063
  %v2065 = vsel %vm1938, %v2040, 0.0
  %v2066 = vadd.f32 %v2064, %v2065
  %v2067 = vrot.slane %v2066, 4
  %v2068 = vadd.f32 %v2066, %v2067
  %v2069 = vrot.slane %v2068, 2
  %v2070 = vadd.f32 %v2068, %v2069
  %v2071 = vrot.slane %v2070, 1
  %v2072 = vadd.f32 %v2070, %v2071
  %v2073 = vadd.f32 %v1973, %v2053
  %v2074 = vadd.f32 %v1992, %v2072
  %v2075 = vmul.f32 %v2025, 0.010204081
  %v2076 = vmul.f32 %v2026, 0.010204081
  %v2077 = vmul.f32 %v2073, 0.010204081
  %v2078 = vmul.f32 %v2074, 0.010204081
  %v2079 = vmul.f32 %v2075, %v2075
  %v2080 = vmul.f32 %v2076, %v2076
  %v2081 = vsub.f32 %v2077, %v2079
  %v2082 = vsub.f32 %v2078, %v2080
  %v2083 = vmax.f32 %v2081, 0.0
  %v2084 = vmax.f32 %v2082, 0.0
  %v2085 = vadd.f32 %v2083, 1e-05
  %v2086 = vadd.f32 %v2084, 1e-05
  %v2087 = vrsqrt.pop %v2085
  %v2088 = vmul.f32 %v2087, %v2085
  %v2089 = vmul.f32 %v2088, %v2087
  %v2090 = vmul.f32 0.5, %v2089
  %v2091 = vsub.f32 1.5, %v2090
  %v2092 = vmul.f32 %v2087, %v2091
  %vm2093 = vweird.f32 %v2085
  %vm2094 = vweird.f32 %v2087
  %vm2095 = vmor %vm2093, %vm2094
  %v2096 = vsel %vm2095, %v2087, %v2092
  %v2097 = vrsqrt.pop %v2086
  %v2098 = vmul.f32 %v2097, %v2086
  %v2099 = vmul.f32 %v2098, %v2097
  %v2100 = vmul.f32 0.5, %v2099
  %v2101 = vsub.f32 1.5, %v2100
  %v2102 = vmul.f32 %v2097, %v2101
  %vm2103 = vweird.f32 %v2086
  %vm2104 = vweird.f32 %v2097
  %vm2105 = vmor %vm2103, %vm2104
  %v2106 = vsel %vm2105, %v2097, %v2102
  %v2109 = vrot.slane %v2106, 7
  %v2110 = vsel %vm994, %v2096, %v2109
  %v2112 = vmul.f32 %v1194, %v2110
  %v2114 = vperm.slane %v2112, 0
  %v2115 = vperm.slane %v2112, 1
  %v2118 = vmul.f32 %v2075, %v2114
  %v2119 = vmul.f32 %v2076, %v2115
  %v2122 = vrot.slane %v2119, 7
  %v2123 = vsel %vm994, %v2118, %v2122
  %v2125 = vsub.f32 %v1196, %v2123
  %v2126 = vmul.f32 %v1569, %v2114
  %v2127 = vmul.f32 %v1570, %v2115
  %v2128 = vmul.f32 %v1571, %v2114
  %v2129 = vmul.f32 %v1572, %v2115
  %v2130 = vmul.f32 %v1573, %v2114
  %v2131 = vmul.f32 %v1574, %v2115
  %v2132 = vmul.f32 %v1575, %v2114
  %v2133 = vmul.f32 %v1576, %v2115
  %v2134 = vmul.f32 %v1577, %v2114
  %v2135 = vmul.f32 %v1578, %v2115
  %v2136 = vmul.f32 %v1579, %v2114
  %v2137 = vmul.f32 %v1580, %v2115
  %v2138 = vmul.f32 %v1581, %v2114
  %v2139 = vmul.f32 %v1582, %v2115
  %v2141 = vperm.slane %v2125, 0
  %v2142 = vperm.slane %v2125, 1
  %v2145 = vadd.f32 %v2126, %v2141
  %v2146 = vadd.f32 %v2127, %v2142
  %v2147 = vadd.f32 %v2128, %v2141
  %v2148 = vadd.f32 %v2129, %v2142
  %v2149 = vadd.f32 %v2130, %v2141
  %v2150 = vadd.f32 %v2131, %v2142
  %v2151 = vadd.f32 %v2132, %v2141
  %v2152 = vadd.f32 %v2133, %v2142
  %v2153 = vadd.f32 %v2134, %v2141
  %v2154 = vadd.f32 %v2135, %v2142
  %v2155 = vadd.f32 %v2136, %v2141
  %v2156 = vadd.f32 %v2137, %v2142
  %v2157 = vadd.f32 %v2138, %v2141
  %v2158 = vadd.f32 %v2139, %v2142
  %v2159 = vmax.f32 %v2145, 0.0
  %v2160 = vmax.f32 %v2146, 0.0
  %v2161 = vmax.f32 %v2147, 0.0
  %v2162 = vmax.f32 %v2148, 0.0
  %v2163 = vmax.f32 %v2149, 0.0
  %v2164 = vmax.f32 %v2150, 0.0
  %v2165 = vmax.f32 %v2151, 0.0
  %v2166 = vmax.f32 %v2152, 0.0
  %v2167 = vmax.f32 %v2153, 0.0
  %v2168 = vmax.f32 %v2154, 0.0
  %v2169 = vmax.f32 %v2155, 0.0
  %v2170 = vmax.f32 %v2156, 0.0
  %v2171 = vmax.f32 %v2157, 0.0
  %v2172 = vmax.f32 %v2158, 0.0
  %v2173 = vmul.f32 %v1900, %v2114
  %v2174 = vmul.f32 %v1901, %v2115
  %v2175 = vmul.f32 %v1902, %v2114
  %v2176 = vmul.f32 %v1903, %v2115
  %v2177 = vmul.f32 %v1904, %v2114
  %v2178 = vmul.f32 %v1905, %v2115
  %v2179 = vmul.f32 %v1906, %v2114
  %v2180 = vmul.f32 %v1907, %v2115
  %v2181 = vmul.f32 %v1908, %v2114
  %v2182 = vmul.f32 %v1909, %v2115
  %v2183 = vmul.f32 %v1910, %v2114
  %v2184 = vmul.f32 %v1911, %v2115
  %v2185 = vmul.f32 %v1912, %v2114
  %v2186 = vmul.f32 %v1913, %v2115
  %v2187 = vadd.f32 %v2173, %v2141
  %v2188 = vadd.f32 %v2174, %v2142
  %v2189 = vadd.f32 %v2175, %v2141
  %v2190 = vadd.f32 %v2176, %v2142
  %v2191 = vadd.f32 %v2177, %v2141
  %v2192 = vadd.f32 %v2178, %v2142
  %v2193 = vadd.f32 %v2179, %v2141
  %v2194 = vadd.f32 %v2180, %v2142
  %v2195 = vadd.f32 %v2181, %v2141
  %v2196 = vadd.f32 %v2182, %v2142
  %v2197 = vadd.f32 %v2183, %v2141
  %v2198 = vadd.f32 %v2184, %v2142
  %v2199 = vadd.f32 %v2185, %v2141
  %v2200 = vadd.f32 %v2186, %v2142
  %v2201 = vmax.f32 %v2187, 0.0
  %v2202 = vmax.f32 %v2188, 0.0
  %v2203 = vmax.f32 %v2189, 0.0
  %v2204 = vmax.f32 %v2190, 0.0
  %v2205 = vmax.f32 %v2191, 0.0
  %v2206 = vmax.f32 %v2192, 0.0
  %v2207 = vmax.f32 %v2193, 0.0
  %v2208 = vmax.f32 %v2194, 0.0
  %v2209 = vmax.f32 %v2195, 0.0
  %v2210 = vmax.f32 %v2196, 0.0
  %v2211 = vmax.f32 %v2197, 0.0
  %v2212 = vmax.f32 %v2198, 0.0
  %v2213 = vmax.f32 %v2199, 0.0
  %v2214 = vmax.f32 %v2200, 0.0
  %v2227 = vrot.slane %v2159, 1
  %v2228 = vrot.slane %v2161, 1
  %v2229 = vsel %vm210, %v2227, %v2228
  %v2230 = vrot.slane %v2160, 1
  %v2231 = vrot.slane %v2162, 1
  %v2232 = vsel %vm210, %v2230, %v2231
  %v2233 = vrot.slane %v2163, 1
  %v2234 = vsel %vm210, %v2228, %v2233
  %v2235 = vrot.slane %v2164, 1
  %v2236 = vsel %vm210, %v2231, %v2235
  %v2237 = vrot.slane %v2165, 1
  %v2238 = vsel %vm210, %v2233, %v2237
  %v2239 = vrot.slane %v2166, 1
  %v2240 = vsel %vm210, %v2235, %v2239
  %v2241 = vrot.slane %v2167, 1
  %v2242 = vsel %vm210, %v2237, %v2241
  %v2243 = vrot.slane %v2168, 1
  %v2244 = vsel %vm210, %v2239, %v2243
  %v2245 = vrot.slane %v2169, 1
  %v2246 = vsel %vm210, %v2241, %v2245
  %v2247 = vrot.slane %v2170, 1
  %v2248 = vsel %vm210, %v2243, %v2247
  %v2261 = vmax.f32 %v2159, %v2229
  %v2262 = vmax.f32 %v2160, %v2232
  %v2263 = vmax.f32 %v2161, %v2234
  %v2264 = vmax.f32 %v2162, %v2236
  %v2265 = vmax.f32 %v2163, %v2238
  %v2266 = vmax.f32 %v2164, %v2240
  %v2267 = vmax.f32 %v2165, %v2242
  %v2268 = vmax.f32 %v2166, %v2244
  %v2269 = vmax.f32 %v2167, %v2246
  %v2270 = vmax.f32 %v2168, %v2248
  %v2271 = vmax.f32 %v2169, %v2245
  %v2272 = vmax.f32 %v2170, %v2247
  %v2275 = vrot.slane %v2159, 2
  %v2276 = vrot.slane %v2161, 2
  %v2277 = vsel %vm293, %v2275, %v2276
  %v2278 = vrot.slane %v2160, 2
  %v2279 = vrot.slane %v2162, 2
  %v2280 = vsel %vm293, %v2278, %v2279
  %v2281 = vrot.slane %v2163, 2
  %v2282 = vsel %vm293, %v2276, %v2281
  %v2283 = vrot.slane %v2164, 2
  %v2284 = vsel %vm293, %v2279, %v2283
  %v2285 = vrot.slane %v2165, 2
  %v2286 = vsel %vm293, %v2281, %v2285
  %v2287 = vrot.slane %v2166, 2
  %v2288 = vsel %vm293, %v2283, %v2287
  %v2289 = vrot.slane %v2167, 2
  %v2290 = vsel %vm293, %v2285, %v2289
  %v2291 = vrot.slane %v2168, 2
  %v2292 = vsel %vm293, %v2287, %v2291
  %v2293 = vrot.slane %v2169, 2
  %v2294 = vsel %vm293, %v2289, %v2293
  %v2295 = vrot.slane %v2170, 2
  %v2296 = vsel %vm293, %v2291, %v2295
  %v2297 = vrot.slane %v2171, 2
  %v2298 = vsel %vm293, %v2293, %v2297
  %v2299 = vrot.slane %v2172, 2
  %v2300 = vsel %vm293, %v2295, %v2299
  %v2313 = vmax.f32 %v2261, %v2277
  %v2314 = vmax.f32 %v2262, %v2280
  %v2315 = vmax.f32 %v2263, %v2282
  %v2316 = vmax.f32 %v2264, %v2284
  %v2317 = vmax.f32 %v2265, %v2286
  %v2318 = vmax.f32 %v2266, %v2288
  %v2319 = vmax.f32 %v2267, %v2290
  %v2320 = vmax.f32 %v2268, %v2292
  %v2321 = vmax.f32 %v2269, %v2294
  %v2322 = vmax.f32 %v2270, %v2296
  %v2323 = vmax.f32 %v2271, %v2298
  %v2324 = vmax.f32 %v2272, %v2300
  %vm2325 = vcmask 384000
  %v2327 = vsel %vm2325, %v57, 0
  %v2330 = vsel %vm2325, %v58, 0
  %v2333 = vsel %vm2325, %v59, 0
  %v2336 = vsel %vm2325, %v60, 0
  %v2339 = vsel %vm210, %v2323, 0
  %v2342 = vsel %vm210, %v2324, 0
  %2344 = vmatpush.msra.mxu0 0.0
  %2345 = vmatpush.msra.mxu0 0.0
  %2346 = vmatpush.msra.mxu0 0.0
  %2347 = vmatpush.msra.mxu0 0.0
  %2348 = vmatpush.msra.mxu0 0.0
  %2349 = vmatpush.msra.mxu0 0.0
  %2350 = vmatpush.msra.mxu0 0.0
  %2351 = vmatpush.msra.mxu0 0.0
  %2352 = vmatpush.msra.mxu0 0.0
  %2353 = vmatpush.msra.mxu0 0.0
  %2354 = vmatpush.msra.mxu0 %v2339
  %2355 = vmatpush.msra.mxu0 %v2321
  %2356 = vmatpush.msra.mxu0 %v2319
  %2357 = vmatpush.msra.mxu0 %v2317
  %2358 = vmatpush.msra.mxu0 %v2315
  %2359 = vmatpush.msra.mxu0 %v2313
  %2360 = vmatmul.f32.gmra.mxu0 %v2327
  %v2361 = vpop.f32.mrf.mxu0
  %v2362 = vadd.f32 0.0, %v2361
  %2363 = vmatmul.f32.gmra.mxu0 %v2330
  %v2364 = vpop.f32.mrf.mxu0
  %v2365 = vadd.f32 0.0, %v2364
  %2366 = vmatmul.f32.gmra.mxu0 %v2333
  %v2367 = vpop.f32.mrf.mxu0
  %v2368 = vadd.f32 0.0, %v2367
  %2369 = vmatmul.f32.gmra.mxu0 %v2336
  %v2370 = vpop.f32.mrf.mxu0
  %v2371 = vadd.f32 0.0, %v2370
  %2372 = vdwg.mxu0
  %2373 = vmatpush.msra.mxu0 0.0
  %2374 = vmatpush.msra.mxu0 0.0
  %2375 = vmatpush.msra.mxu0 0.0
  %2376 = vmatpush.msra.mxu0 0.0
  %2377 = vmatpush.msra.mxu0 0.0
  %2378 = vmatpush.msra.mxu0 0.0
  %2379 = vmatpush.msra.mxu0 0.0
  %2380 = vmatpush.msra.mxu0 0.0
  %2381 = vmatpush.msra.mxu0 0.0
  %2382 = vmatpush.msra.mxu0 0.0
  %2383 = vmatpush.msra.mxu0 %v2342
  %2384 = vmatpush.msra.mxu0 %v2322
  %2385 = vmatpush.msra.mxu0 %v2320
  %2386 = vmatpush.msra.mxu0 %v2318
  %2387 = vmatpush.msra.mxu0 %v2316
  %2388 = vmatpush.msra.mxu0 %v2314
  %2389 = vmatmul.f32.gmra.mxu0 %v2327
  %v2390 = vpop.f32.mrf.mxu0
  %v2391 = vadd.f32 0.0, %v2390
  %2392 = vmatmul.f32.gmra.mxu0 %v2330
  %v2393 = vpop.f32.mrf.mxu0
  %v2394 = vadd.f32 0.0, %v2393
  %2395 = vmatmul.f32.gmra.mxu0 %v2333
  %v2396 = vpop.f32.mrf.mxu0
  %v2397 = vadd.f32 0.0, %v2396
  %2398 = vmatmul.f32.gmra.mxu0 %v2336
  %v2399 = vpop.f32.mrf.mxu0
  %v2400 = vadd.f32 0.0, %v2399
  %2401 = vdwg.mxu0
  %v2414 = vrot.slane %v2201, 1
  %v2415 = vrot.slane %v2203, 1
  %v2416 = vsel %vm210, %v2414, %v2415
  %v2417 = vrot.slane %v2202, 1
  %v2418 = vrot.slane %v2204, 1
  %v2419 = vsel %vm210, %v2417, %v2418
  %v2420 = vrot.slane %v2205, 1
  %v2421 = vsel %vm210, %v2415, %v2420
  %v2422 = vrot.slane %v2206, 1
  %v2423 = vsel %vm210, %v2418, %v2422
  %v2424 = vrot.slane %v2207, 1
  %v2425 = vsel %vm210, %v2420, %v2424
  %v2426 = vrot.slane %v2208, 1
  %v2427 = vsel %vm210, %v2422, %v2426
  %v2428 = vrot.slane %v2209, 1
  %v2429 = vsel %vm210, %v2424, %v2428
  %v2430 = vrot.slane %v2210, 1
  %v2431 = vsel %vm210, %v2426, %v2430
  %v2432 = vrot.slane %v2211, 1
  %v2433 = vsel %vm210, %v2428, %v2432
  %v2434 = vrot.slane %v2212, 1
  %v2435 = vsel %vm210, %v2430, %v2434
  %v2448 = vmax.f32 %v2201, %v2416
  %v2449 = vmax.f32 %v2202, %v2419
  %v2450 = vmax.f32 %v2203, %v2421
  %v2451 = vmax.f32 %v2204, %v2423
  %v2452 = vmax.f32 %v2205, %v2425
  %v2453 = vmax.f32 %v2206, %v2427
  %v2454 = vmax.f32 %v2207, %v2429
  %v2455 = vmax.f32 %v2208, %v2431
  %v2456 = vmax.f32 %v2209, %v2433
  %v2457 = vmax.f32 %v2210, %v2435
  %v2458 = vmax.f32 %v2211, %v2432
  %v2459 = vmax.f32 %v2212, %v2434
  %v2462 = vrot.slane %v2201, 2
  %v2463 = vrot.slane %v2203, 2
  %v2464 = vsel %vm293, %v2462, %v2463
  %v2465 = vrot.slane %v2202, 2
  %v2466 = vrot.slane %v2204, 2
  %v2467 = vsel %vm293, %v2465, %v2466
  %v2468 = vrot.slane %v2205, 2
  %v2469 = vsel %vm293, %v2463, %v2468
  %v2470 = vrot.slane %v2206, 2
  %v2471 = vsel %vm293, %v2466, %v2470
  %v2472 = vrot.slane %v2207, 2
  %v2473 = vsel %vm293, %v2468, %v2472
  %v2474 = vrot.slane %v2208, 2
  %v2475 = vsel %vm293, %v2470, %v2474
  %v2476 = vrot.slane %v2209, 2
  %v2477 = vsel %vm293, %v2472, %v2476
  %v2478 = vrot.slane %v2210, 2
  %v2479 = vsel %vm293, %v2474, %v2478
  %v2480 = vrot.slane %v2211, 2
  %v2481 = vsel %vm293, %v2476, %v2480
  %v2482 = vrot.slane %v2212, 2
  %v2483 = vsel %vm293, %v2478, %v2482
  %v2484 = vrot.slane %v2213, 2
  %v2485 = vsel %vm293, %v2480, %v2484
  %v2486 = vrot.slane %v2214, 2
  %v2487 = vsel %vm293, %v2482, %v2486
  %v2500 = vmax.f32 %v2448, %v2464
  %v2501 = vmax.f32 %v2449, %v2467
  %v2502 = vmax.f32 %v2450, %v2469
  %v2503 = vmax.f32 %v2451, %v2471
  %v2504 = vmax.f32 %v2452, %v2473
  %v2505 = vmax.f32 %v2453, %v2475
  %v2506 = vmax.f32 %v2454, %v2477
  %v2507 = vmax.f32 %v2455, %v2479
  %v2508 = vmax.f32 %v2456, %v2481
  %v2509 = vmax.f32 %v2457, %v2483
  %v2510 = vmax.f32 %v2458, %v2485
  %v2511 = vmax.f32 %v2459, %v2487
  %v2513 = vsel %vm210, %v2510, 0
  %v2516 = vsel %vm210, %v2511, 0
  %2518 = vmatpush.msra.mxu0 0.0
  %2519 = vmatpush.msra.mxu0 0.0
  %2520 = vmatpush.msra.mxu0 0.0
  %2521 = vmatpush.msra.mxu0 0.0
  %2522 = vmatpush.msra.mxu0 0.0
  %2523 = vmatpush.msra.mxu0 0.0
  %2524 = vmatpush.msra.mxu0 0.0
  %2525 = vmatpush.msra.mxu0 0.0
  %2526 = vmatpush.msra.mxu0 0.0
  %2527 = vmatpush.msra.mxu0 0.0
  %2528 = vmatpush.msra.mxu0 %v2513
  %2529 = vmatpush.msra.mxu0 %v2508
  %2530 = vmatpush.msra.mxu0 %v2506
  %2531 = vmatpush.msra.mxu0 %v2504
  %2532 = vmatpush.msra.mxu0 %v2502
  %2533 = vmatpush.msra.mxu0 %v2500
  %2534 = vmatmul.f32.gmra.mxu0 %v2327
  %v2535 = vpop.f32.mrf.mxu0
  %v2536 = vadd.f32 0.0, %v2535
  %2537 = vmatmul.f32.gmra.mxu0 %v2330
  %v2538 = vpop.f32.mrf.mxu0
  %v2539 = vadd.f32 0.0, %v2538
  %2540 = vmatmul.f32.gmra.mxu0 %v2333
  %v2541 = vpop.f32.mrf.mxu0
  %v2542 = vadd.f32 0.0, %v2541
  %2543 = vmatmul.f32.gmra.mxu0 %v2336
  %v2544 = vpop.f32.mrf.mxu0
  %v2545 = vadd.f32 0.0, %v2544
  %2546 = vdwg.mxu0
  %2547 = vmatpush.msra.mxu0 0.0
  %2548 = vmatpush.msra.mxu0 0.0
  %2549 = vmatpush.msra.mxu0 0.0
  %2550 = vmatpush.msra.mxu0 0.0
  %2551 = vmatpush.msra.mxu0 0.0
  %2552 = vmatpush.msra.mxu0 0.0
  %2553 = vmatpush.msra.mxu0 0.0
  %2554 = vmatpush.msra.mxu0 0.0
  %2555 = vmatpush.msra.mxu0 0.0
  %2556 = vmatpush.msra.mxu0 0.0
  %2557 = vmatpush.msra.mxu0 %v2516
  %2558 = vmatpush.msra.mxu0 %v2509
  %2559 = vmatpush.msra.mxu0 %v2507
  %2560 = vmatpush.msra.mxu0 %v2505
  %2561 = vmatpush.msra.mxu0 %v2503
  %2562 = vmatpush.msra.mxu0 %v2501
  %2563 = vmatmul.f32.gmra.mxu0 %v2327
  %v2564 = vpop.f32.mrf.mxu0
  %v2565 = vadd.f32 0.0, %v2564
  %2566 = vmatmul.f32.gmra.mxu0 %v2330
  %v2567 = vpop.f32.mrf.mxu0
  %v2568 = vadd.f32 0.0, %v2567
  %2569 = vmatmul.f32.gmra.mxu0 %v2333
  %v2570 = vpop.f32.mrf.mxu0
  %v2571 = vadd.f32 0.0, %v2570
  %2572 = vmatmul.f32.gmra.mxu0 %v2336
  %v2573 = vpop.f32.mrf.mxu0
  %v2574 = vadd.f32 0.0, %v2573
  %2575 = vdwg.mxu0
  %v2576 = vld [vmem:[%s6] ss:$4 sm:$0x7]
  %s2577 = scalar_lea.vmem %s6, 1
  %v2578 = vld [vmem:[%s2577] ss:$4 sm:$0x7]
  %s2579 = scalar_lea.vmem %s6, 2
  %v2580 = vld [vmem:[%s2579] ss:$4 sm:$0x7]
  %v2581 = vld [vmem:[%s5] sm:$0xff]
  %v2582 = vld [vmem:[%s5 + $0x8] sm:$0xff]
  %v2583 = vld [vmem:[%s5 + $0x10] sm:$0xff]
  %v2584 = vld [vmem:[%s5 + $0x18] sm:$0xff]
  %v2585 = vld [vmem:[%s5 + $0x20] sm:$0xff]
  %v2586 = vld [vmem:[%s5 + $0x28] sm:$0xff]
  %v2587 = vld [vmem:[%s5 + $0x30] sm:$0xff]
  %v2588 = vld [vmem:[%s5 + $0x38] sm:$0xff]
  %v2589 = vld [vmem:[%s5 + $0x40] sm:$0xff]
  %v2590 = vld [vmem:[%s5 + $0x48] sm:$0xff]
  %v2591 = vld [vmem:[%s5 + $0x50] sm:$0xff]
  %v2592 = vld [vmem:[%s5 + $0x58] sm:$0xff]
  %v2593 = vld [vmem:[%s5 + $0x60] sm:$0xff]
  %v2594 = vld [vmem:[%s5 + $0x68] sm:$0xff]
  %v2595 = vld [vmem:[%s5 + $0x70] sm:$0xff]
  %v2596 = vld [vmem:[%s5 + $0x78] sm:$0xff]
  %v2597 = vld [vmem:[%s5 + $0x80] sm:$0xff]
  %v2598 = vld [vmem:[%s5 + $0x88] sm:$0xff]
  %v2599 = vld [vmem:[%s5 + $0x90] sm:$0xff]
  %v2600 = vld [vmem:[%s5 + $0x98] sm:$0xff]
  %v2601 = vld [vmem:[%s5 + $0xa0] sm:$0xff]
  %v2602 = vld [vmem:[%s5 + $0xa8] sm:$0xff]
  %v2603 = vld [vmem:[%s5 + $0xb0] sm:$0xff]
  %v2604 = vld [vmem:[%s5 + $0xb8] sm:$0xff]
  %v2605 = vld [vmem:[%s5 + $0xc0] sm:$0xff]
  %v2606 = vld [vmem:[%s5 + $0xc8] sm:$0xff]
  %v2607 = vld [vmem:[%s5 + $0xd0] sm:$0xff]
  %v2608 = vld [vmem:[%s5 + $0xd8] sm:$0xff]
  %v2609 = vld [vmem:[%s5 + $0xe0] sm:$0xff]
  %v2610 = vld [vmem:[%s5 + $0xe8] sm:$0xff]
  %v2611 = vld [vmem:[%s5 + $0xf0] sm:$0xff]
  %v2612 = vld [vmem:[%s5 + $0xf8] sm:$0xff]
  %v2613 = vld [vmem:[%s5 + $0x100] sm:$0xff]
  %v2614 = vld [vmem:[%s5 + $0x108] sm:$0xff]
  %v2615 = vld [vmem:[%s5 + $0x110] sm:$0xff]
  %v2616 = vld [vmem:[%s5 + $0x118] sm:$0xff]
  %v2617 = vld [vmem:[%s5 + $0x120] sm:$0xff]
  %v2618 = vld [vmem:[%s5 + $0x128] sm:$0xff]
  %v2619 = vld [vmem:[%s5 + $0x130] sm:$0xff]
  %v2620 = vld [vmem:[%s5 + $0x138] sm:$0xff]
  %v2621 = vld [vmem:[%s5 + $0x140] sm:$0xff]
  %v2622 = vld [vmem:[%s5 + $0x148] sm:$0xff]
  %v2623 = vld [vmem:[%s5 + $0x150] sm:$0xff]
  %v2624 = vld [vmem:[%s5 + $0x158] sm:$0xff]
  %v2625 = vld [vmem:[%s5 + $0x160] sm:$0xff]
  %v2626 = vld [vmem:[%s5 + $0x168] sm:$0xff]
  %v2627 = vld [vmem:[%s5 + $0x170] sm:$0xff]
  %v2628 = vld [vmem:[%s5 + $0x178] sm:$0xff]
  %v2629 = vld [vmem:[%s5 + $0x180] sm:$0xff]
  %v2630 = vld [vmem:[%s5 + $0x188] sm:$0xff]
  %v2631 = vld [vmem:[%s5 + $0x190] sm:$0xff]
  %v2632 = vld [vmem:[%s5 + $0x198] sm:$0xff]
  %v2633 = vld [vmem:[%s5 + $0x1a0] sm:$0xff]
  %v2634 = vld [vmem:[%s5 + $0x1a8] sm:$0xff]
  %v2635 = vld [vmem:[%s5 + $0x1b0] sm:$0xff]
  %v2636 = vld [vmem:[%s5 + $0x1b8] sm:$0xff]
  %v2637 = vld [vmem:[%s5 + $0x1c0] sm:$0xff]
  %v2638 = vld [vmem:[%s5 + $0x1c8] sm:$0xff]
  %v2639 = vld [vmem:[%s5 + $0x1d0] sm:$0xff]
  %v2640 = vld [vmem:[%s5 + $0x1d8] sm:$0xff]
  %v2641 = vld [vmem:[%s5 + $0x1e0] sm:$0xff]
  %v2642 = vld [vmem:[%s5 + $0x1e8] sm:$0xff]
  %v2643 = vld [vmem:[%s5 + $0x1f0] sm:$0xff]
  %v2644 = vld [vmem:[%s5 + $0x1f8] sm:$0xff]
  %v2645 = vld [vmem:[%s5 + $0x200] sm:$0xff]
  %v2646 = vld [vmem:[%s5 + $0x208] sm:$0xff]
  %v2647 = vld [vmem:[%s5 + $0x210] sm:$0xff]
  %v2648 = vld [vmem:[%s5 + $0x218] sm:$0xff]
  %v2649 = vld [vmem:[%s5 + $0x220] sm:$0xff]
  %v2650 = vld [vmem:[%s5 + $0x228] sm:$0xff]
  %v2651 = vld [vmem:[%s5 + $0x230] sm:$0xff]
  %v2652 = vld [vmem:[%s5 + $0x238] sm:$0xff]
  %s2653 = scalar_lea.vmem %s5, 576
  %v2654 = vld [vmem:[%s2653] sm:$0xff]
  %v2655 = vld [vmem:[%s2653 + $0x8] sm:$0xff]
  %v2656 = vld [vmem:[%s2653 + $0x10] sm:$0xff]
  %v2657 = vld [vmem:[%s2653 + $0x18] sm:$0xff]
  %v2658 = vld [vmem:[%s2653 + $0x20] sm:$0xff]
  %v2659 = vld [vmem:[%s2653 + $0x28] sm:$0xff]
  %v2660 = vld [vmem:[%s2653 + $0x30] sm:$0xff]
  %v2661 = vld [vmem:[%s2653 + $0x38] sm:$0xff]
  %v2662 = vld [vmem:[%s2653 + $0x40] sm:$0xff]
  %v2663 = vld [vmem:[%s2653 + $0x48] sm:$0xff]
  %v2664 = vld [vmem:[%s2653 + $0x50] sm:$0xff]
  %v2665 = vld [vmem:[%s2653 + $0x58] sm:$0xff]
  %v2666 = vld [vmem:[%s2653 + $0x60] sm:$0xff]
  %v2667 = vld [vmem:[%s2653 + $0x68] sm:$0xff]
  %v2668 = vld [vmem:[%s2653 + $0x70] sm:$0xff]
  %v2669 = vld [vmem:[%s2653 + $0x78] sm:$0xff]
  %v2670 = vld [vmem:[%s2653 + $0x80] sm:$0xff]
  %v2671 = vld [vmem:[%s2653 + $0x88] sm:$0xff]
  %v2672 = vld [vmem:[%s2653 + $0x90] sm:$0xff]
  %v2673 = vld [vmem:[%s2653 + $0x98] sm:$0xff]
  %v2674 = vld [vmem:[%s2653 + $0xa0] sm:$0xff]
  %v2675 = vld [vmem:[%s2653 + $0xa8] sm:$0xff]
  %v2676 = vld [vmem:[%s2653 + $0xb0] sm:$0xff]
  %v2677 = vld [vmem:[%s2653 + $0xb8] sm:$0xff]
  %v2678 = vld [vmem:[%s2653 + $0xc0] sm:$0xff]
  %v2679 = vld [vmem:[%s2653 + $0xc8] sm:$0xff]
  %v2680 = vld [vmem:[%s2653 + $0xd0] sm:$0xff]
  %v2681 = vld [vmem:[%s2653 + $0xd8] sm:$0xff]
  %v2682 = vld [vmem:[%s2653 + $0xe0] sm:$0xff]
  %v2683 = vld [vmem:[%s2653 + $0xe8] sm:$0xff]
  %v2684 = vld [vmem:[%s2653 + $0xf0] sm:$0xff]
  %v2685 = vld [vmem:[%s2653 + $0xf8] sm:$0xff]
  %v2686 = vld [vmem:[%s2653 + $0x100] sm:$0xff]
  %v2687 = vld [vmem:[%s2653 + $0x108] sm:$0xff]
  %v2688 = vld [vmem:[%s2653 + $0x110] sm:$0xff]
  %v2689 = vld [vmem:[%s2653 + $0x118] sm:$0xff]
  %v2690 = vld [vmem:[%s2653 + $0x120] sm:$0xff]
  %v2691 = vld [vmem:[%s2653 + $0x128] sm:$0xff]
  %v2692 = vld [vmem:[%s2653 + $0x130] sm:$0xff]
  %v2693 = vld [vmem:[%s2653 + $0x138] sm:$0xff]
  %v2694 = vld [vmem:[%s2653 + $0x140] sm:$0xff]
  %v2695 = vld [vmem:[%s2653 + $0x148] sm:$0xff]
  %v2696 = vld [vmem:[%s2653 + $0x150] sm:$0xff]
  %v2697 = vld [vmem:[%s2653 + $0x158] sm:$0xff]
  %v2698 = vld [vmem:[%s2653 + $0x160] sm:$0xff]
  %v2699 = vld [vmem:[%s2653 + $0x168] sm:$0xff]
  %v2700 = vld [vmem:[%s2653 + $0x170] sm:$0xff]
  %v2701 = vld [vmem:[%s2653 + $0x178] sm:$0xff]
  %v2702 = vld [vmem:[%s2653 + $0x180] sm:$0xff]
  %v2703 = vld [vmem:[%s2653 + $0x188] sm:$0xff]
  %v2704 = vld [vmem:[%s2653 + $0x190] sm:$0xff]
  %v2705 = vld [vmem:[%s2653 + $0x198] sm:$0xff]
  %v2706 = vld [vmem:[%s2653 + $0x1a0] sm:$0xff]
  %v2707 = vld [vmem:[%s2653 + $0x1a8] sm:$0xff]
  %v2708 = vld [vmem:[%s2653 + $0x1b0] sm:$0xff]
  %v2709 = vld [vmem:[%s2653 + $0x1b8] sm:$0xff]
  %v2710 = vld [vmem:[%s2653 + $0x1c0] sm:$0xff]
  %v2711 = vld [vmem:[%s2653 + $0x1c8] sm:$0xff]
  %v2712 = vld [vmem:[%s2653 + $0x1d0] sm:$0xff]
  %v2713 = vld [vmem:[%s2653 + $0x1d8] sm:$0xff]
  %v2714 = vld [vmem:[%s2653 + $0x1e0] sm:$0xff]
  %v2715 = vld [vmem:[%s2653 + $0x1e8] sm:$0xff]
  %v2716 = vld [vmem:[%s2653 + $0x1f0] sm:$0xff]
  %v2717 = vld [vmem:[%s2653 + $0x1f8] sm:$0xff]
  %v2718 = vld [vmem:[%s2653 + $0x200] sm:$0xff]
  %v2719 = vld [vmem:[%s2653 + $0x208] sm:$0xff]
  %v2720 = vld [vmem:[%s2653 + $0x210] sm:$0xff]
  %v2721 = vld [vmem:[%s2653 + $0x218] sm:$0xff]
  %v2722 = vld [vmem:[%s2653 + $0x220] sm:$0xff]
  %v2723 = vld [vmem:[%s2653 + $0x228] sm:$0xff]
  %v2724 = vld [vmem:[%s2653 + $0x230] sm:$0xff]
  %v2725 = vld [vmem:[%s2653 + $0x238] sm:$0xff]
  %v2734 = vrot.slane %v2362, 1
  %v2735 = vrot.slane %v2365, 1
  %v2736 = vsel %vm210, %v2734, %v2735
  %v2737 = vrot.slane %v2391, 1
  %v2738 = vrot.slane %v2394, 1
  %v2739 = vsel %vm210, %v2737, %v2738
  %v2740 = vrot.slane %v2368, 1
  %v2741 = vsel %vm210, %v2735, %v2740
  %v2742 = vrot.slane %v2397, 1
  %v2743 = vsel %vm210, %v2738, %v2742
  %v2744 = vrot.slane %v2371, 1
  %v2745 = vsel %vm210, %v2740, %v2744
  %v2746 = vrot.slane %v2400, 1
  %v2747 = vsel %vm210, %v2742, %v2746
  %v2751 = vsel %vm604, %v2739, 0
  %v2753 = vsel %vm604, %v2743, 0
  %v2755 = vsel %vm604, %v2747, 0
  %2757 = vmatpush.msra.mxu0 %v2699
  %2758 = vmatpush.msra.mxu0 %v2696
  %2759 = vmatpush.msra.mxu0 %v2693
  %2760 = vmatpush.msra.mxu0 %v2690
  %2761 = vmatpush.msra.mxu0 %v2687
  %2762 = vmatpush.msra.mxu0 %v2684
  %2763 = vmatpush.msra.mxu0 %v2681
  %2764 = vmatpush.msra.mxu0 %v2678
  %2765 = vmatpush.msra.mxu0 %v2675
  %2766 = vmatpush.msra.mxu0 %v2672
  %2767 = vmatpush.msra.mxu0 %v2669
  %2768 = vmatpush.msra.mxu0 %v2666
  %2769 = vmatpush.msra.mxu0 %v2663
  %2770 = vmatpush.msra.mxu0 %v2660
  %2771 = vmatpush.msra.mxu0 %v2657
  %2772 = vmatpush.msra.mxu0 %v2654
  %2773 = vmatmul.f32.gmra.mxu0 %v2736
  %v2774 = vpop.f32.mrf.mxu0
  %v2775 = vadd.f32 0.0, %v2774
  %2776 = vmatmul.f32.gmra.mxu0 %v2741
  %v2777 = vpop.f32.mrf.mxu0
  %v2778 = vadd.f32 0.0, %v2777
  %2779 = vmatmul.f32.gmra.mxu0 %v2745
  %v2780 = vpop.f32.mrf.mxu0
  %v2781 = vadd.f32 0.0, %v2780
  %2782 = vdwg.mxu0
  %2783 = vmatpush.msra.mxu0 0.0
  %2784 = vmatpush.msra.mxu0 0.0
  %2785 = vmatpush.msra.mxu0 0.0
  %2786 = vmatpush.msra.mxu0 0.0
  %2787 = vmatpush.msra.mxu0 0.0
  %2788 = vmatpush.msra.mxu0 0.0
  %2789 = vmatpush.msra.mxu0 0.0
  %2790 = vmatpush.msra.mxu0 0.0
  %2791 = vmatpush.msra.mxu0 %v2723
  %2792 = vmatpush.msra.mxu0 %v2720
  %2793 = vmatpush.msra.mxu0 %v2717
  %2794 = vmatpush.msra.mxu0 %v2714
  %2795 = vmatpush.msra.mxu0 %v2711
  %2796 = vmatpush.msra.mxu0 %v2708
  %2797 = vmatpush.msra.mxu0 %v2705
  %2798 = vmatpush.msra.mxu0 %v2702
  %2799 = vmatmul.f32.gmra.mxu0 %v2751
  %v2800 = vpop.f32.mrf.mxu0
  %v2801 = vadd.f32 %v2775, %v2800
  %2802 = vmatmul.f32.gmra.mxu0 %v2753
  %v2803 = vpop.f32.mrf.mxu0
  %v2804 = vadd.f32 %v2778, %v2803
  %2805 = vmatmul.f32.gmra.mxu0 %v2755
  %v2806 = vpop.f32.mrf.mxu0
  %v2807 = vadd.f32 %v2781, %v2806
  %2808 = vdwg.mxu0
  %2809 = vmatpush.msra.mxu0 %v2700
  %2810 = vmatpush.msra.mxu0 %v2697
  %2811 = vmatpush.msra.mxu0 %v2694
  %2812 = vmatpush.msra.mxu0 %v2691
  %2813 = vmatpush.msra.mxu0 %v2688
  %2814 = vmatpush.msra.mxu0 %v2685
  %2815 = vmatpush.msra.mxu0 %v2682
  %2816 = vmatpush.msra.mxu0 %v2679
  %2817 = vmatpush.msra.mxu0 %v2676
  %2818 = vmatpush.msra.mxu0 %v2673
  %2819 = vmatpush.msra.mxu0 %v2670
  %2820 = vmatpush.msra.mxu0 %v2667
  %2821 = vmatpush.msra.mxu0 %v2664
  %2822 = vmatpush.msra.mxu0 %v2661
  %2823 = vmatpush.msra.mxu0 %v2658
  %2824 = vmatpush.msra.mxu0 %v2655
  %2825 = vmatmul.f32.gmra.mxu0 %v2736
  %v2826 = vpop.f32.mrf.mxu0
  %v2827 = vadd.f32 0.0, %v2826
  %2828 = vmatmul.f32.gmra.mxu0 %v2741
  %v2829 = vpop.f32.mrf.mxu0
  %v2830 = vadd.f32 0.0, %v2829
  %2831 = vmatmul.f32.gmra.mxu0 %v2745
  %v2832 = vpop.f32.mrf.mxu0
  %v2833 = vadd.f32 0.0, %v2832
  %2834 = vdwg.mxu0
  %2835 = vmatpush.msra.mxu0 0.0
  %2836 = vmatpush.msra.mxu0 0.0
  %2837 = vmatpush.msra.mxu0 0.0
  %2838 = vmatpush.msra.mxu0 0.0
  %2839 = vmatpush.msra.mxu0 0.0
  %2840 = vmatpush.msra.mxu0 0.0
  %2841 = vmatpush.msra.mxu0 0.0
  %2842 = vmatpush.msra.mxu0 0.0
  %2843 = vmatpush.msra.mxu0 %v2724
  %2844 = vmatpush.msra.mxu0 %v2721
  %2845 = vmatpush.msra.mxu0 %v2718
  %2846 = vmatpush.msra.mxu0 %v2715
  %2847 = vmatpush.msra.mxu0 %v2712
  %2848 = vmatpush.msra.mxu0 %v2709
  %2849 = vmatpush.msra.mxu0 %v2706
  %2850 = vmatpush.msra.mxu0 %v2703
  %2851 = vmatmul.f32.gmra.mxu0 %v2751
  %v2852 = vpop.f32.mrf.mxu0
  %v2853 = vadd.f32 %v2827, %v2852
  %2854 = vmatmul.f32.gmra.mxu0 %v2753
  %v2855 = vpop.f32.mrf.mxu0
  %v2856 = vadd.f32 %v2830, %v2855
  %2857 = vmatmul.f32.gmra.mxu0 %v2755
  %v2858 = vpop.f32.mrf.mxu0
  %v2859 = vadd.f32 %v2833, %v2858
  %2860 = vdwg.mxu0
  %2861 = vmatpush.msra.mxu0 %v2701
  %2862 = vmatpush.msra.mxu0 %v2698
  %2863 = vmatpush.msra.mxu0 %v2695
  %2864 = vmatpush.msra.mxu0 %v2692
  %2865 = vmatpush.msra.mxu0 %v2689
  %2866 = vmatpush.msra.mxu0 %v2686
  %2867 = vmatpush.msra.mxu0 %v2683
  %2868 = vmatpush.msra.mxu0 %v2680
  %2869 = vmatpush.msra.mxu0 %v2677
  %2870 = vmatpush.msra.mxu0 %v2674
  %2871 = vmatpush.msra.mxu0 %v2671
  %2872 = vmatpush.msra.mxu0 %v2668
  %2873 = vmatpush.msra.mxu0 %v2665
  %2874 = vmatpush.msra.mxu0 %v2662
  %2875 = vmatpush.msra.mxu0 %v2659
  %2876 = vmatpush.msra.mxu0 %v2656
  %2877 = vmatmul.f32.gmra.mxu0 %v2736
  %v2878 = vpop.f32.mrf.mxu0
  %v2879 = vadd.f32 0.0, %v2878
  %2880 = vmatmul.f32.gmra.mxu0 %v2741
  %v2881 = vpop.f32.mrf.mxu0
  %v2882 = vadd.f32 0.0, %v2881
  %2883 = vmatmul.f32.gmra.mxu0 %v2745
  %v2884 = vpop.f32.mrf.mxu0
  %v2885 = vadd.f32 0.0, %v2884
  %2886 = vdwg.mxu0
  %2887 = vmatpush.msra.mxu0 0.0
  %2888 = vmatpush.msra.mxu0 0.0
  %2889 = vmatpush.msra.mxu0 0.0
  %2890 = vmatpush.msra.mxu0 0.0
  %2891 = vmatpush.msra.mxu0 0.0
  %2892 = vmatpush.msra.mxu0 0.0
  %2893 = vmatpush.msra.mxu0 0.0
  %2894 = vmatpush.msra.mxu0 0.0
  %2895 = vmatpush.msra.mxu0 %v2725
  %2896 = vmatpush.msra.mxu0 %v2722
  %2897 = vmatpush.msra.mxu0 %v2719
  %2898 = vmatpush.msra.mxu0 %v2716
  %2899 = vmatpush.msra.mxu0 %v2713
  %2900 = vmatpush.msra.mxu0 %v2710
  %2901 = vmatpush.msra.mxu0 %v2707
  %2902 = vmatpush.msra.mxu0 %v2704
  %2903 = vmatmul.f32.gmra.mxu0 %v2751
  %v2904 = vpop.f32.mrf.mxu0
  %v2905 = vadd.f32 %v2879, %v2904
  %2906 = vmatmul.f32.gmra.mxu0 %v2753
  %v2907 = vpop.f32.mrf.mxu0
  %v2908 = vadd.f32 %v2882, %v2907
  %2909 = vmatmul.f32.gmra.mxu0 %v2755
  %v2910 = vpop.f32.mrf.mxu0
  %v2911 = vadd.f32 %v2885, %v2910
  %2912 = vdwg.mxu0
  %v2913 = vsel %vm604, %v2391, 0
  %v2915 = vsel %vm604, %v2394, 0
  %v2917 = vsel %vm604, %v2397, 0
  %2919 = vmatpush.msra.mxu0 %v2626
  %2920 = vmatpush.msra.mxu0 %v2623
  %2921 = vmatpush.msra.mxu0 %v2620
  %2922 = vmatpush.msra.mxu0 %v2617
  %2923 = vmatpush.msra.mxu0 %v2614
  %2924 = vmatpush.msra.mxu0 %v2611
  %2925 = vmatpush.msra.mxu0 %v2608
  %2926 = vmatpush.msra.mxu0 %v2605
  %2927 = vmatpush.msra.mxu0 %v2602
  %2928 = vmatpush.msra.mxu0 %v2599
  %2929 = vmatpush.msra.mxu0 %v2596
  %2930 = vmatpush.msra.mxu0 %v2593
  %2931 = vmatpush.msra.mxu0 %v2590
  %2932 = vmatpush.msra.mxu0 %v2587
  %2933 = vmatpush.msra.mxu0 %v2584
  %2934 = vmatpush.msra.mxu0 %v2581
  %2935 = vmatmul.f32.gmra.mxu0 %v2362
  %v2936 = vpop.f32.mrf.mxu0
  %v2937 = vadd.f32 %v2801, %v2936
  %2938 = vmatmul.f32.gmra.mxu0 %v2365
  %v2939 = vpop.f32.mrf.mxu0
  %v2940 = vadd.f32 %v2804, %v2939
  %2941 = vmatmul.f32.gmra.mxu0 %v2368
  %v2942 = vpop.f32.mrf.mxu0
  %v2943 = vadd.f32 %v2807, %v2942
  %2944 = vdwg.mxu0
  %2945 = vmatpush.msra.mxu0 0.0
  %2946 = vmatpush.msra.mxu0 0.0
  %2947 = vmatpush.msra.mxu0 0.0
  %2948 = vmatpush.msra.mxu0 0.0
  %2949 = vmatpush.msra.mxu0 0.0
  %2950 = vmatpush.msra.mxu0 0.0
  %2951 = vmatpush.msra.mxu0 0.0
  %2952 = vmatpush.msra.mxu0 0.0
  %2953 = vmatpush.msra.mxu0 %v2650
  %2954 = vmatpush.msra.mxu0 %v2647
  %2955 = vmatpush.msra.mxu0 %v2644
  %2956 = vmatpush.msra.mxu0 %v2641
  %2957 = vmatpush.msra.mxu0 %v2638
  %2958 = vmatpush.msra.mxu0 %v2635
  %2959 = vmatpush.msra.mxu0 %v2632
  %2960 = vmatpush.msra.mxu0 %v2629
  %2961 = vmatmul.f32.gmra.mxu0 %v2913
  %v2962 = vpop.f32.mrf.mxu0
  %v2963 = vadd.f32 %v2937, %v2962
  %2964 = vmatmul.f32.gmra.mxu0 %v2915
  %v2965 = vpop.f32.mrf.mxu0
  %v2966 = vadd.f32 %v2940, %v2965
  %2967 = vmatmul.f32.gmra.mxu0 %v2917
  %v2968 = vpop.f32.mrf.mxu0
  %v2969 = vadd.f32 %v2943, %v2968
  %2970 = vdwg.mxu0
  %2971 = vmatpush.msra.mxu0 %v2627
  %2972 = vmatpush.msra.mxu0 %v2624
  %2973 = vmatpush.msra.mxu0 %v2621
  %2974 = vmatpush.msra.mxu0 %v2618
  %2975 = vmatpush.msra.mxu0 %v2615
  %2976 = vmatpush.msra.mxu0 %v2612
  %2977 = vmatpush.msra.mxu0 %v2609
  %2978 = vmatpush.msra.mxu0 %v2606
  %2979 = vmatpush.msra.mxu0 %v2603
  %2980 = vmatpush.msra.mxu0 %v2600
  %2981 = vmatpush.msra.mxu0 %v2597
  %2982 = vmatpush.msra.mxu0 %v2594
  %2983 = vmatpush.msra.mxu0 %v2591
  %2984 = vmatpush.msra.mxu0 %v2588
  %2985 = vmatpush.msra.mxu0 %v2585
  %2986 = vmatpush.msra.mxu0 %v2582
  %2987 = vmatmul.f32.gmra.mxu0 %v2362
  %v2988 = vpop.f32.mrf.mxu0
  %v2989 = vadd.f32 %v2853, %v2988
  %2990 = vmatmul.f32.gmra.mxu0 %v2365
  %v2991 = vpop.f32.mrf.mxu0
  %v2992 = vadd.f32 %v2856, %v2991
  %2993 = vmatmul.f32.gmra.mxu0 %v2368
  %v2994 = vpop.f32.mrf.mxu0
  %v2995 = vadd.f32 %v2859, %v2994
  %2996 = vdwg.mxu0
  %2997 = vmatpush.msra.mxu0 0.0
  %2998 = vmatpush.msra.mxu0 0.0
  %2999 = vmatpush.msra.mxu0 0.0
  %3000 = vmatpush.msra.mxu0 0.0
  %3001 = vmatpush.msra.mxu0 0.0
  %3002 = vmatpush.msra.mxu0 0.0
  %3003 = vmatpush.msra.mxu0 0.0
  %3004 = vmatpush.msra.mxu0 0.0
  %3005 = vmatpush.msra.mxu0 %v2651
  %3006 = vmatpush.msra.mxu0 %v2648
  %3007 = vmatpush.msra.mxu0 %v2645
  %3008 = vmatpush.msra.mxu0 %v2642
  %3009 = vmatpush.msra.mxu0 %v2639
  %3010 = vmatpush.msra.mxu0 %v2636
  %3011 = vmatpush.msra.mxu0 %v2633
  %3012 = vmatpush.msra.mxu0 %v2630
  %3013 = vmatmul.f32.gmra.mxu0 %v2913
  %v3014 = vpop.f32.mrf.mxu0
  %v3015 = vadd.f32 %v2989, %v3014
  %3016 = vmatmul.f32.gmra.mxu0 %v2915
  %v3017 = vpop.f32.mrf.mxu0
  %v3018 = vadd.f32 %v2992, %v3017
  %3019 = vmatmul.f32.gmra.mxu0 %v2917
  %v3020 = vpop.f32.mrf.mxu0
  %v3021 = vadd.f32 %v2995, %v3020
  %3022 = vdwg.mxu0
  %3023 = vmatpush.msra.mxu0 %v2628
  %3024 = vmatpush.msra.mxu0 %v2625
  %3025 = vmatpush.msra.mxu0 %v2622
  %3026 = vmatpush.msra.mxu0 %v2619
  %3027 = vmatpush.msra.mxu0 %v2616
  %3028 = vmatpush.msra.mxu0 %v2613
  %3029 = vmatpush.msra.mxu0 %v2610
  %3030 = vmatpush.msra.mxu0 %v2607
  %3031 = vmatpush.msra.mxu0 %v2604
  %3032 = vmatpush.msra.mxu0 %v2601
  %3033 = vmatpush.msra.mxu0 %v2598
  %3034 = vmatpush.msra.mxu0 %v2595
  %3035 = vmatpush.msra.mxu0 %v2592
  %3036 = vmatpush.msra.mxu0 %v2589
  %3037 = vmatpush.msra.mxu0 %v2586
  %3038 = vmatpush.msra.mxu0 %v2583
  %3039 = vmatmul.f32.gmra.mxu0 %v2362
  %v3040 = vpop.f32.mrf.mxu0
  %v3041 = vadd.f32 %v2905, %v3040
  %3042 = vmatmul.f32.gmra.mxu0 %v2365
  %v3043 = vpop.f32.mrf.mxu0
  %v3044 = vadd.f32 %v2908, %v3043
  %3045 = vmatmul.f32.gmra.mxu0 %v2368
  %v3046 = vpop.f32.mrf.mxu0
  %v3047 = vadd.f32 %v2911, %v3046
  %3048 = vdwg.mxu0
  %3049 = vmatpush.msra.mxu0 0.0
  %3050 = vmatpush.msra.mxu0 0.0
  %3051 = vmatpush.msra.mxu0 0.0
  %3052 = vmatpush.msra.mxu0 0.0
  %3053 = vmatpush.msra.mxu0 0.0
  %3054 = vmatpush.msra.mxu0 0.0
  %3055 = vmatpush.msra.mxu0 0.0
  %3056 = vmatpush.msra.mxu0 0.0
  %3057 = vmatpush.msra.mxu0 %v2652
  %3058 = vmatpush.msra.mxu0 %v2649
  %3059 = vmatpush.msra.mxu0 %v2646
  %3060 = vmatpush.msra.mxu0 %v2643
  %3061 = vmatpush.msra.mxu0 %v2640
  %3062 = vmatpush.msra.mxu0 %v2637
  %3063 = vmatpush.msra.mxu0 %v2634
  %3064 = vmatpush.msra.mxu0 %v2631
  %3065 = vmatmul.f32.gmra.mxu0 %v2913
  %v3066 = vpop.f32.mrf.mxu0
  %v3067 = vadd.f32 %v3041, %v3066
  %3068 = vmatmul.f32.gmra.mxu0 %v2915
  %v3069 = vpop.f32.mrf.mxu0
  %v3070 = vadd.f32 %v3044, %v3069
  %3071 = vmatmul.f32.gmra.mxu0 %v2917
  %v3072 = vpop.f32.mrf.mxu0
  %v3073 = vadd.f32 %v3047, %v3072
  %3074 = vdwg.mxu0
  %s3075 = scalar_lea.vmem %s5, 1152
  %v3076 = vld [vmem:[%s3075] sm:$0xff]
  %v3077 = vld [vmem:[%s3075 + $0x8] sm:$0xff]
  %v3078 = vld [vmem:[%s3075 + $0x10] sm:$0xff]
  %v3079 = vld [vmem:[%s3075 + $0x18] sm:$0xff]
  %v3080 = vld [vmem:[%s3075 + $0x20] sm:$0xff]
  %v3081 = vld [vmem:[%s3075 + $0x28] sm:$0xff]
  %v3082 = vld [vmem:[%s3075 + $0x30] sm:$0xff]
  %v3083 = vld [vmem:[%s3075 + $0x38] sm:$0xff]
  %v3084 = vld [vmem:[%s3075 + $0x40] sm:$0xff]
  %v3085 = vld [vmem:[%s3075 + $0x48] sm:$0xff]
  %v3086 = vld [vmem:[%s3075 + $0x50] sm:$0xff]
  %v3087 = vld [vmem:[%s3075 + $0x58] sm:$0xff]
  %v3088 = vld [vmem:[%s3075 + $0x60] sm:$0xff]
  %v3089 = vld [vmem:[%s3075 + $0x68] sm:$0xff]
  %v3090 = vld [vmem:[%s3075 + $0x70] sm:$0xff]
  %v3091 = vld [vmem:[%s3075 + $0x78] sm:$0xff]
  %v3092 = vld [vmem:[%s3075 + $0x80] sm:$0xff]
  %v3093 = vld [vmem:[%s3075 + $0x88] sm:$0xff]
  %v3094 = vld [vmem:[%s3075 + $0x90] sm:$0xff]
  %v3095 = vld [vmem:[%s3075 + $0x98] sm:$0xff]
  %v3096 = vld [vmem:[%s3075 + $0xa0] sm:$0xff]
  %v3097 = vld [vmem:[%s3075 + $0xa8] sm:$0xff]
  %v3098 = vld [vmem:[%s3075 + $0xb0] sm:$0xff]
  %v3099 = vld [vmem:[%s3075 + $0xb8] sm:$0xff]
  %v3100 = vld [vmem:[%s3075 + $0xc0] sm:$0xff]
  %v3101 = vld [vmem:[%s3075 + $0xc8] sm:$0xff]
  %v3102 = vld [vmem:[%s3075 + $0xd0] sm:$0xff]
  %v3103 = vld [vmem:[%s3075 + $0xd8] sm:$0xff]
  %v3104 = vld [vmem:[%s3075 + $0xe0] sm:$0xff]
  %v3105 = vld [vmem:[%s3075 + $0xe8] sm:$0xff]
  %v3106 = vld [vmem:[%s3075 + $0xf0] sm:$0xff]
  %v3107 = vld [vmem:[%s3075 + $0xf8] sm:$0xff]
  %v3108 = vld [vmem:[%s3075 + $0x100] sm:$0xff]
  %v3109 = vld [vmem:[%s3075 + $0x108] sm:$0xff]
  %v3110 = vld [vmem:[%s3075 + $0x110] sm:$0xff]
  %v3111 = vld [vmem:[%s3075 + $0x118] sm:$0xff]
  %v3112 = vld [vmem:[%s3075 + $0x120] sm:$0xff]
  %v3113 = vld [vmem:[%s3075 + $0x128] sm:$0xff]
  %v3114 = vld [vmem:[%s3075 + $0x130] sm:$0xff]
  %v3115 = vld [vmem:[%s3075 + $0x138] sm:$0xff]
  %v3116 = vld [vmem:[%s3075 + $0x140] sm:$0xff]
  %v3117 = vld [vmem:[%s3075 + $0x148] sm:$0xff]
  %v3118 = vld [vmem:[%s3075 + $0x150] sm:$0xff]
  %v3119 = vld [vmem:[%s3075 + $0x158] sm:$0xff]
  %v3120 = vld [vmem:[%s3075 + $0x160] sm:$0xff]
  %v3121 = vld [vmem:[%s3075 + $0x168] sm:$0xff]
  %v3122 = vld [vmem:[%s3075 + $0x170] sm:$0xff]
  %v3123 = vld [vmem:[%s3075 + $0x178] sm:$0xff]
  %v3124 = vld [vmem:[%s3075 + $0x180] sm:$0xff]
  %v3125 = vld [vmem:[%s3075 + $0x188] sm:$0xff]
  %v3126 = vld [vmem:[%s3075 + $0x190] sm:$0xff]
  %v3127 = vld [vmem:[%s3075 + $0x198] sm:$0xff]
  %v3128 = vld [vmem:[%s3075 + $0x1a0] sm:$0xff]
  %v3129 = vld [vmem:[%s3075 + $0x1a8] sm:$0xff]
  %v3130 = vld [vmem:[%s3075 + $0x1b0] sm:$0xff]
  %v3131 = vld [vmem:[%s3075 + $0x1b8] sm:$0xff]
  %v3132 = vld [vmem:[%s3075 + $0x1c0] sm:$0xff]
  %v3133 = vld [vmem:[%s3075 + $0x1c8] sm:$0xff]
  %v3134 = vld [vmem:[%s3075 + $0x1d0] sm:$0xff]
  %v3135 = vld [vmem:[%s3075 + $0x1d8] sm:$0xff]
  %v3136 = vld [vmem:[%s3075 + $0x1e0] sm:$0xff]
  %v3137 = vld [vmem:[%s3075 + $0x1e8] sm:$0xff]
  %v3138 = vld [vmem:[%s3075 + $0x1f0] sm:$0xff]
  %v3139 = vld [vmem:[%s3075 + $0x1f8] sm:$0xff]
  %v3140 = vld [vmem:[%s3075 + $0x200] sm:$0xff]
  %v3141 = vld [vmem:[%s3075 + $0x208] sm:$0xff]
  %v3142 = vld [vmem:[%s3075 + $0x210] sm:$0xff]
  %v3143 = vld [vmem:[%s3075 + $0x218] sm:$0xff]
  %v3144 = vld [vmem:[%s3075 + $0x220] sm:$0xff]
  %v3145 = vld [vmem:[%s3075 + $0x228] sm:$0xff]
  %v3146 = vld [vmem:[%s3075 + $0x230] sm:$0xff]
  %v3147 = vld [vmem:[%s3075 + $0x238] sm:$0xff]
  %v3148 = vrot.slane %v2362, 2
  %v3149 = vrot.slane %v2365, 2
  %v3150 = vsel %vm293, %v3148, %v3149
  %v3151 = vrot.slane %v2391, 2
  %v3152 = vrot.slane %v2394, 2
  %v3153 = vsel %vm293, %v3151, %v3152
  %v3154 = vrot.slane %v2368, 2
  %v3155 = vsel %vm293, %v3149, %v3154
  %v3156 = vrot.slane %v2397, 2
  %v3157 = vsel %vm293, %v3152, %v3156
  %v3158 = vrot.slane %v2371, 2
  %v3159 = vsel %vm293, %v3154, %v3158
  %v3160 = vrot.slane %v2400, 2
  %v3161 = vsel %vm293, %v3156, %v3160
  %v3165 = vsel %vm604, %v3153, 0
  %v3167 = vsel %vm604, %v3157, 0
  %v3169 = vsel %vm604, %v3161, 0
  %3171 = vmatpush.msra.mxu0 %v3121
  %3172 = vmatpush.msra.mxu0 %v3118
  %3173 = vmatpush.msra.mxu0 %v3115
  %3174 = vmatpush.msra.mxu0 %v3112
  %3175 = vmatpush.msra.mxu0 %v3109
  %3176 = vmatpush.msra.mxu0 %v3106
  %3177 = vmatpush.msra.mxu0 %v3103
  %3178 = vmatpush.msra.mxu0 %v3100
  %3179 = vmatpush.msra.mxu0 %v3097
  %3180 = vmatpush.msra.mxu0 %v3094
  %3181 = vmatpush.msra.mxu0 %v3091
  %3182 = vmatpush.msra.mxu0 %v3088
  %3183 = vmatpush.msra.mxu0 %v3085
  %3184 = vmatpush.msra.mxu0 %v3082
  %3185 = vmatpush.msra.mxu0 %v3079
  %3186 = vmatpush.msra.mxu0 %v3076
  %3187 = vmatmul.f32.gmra.mxu0 %v3150
  %v3188 = vpop.f32.mrf.mxu0
  %v3189 = vadd.f32 0.0, %v3188
  %3190 = vmatmul.f32.gmra.mxu0 %v3155
  %v3191 = vpop.f32.mrf.mxu0
  %v3192 = vadd.f32 0.0, %v3191
  %3193 = vmatmul.f32.gmra.mxu0 %v3159
  %v3194 = vpop.f32.mrf.mxu0
  %v3195 = vadd.f32 0.0, %v3194
  %3196 = vdwg.mxu0
  %3197 = vmatpush.msra.mxu0 0.0
  %3198 = vmatpush.msra.mxu0 0.0
  %3199 = vmatpush.msra.mxu0 0.0
  %3200 = vmatpush.msra.mxu0 0.0
  %3201 = vmatpush.msra.mxu0 0.0
  %3202 = vmatpush.msra.mxu0 0.0
  %3203 = vmatpush.msra.mxu0 0.0
  %3204 = vmatpush.msra.mxu0 0.0
  %3205 = vmatpush.msra.mxu0 %v3145
  %3206 = vmatpush.msra.mxu0 %v3142
  %3207 = vmatpush.msra.mxu0 %v3139
  %3208 = vmatpush.msra.mxu0 %v3136
  %3209 = vmatpush.msra.mxu0 %v3133
  %3210 = vmatpush.msra.mxu0 %v3130
  %3211 = vmatpush.msra.mxu0 %v3127
  %3212 = vmatpush.msra.mxu0 %v3124
  %3213 = vmatmul.f32.gmra.mxu0 %v3165
  %v3214 = vpop.f32.mrf.mxu0
  %v3215 = vadd.f32 %v3189, %v3214
  %3216 = vmatmul.f32.gmra.mxu0 %v3167
  %v3217 = vpop.f32.mrf.mxu0
  %v3218 = vadd.f32 %v3192, %v3217
  %3219 = vmatmul.f32.gmra.mxu0 %v3169
  %v3220 = vpop.f32.mrf.mxu0
  %v3221 = vadd.f32 %v3195, %v3220
  %3222 = vdwg.mxu0
  %3223 = vmatpush.msra.mxu0 %v3122
  %3224 = vmatpush.msra.mxu0 %v3119
  %3225 = vmatpush.msra.mxu0 %v3116
  %3226 = vmatpush.msra.mxu0 %v3113
  %3227 = vmatpush.msra.mxu0 %v3110
  %3228 = vmatpush.msra.mxu0 %v3107
  %3229 = vmatpush.msra.mxu0 %v3104
  %3230 = vmatpush.msra.mxu0 %v3101
  %3231 = vmatpush.msra.mxu0 %v3098
  %3232 = vmatpush.msra.mxu0 %v3095
  %3233 = vmatpush.msra.mxu0 %v3092
  %3234 = vmatpush.msra.mxu0 %v3089
  %3235 = vmatpush.msra.mxu0 %v3086
  %3236 = vmatpush.msra.mxu0 %v3083
  %3237 = vmatpush.msra.mxu0 %v3080
  %3238 = vmatpush.msra.mxu0 %v3077
  %3239 = vmatmul.f32.gmra.mxu0 %v3150
  %v3240 = vpop.f32.mrf.mxu0
  %v3241 = vadd.f32 0.0, %v3240
  %3242 = vmatmul.f32.gmra.mxu0 %v3155
  %v3243 = vpop.f32.mrf.mxu0
  %v3244 = vadd.f32 0.0, %v3243
  %3245 = vmatmul.f32.gmra.mxu0 %v3159
  %v3246 = vpop.f32.mrf.mxu0
  %v3247 = vadd.f32 0.0, %v3246
  %3248 = vdwg.mxu0
  %3249 = vmatpush.msra.mxu0 0.0
  %3250 = vmatpush.msra.mxu0 0.0
  %3251 = vmatpush.msra.mxu0 0.0
  %3252 = vmatpush.msra.mxu0 0.0
  %3253 = vmatpush.msra.mxu0 0.0
  %3254 = vmatpush.msra.mxu0 0.0
  %3255 = vmatpush.msra.mxu0 0.0
  %3256 = vmatpush.msra.mxu0 0.0
  %3257 = vmatpush.msra.mxu0 %v3146
  %3258 = vmatpush.msra.mxu0 %v3143
  %3259 = vmatpush.msra.mxu0 %v3140
  %3260 = vmatpush.msra.mxu0 %v3137
  %3261 = vmatpush.msra.mxu0 %v3134
  %3262 = vmatpush.msra.mxu0 %v3131
  %3263 = vmatpush.msra.mxu0 %v3128
  %3264 = vmatpush.msra.mxu0 %v3125
  %3265 = vmatmul.f32.gmra.mxu0 %v3165
  %v3266 = vpop.f32.mrf.mxu0
  %v3267 = vadd.f32 %v3241, %v3266
  %3268 = vmatmul.f32.gmra.mxu0 %v3167
  %v3269 = vpop.f32.mrf.mxu0
  %v3270 = vadd.f32 %v3244, %v3269
  %3271 = vmatmul.f32.gmra.mxu0 %v3169
  %v3272 = vpop.f32.mrf.mxu0
  %v3273 = vadd.f32 %v3247, %v3272
  %3274 = vdwg.mxu0
  %3275 = vmatpush.msra.mxu0 %v3123
  %3276 = vmatpush.msra.mxu0 %v3120
  %3277 = vmatpush.msra.mxu0 %v3117
  %3278 = vmatpush.msra.mxu0 %v3114
  %3279 = vmatpush.msra.mxu0 %v3111
  %3280 = vmatpush.msra.mxu0 %v3108
  %3281 = vmatpush.msra.mxu0 %v3105
  %3282 = vmatpush.msra.mxu0 %v3102
  %3283 = vmatpush.msra.mxu0 %v3099
  %3284 = vmatpush.msra.mxu0 %v3096
  %3285 = vmatpush.msra.mxu0 %v3093
  %3286 = vmatpush.msra.mxu0 %v3090
  %3287 = vmatpush.msra.mxu0 %v3087
  %3288 = vmatpush.msra.mxu0 %v3084
  %3289 = vmatpush.msra.mxu0 %v3081
  %3290 = vmatpush.msra.mxu0 %v3078
  %3291 = vmatmul.f32.gmra.mxu0 %v3150
  %v3292 = vpop.f32.mrf.mxu0
  %v3293 = vadd.f32 0.0, %v3292
  %3294 = vmatmul.f32.gmra.mxu0 %v3155
  %v3295 = vpop.f32.mrf.mxu0
  %v3296 = vadd.f32 0.0, %v3295
  %3297 = vmatmul.f32.gmra.mxu0 %v3159
  %v3298 = vpop.f32.mrf.mxu0
  %v3299 = vadd.f32 0.0, %v3298
  %3300 = vdwg.mxu0
  %3301 = vmatpush.msra.mxu0 0.0
  %3302 = vmatpush.msra.mxu0 0.0
  %3303 = vmatpush.msra.mxu0 0.0
  %3304 = vmatpush.msra.mxu0 0.0
  %3305 = vmatpush.msra.mxu0 0.0
  %3306 = vmatpush.msra.mxu0 0.0
  %3307 = vmatpush.msra.mxu0 0.0
  %3308 = vmatpush.msra.mxu0 0.0
  %3309 = vmatpush.msra.mxu0 %v3147
  %3310 = vmatpush.msra.mxu0 %v3144
  %3311 = vmatpush.msra.mxu0 %v3141
  %3312 = vmatpush.msra.mxu0 %v3138
  %3313 = vmatpush.msra.mxu0 %v3135
  %3314 = vmatpush.msra.mxu0 %v3132
  %3315 = vmatpush.msra.mxu0 %v3129
  %3316 = vmatpush.msra.mxu0 %v3126
  %3317 = vmatmul.f32.gmra.mxu0 %v3165
  %v3318 = vpop.f32.mrf.mxu0
  %v3319 = vadd.f32 %v3293, %v3318
  %3320 = vmatmul.f32.gmra.mxu0 %v3167
  %v3321 = vpop.f32.mrf.mxu0
  %v3322 = vadd.f32 %v3296, %v3321
  %3323 = vmatmul.f32.gmra.mxu0 %v3169
  %v3324 = vpop.f32.mrf.mxu0
  %v3325 = vadd.f32 %v3299, %v3324
  %3326 = vdwg.mxu0
  %v3327 = vadd.f32 %v2963, %v3215
  %v3328 = vadd.f32 %v3015, %v3267
  %v3329 = vadd.f32 %v3067, %v3319
  %v3330 = vadd.f32 %v2966, %v3218
  %v3331 = vadd.f32 %v3018, %v3270
  %v3332 = vadd.f32 %v3070, %v3322
  %v3333 = vadd.f32 %v2969, %v3221
  %v3334 = vadd.f32 %v3021, %v3273
  %v3335 = vadd.f32 %v3073, %v3325
  %v3337 = vperm.slane %v2576, 0
  %v3338 = vperm.slane %v2576, 1
  %v3339 = vperm.slane %v2576, 2
  %v3343 = vadd.f32 %v3327, %v3337
  %v3344 = vadd.f32 %v3328, %v3338
  %v3345 = vadd.f32 %v3329, %v3339
  %v3346 = vadd.f32 %v3330, %v3337
  %v3347 = vadd.f32 %v3331, %v3338
  %v3348 = vadd.f32 %v3332, %v3339
  %v3349 = vadd.f32 %v3333, %v3337
  %v3350 = vadd.f32 %v3334, %v3338
  %v3351 = vadd.f32 %v3335, %v3339
  %v3360 = vrot.slane %v2536, 1
  %v3361 = vrot.slane %v2539, 1
  %v3362 = vsel %vm210, %v3360, %v3361
  %v3363 = vrot.slane %v2565, 1
  %v3364 = vrot.slane %v2568, 1
  %v3365 = vsel %vm210, %v3363, %v3364
  %v3366 = vrot.slane %v2542, 1
  %v3367 = vsel %vm210, %v3361, %v3366
  %v3368 = vrot.slane %v2571, 1
  %v3369 = vsel %vm210, %v3364, %v3368
  %v3370 = vrot.slane %v2545, 1
  %v3371 = vsel %vm210, %v3366, %v3370
  %v3372 = vrot.slane %v2574, 1
  %v3373 = vsel %vm210, %v3368, %v3372
  %v3377 = vsel %vm604, %v3365, 0
  %v3379 = vsel %vm604, %v3369, 0
  %v3381 = vsel %vm604, %v3373, 0
  %3383 = vmatpush.msra.mxu0 %v2699
  %3384 = vmatpush.msra.mxu0 %v2696
  %3385 = vmatpush.msra.mxu0 %v2693
  %3386 = vmatpush.msra.mxu0 %v2690
  %3387 = vmatpush.msra.mxu0 %v2687
  %3388 = vmatpush.msra.mxu0 %v2684
  %3389 = vmatpush.msra.mxu0 %v2681
  %3390 = vmatpush.msra.mxu0 %v2678
  %3391 = vmatpush.msra.mxu0 %v2675
  %3392 = vmatpush.msra.mxu0 %v2672
  %3393 = vmatpush.msra.mxu0 %v2669
  %3394 = vmatpush.msra.mxu0 %v2666
  %3395 = vmatpush.msra.mxu0 %v2663
  %3396 = vmatpush.msra.mxu0 %v2660
  %3397 = vmatpush.msra.mxu0 %v2657
  %3398 = vmatpush.msra.mxu0 %v2654
  %3399 = vmatmul.f32.gmra.mxu0 %v3362
  %v3400 = vpop.f32.mrf.mxu0
  %v3401 = vadd.f32 0.0, %v3400
  %3402 = vmatmul.f32.gmra.mxu0 %v3367
  %v3403 = vpop.f32.mrf.mxu0
  %v3404 = vadd.f32 0.0, %v3403
  %3405 = vmatmul.f32.gmra.mxu0 %v3371
  %v3406 = vpop.f32.mrf.mxu0
  %v3407 = vadd.f32 0.0, %v3406
  %3408 = vdwg.mxu0
  %3409 = vmatpush.msra.mxu0 0.0
  %3410 = vmatpush.msra.mxu0 0.0
  %3411 = vmatpush.msra.mxu0 0.0
  %3412 = vmatpush.msra.mxu0 0.0
  %3413 = vmatpush.msra.mxu0 0.0
  %3414 = vmatpush.msra.mxu0 0.0
  %3415 = vmatpush.msra.mxu0 0.0
  %3416 = vmatpush.msra.mxu0 0.0
  %3417 = vmatpush.msra.mxu0 %v2723
  %3418 = vmatpush.msra.mxu0 %v2720
  %3419 = vmatpush.msra.mxu0 %v2717
  %3420 = vmatpush.msra.mxu0 %v2714
  %3421 = vmatpush.msra.mxu0 %v2711
  %3422 = vmatpush.msra.mxu0 %v2708
  %3423 = vmatpush.msra.mxu0 %v2705
  %3424 = vmatpush.msra.mxu0 %v2702
  %3425 = vmatmul.f32.gmra.mxu0 %v3377
  %v3426 = vpop.f32.mrf.mxu0
  %v3427 = vadd.f32 %v3401, %v3426
  %3428 = vmatmul.f32.gmra.mxu0 %v3379
  %v3429 = vpop.f32.mrf.mxu0
  %v3430 = vadd.f32 %v3404, %v3429
  %3431 = vmatmul.f32.gmra.mxu0 %v3381
  %v3432 = vpop.f32.mrf.mxu0
  %v3433 = vadd.f32 %v3407, %v3432
  %3434 = vdwg.mxu0
  %3435 = vmatpush.msra.mxu0 %v2700
  %3436 = vmatpush.msra.mxu0 %v2697
  %3437 = vmatpush.msra.mxu0 %v2694
  %3438 = vmatpush.msra.mxu0 %v2691
  %3439 = vmatpush.msra.mxu0 %v2688
  %3440 = vmatpush.msra.mxu0 %v2685
  %3441 = vmatpush.msra.mxu0 %v2682
  %3442 = vmatpush.msra.mxu0 %v2679
  %3443 = vmatpush.msra.mxu0 %v2676
  %3444 = vmatpush.msra.mxu0 %v2673
  %3445 = vmatpush.msra.mxu0 %v2670
  %3446 = vmatpush.msra.mxu0 %v2667
  %3447 = vmatpush.msra.mxu0 %v2664
  %3448 = vmatpush.msra.mxu0 %v2661
  %3449 = vmatpush.msra.mxu0 %v2658
  %3450 = vmatpush.msra.mxu0 %v2655
  %3451 = vmatmul.f32.gmra.mxu0 %v3362
  %v3452 = vpop.f32.mrf.mxu0
  %v3453 = vadd.f32 0.0, %v3452
  %3454 = vmatmul.f32.gmra.mxu0 %v3367
  %v3455 = vpop.f32.mrf.mxu0
  %v3456 = vadd.f32 0.0, %v3455
  %3457 = vmatmul.f32.gmra.mxu0 %v3371
  %v3458 = vpop.f32.mrf.mxu0
  %v3459 = vadd.f32 0.0, %v3458
  %3460 = vdwg.mxu0
  %3461 = vmatpush.msra.mxu0 0.0
  %3462 = vmatpush.msra.mxu0 0.0
  %3463 = vmatpush.msra.mxu0 0.0
  %3464 = vmatpush.msra.mxu0 0.0
  %3465 = vmatpush.msra.mxu0 0.0
  %3466 = vmatpush.msra.mxu0 0.0
  %3467 = vmatpush.msra.mxu0 0.0
  %3468 = vmatpush.msra.mxu0 0.0
  %3469 = vmatpush.msra.mxu0 %v2724
  %3470 = vmatpush.msra.mxu0 %v2721
  %3471 = vmatpush.msra.mxu0 %v2718
  %3472 = vmatpush.msra.mxu0 %v2715
  %3473 = vmatpush.msra.mxu0 %v2712
  %3474 = vmatpush.msra.mxu0 %v2709
  %3475 = vmatpush.msra.mxu0 %v2706
  %3476 = vmatpush.msra.mxu0 %v2703
  %3477 = vmatmul.f32.gmra.mxu0 %v3377
  %v3478 = vpop.f32.mrf.mxu0
  %v3479 = vadd.f32 %v3453, %v3478
  %3480 = vmatmul.f32.gmra.mxu0 %v3379
  %v3481 = vpop.f32.mrf.mxu0
  %v3482 = vadd.f32 %v3456, %v3481
  %3483 = vmatmul.f32.gmra.mxu0 %v3381
  %v3484 = vpop.f32.mrf.mxu0
  %v3485 = vadd.f32 %v3459, %v3484
  %3486 = vdwg.mxu0
  %3487 = vmatpush.msra.mxu0 %v2701
  %3488 = vmatpush.msra.mxu0 %v2698
  %3489 = vmatpush.msra.mxu0 %v2695
  %3490 = vmatpush.msra.mxu0 %v2692
  %3491 = vmatpush.msra.mxu0 %v2689
  %3492 = vmatpush.msra.mxu0 %v2686
  %3493 = vmatpush.msra.mxu0 %v2683
  %3494 = vmatpush.msra.mxu0 %v2680
  %3495 = vmatpush.msra.mxu0 %v2677
  %3496 = vmatpush.msra.mxu0 %v2674
  %3497 = vmatpush.msra.mxu0 %v2671
  %3498 = vmatpush.msra.mxu0 %v2668
  %3499 = vmatpush.msra.mxu0 %v2665
  %3500 = vmatpush.msra.mxu0 %v2662
  %3501 = vmatpush.msra.mxu0 %v2659
  %3502 = vmatpush.msra.mxu0 %v2656
  %3503 = vmatmul.f32.gmra.mxu0 %v3362
  %v3504 = vpop.f32.mrf.mxu0
  %v3505 = vadd.f32 0.0, %v3504
  %3506 = vmatmul.f32.gmra.mxu0 %v3367
  %v3507 = vpop.f32.mrf.mxu0
  %v3508 = vadd.f32 0.0, %v3507
  %3509 = vmatmul.f32.gmra.mxu0 %v3371
  %v3510 = vpop.f32.mrf.mxu0
  %v3511 = vadd.f32 0.0, %v3510
  %3512 = vdwg.mxu0
  %3513 = vmatpush.msra.mxu0 0.0
  %3514 = vmatpush.msra.mxu0 0.0
  %3515 = vmatpush.msra.mxu0 0.0
  %3516 = vmatpush.msra.mxu0 0.0
  %3517 = vmatpush.msra.mxu0 0.0
  %3518 = vmatpush.msra.mxu0 0.0
  %3519 = vmatpush.msra.mxu0 0.0
  %3520 = vmatpush.msra.mxu0 0.0
  %3521 = vmatpush.msra.mxu0 %v2725
  %3522 = vmatpush.msra.mxu0 %v2722
  %3523 = vmatpush.msra.mxu0 %v2719
  %3524 = vmatpush.msra.mxu0 %v2716
  %3525 = vmatpush.msra.mxu0 %v2713
  %3526 = vmatpush.msra.mxu0 %v2710
  %3527 = vmatpush.msra.mxu0 %v2707
  %3528 = vmatpush.msra.mxu0 %v2704
  %3529 = vmatmul.f32.gmra.mxu0 %v3377
  %v3530 = vpop.f32.mrf.mxu0
  %v3531 = vadd.f32 %v3505, %v3530
  %3532 = vmatmul.f32.gmra.mxu0 %v3379
  %v3533 = vpop.f32.mrf.mxu0
  %v3534 = vadd.f32 %v3508, %v3533
  %3535 = vmatmul.f32.gmra.mxu0 %v3381
  %v3536 = vpop.f32.mrf.mxu0
  %v3537 = vadd.f32 %v3511, %v3536
  %3538 = vdwg.mxu0
  %v3539 = vsel %vm604, %v2565, 0
  %v3541 = vsel %vm604, %v2568, 0
  %v3543 = vsel %vm604, %v2571, 0
  %3545 = vmatpush.msra.mxu0 %v2626
  %3546 = vmatpush.msra.mxu0 %v2623
  %3547 = vmatpush.msra.mxu0 %v2620
  %3548 = vmatpush.msra.mxu0 %v2617
  %3549 = vmatpush.msra.mxu0 %v2614
  %3550 = vmatpush.msra.mxu0 %v2611
  %3551 = vmatpush.msra.mxu0 %v2608
  %3552 = vmatpush.msra.mxu0 %v2605
  %3553 = vmatpush.msra.mxu0 %v2602
  %3554 = vmatpush.msra.mxu0 %v2599
  %3555 = vmatpush.msra.mxu0 %v2596
  %3556 = vmatpush.msra.mxu0 %v2593
  %3557 = vmatpush.msra.mxu0 %v2590
  %3558 = vmatpush.msra.mxu0 %v2587
  %3559 = vmatpush.msra.mxu0 %v2584
  %3560 = vmatpush.msra.mxu0 %v2581
  %3561 = vmatmul.f32.gmra.mxu0 %v2536
  %v3562 = vpop.f32.mrf.mxu0
  %v3563 = vadd.f32 %v3427, %v3562
  %3564 = vmatmul.f32.gmra.mxu0 %v2539
  %v3565 = vpop.f32.mrf.mxu0
  %v3566 = vadd.f32 %v3430, %v3565
  %3567 = vmatmul.f32.gmra.mxu0 %v2542
  %v3568 = vpop.f32.mrf.mxu0
  %v3569 = vadd.f32 %v3433, %v3568
  %3570 = vdwg.mxu0
  %3571 = vmatpush.msra.mxu0 0.0
  %3572 = vmatpush.msra.mxu0 0.0
  %3573 = vmatpush.msra.mxu0 0.0
  %3574 = vmatpush.msra.mxu0 0.0
  %3575 = vmatpush.msra.mxu0 0.0
  %3576 = vmatpush.msra.mxu0 0.0
  %3577 = vmatpush.msra.mxu0 0.0
  %3578 = vmatpush.msra.mxu0 0.0
  %3579 = vmatpush.msra.mxu0 %v2650
  %3580 = vmatpush.msra.mxu0 %v2647
  %3581 = vmatpush.msra.mxu0 %v2644
  %3582 = vmatpush.msra.mxu0 %v2641
  %3583 = vmatpush.msra.mxu0 %v2638
  %3584 = vmatpush.msra.mxu0 %v2635
  %3585 = vmatpush.msra.mxu0 %v2632
  %3586 = vmatpush.msra.mxu0 %v2629
  %3587 = vmatmul.f32.gmra.mxu0 %v3539
  %v3588 = vpop.f32.mrf.mxu0
  %v3589 = vadd.f32 %v3563, %v3588
  %3590 = vmatmul.f32.gmra.mxu0 %v3541
  %v3591 = vpop.f32.mrf.mxu0
  %v3592 = vadd.f32 %v3566, %v3591
  %3593 = vmatmul.f32.gmra.mxu0 %v3543
  %v3594 = vpop.f32.mrf.mxu0
  %v3595 = vadd.f32 %v3569, %v3594
  %3596 = vdwg.mxu0
  %3597 = vmatpush.msra.mxu0 %v2627
  %3598 = vmatpush.msra.mxu0 %v2624
  %3599 = vmatpush.msra.mxu0 %v2621
  %3600 = vmatpush.msra.mxu0 %v2618
  %3601 = vmatpush.msra.mxu0 %v2615
  %3602 = vmatpush.msra.mxu0 %v2612
  %3603 = vmatpush.msra.mxu0 %v2609
  %3604 = vmatpush.msra.mxu0 %v2606
  %3605 = vmatpush.msra.mxu0 %v2603
  %3606 = vmatpush.msra.mxu0 %v2600
  %3607 = vmatpush.msra.mxu0 %v2597
  %3608 = vmatpush.msra.mxu0 %v2594
  %3609 = vmatpush.msra.mxu0 %v2591
  %3610 = vmatpush.msra.mxu0 %v2588
  %3611 = vmatpush.msra.mxu0 %v2585
  %3612 = vmatpush.msra.mxu0 %v2582
  %3613 = vmatmul.f32.gmra.mxu0 %v2536
  %v3614 = vpop.f32.mrf.mxu0
  %v3615 = vadd.f32 %v3479, %v3614
  %3616 = vmatmul.f32.gmra.mxu0 %v2539
  %v3617 = vpop.f32.mrf.mxu0
  %v3618 = vadd.f32 %v3482, %v3617
  %3619 = vmatmul.f32.gmra.mxu0 %v2542
  %v3620 = vpop.f32.mrf.mxu0
  %v3621 = vadd.f32 %v3485, %v3620
  %3622 = vdwg.mxu0
  %3623 = vmatpush.msra.mxu0 0.0
  %3624 = vmatpush.msra.mxu0 0.0
  %3625 = vmatpush.msra.mxu0 0.0
  %3626 = vmatpush.msra.mxu0 0.0
  %3627 = vmatpush.msra.mxu0 0.0
  %3628 = vmatpush.msra.mxu0 0.0
  %3629 = vmatpush.msra.mxu0 0.0
  %3630 = vmatpush.msra.mxu0 0.0
  %3631 = vmatpush.msra.mxu0 %v2651
  %3632 = vmatpush.msra.mxu0 %v2648
  %3633 = vmatpush.msra.mxu0 %v2645
  %3634 = vmatpush.msra.mxu0 %v2642
  %3635 = vmatpush.msra.mxu0 %v2639
  %3636 = vmatpush.msra.mxu0 %v2636
  %3637 = vmatpush.msra.mxu0 %v2633
  %3638 = vmatpush.msra.mxu0 %v2630
  %3639 = vmatmul.f32.gmra.mxu0 %v3539
  %v3640 = vpop.f32.mrf.mxu0
  %v3641 = vadd.f32 %v3615, %v3640
  %3642 = vmatmul.f32.gmra.mxu0 %v3541
  %v3643 = vpop.f32.mrf.mxu0
  %v3644 = vadd.f32 %v3618, %v3643
  %3645 = vmatmul.f32.gmra.mxu0 %v3543
  %v3646 = vpop.f32.mrf.mxu0
  %v3647 = vadd.f32 %v3621, %v3646
  %3648 = vdwg.mxu0
  %3649 = vmatpush.msra.mxu0 %v2628
  %3650 = vmatpush.msra.mxu0 %v2625
  %3651 = vmatpush.msra.mxu0 %v2622
  %3652 = vmatpush.msra.mxu0 %v2619
  %3653 = vmatpush.msra.mxu0 %v2616
  %3654 = vmatpush.msra.mxu0 %v2613
  %3655 = vmatpush.msra.mxu0 %v2610
  %3656 = vmatpush.msra.mxu0 %v2607
  %3657 = vmatpush.msra.mxu0 %v2604
  %3658 = vmatpush.msra.mxu0 %v2601
  %3659 = vmatpush.msra.mxu0 %v2598
  %3660 = vmatpush.msra.mxu0 %v2595
  %3661 = vmatpush.msra.mxu0 %v2592
  %3662 = vmatpush.msra.mxu0 %v2589
  %3663 = vmatpush.msra.mxu0 %v2586
  %3664 = vmatpush.msra.mxu0 %v2583
  %3665 = vmatmul.f32.gmra.mxu0 %v2536
  %v3666 = vpop.f32.mrf.mxu0
  %v3667 = vadd.f32 %v3531, %v3666
  %3668 = vmatmul.f32.gmra.mxu0 %v2539
  %v3669 = vpop.f32.mrf.mxu0
  %v3670 = vadd.f32 %v3534, %v3669
  %3671 = vmatmul.f32.gmra.mxu0 %v2542
  %v3672 = vpop.f32.mrf.mxu0
  %v3673 = vadd.f32 %v3537, %v3672
  %3674 = vdwg.mxu0
  %3675 = vmatpush.msra.mxu0 0.0
  %3676 = vmatpush.msra.mxu0 0.0
  %3677 = vmatpush.msra.mxu0 0.0
  %3678 = vmatpush.msra.mxu0 0.0
  %3679 = vmatpush.msra.mxu0 0.0
  %3680 = vmatpush.msra.mxu0 0.0
  %3681 = vmatpush.msra.mxu0 0.0
  %3682 = vmatpush.msra.mxu0 0.0
  %3683 = vmatpush.msra.mxu0 %v2652
  %3684 = vmatpush.msra.mxu0 %v2649
  %3685 = vmatpush.msra.mxu0 %v2646
  %3686 = vmatpush.msra.mxu0 %v2643
  %3687 = vmatpush.msra.mxu0 %v2640
  %3688 = vmatpush.msra.mxu0 %v2637
  %3689 = vmatpush.msra.mxu0 %v2634
  %3690 = vmatpush.msra.mxu0 %v2631
  %3691 = vmatmul.f32.gmra.mxu0 %v3539
  %v3692 = vpop.f32.mrf.mxu0
  %v3693 = vadd.f32 %v3667, %v3692
  %3694 = vmatmul.f32.gmra.mxu0 %v3541
  %v3695 = vpop.f32.mrf.mxu0
  %v3696 = vadd.f32 %v3670, %v3695
  %3697 = vmatmul.f32.gmra.mxu0 %v3543
  %v3698 = vpop.f32.mrf.mxu0
  %v3699 = vadd.f32 %v3673, %v3698
  %3700 = vdwg.mxu0
  %v3701 = vrot.slane %v2536, 2
  %v3702 = vrot.slane %v2539, 2
  %v3703 = vsel %vm293, %v3701, %v3702
  %v3704 = vrot.slane %v2565, 2
  %v3705 = vrot.slane %v2568, 2
  %v3706 = vsel %vm293, %v3704, %v3705
  %v3707 = vrot.slane %v2542, 2
  %v3708 = vsel %vm293, %v3702, %v3707
  %v3709 = vrot.slane %v2571, 2
  %v3710 = vsel %vm293, %v3705, %v3709
  %v3711 = vrot.slane %v2545, 2
  %v3712 = vsel %vm293, %v3707, %v3711
  %v3713 = vrot.slane %v2574, 2
  %v3714 = vsel %vm293, %v3709, %v3713
  %v3718 = vsel %vm604, %v3706, 0
  %v3720 = vsel %vm604, %v3710, 0
  %v3722 = vsel %vm604, %v3714, 0
  %3724 = vmatpush.msra.mxu0 %v3121
  %3725 = vmatpush.msra.mxu0 %v3118
  %3726 = vmatpush.msra.mxu0 %v3115
  %3727 = vmatpush.msra.mxu0 %v3112
  %3728 = vmatpush.msra.mxu0 %v3109
  %3729 = vmatpush.msra.mxu0 %v3106
  %3730 = vmatpush.msra.mxu0 %v3103
  %3731 = vmatpush.msra.mxu0 %v3100
  %3732 = vmatpush.msra.mxu0 %v3097
  %3733 = vmatpush.msra.mxu0 %v3094
  %3734 = vmatpush.msra.mxu0 %v3091
  %3735 = vmatpush.msra.mxu0 %v3088
  %3736 = vmatpush.msra.mxu0 %v3085
  %3737 = vmatpush.msra.mxu0 %v3082
  %3738 = vmatpush.msra.mxu0 %v3079
  %3739 = vmatpush.msra.mxu0 %v3076
  %3740 = vmatmul.f32.gmra.mxu0 %v3703
  %v3741 = vpop.f32.mrf.mxu0
  %v3742 = vadd.f32 0.0, %v3741
  %3743 = vmatmul.f32.gmra.mxu0 %v3708
  %v3744 = vpop.f32.mrf.mxu0
  %v3745 = vadd.f32 0.0, %v3744
  %3746 = vmatmul.f32.gmra.mxu0 %v3712
  %v3747 = vpop.f32.mrf.mxu0
  %v3748 = vadd.f32 0.0, %v3747
  %3749 = vdwg.mxu0
  %3750 = vmatpush.msra.mxu0 0.0
  %3751 = vmatpush.msra.mxu0 0.0
  %3752 = vmatpush.msra.mxu0 0.0
  %3753 = vmatpush.msra.mxu0 0.0
  %3754 = vmatpush.msra.mxu0 0.0
  %3755 = vmatpush.msra.mxu0 0.0
  %3756 = vmatpush.msra.mxu0 0.0
  %3757 = vmatpush.msra.mxu0 0.0
  %3758 = vmatpush.msra.mxu0 %v3145
  %3759 = vmatpush.msra.mxu0 %v3142
  %3760 = vmatpush.msra.mxu0 %v3139
  %3761 = vmatpush.msra.mxu0 %v3136
  %3762 = vmatpush.msra.mxu0 %v3133
  %3763 = vmatpush.msra.mxu0 %v3130
  %3764 = vmatpush.msra.mxu0 %v3127
  %3765 = vmatpush.msra.mxu0 %v3124
  %3766 = vmatmul.f32.gmra.mxu0 %v3718
  %v3767 = vpop.f32.mrf.mxu0
  %v3768 = vadd.f32 %v3742, %v3767
  %3769 = vmatmul.f32.gmra.mxu0 %v3720
  %v3770 = vpop.f32.mrf.mxu0
  %v3771 = vadd.f32 %v3745, %v3770
  %3772 = vmatmul.f32.gmra.mxu0 %v3722
  %v3773 = vpop.f32.mrf.mxu0
  %v3774 = vadd.f32 %v3748, %v3773
  %3775 = vdwg.mxu0
  %3776 = vmatpush.msra.mxu0 %v3122
  %3777 = vmatpush.msra.mxu0 %v3119
  %3778 = vmatpush.msra.mxu0 %v3116
  %3779 = vmatpush.msra.mxu0 %v3113
  %3780 = vmatpush.msra.mxu0 %v3110
  %3781 = vmatpush.msra.mxu0 %v3107
  %3782 = vmatpush.msra.mxu0 %v3104
  %3783 = vmatpush.msra.mxu0 %v3101
  %3784 = vmatpush.msra.mxu0 %v3098
  %3785 = vmatpush.msra.mxu0 %v3095
  %3786 = vmatpush.msra.mxu0 %v3092
  %3787 = vmatpush.msra.mxu0 %v3089
  %3788 = vmatpush.msra.mxu0 %v3086
  %3789 = vmatpush.msra.mxu0 %v3083
  %3790 = vmatpush.msra.mxu0 %v3080
  %3791 = vmatpush.msra.mxu0 %v3077
  %3792 = vmatmul.f32.gmra.mxu0 %v3703
  %v3793 = vpop.f32.mrf.mxu0
  %v3794 = vadd.f32 0.0, %v3793
  %3795 = vmatmul.f32.gmra.mxu0 %v3708
  %v3796 = vpop.f32.mrf.mxu0
  %v3797 = vadd.f32 0.0, %v3796
  %3798 = vmatmul.f32.gmra.mxu0 %v3712
  %v3799 = vpop.f32.mrf.mxu0
  %v3800 = vadd.f32 0.0, %v3799
  %3801 = vdwg.mxu0
  %3802 = vmatpush.msra.mxu0 0.0
  %3803 = vmatpush.msra.mxu0 0.0
  %3804 = vmatpush.msra.mxu0 0.0
  %3805 = vmatpush.msra.mxu0 0.0
  %3806 = vmatpush.msra.mxu0 0.0
  %3807 = vmatpush.msra.mxu0 0.0
  %3808 = vmatpush.msra.mxu0 0.0
  %3809 = vmatpush.msra.mxu0 0.0
  %3810 = vmatpush.msra.mxu0 %v3146
  %3811 = vmatpush.msra.mxu0 %v3143
  %3812 = vmatpush.msra.mxu0 %v3140
  %3813 = vmatpush.msra.mxu0 %v3137
  %3814 = vmatpush.msra.mxu0 %v3134
  %3815 = vmatpush.msra.mxu0 %v3131
  %3816 = vmatpush.msra.mxu0 %v3128
  %3817 = vmatpush.msra.mxu0 %v3125
  %3818 = vmatmul.f32.gmra.mxu0 %v3718
  %v3819 = vpop.f32.mrf.mxu0
  %v3820 = vadd.f32 %v3794, %v3819
  %3821 = vmatmul.f32.gmra.mxu0 %v3720
  %v3822 = vpop.f32.mrf.mxu0
  %v3823 = vadd.f32 %v3797, %v3822
  %3824 = vmatmul.f32.gmra.mxu0 %v3722
  %v3825 = vpop.f32.mrf.mxu0
  %v3826 = vadd.f32 %v3800, %v3825
  %3827 = vdwg.mxu0
  %3828 = vmatpush.msra.mxu0 %v3123
  %3829 = vmatpush.msra.mxu0 %v3120
  %3830 = vmatpush.msra.mxu0 %v3117
  %3831 = vmatpush.msra.mxu0 %v3114
  %3832 = vmatpush.msra.mxu0 %v3111
  %3833 = vmatpush.msra.mxu0 %v3108
  %3834 = vmatpush.msra.mxu0 %v3105
  %3835 = vmatpush.msra.mxu0 %v3102
  %3836 = vmatpush.msra.mxu0 %v3099
  %3837 = vmatpush.msra.mxu0 %v3096
  %3838 = vmatpush.msra.mxu0 %v3093
  %3839 = vmatpush.msra.mxu0 %v3090
  %3840 = vmatpush.msra.mxu0 %v3087
  %3841 = vmatpush.msra.mxu0 %v3084
  %3842 = vmatpush.msra.mxu0 %v3081
  %3843 = vmatpush.msra.mxu0 %v3078
  %3844 = vmatmul.f32.gmra.mxu0 %v3703
  %v3845 = vpop.f32.mrf.mxu0
  %v3846 = vadd.f32 0.0, %v3845
  %3847 = vmatmul.f32.gmra.mxu0 %v3708
  %v3848 = vpop.f32.mrf.mxu0
  %v3849 = vadd.f32 0.0, %v3848
  %3850 = vmatmul.f32.gmra.mxu0 %v3712
  %v3851 = vpop.f32.mrf.mxu0
  %v3852 = vadd.f32 0.0, %v3851
  %3853 = vdwg.mxu0
  %3854 = vmatpush.msra.mxu0 0.0
  %3855 = vmatpush.msra.mxu0 0.0
  %3856 = vmatpush.msra.mxu0 0.0
  %3857 = vmatpush.msra.mxu0 0.0
  %3858 = vmatpush.msra.mxu0 0.0
  %3859 = vmatpush.msra.mxu0 0.0
  %3860 = vmatpush.msra.mxu0 0.0
  %3861 = vmatpush.msra.mxu0 0.0
  %3862 = vmatpush.msra.mxu0 %v3147
  %3863 = vmatpush.msra.mxu0 %v3144
  %3864 = vmatpush.msra.mxu0 %v3141
  %3865 = vmatpush.msra.mxu0 %v3138
  %3866 = vmatpush.msra.mxu0 %v3135
  %3867 = vmatpush.msra.mxu0 %v3132
  %3868 = vmatpush.msra.mxu0 %v3129
  %3869 = vmatpush.msra.mxu0 %v3126
  %3870 = vmatmul.f32.gmra.mxu0 %v3718
  %v3871 = vpop.f32.mrf.mxu0
  %v3872 = vadd.f32 %v3846, %v3871
  %3873 = vmatmul.f32.gmra.mxu0 %v3720
  %v3874 = vpop.f32.mrf.mxu0
  %v3875 = vadd.f32 %v3849, %v3874
  %3876 = vmatmul.f32.gmra.mxu0 %v3722
  %v3877 = vpop.f32.mrf.mxu0
  %v3878 = vadd.f32 %v3852, %v3877
  %3879 = vdwg.mxu0
  %v3880 = vadd.f32 %v3589, %v3768
  %v3881 = vadd.f32 %v3641, %v3820
  %v3882 = vadd.f32 %v3693, %v3872
  %v3883 = vadd.f32 %v3592, %v3771
  %v3884 = vadd.f32 %v3644, %v3823
  %v3885 = vadd.f32 %v3696, %v3875
  %v3886 = vadd.f32 %v3595, %v3774
  %v3887 = vadd.f32 %v3647, %v3826
  %v3888 = vadd.f32 %v3699, %v3878
  %v3889 = vadd.f32 %v3880, %v3337
  %v3890 = vadd.f32 %v3881, %v3338
  %v3891 = vadd.f32 %v3882, %v3339
  %v3892 = vadd.f32 %v3883, %v3337
  %v3893 = vadd.f32 %v3884, %v3338
  %v3894 = vadd.f32 %v3885, %v3339
  %v3895 = vadd.f32 %v3886, %v3337
  %v3896 = vadd.f32 %v3887, %v3338
  %v3897 = vadd.f32 %v3888, %v3339
  %v3898 = vadd.f32 %v3343, %v3346
  %v3899 = vadd.f32 %v3898, %v3349
  %v3900 = vrot.slane %v3899, 4
  %v3901 = vadd.f32 %v3899, %v3900
  %v3902 = vrot.slane %v3901, 2
  %v3903 = vadd.f32 %v3901, %v3902
  %v3904 = vrot.slane %v3903, 1
  %v3905 = vadd.f32 %v3903, %v3904
  %v3906 = vadd.f32 %v3344, %v3347
  %v3907 = vadd.f32 %v3906, %v3350
  %v3908 = vrot.slane %v3907, 4
  %v3909 = vadd.f32 %v3907, %v3908
  %v3910 = vrot.slane %v3909, 2
  %v3911 = vadd.f32 %v3909, %v3910
  %v3912 = vrot.slane %v3911, 1
  %v3913 = vadd.f32 %v3911, %v3912
  %v3914 = vadd.f32 %v3345, %v3348
  %v3915 = vadd.f32 %v3914, %v3351
  %v3916 = vrot.slane %v3915, 4
  %v3917 = vadd.f32 %v3915, %v3916
  %v3918 = vrot.slane %v3917, 2
  %v3919 = vadd.f32 %v3917, %v3918
  %v3920 = vrot.slane %v3919, 1
  %v3921 = vadd.f32 %v3919, %v3920
  %v3922 = vmul.f32 %v3343, %v3343
  %v3923 = vmul.f32 %v3344, %v3344
  %v3924 = vmul.f32 %v3345, %v3345
  %v3925 = vmul.f32 %v3346, %v3346
  %v3926 = vmul.f32 %v3347, %v3347
  %v3927 = vmul.f32 %v3348, %v3348
  %v3928 = vmul.f32 %v3349, %v3349
  %v3929 = vmul.f32 %v3350, %v3350
  %v3930 = vmul.f32 %v3351, %v3351
  %v3931 = vadd.f32 %v3922, %v3925
  %v3932 = vadd.f32 %v3931, %v3928
  %v3933 = vrot.slane %v3932, 4
  %v3934 = vadd.f32 %v3932, %v3933
  %v3935 = vrot.slane %v3934, 2
  %v3936 = vadd.f32 %v3934, %v3935
  %v3937 = vrot.slane %v3936, 1
  %v3938 = vadd.f32 %v3936, %v3937
  %v3939 = vadd.f32 %v3923, %v3926
  %v3940 = vadd.f32 %v3939, %v3929
  %v3941 = vrot.slane %v3940, 4
  %v3942 = vadd.f32 %v3940, %v3941
  %v3943 = vrot.slane %v3942, 2
  %v3944 = vadd.f32 %v3942, %v3943
  %v3945 = vrot.slane %v3944, 1
  %v3946 = vadd.f32 %v3944, %v3945
  %v3947 = vadd.f32 %v3924, %v3927
  %v3948 = vadd.f32 %v3947, %v3930
  %v3949 = vrot.slane %v3948, 4
  %v3950 = vadd.f32 %v3948, %v3949
  %v3951 = vrot.slane %v3950, 2
  %v3952 = vadd.f32 %v3950, %v3951
  %v3953 = vrot.slane %v3952, 1
  %v3954 = vadd.f32 %v3952, %v3953
  %v3955 = vadd.f32 %v3889, %v3892
  %v3956 = vadd.f32 %v3955, %v3895
  %v3957 = vrot.slane %v3956, 4
  %v3958 = vadd.f32 %v3956, %v3957
  %v3959 = vrot.slane %v3958, 2
  %v3960 = vadd.f32 %v3958, %v3959
  %v3961 = vrot.slane %v3960, 1
  %v3962 = vadd.f32 %v3960, %v3961
  %v3963 = vadd.f32 %v3890, %v3893
  %v3964 = vadd.f32 %v3963, %v3896
  %v3965 = vrot.slane %v3964, 4
  %v3966 = vadd.f32 %v3964, %v3965
  %v3967 = vrot.slane %v3966, 2
  %v3968 = vadd.f32 %v3966, %v3967
  %v3969 = vrot.slane %v3968, 1
  %v3970 = vadd.f32 %v3968, %v3969
  %v3971 = vadd.f32 %v3891, %v3894
  %v3972 = vadd.f32 %v3971, %v3897
  %v3973 = vrot.slane %v3972, 4
  %v3974 = vadd.f32 %v3972, %v3973
  %v3975 = vrot.slane %v3974, 2
  %v3976 = vadd.f32 %v3974, %v3975
  %v3977 = vrot.slane %v3976, 1
  %v3978 = vadd.f32 %v3976, %v3977
  %v3979 = vadd.f32 %v3905, %v3962
  %v3980 = vadd.f32 %v3913, %v3970
  %v3981 = vadd.f32 %v3921, %v3978
  %v3982 = vmul.f32 %v3889, %v3889
  %v3983 = vmul.f32 %v3890, %v3890
  %v3984 = vmul.f32 %v3891, %v3891
  %v3985 = vmul.f32 %v3892, %v3892
  %v3986 = vmul.f32 %v3893, %v3893
  %v3987 = vmul.f32 %v3894, %v3894
  %v3988 = vmul.f32 %v3895, %v3895
  %v3989 = vmul.f32 %v3896, %v3896
  %v3990 = vmul.f32 %v3897, %v3897
  %v3991 = vadd.f32 %v3982, %v3985
  %v3992 = vadd.f32 %v3991, %v3988
  %v3993 = vrot.slane %v3992, 4
  %v3994 = vadd.f32 %v3992, %v3993
  %v3995 = vrot.slane %v3994, 2
  %v3996 = vadd.f32 %v3994, %v3995
  %v3997 = vrot.slane %v3996, 1
  %v3998 = vadd.f32 %v3996, %v3997
  %v3999 = vadd.f32 %v3983, %v3986
  %v4000 = vadd.f32 %v3999, %v3989
  %v4001 = vrot.slane %v4000, 4
  %v4002 = vadd.f32 %v4000, %v4001
  %v4003 = vrot.slane %v4002, 2
  %v4004 = vadd.f32 %v4002, %v4003
  %v4005 = vrot.slane %v4004, 1
  %v4006 = vadd.f32 %v4004, %v4005
  %v4007 = vadd.f32 %v3984, %v3987
  %v4008 = vadd.f32 %v4007, %v3990
  %v4009 = vrot.slane %v4008, 4
  %v4010 = vadd.f32 %v4008, %v4009
  %v4011 = vrot.slane %v4010, 2
  %v4012 = vadd.f32 %v4010, %v4011
  %v4013 = vrot.slane %v4012, 1
  %v4014 = vadd.f32 %v4012, %v4013
  %v4015 = vadd.f32 %v3938, %v3998
  %v4016 = vadd.f32 %v3946, %v4006
  %v4017 = vadd.f32 %v3954, %v4014
  %v4018 = vmul.f32 %v3979, 0.020833334
  %v4019 = vmul.f32 %v3980, 0.020833334
  %v4020 = vmul.f32 %v3981, 0.020833334
  %v4021 = vmul.f32 %v4015, 0.020833334
  %v4022 = vmul.f32 %v4016, 0.020833334
  %v4023 = vmul.f32 %v4017, 0.020833334
  %v4024 = vmul.f32 %v4018, %v4018
  %v4025 = vmul.f32 %v4019, %v4019
  %v4026 = vmul.f32 %v4020, %v4020
  %v4027 = vsub.f32 %v4021, %v4024
  %v4028 = vsub.f32 %v4022, %v4025
  %v4029 = vsub.f32 %v4023, %v4026
  %v4030 = vmax.f32 %v4027, 0.0
  %v4031 = vmax.f32 %v4028, 0.0
  %v4032 = vmax.f32 %v4029, 0.0
  %v4033 = vadd.f32 %v4030, 1e-05
  %v4034 = vadd.f32 %v4031, 1e-05
  %v4035 = vadd.f32 %v4032, 1e-05
  %v4036 = vrsqrt.pop %v4033
  %v4037 = vmul.f32 %v4036, %v4033
  %v4038 = vmul.f32 %v4037, %v4036
  %v4039 = vmul.f32 0.5, %v4038
  %v4040 = vsub.f32 1.5, %v4039
  %v4041 = vmul.f32 %v4036, %v4040
  %vm4042 = vweird.f32 %v4033
  %vm4043 = vweird.f32 %v4036
  %vm4044 = vmor %vm4042, %vm4043
  %v4045 = vsel %vm4044, %v4036, %v4041
  %v4046 = vrsqrt.pop %v4034
  %v4047 = vmul.f32 %v4046, %v4034
  %v4048 = vmul.f32 %v4047, %v4046
  %v4049 = vmul.f32 0.5, %v4048
  %v4050 = vsub.f32 1.5, %v4049
  %v4051 = vmul.f32 %v4046, %v4050
  %vm4052 = vweird.f32 %v4034
  %vm4053 = vweird.f32 %v4046
  %vm4054 = vmor %vm4052, %vm4053
  %v4055 = vsel %vm4054, %v4046, %v4051
  %v4056 = vrsqrt.pop %v4035
  %v4057 = vmul.f32 %v4056, %v4035
  %v4058 = vmul.f32 %v4057, %v4056
  %v4059 = vmul.f32 0.5, %v4058
  %v4060 = vsub.f32 1.5, %v4059
  %v4061 = vmul.f32 %v4056, %v4060
  %vm4062 = vweird.f32 %v4035
  %vm4063 = vweird.f32 %v4056
  %vm4064 = vmor %vm4062, %vm4063
  %v4065 = vsel %vm4064, %v4056, %v4061
  %v4069 = vrot.slane %v4055, 7
  %v4070 = vrot.slane %v4065, 6
  %v4071 = vsel %vm994, %v4045, %v4069
  %vm4072 = vcmask 1041408
  %v4073 = vsel %vm4072, %v4071, %v4070
  %v4075 = vmul.f32 %v2578, %v4073
  %v4077 = vperm.slane %v4075, 0
  %v4078 = vperm.slane %v4075, 1
  %v4079 = vperm.slane %v4075, 2
  %v4083 = vmul.f32 %v4018, %v4077
  %v4084 = vmul.f32 %v4019, %v4078
  %v4085 = vmul.f32 %v4020, %v4079
  %v4089 = vrot.slane %v4084, 7
  %v4090 = vrot.slane %v4085, 6
  %v4091 = vsel %vm994, %v4083, %v4089
  %v4092 = vsel %vm4072, %v4091, %v4090
  %v4094 = vsub.f32 %v2580, %v4092
  %v4095 = vmul.f32 %v3343, %v4077
  %v4096 = vmul.f32 %v3344, %v4078
  %v4097 = vmul.f32 %v3345, %v4079
  %v4098 = vmul.f32 %v3346, %v4077
  %v4099 = vmul.f32 %v3347, %v4078
  %v4100 = vmul.f32 %v3348, %v4079
  %v4101 = vmul.f32 %v3349, %v4077
  %v4102 = vmul.f32 %v3350, %v4078
  %v4103 = vmul.f32 %v3351, %v4079
  %v4105 = vperm.slane %v4094, 0
  %v4106 = vperm.slane %v4094, 1
  %v4107 = vperm.slane %v4094, 2
  %v4111 = vadd.f32 %v4095, %v4105
  %v4112 = vadd.f32 %v4096, %v4106
  %v4113 = vadd.f32 %v4097, %v4107
  %v4114 = vadd.f32 %v4098, %v4105
  %v4115 = vadd.f32 %v4099, %v4106
  %v4116 = vadd.f32 %v4100, %v4107
  %v4117 = vadd.f32 %v4101, %v4105
  %v4118 = vadd.f32 %v4102, %v4106
  %v4119 = vadd.f32 %v4103, %v4107
  %v4120 = vmax.f32 %v4111, 0.0
  %v4121 = vmax.f32 %v4112, 0.0
  %v4122 = vmax.f32 %v4113, 0.0
  %v4123 = vmax.f32 %v4114, 0.0
  %v4124 = vmax.f32 %v4115, 0.0
  %v4125 = vmax.f32 %v4116, 0.0
  %v4126 = vmax.f32 %v4117, 0.0
  %v4127 = vmax.f32 %v4118, 0.0
  %v4128 = vmax.f32 %v4119, 0.0
  %v4129 = vmul.f32 %v3889, %v4077
  %v4130 = vmul.f32 %v3890, %v4078
  %v4131 = vmul.f32 %v3891, %v4079
  %v4132 = vmul.f32 %v3892, %v4077
  %v4133 = vmul.f32 %v3893, %v4078
  %v4134 = vmul.f32 %v3894, %v4079
  %v4135 = vmul.f32 %v3895, %v4077
  %v4136 = vmul.f32 %v3896, %v4078
  %v4137 = vmul.f32 %v3897, %v4079
  %v4138 = vadd.f32 %v4129, %v4105
  %v4139 = vadd.f32 %v4130, %v4106
  %v4140 = vadd.f32 %v4131, %v4107
  %v4141 = vadd.f32 %v4132, %v4105
  %v4142 = vadd.f32 %v4133, %v4106
  %v4143 = vadd.f32 %v4134, %v4107
  %v4144 = vadd.f32 %v4135, %v4105
  %v4145 = vadd.f32 %v4136, %v4106
  %v4146 = vadd.f32 %v4137, %v4107
  %v4147 = vmax.f32 %v4138, 0.0
  %v4148 = vmax.f32 %v4139, 0.0
  %v4149 = vmax.f32 %v4140, 0.0
  %v4150 = vmax.f32 %v4141, 0.0
  %v4151 = vmax.f32 %v4142, 0.0
  %v4152 = vmax.f32 %v4143, 0.0
  %v4153 = vmax.f32 %v4144, 0.0
  %v4154 = vmax.f32 %v4145, 0.0
  %v4155 = vmax.f32 %v4146, 0.0
  %vm4156 = vcmask 195584
  %v4158 = vsel %vm4156, %v61, 0
  %v4161 = vsel %vm4156, %v62, 0
  %v4164 = vsel %vm4156, %v63, 0
  %v4167 = vsel %vm4156, %v64, 0
  %4169 = vmatpush.msra.mxu0 0.0
  %4170 = vmatpush.msra.mxu0 0.0
  %4171 = vmatpush.msra.mxu0 0.0
  %4172 = vmatpush.msra.mxu0 0.0
  %4173 = vmatpush.msra.mxu0 0.0
  %4174 = vmatpush.msra.mxu0 0.0
  %4175 = vmatpush.msra.mxu0 0.0
  %4176 = vmatpush.msra.mxu0 0.0
  %4177 = vmatpush.msra.mxu0 0.0
  %4178 = vmatpush.msra.mxu0 0.0
  %4179 = vmatpush.msra.mxu0 0.0
  %4180 = vmatpush.msra.mxu0 0.0
  %4181 = vmatpush.msra.mxu0 0.0
  %4182 = vmatpush.msra.mxu0 %v4126
  %4183 = vmatpush.msra.mxu0 %v4123
  %4184 = vmatpush.msra.mxu0 %v4120
  %4185 = vmatmul.f32.gmra.mxu0 %v4158
  %v4186 = vpop.f32.mrf.mxu0
  %v4187 = vadd.f32 0.0, %v4186
  %4188 = vmatmul.f32.gmra.mxu0 %v4161
  %v4189 = vpop.f32.mrf.mxu0
  %v4190 = vadd.f32 0.0, %v4189
  %4191 = vmatmul.f32.gmra.mxu0 %v4164
  %v4192 = vpop.f32.mrf.mxu0
  %v4193 = vadd.f32 0.0, %v4192
  %4194 = vmatmul.f32.gmra.mxu0 %v4167
  %v4195 = vpop.f32.mrf.mxu0
  %v4196 = vadd.f32 0.0, %v4195
  %4197 = vdwg.mxu0
  %4198 = vmatpush.msra.mxu0 0.0
  %4199 = vmatpush.msra.mxu0 0.0
  %4200 = vmatpush.msra.mxu0 0.0
  %4201 = vmatpush.msra.mxu0 0.0
  %4202 = vmatpush.msra.mxu0 0.0
  %4203 = vmatpush.msra.mxu0 0.0
  %4204 = vmatpush.msra.mxu0 0.0
  %4205 = vmatpush.msra.mxu0 0.0
  %4206 = vmatpush.msra.mxu0 0.0
  %4207 = vmatpush.msra.mxu0 0.0
  %4208 = vmatpush.msra.mxu0 0.0
  %4209 = vmatpush.msra.mxu0 0.0
  %4210 = vmatpush.msra.mxu0 0.0
  %4211 = vmatpush.msra.mxu0 %v4127
  %4212 = vmatpush.msra.mxu0 %v4124
  %4213 = vmatpush.msra.mxu0 %v4121
  %4214 = vmatmul.f32.gmra.mxu0 %v4158
  %v4215 = vpop.f32.mrf.mxu0
  %v4216 = vadd.f32 0.0, %v4215
  %4217 = vmatmul.f32.gmra.mxu0 %v4161
  %v4218 = vpop.f32.mrf.mxu0
  %v4219 = vadd.f32 0.0, %v4218
  %4220 = vmatmul.f32.gmra.mxu0 %v4164
  %v4221 = vpop.f32.mrf.mxu0
  %v4222 = vadd.f32 0.0, %v4221
  %4223 = vmatmul.f32.gmra.mxu0 %v4167
  %v4224 = vpop.f32.mrf.mxu0
  %v4225 = vadd.f32 0.0, %v4224
  %4226 = vdwg.mxu0
  %4227 = vmatpush.msra.mxu0 0.0
  %4228 = vmatpush.msra.mxu0 0.0
  %4229 = vmatpush.msra.mxu0 0.0
  %4230 = vmatpush.msra.mxu0 0.0
  %4231 = vmatpush.msra.mxu0 0.0
  %4232 = vmatpush.msra.mxu0 0.0
  %4233 = vmatpush.msra.mxu0 0.0
  %4234 = vmatpush.msra.mxu0 0.0
  %4235 = vmatpush.msra.mxu0 0.0
  %4236 = vmatpush.msra.mxu0 0.0
  %4237 = vmatpush.msra.mxu0 0.0
  %4238 = vmatpush.msra.mxu0 0.0
  %4239 = vmatpush.msra.mxu0 0.0
  %4240 = vmatpush.msra.mxu0 %v4128
  %4241 = vmatpush.msra.mxu0 %v4125
  %4242 = vmatpush.msra.mxu0 %v4122
  %4243 = vmatmul.f32.gmra.mxu0 %v4158
  %v4244 = vpop.f32.mrf.mxu0
  %v4245 = vadd.f32 0.0, %v4244
  %4246 = vmatmul.f32.gmra.mxu0 %v4161
  %v4247 = vpop.f32.mrf.mxu0
  %v4248 = vadd.f32 0.0, %v4247
  %4249 = vmatmul.f32.gmra.mxu0 %v4164
  %v4250 = vpop.f32.mrf.mxu0
  %v4251 = vadd.f32 0.0, %v4250
  %4252 = vmatmul.f32.gmra.mxu0 %v4167
  %v4253 = vpop.f32.mrf.mxu0
  %v4254 = vadd.f32 0.0, %v4253
  %4255 = vdwg.mxu0
  %4256 = vmatpush.msra.mxu0 0.0
  %4257 = vmatpush.msra.mxu0 0.0
  %4258 = vmatpush.msra.mxu0 0.0
  %4259 = vmatpush.msra.mxu0 0.0
  %4260 = vmatpush.msra.mxu0 0.0
  %4261 = vmatpush.msra.mxu0 0.0
  %4262 = vmatpush.msra.mxu0 0.0
  %4263 = vmatpush.msra.mxu0 0.0
  %4264 = vmatpush.msra.mxu0 0.0
  %4265 = vmatpush.msra.mxu0 0.0
  %4266 = vmatpush.msra.mxu0 0.0
  %4267 = vmatpush.msra.mxu0 0.0
  %4268 = vmatpush.msra.mxu0 0.0
  %4269 = vmatpush.msra.mxu0 %v4153
  %4270 = vmatpush.msra.mxu0 %v4150
  %4271 = vmatpush.msra.mxu0 %v4147
  %4272 = vmatmul.f32.gmra.mxu0 %v4158
  %v4273 = vpop.f32.mrf.mxu0
  %v4274 = vadd.f32 0.0, %v4273
  %4275 = vmatmul.f32.gmra.mxu0 %v4161
  %v4276 = vpop.f32.mrf.mxu0
  %v4277 = vadd.f32 0.0, %v4276
  %4278 = vmatmul.f32.gmra.mxu0 %v4164
  %v4279 = vpop.f32.mrf.mxu0
  %v4280 = vadd.f32 0.0, %v4279
  %4281 = vmatmul.f32.gmra.mxu0 %v4167
  %v4282 = vpop.f32.mrf.mxu0
  %v4283 = vadd.f32 0.0, %v4282
  %4284 = vdwg.mxu0
  %4285 = vmatpush.msra.mxu0 0.0
  %4286 = vmatpush.msra.mxu0 0.0
  %4287 = vmatpush.msra.mxu0 0.0
  %4288 = vmatpush.msra.mxu0 0.0
  %4289 = vmatpush.msra.mxu0 0.0
  %4290 = vmatpush.msra.mxu0 0.0
  %4291 = vmatpush.msra.mxu0 0.0
  %4292 = vmatpush.msra.mxu0 0.0
  %4293 = vmatpush.msra.mxu0 0.0
  %4294 = vmatpush.msra.mxu0 0.0
  %4295 = vmatpush.msra.mxu0 0.0
  %4296 = vmatpush.msra.mxu0 0.0
  %4297 = vmatpush.msra.mxu0 0.0
  %4298 = vmatpush.msra.mxu0 %v4154
  %4299 = vmatpush.msra.mxu0 %v4151
  %4300 = vmatpush.msra.mxu0 %v4148
  %4301 = vmatmul.f32.gmra.mxu0 %v4158
  %v4302 = vpop.f32.mrf.mxu0
  %v4303 = vadd.f32 0.0, %v4302
  %4304 = vmatmul.f32.gmra.mxu0 %v4161
  %v4305 = vpop.f32.mrf.mxu0
  %v4306 = vadd.f32 0.0, %v4305
  %4307 = vmatmul.f32.gmra.mxu0 %v4164
  %v4308 = vpop.f32.mrf.mxu0
  %v4309 = vadd.f32 0.0, %v4308
  %4310 = vmatmul.f32.gmra.mxu0 %v4167
  %v4311 = vpop.f32.mrf.mxu0
  %v4312 = vadd.f32 0.0, %v4311
  %4313 = vdwg.mxu0
  %4314 = vmatpush.msra.mxu0 0.0
  %4315 = vmatpush.msra.mxu0 0.0
  %4316 = vmatpush.msra.mxu0 0.0
  %4317 = vmatpush.msra.mxu0 0.0
  %4318 = vmatpush.msra.mxu0 0.0
  %4319 = vmatpush.msra.mxu0 0.0
  %4320 = vmatpush.msra.mxu0 0.0
  %4321 = vmatpush.msra.mxu0 0.0
  %4322 = vmatpush.msra.mxu0 0.0
  %4323 = vmatpush.msra.mxu0 0.0
  %4324 = vmatpush.msra.mxu0 0.0
  %4325 = vmatpush.msra.mxu0 0.0
  %4326 = vmatpush.msra.mxu0 0.0
  %4327 = vmatpush.msra.mxu0 %v4155
  %4328 = vmatpush.msra.mxu0 %v4152
  %4329 = vmatpush.msra.mxu0 %v4149
  %4330 = vmatmul.f32.gmra.mxu0 %v4158
  %v4331 = vpop.f32.mrf.mxu0
  %v4332 = vadd.f32 0.0, %v4331
  %4333 = vmatmul.f32.gmra.mxu0 %v4161
  %v4334 = vpop.f32.mrf.mxu0
  %v4335 = vadd.f32 0.0, %v4334
  %4336 = vmatmul.f32.gmra.mxu0 %v4164
  %v4337 = vpop.f32.mrf.mxu0
  %v4338 = vadd.f32 0.0, %v4337
  %4339 = vmatmul.f32.gmra.mxu0 %v4167
  %v4340 = vpop.f32.mrf.mxu0
  %v4341 = vadd.f32 0.0, %v4340
  %4342 = vdwg.mxu0
  %v4343 = vld [vmem:[%s8] ss:$4 sm:$0x3]
  %s4344 = scalar_lea.vmem %s8, 1
  %v4345 = vld [vmem:[%s4344] ss:$4 sm:$0x3]
  %s4346 = scalar_lea.vmem %s8, 2
  %v4347 = vld [vmem:[%s4346] ss:$4 sm:$0x3]
  %v4348 = vld [vmem:[%s7] sm:$0xff]
  %v4349 = vld [vmem:[%s7 + $0x8] sm:$0xff]
  %v4350 = vld [vmem:[%s7 + $0x10] sm:$0xff]
  %v4351 = vld [vmem:[%s7 + $0x18] sm:$0xff]
  %v4352 = vld [vmem:[%s7 + $0x20] sm:$0xff]
  %v4353 = vld [vmem:[%s7 + $0x28] sm:$0xff]
  %v4354 = vld [vmem:[%s7 + $0x30] sm:$0xff]
  %v4355 = vld [vmem:[%s7 + $0x38] sm:$0xff]
  %v4356 = vld [vmem:[%s7 + $0x40] sm:$0xff]
  %v4357 = vld [vmem:[%s7 + $0x48] sm:$0xff]
  %v4358 = vld [vmem:[%s7 + $0x50] sm:$0xff]
  %v4359 = vld [vmem:[%s7 + $0x58] sm:$0xff]
  %v4360 = vld [vmem:[%s7 + $0x60] sm:$0xff]
  %v4361 = vld [vmem:[%s7 + $0x68] sm:$0xff]
  %v4362 = vld [vmem:[%s7 + $0x70] sm:$0xff]
  %v4363 = vld [vmem:[%s7 + $0x78] sm:$0xff]
  %v4364 = vld [vmem:[%s7 + $0x80] sm:$0xff]
  %v4365 = vld [vmem:[%s7 + $0x88] sm:$0xff]
  %v4366 = vld [vmem:[%s7 + $0x90] sm:$0xff]
  %v4367 = vld [vmem:[%s7 + $0x98] sm:$0xff]
  %v4368 = vld [vmem:[%s7 + $0xa0] sm:$0xff]
  %v4369 = vld [vmem:[%s7 + $0xa8] sm:$0xff]
  %v4370 = vld [vmem:[%s7 + $0xb0] sm:$0xff]
  %v4371 = vld [vmem:[%s7 + $0xb8] sm:$0xff]
  %v4372 = vld [vmem:[%s7 + $0xc0] sm:$0xff]
  %v4373 = vld [vmem:[%s7 + $0xc8] sm:$0xff]
  %v4374 = vld [vmem:[%s7 + $0xd0] sm:$0xff]
  %v4375 = vld [vmem:[%s7 + $0xd8] sm:$0xff]
  %v4376 = vld [vmem:[%s7 + $0xe0] sm:$0xff]
  %v4377 = vld [vmem:[%s7 + $0xe8] sm:$0xff]
  %v4378 = vld [vmem:[%s7 + $0xf0] sm:$0xff]
  %v4379 = vld [vmem:[%s7 + $0xf8] sm:$0xff]
  %v4380 = vld [vmem:[%s7 + $0x100] sm:$0xff]
  %v4381 = vld [vmem:[%s7 + $0x108] sm:$0xff]
  %v4382 = vld [vmem:[%s7 + $0x110] sm:$0xff]
  %v4383 = vld [vmem:[%s7 + $0x118] sm:$0xff]
  %v4384 = vld [vmem:[%s7 + $0x120] sm:$0xff]
  %v4385 = vld [vmem:[%s7 + $0x128] sm:$0xff]
  %v4386 = vld [vmem:[%s7 + $0x130] sm:$0xff]
  %v4387 = vld [vmem:[%s7 + $0x138] sm:$0xff]
  %v4388 = vld [vmem:[%s7 + $0x140] sm:$0xff]
  %v4389 = vld [vmem:[%s7 + $0x148] sm:$0xff]
  %v4390 = vld [vmem:[%s7 + $0x150] sm:$0xff]
  %v4391 = vld [vmem:[%s7 + $0x158] sm:$0xff]
  %v4392 = vld [vmem:[%s7 + $0x160] sm:$0xff]
  %v4393 = vld [vmem:[%s7 + $0x168] sm:$0xff]
  %v4394 = vld [vmem:[%s7 + $0x170] sm:$0xff]
  %v4395 = vld [vmem:[%s7 + $0x178] sm:$0xff]
  %v4396 = vld [vmem:[%s7 + $0x180] sm:$0xff]
  %v4397 = vld [vmem:[%s7 + $0x188] sm:$0xff]
  %v4398 = vld [vmem:[%s7 + $0x190] sm:$0xff]
  %v4399 = vld [vmem:[%s7 + $0x198] sm:$0xff]
  %v4400 = vld [vmem:[%s7 + $0x1a0] sm:$0xff]
  %v4401 = vld [vmem:[%s7 + $0x1a8] sm:$0xff]
  %v4402 = vld [vmem:[%s7 + $0x1b0] sm:$0xff]
  %v4403 = vld [vmem:[%s7 + $0x1b8] sm:$0xff]
  %v4404 = vld [vmem:[%s7 + $0x1c0] sm:$0xff]
  %v4405 = vld [vmem:[%s7 + $0x1c8] sm:$0xff]
  %v4406 = vld [vmem:[%s7 + $0x1d0] sm:$0xff]
  %v4407 = vld [vmem:[%s7 + $0x1d8] sm:$0xff]
  %v4408 = vld [vmem:[%s7 + $0x1e0] sm:$0xff]
  %v4409 = vld [vmem:[%s7 + $0x1e8] sm:$0xff]
  %v4410 = vld [vmem:[%s7 + $0x1f0] sm:$0xff]
  %v4411 = vld [vmem:[%s7 + $0x1f8] sm:$0xff]
  %v4412 = vld [vmem:[%s7 + $0x200] sm:$0xff]
  %v4413 = vld [vmem:[%s7 + $0x208] sm:$0xff]
  %v4414 = vld [vmem:[%s7 + $0x210] sm:$0xff]
  %v4415 = vld [vmem:[%s7 + $0x218] sm:$0xff]
  %v4416 = vld [vmem:[%s7 + $0x220] sm:$0xff]
  %v4417 = vld [vmem:[%s7 + $0x228] sm:$0xff]
  %v4418 = vld [vmem:[%s7 + $0x230] sm:$0xff]
  %v4419 = vld [vmem:[%s7 + $0x238] sm:$0xff]
  %v4420 = vld [vmem:[%s7 + $0x240] sm:$0xff]
  %v4421 = vld [vmem:[%s7 + $0x248] sm:$0xff]
  %v4422 = vld [vmem:[%s7 + $0x250] sm:$0xff]
  %v4423 = vld [vmem:[%s7 + $0x258] sm:$0xff]
  %v4424 = vld [vmem:[%s7 + $0x260] sm:$0xff]
  %v4425 = vld [vmem:[%s7 + $0x268] sm:$0xff]
  %v4426 = vld [vmem:[%s7 + $0x270] sm:$0xff]
  %v4427 = vld [vmem:[%s7 + $0x278] sm:$0xff]
  %v4428 = vld [vmem:[%s7 + $0x280] sm:$0xff]
  %v4429 = vld [vmem:[%s7 + $0x288] sm:$0xff]
  %v4430 = vld [vmem:[%s7 + $0x290] sm:$0xff]
  %v4431 = vld [vmem:[%s7 + $0x298] sm:$0xff]
  %v4432 = vld [vmem:[%s7 + $0x2a0] sm:$0xff]
  %v4433 = vld [vmem:[%s7 + $0x2a8] sm:$0xff]
  %v4434 = vld [vmem:[%s7 + $0x2b0] sm:$0xff]
  %v4435 = vld [vmem:[%s7 + $0x2b8] sm:$0xff]
  %v4436 = vld [vmem:[%s7 + $0x2c0] sm:$0xff]
  %v4437 = vld [vmem:[%s7 + $0x2c8] sm:$0xff]
  %v4438 = vld [vmem:[%s7 + $0x2d0] sm:$0xff]
  %v4439 = vld [vmem:[%s7 + $0x2d8] sm:$0xff]
  %v4440 = vld [vmem:[%s7 + $0x2e0] sm:$0xff]
  %v4441 = vld [vmem:[%s7 + $0x2e8] sm:$0xff]
  %v4442 = vld [vmem:[%s7 + $0x2f0] sm:$0xff]
  %v4443 = vld [vmem:[%s7 + $0x2f8] sm:$0xff]
  %s4444 = scalar_lea.vmem %s7, 768
  %v4445 = vld [vmem:[%s4444] sm:$0xff]
  %v4446 = vld [vmem:[%s4444 + $0x8] sm:$0xff]
  %v4447 = vld [vmem:[%s4444 + $0x10] sm:$0xff]
  %v4448 = vld [vmem:[%s4444 + $0x18] sm:$0xff]
  %v4449 = vld [vmem:[%s4444 + $0x20] sm:$0xff]
  %v4450 = vld [vmem:[%s4444 + $0x28] sm:$0xff]
  %v4451 = vld [vmem:[%s4444 + $0x30] sm:$0xff]
  %v4452 = vld [vmem:[%s4444 + $0x38] sm:$0xff]
  %v4453 = vld [vmem:[%s4444 + $0x40] sm:$0xff]
  %v4454 = vld [vmem:[%s4444 + $0x48] sm:$0xff]
  %v4455 = vld [vmem:[%s4444 + $0x50] sm:$0xff]
  %v4456 = vld [vmem:[%s4444 + $0x58] sm:$0xff]
  %v4457 = vld [vmem:[%s4444 + $0x60] sm:$0xff]
  %v4458 = vld [vmem:[%s4444 + $0x68] sm:$0xff]
  %v4459 = vld [vmem:[%s4444 + $0x70] sm:$0xff]
  %v4460 = vld [vmem:[%s4444 + $0x78] sm:$0xff]
  %v4461 = vld [vmem:[%s4444 + $0x80] sm:$0xff]
  %v4462 = vld [vmem:[%s4444 + $0x88] sm:$0xff]
  %v4463 = vld [vmem:[%s4444 + $0x90] sm:$0xff]
  %v4464 = vld [vmem:[%s4444 + $0x98] sm:$0xff]
  %v4465 = vld [vmem:[%s4444 + $0xa0] sm:$0xff]
  %v4466 = vld [vmem:[%s4444 + $0xa8] sm:$0xff]
  %v4467 = vld [vmem:[%s4444 + $0xb0] sm:$0xff]
  %v4468 = vld [vmem:[%s4444 + $0xb8] sm:$0xff]
  %v4469 = vld [vmem:[%s4444 + $0xc0] sm:$0xff]
  %v4470 = vld [vmem:[%s4444 + $0xc8] sm:$0xff]
  %v4471 = vld [vmem:[%s4444 + $0xd0] sm:$0xff]
  %v4472 = vld [vmem:[%s4444 + $0xd8] sm:$0xff]
  %v4473 = vld [vmem:[%s4444 + $0xe0] sm:$0xff]
  %v4474 = vld [vmem:[%s4444 + $0xe8] sm:$0xff]
  %v4475 = vld [vmem:[%s4444 + $0xf0] sm:$0xff]
  %v4476 = vld [vmem:[%s4444 + $0xf8] sm:$0xff]
  %v4477 = vld [vmem:[%s4444 + $0x100] sm:$0xff]
  %v4478 = vld [vmem:[%s4444 + $0x108] sm:$0xff]
  %v4479 = vld [vmem:[%s4444 + $0x110] sm:$0xff]
  %v4480 = vld [vmem:[%s4444 + $0x118] sm:$0xff]
  %v4481 = vld [vmem:[%s4444 + $0x120] sm:$0xff]
  %v4482 = vld [vmem:[%s4444 + $0x128] sm:$0xff]
  %v4483 = vld [vmem:[%s4444 + $0x130] sm:$0xff]
  %v4484 = vld [vmem:[%s4444 + $0x138] sm:$0xff]
  %v4485 = vld [vmem:[%s4444 + $0x140] sm:$0xff]
  %v4486 = vld [vmem:[%s4444 + $0x148] sm:$0xff]
  %v4487 = vld [vmem:[%s4444 + $0x150] sm:$0xff]
  %v4488 = vld [vmem:[%s4444 + $0x158] sm:$0xff]
  %v4489 = vld [vmem:[%s4444 + $0x160] sm:$0xff]
  %v4490 = vld [vmem:[%s4444 + $0x168] sm:$0xff]
  %v4491 = vld [vmem:[%s4444 + $0x170] sm:$0xff]
  %v4492 = vld [vmem:[%s4444 + $0x178] sm:$0xff]
  %v4493 = vld [vmem:[%s4444 + $0x180] sm:$0xff]
  %v4494 = vld [vmem:[%s4444 + $0x188] sm:$0xff]
  %v4495 = vld [vmem:[%s4444 + $0x190] sm:$0xff]
  %v4496 = vld [vmem:[%s4444 + $0x198] sm:$0xff]
  %v4497 = vld [vmem:[%s4444 + $0x1a0] sm:$0xff]
  %v4498 = vld [vmem:[%s4444 + $0x1a8] sm:$0xff]
  %v4499 = vld [vmem:[%s4444 + $0x1b0] sm:$0xff]
  %v4500 = vld [vmem:[%s4444 + $0x1b8] sm:$0xff]
  %v4501 = vld [vmem:[%s4444 + $0x1c0] sm:$0xff]
  %v4502 = vld [vmem:[%s4444 + $0x1c8] sm:$0xff]
  %v4503 = vld [vmem:[%s4444 + $0x1d0] sm:$0xff]
  %v4504 = vld [vmem:[%s4444 + $0x1d8] sm:$0xff]
  %v4505 = vld [vmem:[%s4444 + $0x1e0] sm:$0xff]
  %v4506 = vld [vmem:[%s4444 + $0x1e8] sm:$0xff]
  %v4507 = vld [vmem:[%s4444 + $0x1f0] sm:$0xff]
  %v4508 = vld [vmem:[%s4444 + $0x1f8] sm:$0xff]
  %v4509 = vld [vmem:[%s4444 + $0x200] sm:$0xff]
  %v4510 = vld [vmem:[%s4444 + $0x208] sm:$0xff]
  %v4511 = vld [vmem:[%s4444 + $0x210] sm:$0xff]
  %v4512 = vld [vmem:[%s4444 + $0x218] sm:$0xff]
  %v4513 = vld [vmem:[%s4444 + $0x220] sm:$0xff]
  %v4514 = vld [vmem:[%s4444 + $0x228] sm:$0xff]
  %v4515 = vld [vmem:[%s4444 + $0x230] sm:$0xff]
  %v4516 = vld [vmem:[%s4444 + $0x238] sm:$0xff]
  %v4517 = vld [vmem:[%s4444 + $0x240] sm:$0xff]
  %v4518 = vld [vmem:[%s4444 + $0x248] sm:$0xff]
  %v4519 = vld [vmem:[%s4444 + $0x250] sm:$0xff]
  %v4520 = vld [vmem:[%s4444 + $0x258] sm:$0xff]
  %v4521 = vld [vmem:[%s4444 + $0x260] sm:$0xff]
  %v4522 = vld [vmem:[%s4444 + $0x268] sm:$0xff]
  %v4523 = vld [vmem:[%s4444 + $0x270] sm:$0xff]
  %v4524 = vld [vmem:[%s4444 + $0x278] sm:$0xff]
  %v4525 = vld [vmem:[%s4444 + $0x280] sm:$0xff]
  %v4526 = vld [vmem:[%s4444 + $0x288] sm:$0xff]
  %v4527 = vld [vmem:[%s4444 + $0x290] sm:$0xff]
  %v4528 = vld [vmem:[%s4444 + $0x298] sm:$0xff]
  %v4529 = vld [vmem:[%s4444 + $0x2a0] sm:$0xff]
  %v4530 = vld [vmem:[%s4444 + $0x2a8] sm:$0xff]
  %v4531 = vld [vmem:[%s4444 + $0x2b0] sm:$0xff]
  %v4532 = vld [vmem:[%s4444 + $0x2b8] sm:$0xff]
  %v4533 = vld [vmem:[%s4444 + $0x2c0] sm:$0xff]
  %v4534 = vld [vmem:[%s4444 + $0x2c8] sm:$0xff]
  %v4535 = vld [vmem:[%s4444 + $0x2d0] sm:$0xff]
  %v4536 = vld [vmem:[%s4444 + $0x2d8] sm:$0xff]
  %v4537 = vld [vmem:[%s4444 + $0x2e0] sm:$0xff]
  %v4538 = vld [vmem:[%s4444 + $0x2e8] sm:$0xff]
  %v4539 = vld [vmem:[%s4444 + $0x2f0] sm:$0xff]
  %v4540 = vld [vmem:[%s4444 + $0x2f8] sm:$0xff]
  %v4553 = vrot.slane %v4187, 1
  %v4554 = vrot.slane %v4190, 1
  %v4555 = vsel %vm210, %v4553, %v4554
  %v4556 = vrot.slane %v4216, 1
  %v4557 = vrot.slane %v4219, 1
  %v4558 = vsel %vm210, %v4556, %v4557
  %v4559 = vrot.slane %v4245, 1
  %v4560 = vrot.slane %v4248, 1
  %v4561 = vsel %vm210, %v4559, %v4560
  %v4562 = vrot.slane %v4193, 1
  %v4563 = vsel %vm210, %v4554, %v4562
  %v4564 = vrot.slane %v4222, 1
  %v4565 = vsel %vm210, %v4557, %v4564
  %v4566 = vrot.slane %v4251, 1
  %v4567 = vsel %vm210, %v4560, %v4566
  %v4568 = vrot.slane %v4196, 1
  %v4569 = vsel %vm210, %v4562, %v4568
  %v4570 = vrot.slane %v4225, 1
  %v4571 = vsel %vm210, %v4564, %v4570
  %v4572 = vrot.slane %v4254, 1
  %v4573 = vsel %vm210, %v4566, %v4572
  %4583 = vmatpush.msra.mxu0 %v4475
  %4584 = vmatpush.msra.mxu0 %v4473
  %4585 = vmatpush.msra.mxu0 %v4471
  %4586 = vmatpush.msra.mxu0 %v4469
  %4587 = vmatpush.msra.mxu0 %v4467
  %4588 = vmatpush.msra.mxu0 %v4465
  %4589 = vmatpush.msra.mxu0 %v4463
  %4590 = vmatpush.msra.mxu0 %v4461
  %4591 = vmatpush.msra.mxu0 %v4459
  %4592 = vmatpush.msra.mxu0 %v4457
  %4593 = vmatpush.msra.mxu0 %v4455
  %4594 = vmatpush.msra.mxu0 %v4453
  %4595 = vmatpush.msra.mxu0 %v4451
  %4596 = vmatpush.msra.mxu0 %v4449
  %4597 = vmatpush.msra.mxu0 %v4447
  %4598 = vmatpush.msra.mxu0 %v4445
  %4599 = vmatmul.f32.gmra.mxu0 %v4555
  %v4600 = vpop.f32.mrf.mxu0
  %v4601 = vadd.f32 0.0, %v4600
  %4602 = vmatmul.f32.gmra.mxu0 %v4563
  %v4603 = vpop.f32.mrf.mxu0
  %v4604 = vadd.f32 0.0, %v4603
  %4605 = vmatmul.f32.gmra.mxu0 %v4569
  %v4606 = vpop.f32.mrf.mxu0
  %v4607 = vadd.f32 0.0, %v4606
  %4608 = vdwg.mxu0
  %4609 = vmatpush.msra.mxu0 %v4507
  %4610 = vmatpush.msra.mxu0 %v4505
  %4611 = vmatpush.msra.mxu0 %v4503
  %4612 = vmatpush.msra.mxu0 %v4501
  %4613 = vmatpush.msra.mxu0 %v4499
  %4614 = vmatpush.msra.mxu0 %v4497
  %4615 = vmatpush.msra.mxu0 %v4495
  %4616 = vmatpush.msra.mxu0 %v4493
  %4617 = vmatpush.msra.mxu0 %v4491
  %4618 = vmatpush.msra.mxu0 %v4489
  %4619 = vmatpush.msra.mxu0 %v4487
  %4620 = vmatpush.msra.mxu0 %v4485
  %4621 = vmatpush.msra.mxu0 %v4483
  %4622 = vmatpush.msra.mxu0 %v4481
  %4623 = vmatpush.msra.mxu0 %v4479
  %4624 = vmatpush.msra.mxu0 %v4477
  %4625 = vmatmul.f32.gmra.mxu0 %v4558
  %v4626 = vpop.f32.mrf.mxu0
  %v4627 = vadd.f32 %v4601, %v4626
  %4628 = vmatmul.f32.gmra.mxu0 %v4565
  %v4629 = vpop.f32.mrf.mxu0
  %v4630 = vadd.f32 %v4604, %v4629
  %4631 = vmatmul.f32.gmra.mxu0 %v4571
  %v4632 = vpop.f32.mrf.mxu0
  %v4633 = vadd.f32 %v4607, %v4632
  %4634 = vdwg.mxu0
  %4635 = vmatpush.msra.mxu0 %v4539
  %4636 = vmatpush.msra.mxu0 %v4537
  %4637 = vmatpush.msra.mxu0 %v4535
  %4638 = vmatpush.msra.mxu0 %v4533
  %4639 = vmatpush.msra.mxu0 %v4531
  %4640 = vmatpush.msra.mxu0 %v4529
  %4641 = vmatpush.msra.mxu0 %v4527
  %4642 = vmatpush.msra.mxu0 %v4525
  %4643 = vmatpush.msra.mxu0 %v4523
  %4644 = vmatpush.msra.mxu0 %v4521
  %4645 = vmatpush.msra.mxu0 %v4519
  %4646 = vmatpush.msra.mxu0 %v4517
  %4647 = vmatpush.msra.mxu0 %v4515
  %4648 = vmatpush.msra.mxu0 %v4513
  %4649 = vmatpush.msra.mxu0 %v4511
  %4650 = vmatpush.msra.mxu0 %v4509
  %4651 = vmatmul.f32.gmra.mxu0 %v4561
  %v4652 = vpop.f32.mrf.mxu0
  %v4653 = vadd.f32 %v4627, %v4652
  %4654 = vmatmul.f32.gmra.mxu0 %v4567
  %v4655 = vpop.f32.mrf.mxu0
  %v4656 = vadd.f32 %v4630, %v4655
  %4657 = vmatmul.f32.gmra.mxu0 %v4573
  %v4658 = vpop.f32.mrf.mxu0
  %v4659 = vadd.f32 %v4633, %v4658
  %4660 = vdwg.mxu0
  %4661 = vmatpush.msra.mxu0 %v4476
  %4662 = vmatpush.msra.mxu0 %v4474
  %4663 = vmatpush.msra.mxu0 %v4472
  %4664 = vmatpush.msra.mxu0 %v4470
  %4665 = vmatpush.msra.mxu0 %v4468
  %4666 = vmatpush.msra.mxu0 %v4466
  %4667 = vmatpush.msra.mxu0 %v4464
  %4668 = vmatpush.msra.mxu0 %v4462
  %4669 = vmatpush.msra.mxu0 %v4460
  %4670 = vmatpush.msra.mxu0 %v4458
  %4671 = vmatpush.msra.mxu0 %v4456
  %4672 = vmatpush.msra.mxu0 %v4454
  %4673 = vmatpush.msra.mxu0 %v4452
  %4674 = vmatpush.msra.mxu0 %v4450
  %4675 = vmatpush.msra.mxu0 %v4448
  %4676 = vmatpush.msra.mxu0 %v4446
  %4677 = vmatmul.f32.gmra.mxu0 %v4555
  %v4678 = vpop.f32.mrf.mxu0
  %v4679 = vadd.f32 0.0, %v4678
  %4680 = vmatmul.f32.gmra.mxu0 %v4563
  %v4681 = vpop.f32.mrf.mxu0
  %v4682 = vadd.f32 0.0, %v4681
  %4683 = vmatmul.f32.gmra.mxu0 %v4569
  %v4684 = vpop.f32.mrf.mxu0
  %v4685 = vadd.f32 0.0, %v4684
  %4686 = vdwg.mxu0
  %4687 = vmatpush.msra.mxu0 %v4508
  %4688 = vmatpush.msra.mxu0 %v4506
  %4689 = vmatpush.msra.mxu0 %v4504
  %4690 = vmatpush.msra.mxu0 %v4502
  %4691 = vmatpush.msra.mxu0 %v4500
  %4692 = vmatpush.msra.mxu0 %v4498
  %4693 = vmatpush.msra.mxu0 %v4496
  %4694 = vmatpush.msra.mxu0 %v4494
  %4695 = vmatpush.msra.mxu0 %v4492
  %4696 = vmatpush.msra.mxu0 %v4490
  %4697 = vmatpush.msra.mxu0 %v4488
  %4698 = vmatpush.msra.mxu0 %v4486
  %4699 = vmatpush.msra.mxu0 %v4484
  %4700 = vmatpush.msra.mxu0 %v4482
  %4701 = vmatpush.msra.mxu0 %v4480
  %4702 = vmatpush.msra.mxu0 %v4478
  %4703 = vmatmul.f32.gmra.mxu0 %v4558
  %v4704 = vpop.f32.mrf.mxu0
  %v4705 = vadd.f32 %v4679, %v4704
  %4706 = vmatmul.f32.gmra.mxu0 %v4565
  %v4707 = vpop.f32.mrf.mxu0
  %v4708 = vadd.f32 %v4682, %v4707
  %4709 = vmatmul.f32.gmra.mxu0 %v4571
  %v4710 = vpop.f32.mrf.mxu0
  %v4711 = vadd.f32 %v4685, %v4710
  %4712 = vdwg.mxu0
  %4713 = vmatpush.msra.mxu0 %v4540
  %4714 = vmatpush.msra.mxu0 %v4538
  %4715 = vmatpush.msra.mxu0 %v4536
  %4716 = vmatpush.msra.mxu0 %v4534
  %4717 = vmatpush.msra.mxu0 %v4532
  %4718 = vmatpush.msra.mxu0 %v4530
  %4719 = vmatpush.msra.mxu0 %v4528
  %4720 = vmatpush.msra.mxu0 %v4526
  %4721 = vmatpush.msra.mxu0 %v4524
  %4722 = vmatpush.msra.mxu0 %v4522
  %4723 = vmatpush.msra.mxu0 %v4520
  %4724 = vmatpush.msra.mxu0 %v4518
  %4725 = vmatpush.msra.mxu0 %v4516
  %4726 = vmatpush.msra.mxu0 %v4514
  %4727 = vmatpush.msra.mxu0 %v4512
  %4728 = vmatpush.msra.mxu0 %v4510
  %4729 = vmatmul.f32.gmra.mxu0 %v4561
  %v4730 = vpop.f32.mrf.mxu0
  %v4731 = vadd.f32 %v4705, %v4730
  %4732 = vmatmul.f32.gmra.mxu0 %v4567
  %v4733 = vpop.f32.mrf.mxu0
  %v4734 = vadd.f32 %v4708, %v4733
  %4735 = vmatmul.f32.gmra.mxu0 %v4573
  %v4736 = vpop.f32.mrf.mxu0
  %v4737 = vadd.f32 %v4711, %v4736
  %4738 = vdwg.mxu0
  %4739 = vmatpush.msra.mxu0 %v4378
  %4740 = vmatpush.msra.mxu0 %v4376
  %4741 = vmatpush.msra.mxu0 %v4374
  %4742 = vmatpush.msra.mxu0 %v4372
  %4743 = vmatpush.msra.mxu0 %v4370
  %4744 = vmatpush.msra.mxu0 %v4368
  %4745 = vmatpush.msra.mxu0 %v4366
  %4746 = vmatpush.msra.mxu0 %v4364
  %4747 = vmatpush.msra.mxu0 %v4362
  %4748 = vmatpush.msra.mxu0 %v4360
  %4749 = vmatpush.msra.mxu0 %v4358
  %4750 = vmatpush.msra.mxu0 %v4356
  %4751 = vmatpush.msra.mxu0 %v4354
  %4752 = vmatpush.msra.mxu0 %v4352
  %4753 = vmatpush.msra.mxu0 %v4350
  %4754 = vmatpush.msra.mxu0 %v4348
  %4755 = vmatmul.f32.gmra.mxu0 %v4187
  %v4756 = vpop.f32.mrf.mxu0
  %v4757 = vadd.f32 %v4653, %v4756
  %4758 = vmatmul.f32.gmra.mxu0 %v4190
  %v4759 = vpop.f32.mrf.mxu0
  %v4760 = vadd.f32 %v4656, %v4759
  %4761 = vmatmul.f32.gmra.mxu0 %v4193
  %v4762 = vpop.f32.mrf.mxu0
  %v4763 = vadd.f32 %v4659, %v4762
  %4764 = vdwg.mxu0
  %4765 = vmatpush.msra.mxu0 %v4410
  %4766 = vmatpush.msra.mxu0 %v4408
  %4767 = vmatpush.msra.mxu0 %v4406
  %4768 = vmatpush.msra.mxu0 %v4404
  %4769 = vmatpush.msra.mxu0 %v4402
  %4770 = vmatpush.msra.mxu0 %v4400
  %4771 = vmatpush.msra.mxu0 %v4398
  %4772 = vmatpush.msra.mxu0 %v4396
  %4773 = vmatpush.msra.mxu0 %v4394
  %4774 = vmatpush.msra.mxu0 %v4392
  %4775 = vmatpush.msra.mxu0 %v4390
  %4776 = vmatpush.msra.mxu0 %v4388
  %4777 = vmatpush.msra.mxu0 %v4386
  %4778 = vmatpush.msra.mxu0 %v4384
  %4779 = vmatpush.msra.mxu0 %v4382
  %4780 = vmatpush.msra.mxu0 %v4380
  %4781 = vmatmul.f32.gmra.mxu0 %v4216
  %v4782 = vpop.f32.mrf.mxu0
  %v4783 = vadd.f32 %v4757, %v4782
  %4784 = vmatmul.f32.gmra.mxu0 %v4219
  %v4785 = vpop.f32.mrf.mxu0
  %v4786 = vadd.f32 %v4760, %v4785
  %4787 = vmatmul.f32.gmra.mxu0 %v4222
  %v4788 = vpop.f32.mrf.mxu0
  %v4789 = vadd.f32 %v4763, %v4788
  %4790 = vdwg.mxu0
  %4791 = vmatpush.msra.mxu0 %v4442
  %4792 = vmatpush.msra.mxu0 %v4440
  %4793 = vmatpush.msra.mxu0 %v4438
  %4794 = vmatpush.msra.mxu0 %v4436
  %4795 = vmatpush.msra.mxu0 %v4434
  %4796 = vmatpush.msra.mxu0 %v4432
  %4797 = vmatpush.msra.mxu0 %v4430
  %4798 = vmatpush.msra.mxu0 %v4428
  %4799 = vmatpush.msra.mxu0 %v4426
  %4800 = vmatpush.msra.mxu0 %v4424
  %4801 = vmatpush.msra.mxu0 %v4422
  %4802 = vmatpush.msra.mxu0 %v4420
  %4803 = vmatpush.msra.mxu0 %v4418
  %4804 = vmatpush.msra.mxu0 %v4416
  %4805 = vmatpush.msra.mxu0 %v4414
  %4806 = vmatpush.msra.mxu0 %v4412
  %4807 = vmatmul.f32.gmra.mxu0 %v4245
  %v4808 = vpop.f32.mrf.mxu0
  %v4809 = vadd.f32 %v4783, %v4808
  %4810 = vmatmul.f32.gmra.mxu0 %v4248
  %v4811 = vpop.f32.mrf.mxu0
  %v4812 = vadd.f32 %v4786, %v4811
  %4813 = vmatmul.f32.gmra.mxu0 %v4251
  %v4814 = vpop.f32.mrf.mxu0
  %v4815 = vadd.f32 %v4789, %v4814
  %4816 = vdwg.mxu0
  %4817 = vmatpush.msra.mxu0 %v4379
  %4818 = vmatpush.msra.mxu0 %v4377
  %4819 = vmatpush.msra.mxu0 %v4375
  %4820 = vmatpush.msra.mxu0 %v4373
  %4821 = vmatpush.msra.mxu0 %v4371
  %4822 = vmatpush.msra.mxu0 %v4369
  %4823 = vmatpush.msra.mxu0 %v4367
  %4824 = vmatpush.msra.mxu0 %v4365
  %4825 = vmatpush.msra.mxu0 %v4363
  %4826 = vmatpush.msra.mxu0 %v4361
  %4827 = vmatpush.msra.mxu0 %v4359
  %4828 = vmatpush.msra.mxu0 %v4357
  %4829 = vmatpush.msra.mxu0 %v4355
  %4830 = vmatpush.msra.mxu0 %v4353
  %4831 = vmatpush.msra.mxu0 %v4351
  %4832 = vmatpush.msra.mxu0 %v4349
  %4833 = vmatmul.f32.gmra.mxu0 %v4187
  %v4834 = vpop.f32.mrf.mxu0
  %v4835 = vadd.f32 %v4731, %v4834
  %4836 = vmatmul.f32.gmra.mxu0 %v4190
  %v4837 = vpop.f32.mrf.mxu0
  %v4838 = vadd.f32 %v4734, %v4837
  %4839 = vmatmul.f32.gmra.mxu0 %v4193
  %v4840 = vpop.f32.mrf.mxu0
  %v4841 = vadd.f32 %v4737, %v4840
  %4842 = vdwg.mxu0
  %4843 = vmatpush.msra.mxu0 %v4411
  %4844 = vmatpush.msra.mxu0 %v4409
  %4845 = vmatpush.msra.mxu0 %v4407
  %4846 = vmatpush.msra.mxu0 %v4405
  %4847 = vmatpush.msra.mxu0 %v4403
  %4848 = vmatpush.msra.mxu0 %v4401
  %4849 = vmatpush.msra.mxu0 %v4399
  %4850 = vmatpush.msra.mxu0 %v4397
  %4851 = vmatpush.msra.mxu0 %v4395
  %4852 = vmatpush.msra.mxu0 %v4393
  %4853 = vmatpush.msra.mxu0 %v4391
  %4854 = vmatpush.msra.mxu0 %v4389
  %4855 = vmatpush.msra.mxu0 %v4387
  %4856 = vmatpush.msra.mxu0 %v4385
  %4857 = vmatpush.msra.mxu0 %v4383
  %4858 = vmatpush.msra.mxu0 %v4381
  %4859 = vmatmul.f32.gmra.mxu0 %v4216
  %v4860 = vpop.f32.mrf.mxu0
  %v4861 = vadd.f32 %v4835, %v4860
  %4862 = vmatmul.f32.gmra.mxu0 %v4219
  %v4863 = vpop.f32.mrf.mxu0
  %v4864 = vadd.f32 %v4838, %v4863
  %4865 = vmatmul.f32.gmra.mxu0 %v4222
  %v4866 = vpop.f32.mrf.mxu0
  %v4867 = vadd.f32 %v4841, %v4866
  %4868 = vdwg.mxu0
  %4869 = vmatpush.msra.mxu0 %v4443
  %4870 = vmatpush.msra.mxu0 %v4441
  %4871 = vmatpush.msra.mxu0 %v4439
  %4872 = vmatpush.msra.mxu0 %v4437
  %4873 = vmatpush.msra.mxu0 %v4435
  %4874 = vmatpush.msra.mxu0 %v4433
  %4875 = vmatpush.msra.mxu0 %v4431
  %4876 = vmatpush.msra.mxu0 %v4429
  %4877 = vmatpush.msra.mxu0 %v4427
  %4878 = vmatpush.msra.mxu0 %v4425
  %4879 = vmatpush.msra.mxu0 %v4423
  %4880 = vmatpush.msra.mxu0 %v4421
  %4881 = vmatpush.msra.mxu0 %v4419
  %4882 = vmatpush.msra.mxu0 %v4417
  %4883 = vmatpush.msra.mxu0 %v4415
  %4884 = vmatpush.msra.mxu0 %v4413
  %4885 = vmatmul.f32.gmra.mxu0 %v4245
  %v4886 = vpop.f32.mrf.mxu0
  %v4887 = vadd.f32 %v4861, %v4886
  %4888 = vmatmul.f32.gmra.mxu0 %v4248
  %v4889 = vpop.f32.mrf.mxu0
  %v4890 = vadd.f32 %v4864, %v4889
  %4891 = vmatmul.f32.gmra.mxu0 %v4251
  %v4892 = vpop.f32.mrf.mxu0
  %v4893 = vadd.f32 %v4867, %v4892
  %4894 = vdwg.mxu0
  %s4895 = scalar_lea.vmem %s7, 1536
  %v4896 = vld [vmem:[%s4895] sm:$0xff]
  %v4897 = vld [vmem:[%s4895 + $0x8] sm:$0xff]
  %v4898 = vld [vmem:[%s4895 + $0x10] sm:$0xff]
  %v4899 = vld [vmem:[%s4895 + $0x18] sm:$0xff]
  %v4900 = vld [vmem:[%s4895 + $0x20] sm:$0xff]
  %v4901 = vld [vmem:[%s4895 + $0x28] sm:$0xff]
  %v4902 = vld [vmem:[%s4895 + $0x30] sm:$0xff]
  %v4903 = vld [vmem:[%s4895 + $0x38] sm:$0xff]
  %v4904 = vld [vmem:[%s4895 + $0x40] sm:$0xff]
  %v4905 = vld [vmem:[%s4895 + $0x48] sm:$0xff]
  %v4906 = vld [vmem:[%s4895 + $0x50] sm:$0xff]
  %v4907 = vld [vmem:[%s4895 + $0x58] sm:$0xff]
  %v4908 = vld [vmem:[%s4895 + $0x60] sm:$0xff]
  %v4909 = vld [vmem:[%s4895 + $0x68] sm:$0xff]
  %v4910 = vld [vmem:[%s4895 + $0x70] sm:$0xff]
  %v4911 = vld [vmem:[%s4895 + $0x78] sm:$0xff]
  %v4912 = vld [vmem:[%s4895 + $0x80] sm:$0xff]
  %v4913 = vld [vmem:[%s4895 + $0x88] sm:$0xff]
  %v4914 = vld [vmem:[%s4895 + $0x90] sm:$0xff]
  %v4915 = vld [vmem:[%s4895 + $0x98] sm:$0xff]
  %v4916 = vld [vmem:[%s4895 + $0xa0] sm:$0xff]
  %v4917 = vld [vmem:[%s4895 + $0xa8] sm:$0xff]
  %v4918 = vld [vmem:[%s4895 + $0xb0] sm:$0xff]
  %v4919 = vld [vmem:[%s4895 + $0xb8] sm:$0xff]
  %v4920 = vld [vmem:[%s4895 + $0xc0] sm:$0xff]
  %v4921 = vld [vmem:[%s4895 + $0xc8] sm:$0xff]
  %v4922 = vld [vmem:[%s4895 + $0xd0] sm:$0xff]
  %v4923 = vld [vmem:[%s4895 + $0xd8] sm:$0xff]
  %v4924 = vld [vmem:[%s4895 + $0xe0] sm:$0xff]
  %v4925 = vld [vmem:[%s4895 + $0xe8] sm:$0xff]
  %v4926 = vld [vmem:[%s4895 + $0xf0] sm:$0xff]
  %v4927 = vld [vmem:[%s4895 + $0xf8] sm:$0xff]
  %v4928 = vld [vmem:[%s4895 + $0x100] sm:$0xff]
  %v4929 = vld [vmem:[%s4895 + $0x108] sm:$0xff]
  %v4930 = vld [vmem:[%s4895 + $0x110] sm:$0xff]
  %v4931 = vld [vmem:[%s4895 + $0x118] sm:$0xff]
  %v4932 = vld [vmem:[%s4895 + $0x120] sm:$0xff]
  %v4933 = vld [vmem:[%s4895 + $0x128] sm:$0xff]
  %v4934 = vld [vmem:[%s4895 + $0x130] sm:$0xff]
  %v4935 = vld [vmem:[%s4895 + $0x138] sm:$0xff]
  %v4936 = vld [vmem:[%s4895 + $0x140] sm:$0xff]
  %v4937 = vld [vmem:[%s4895 + $0x148] sm:$0xff]
  %v4938 = vld [vmem:[%s4895 + $0x150] sm:$0xff]
  %v4939 = vld [vmem:[%s4895 + $0x158] sm:$0xff]
  %v4940 = vld [vmem:[%s4895 + $0x160] sm:$0xff]
  %v4941 = vld [vmem:[%s4895 + $0x168] sm:$0xff]
  %v4942 = vld [vmem:[%s4895 + $0x170] sm:$0xff]
  %v4943 = vld [vmem:[%s4895 + $0x178] sm:$0xff]
  %v4944 = vld [vmem:[%s4895 + $0x180] sm:$0xff]
  %v4945 = vld [vmem:[%s4895 + $0x188] sm:$0xff]
  %v4946 = vld [vmem:[%s4895 + $0x190] sm:$0xff]
  %v4947 = vld [vmem:[%s4895 + $0x198] sm:$0xff]
  %v4948 = vld [vmem:[%s4895 + $0x1a0] sm:$0xff]
  %v4949 = vld [vmem:[%s4895 + $0x1a8] sm:$0xff]
  %v4950 = vld [vmem:[%s4895 + $0x1b0] sm:$0xff]
  %v4951 = vld [vmem:[%s4895 + $0x1b8] sm:$0xff]
  %v4952 = vld [vmem:[%s4895 + $0x1c0] sm:$0xff]
  %v4953 = vld [vmem:[%s4895 + $0x1c8] sm:$0xff]
  %v4954 = vld [vmem:[%s4895 + $0x1d0] sm:$0xff]
  %v4955 = vld [vmem:[%s4895 + $0x1d8] sm:$0xff]
  %v4956 = vld [vmem:[%s4895 + $0x1e0] sm:$0xff]
  %v4957 = vld [vmem:[%s4895 + $0x1e8] sm:$0xff]
  %v4958 = vld [vmem:[%s4895 + $0x1f0] sm:$0xff]
  %v4959 = vld [vmem:[%s4895 + $0x1f8] sm:$0xff]
  %v4960 = vld [vmem:[%s4895 + $0x200] sm:$0xff]
  %v4961 = vld [vmem:[%s4895 + $0x208] sm:$0xff]
  %v4962 = vld [vmem:[%s4895 + $0x210] sm:$0xff]
  %v4963 = vld [vmem:[%s4895 + $0x218] sm:$0xff]
  %v4964 = vld [vmem:[%s4895 + $0x220] sm:$0xff]
  %v4965 = vld [vmem:[%s4895 + $0x228] sm:$0xff]
  %v4966 = vld [vmem:[%s4895 + $0x230] sm:$0xff]
  %v4967 = vld [vmem:[%s4895 + $0x238] sm:$0xff]
  %v4968 = vld [vmem:[%s4895 + $0x240] sm:$0xff]
  %v4969 = vld [vmem:[%s4895 + $0x248] sm:$0xff]
  %v4970 = vld [vmem:[%s4895 + $0x250] sm:$0xff]
  %v4971 = vld [vmem:[%s4895 + $0x258] sm:$0xff]
  %v4972 = vld [vmem:[%s4895 + $0x260] sm:$0xff]
  %v4973 = vld [vmem:[%s4895 + $0x268] sm:$0xff]
  %v4974 = vld [vmem:[%s4895 + $0x270] sm:$0xff]
  %v4975 = vld [vmem:[%s4895 + $0x278] sm:$0xff]
  %v4976 = vld [vmem:[%s4895 + $0x280] sm:$0xff]
  %v4977 = vld [vmem:[%s4895 + $0x288] sm:$0xff]
  %v4978 = vld [vmem:[%s4895 + $0x290] sm:$0xff]
  %v4979 = vld [vmem:[%s4895 + $0x298] sm:$0xff]
  %v4980 = vld [vmem:[%s4895 + $0x2a0] sm:$0xff]
  %v4981 = vld [vmem:[%s4895 + $0x2a8] sm:$0xff]
  %v4982 = vld [vmem:[%s4895 + $0x2b0] sm:$0xff]
  %v4983 = vld [vmem:[%s4895 + $0x2b8] sm:$0xff]
  %v4984 = vld [vmem:[%s4895 + $0x2c0] sm:$0xff]
  %v4985 = vld [vmem:[%s4895 + $0x2c8] sm:$0xff]
  %v4986 = vld [vmem:[%s4895 + $0x2d0] sm:$0xff]
  %v4987 = vld [vmem:[%s4895 + $0x2d8] sm:$0xff]
  %v4988 = vld [vmem:[%s4895 + $0x2e0] sm:$0xff]
  %v4989 = vld [vmem:[%s4895 + $0x2e8] sm:$0xff]
  %v4990 = vld [vmem:[%s4895 + $0x2f0] sm:$0xff]
  %v4991 = vld [vmem:[%s4895 + $0x2f8] sm:$0xff]
  %v4992 = vrot.slane %v4187, 2
  %v4993 = vrot.slane %v4190, 2
  %v4994 = vsel %vm293, %v4992, %v4993
  %v4995 = vrot.slane %v4216, 2
  %v4996 = vrot.slane %v4219, 2
  %v4997 = vsel %vm293, %v4995, %v4996
  %v4998 = vrot.slane %v4245, 2
  %v4999 = vrot.slane %v4248, 2
  %v5000 = vsel %vm293, %v4998, %v4999
  %v5001 = vrot.slane %v4193, 2
  %v5002 = vsel %vm293, %v4993, %v5001
  %v5003 = vrot.slane %v4222, 2
  %v5004 = vsel %vm293, %v4996, %v5003
  %v5005 = vrot.slane %v4251, 2
  %v5006 = vsel %vm293, %v4999, %v5005
  %v5007 = vrot.slane %v4196, 2
  %v5008 = vsel %vm293, %v5001, %v5007
  %v5009 = vrot.slane %v4225, 2
  %v5010 = vsel %vm293, %v5003, %v5009
  %v5011 = vrot.slane %v4254, 2
  %v5012 = vsel %vm293, %v5005, %v5011
  %5022 = vmatpush.msra.mxu0 %v4926
  %5023 = vmatpush.msra.mxu0 %v4924
  %5024 = vmatpush.msra.mxu0 %v4922
  %5025 = vmatpush.msra.mxu0 %v4920
  %5026 = vmatpush.msra.mxu0 %v4918
  %5027 = vmatpush.msra.mxu0 %v4916
  %5028 = vmatpush.msra.mxu0 %v4914
  %5029 = vmatpush.msra.mxu0 %v4912
  %5030 = vmatpush.msra.mxu0 %v4910
  %5031 = vmatpush.msra.mxu0 %v4908
  %5032 = vmatpush.msra.mxu0 %v4906
  %5033 = vmatpush.msra.mxu0 %v4904
  %5034 = vmatpush.msra.mxu0 %v4902
  %5035 = vmatpush.msra.mxu0 %v4900
  %5036 = vmatpush.msra.mxu0 %v4898
  %5037 = vmatpush.msra.mxu0 %v4896
  %5038 = vmatmul.f32.gmra.mxu0 %v4994
  %v5039 = vpop.f32.mrf.mxu0
  %v5040 = vadd.f32 0.0, %v5039
  %5041 = vmatmul.f32.gmra.mxu0 %v5002
  %v5042 = vpop.f32.mrf.mxu0
  %v5043 = vadd.f32 0.0, %v5042
  %5044 = vmatmul.f32.gmra.mxu0 %v5008
  %v5045 = vpop.f32.mrf.mxu0
  %v5046 = vadd.f32 0.0, %v5045
  %5047 = vdwg.mxu0
  %5048 = vmatpush.msra.mxu0 %v4958
  %5049 = vmatpush.msra.mxu0 %v4956
  %5050 = vmatpush.msra.mxu0 %v4954
  %5051 = vmatpush.msra.mxu0 %v4952
  %5052 = vmatpush.msra.mxu0 %v4950
  %5053 = vmatpush.msra.mxu0 %v4948
  %5054 = vmatpush.msra.mxu0 %v4946
  %5055 = vmatpush.msra.mxu0 %v4944
  %5056 = vmatpush.msra.mxu0 %v4942
  %5057 = vmatpush.msra.mxu0 %v4940
  %5058 = vmatpush.msra.mxu0 %v4938
  %5059 = vmatpush.msra.mxu0 %v4936
  %5060 = vmatpush.msra.mxu0 %v4934
  %5061 = vmatpush.msra.mxu0 %v4932
  %5062 = vmatpush.msra.mxu0 %v4930
  %5063 = vmatpush.msra.mxu0 %v4928
  %5064 = vmatmul.f32.gmra.mxu0 %v4997
  %v5065 = vpop.f32.mrf.mxu0
  %v5066 = vadd.f32 %v5040, %v5065
  %5067 = vmatmul.f32.gmra.mxu0 %v5004
  %v5068 = vpop.f32.mrf.mxu0
  %v5069 = vadd.f32 %v5043, %v5068
  %5070 = vmatmul.f32.gmra.mxu0 %v5010
  %v5071 = vpop.f32.mrf.mxu0
  %v5072 = vadd.f32 %v5046, %v5071
  %5073 = vdwg.mxu0
  %5074 = vmatpush.msra.mxu0 %v4990
  %5075 = vmatpush.msra.mxu0 %v4988
  %5076 = vmatpush.msra.mxu0 %v4986
  %5077 = vmatpush.msra.mxu0 %v4984
  %5078 = vmatpush.msra.mxu0 %v4982
  %5079 = vmatpush.msra.mxu0 %v4980
  %5080 = vmatpush.msra.mxu0 %v4978
  %5081 = vmatpush.msra.mxu0 %v4976
  %5082 = vmatpush.msra.mxu0 %v4974
  %5083 = vmatpush.msra.mxu0 %v4972
  %5084 = vmatpush.msra.mxu0 %v4970
  %5085 = vmatpush.msra.mxu0 %v4968
  %5086 = vmatpush.msra.mxu0 %v4966
  %5087 = vmatpush.msra.mxu0 %v4964
  %5088 = vmatpush.msra.mxu0 %v4962
  %5089 = vmatpush.msra.mxu0 %v4960
  %5090 = vmatmul.f32.gmra.mxu0 %v5000
  %v5091 = vpop.f32.mrf.mxu0
  %v5092 = vadd.f32 %v5066, %v5091
  %5093 = vmatmul.f32.gmra.mxu0 %v5006
  %v5094 = vpop.f32.mrf.mxu0
  %v5095 = vadd.f32 %v5069, %v5094
  %5096 = vmatmul.f32.gmra.mxu0 %v5012
  %v5097 = vpop.f32.mrf.mxu0
  %v5098 = vadd.f32 %v5072, %v5097
  %5099 = vdwg.mxu0
  %5100 = vmatpush.msra.mxu0 %v4927
  %5101 = vmatpush.msra.mxu0 %v4925
  %5102 = vmatpush.msra.mxu0 %v4923
  %5103 = vmatpush.msra.mxu0 %v4921
  %5104 = vmatpush.msra.mxu0 %v4919
  %5105 = vmatpush.msra.mxu0 %v4917
  %5106 = vmatpush.msra.mxu0 %v4915
  %5107 = vmatpush.msra.mxu0 %v4913
  %5108 = vmatpush.msra.mxu0 %v4911
  %5109 = vmatpush.msra.mxu0 %v4909
  %5110 = vmatpush.msra.mxu0 %v4907
  %5111 = vmatpush.msra.mxu0 %v4905
  %5112 = vmatpush.msra.mxu0 %v4903
  %5113 = vmatpush.msra.mxu0 %v4901
  %5114 = vmatpush.msra.mxu0 %v4899
  %5115 = vmatpush.msra.mxu0 %v4897
  %5116 = vmatmul.f32.gmra.mxu0 %v4994
  %v5117 = vpop.f32.mrf.mxu0
  %v5118 = vadd.f32 0.0, %v5117
  %5119 = vmatmul.f32.gmra.mxu0 %v5002
  %v5120 = vpop.f32.mrf.mxu0
  %v5121 = vadd.f32 0.0, %v5120
  %5122 = vmatmul.f32.gmra.mxu0 %v5008
  %v5123 = vpop.f32.mrf.mxu0
  %v5124 = vadd.f32 0.0, %v5123
  %5125 = vdwg.mxu0
  %5126 = vmatpush.msra.mxu0 %v4959
  %5127 = vmatpush.msra.mxu0 %v4957
  %5128 = vmatpush.msra.mxu0 %v4955
  %5129 = vmatpush.msra.mxu0 %v4953
  %5130 = vmatpush.msra.mxu0 %v4951
  %5131 = vmatpush.msra.mxu0 %v4949
  %5132 = vmatpush.msra.mxu0 %v4947
  %5133 = vmatpush.msra.mxu0 %v4945
  %5134 = vmatpush.msra.mxu0 %v4943
  %5135 = vmatpush.msra.mxu0 %v4941
  %5136 = vmatpush.msra.mxu0 %v4939
  %5137 = vmatpush.msra.mxu0 %v4937
  %5138 = vmatpush.msra.mxu0 %v4935
  %5139 = vmatpush.msra.mxu0 %v4933
  %5140 = vmatpush.msra.mxu0 %v4931
  %5141 = vmatpush.msra.mxu0 %v4929
  %5142 = vmatmul.f32.gmra.mxu0 %v4997
  %v5143 = vpop.f32.mrf.mxu0
  %v5144 = vadd.f32 %v5118, %v5143
  %5145 = vmatmul.f32.gmra.mxu0 %v5004
  %v5146 = vpop.f32.mrf.mxu0
  %v5147 = vadd.f32 %v5121, %v5146
  %5148 = vmatmul.f32.gmra.mxu0 %v5010
  %v5149 = vpop.f32.mrf.mxu0
  %v5150 = vadd.f32 %v5124, %v5149
  %5151 = vdwg.mxu0
  %5152 = vmatpush.msra.mxu0 %v4991
  %5153 = vmatpush.msra.mxu0 %v4989
  %5154 = vmatpush.msra.mxu0 %v4987
  %5155 = vmatpush.msra.mxu0 %v4985
  %5156 = vmatpush.msra.mxu0 %v4983
  %5157 = vmatpush.msra.mxu0 %v4981
  %5158 = vmatpush.msra.mxu0 %v4979
  %5159 = vmatpush.msra.mxu0 %v4977
  %5160 = vmatpush.msra.mxu0 %v4975
  %5161 = vmatpush.msra.mxu0 %v4973
  %5162 = vmatpush.msra.mxu0 %v4971
  %5163 = vmatpush.msra.mxu0 %v4969
  %5164 = vmatpush.msra.mxu0 %v4967
  %5165 = vmatpush.msra.mxu0 %v4965
  %5166 = vmatpush.msra.mxu0 %v4963
  %5167 = vmatpush.msra.mxu0 %v4961
  %5168 = vmatmul.f32.gmra.mxu0 %v5000
  %v5169 = vpop.f32.mrf.mxu0
  %v5170 = vadd.f32 %v5144, %v5169
  %5171 = vmatmul.f32.gmra.mxu0 %v5006
  %v5172 = vpop.f32.mrf.mxu0
  %v5173 = vadd.f32 %v5147, %v5172
  %5174 = vmatmul.f32.gmra.mxu0 %v5012
  %v5175 = vpop.f32.mrf.mxu0
  %v5176 = vadd.f32 %v5150, %v5175
  %5177 = vdwg.mxu0
  %v5178 = vadd.f32 %v4809, %v5092
  %v5179 = vadd.f32 %v4887, %v5170
  %v5180 = vadd.f32 %v4812, %v5095
  %v5181 = vadd.f32 %v4890, %v5173
  %v5182 = vadd.f32 %v4815, %v5098
  %v5183 = vadd.f32 %v4893, %v5176
  %v5185 = vperm.slane %v4343, 0
  %v5186 = vperm.slane %v4343, 1
  %v5189 = vadd.f32 %v5178, %v5185
  %v5190 = vadd.f32 %v5179, %v5186
  %v5191 = vadd.f32 %v5180, %v5185
  %v5192 = vadd.f32 %v5181, %v5186
  %v5193 = vadd.f32 %v5182, %v5185
  %v5194 = vadd.f32 %v5183, %v5186
  %v5207 = vrot.slane %v4274, 1
  %v5208 = vrot.slane %v4277, 1
  %v5209 = vsel %vm210, %v5207, %v5208
  %v5210 = vrot.slane %v4303, 1
  %v5211 = vrot.slane %v4306, 1
  %v5212 = vsel %vm210, %v5210, %v5211
  %v5213 = vrot.slane %v4332, 1
  %v5214 = vrot.slane %v4335, 1
  %v5215 = vsel %vm210, %v5213, %v5214
  %v5216 = vrot.slane %v4280, 1
  %v5217 = vsel %vm210, %v5208, %v5216
  %v5218 = vrot.slane %v4309, 1
  %v5219 = vsel %vm210, %v5211, %v5218
  %v5220 = vrot.slane %v4338, 1
  %v5221 = vsel %vm210, %v5214, %v5220
  %v5222 = vrot.slane %v4283, 1
  %v5223 = vsel %vm210, %v5216, %v5222
  %v5224 = vrot.slane %v4312, 1
  %v5225 = vsel %vm210, %v5218, %v5224
  %v5226 = vrot.slane %v4341, 1
  %v5227 = vsel %vm210, %v5220, %v5226
  %5237 = vmatpush.msra.mxu0 %v4475
  %5238 = vmatpush.msra.mxu0 %v4473
  %5239 = vmatpush.msra.mxu0 %v4471
  %5240 = vmatpush.msra.mxu0 %v4469
  %5241 = vmatpush.msra.mxu0 %v4467
  %5242 = vmatpush.msra.mxu0 %v4465
  %5243 = vmatpush.msra.mxu0 %v4463
  %5244 = vmatpush.msra.mxu0 %v4461
  %5245 = vmatpush.msra.mxu0 %v4459
  %5246 = vmatpush.msra.mxu0 %v4457
  %5247 = vmatpush.msra.mxu0 %v4455
  %5248 = vmatpush.msra.mxu0 %v4453
  %5249 = vmatpush.msra.mxu0 %v4451
  %5250 = vmatpush.msra.mxu0 %v4449
  %5251 = vmatpush.msra.mxu0 %v4447
  %5252 = vmatpush.msra.mxu0 %v4445
  %5253 = vmatmul.f32.gmra.mxu0 %v5209
  %v5254 = vpop.f32.mrf.mxu0
  %v5255 = vadd.f32 0.0, %v5254
  %5256 = vmatmul.f32.gmra.mxu0 %v5217
  %v5257 = vpop.f32.mrf.mxu0
  %v5258 = vadd.f32 0.0, %v5257
  %5259 = vmatmul.f32.gmra.mxu0 %v5223
  %v5260 = vpop.f32.mrf.mxu0
  %v5261 = vadd.f32 0.0, %v5260
  %5262 = vdwg.mxu0
  %5263 = vmatpush.msra.mxu0 %v4507
  %5264 = vmatpush.msra.mxu0 %v4505
  %5265 = vmatpush.msra.mxu0 %v4503
  %5266 = vmatpush.msra.mxu0 %v4501
  %5267 = vmatpush.msra.mxu0 %v4499
  %5268 = vmatpush.msra.mxu0 %v4497
  %5269 = vmatpush.msra.mxu0 %v4495
  %5270 = vmatpush.msra.mxu0 %v4493
  %5271 = vmatpush.msra.mxu0 %v4491
  %5272 = vmatpush.msra.mxu0 %v4489
  %5273 = vmatpush.msra.mxu0 %v4487
  %5274 = vmatpush.msra.mxu0 %v4485
  %5275 = vmatpush.msra.mxu0 %v4483
  %5276 = vmatpush.msra.mxu0 %v4481
  %5277 = vmatpush.msra.mxu0 %v4479
  %5278 = vmatpush.msra.mxu0 %v4477
  %5279 = vmatmul.f32.gmra.mxu0 %v5212
  %v5280 = vpop.f32.mrf.mxu0
  %v5281 = vadd.f32 %v5255, %v5280
  %5282 = vmatmul.f32.gmra.mxu0 %v5219
  %v5283 = vpop.f32.mrf.mxu0
  %v5284 = vadd.f32 %v5258, %v5283
  %5285 = vmatmul.f32.gmra.mxu0 %v5225
  %v5286 = vpop.f32.mrf.mxu0
  %v5287 = vadd.f32 %v5261, %v5286
  %5288 = vdwg.mxu0
  %5289 = vmatpush.msra.mxu0 %v4539
  %5290 = vmatpush.msra.mxu0 %v4537
  %5291 = vmatpush.msra.mxu0 %v4535
  %5292 = vmatpush.msra.mxu0 %v4533
  %5293 = vmatpush.msra.mxu0 %v4531
  %5294 = vmatpush.msra.mxu0 %v4529
  %5295 = vmatpush.msra.mxu0 %v4527
  %5296 = vmatpush.msra.mxu0 %v4525
  %5297 = vmatpush.msra.mxu0 %v4523
  %5298 = vmatpush.msra.mxu0 %v4521
  %5299 = vmatpush.msra.mxu0 %v4519
  %5300 = vmatpush.msra.mxu0 %v4517
  %5301 = vmatpush.msra.mxu0 %v4515
  %5302 = vmatpush.msra.mxu0 %v4513
  %5303 = vmatpush.msra.mxu0 %v4511
  %5304 = vmatpush.msra.mxu0 %v4509
  %5305 = vmatmul.f32.gmra.mxu0 %v5215
  %v5306 = vpop.f32.mrf.mxu0
  %v5307 = vadd.f32 %v5281, %v5306
  %5308 = vmatmul.f32.gmra.mxu0 %v5221
  %v5309 = vpop.f32.mrf.mxu0
  %v5310 = vadd.f32 %v5284, %v5309
  %5311 = vmatmul.f32.gmra.mxu0 %v5227
  %v5312 = vpop.f32.mrf.mxu0
  %v5313 = vadd.f32 %v5287, %v5312
  %5314 = vdwg.mxu0
  %5315 = vmatpush.msra.mxu0 %v4476
  %5316 = vmatpush.msra.mxu0 %v4474
  %5317 = vmatpush.msra.mxu0 %v4472
  %5318 = vmatpush.msra.mxu0 %v4470
  %5319 = vmatpush.msra.mxu0 %v4468
  %5320 = vmatpush.msra.mxu0 %v4466
  %5321 = vmatpush.msra.mxu0 %v4464
  %5322 = vmatpush.msra.mxu0 %v4462
  %5323 = vmatpush.msra.mxu0 %v4460
  %5324 = vmatpush.msra.mxu0 %v4458
  %5325 = vmatpush.msra.mxu0 %v4456
  %5326 = vmatpush.msra.mxu0 %v4454
  %5327 = vmatpush.msra.mxu0 %v4452
  %5328 = vmatpush.msra.mxu0 %v4450
  %5329 = vmatpush.msra.mxu0 %v4448
  %5330 = vmatpush.msra.mxu0 %v4446
  %5331 = vmatmul.f32.gmra.mxu0 %v5209
  %v5332 = vpop.f32.mrf.mxu0
  %v5333 = vadd.f32 0.0, %v5332
  %5334 = vmatmul.f32.gmra.mxu0 %v5217
  %v5335 = vpop.f32.mrf.mxu0
  %v5336 = vadd.f32 0.0, %v5335
  %5337 = vmatmul.f32.gmra.mxu0 %v5223
  %v5338 = vpop.f32.mrf.mxu0
  %v5339 = vadd.f32 0.0, %v5338
  %5340 = vdwg.mxu0
  %5341 = vmatpush.msra.mxu0 %v4508
  %5342 = vmatpush.msra.mxu0 %v4506
  %5343 = vmatpush.msra.mxu0 %v4504
  %5344 = vmatpush.msra.mxu0 %v4502
  %5345 = vmatpush.msra.mxu0 %v4500
  %5346 = vmatpush.msra.mxu0 %v4498
  %5347 = vmatpush.msra.mxu0 %v4496
  %5348 = vmatpush.msra.mxu0 %v4494
  %5349 = vmatpush.msra.mxu0 %v4492
  %5350 = vmatpush.msra.mxu0 %v4490
  %5351 = vmatpush.msra.mxu0 %v4488
  %5352 = vmatpush.msra.mxu0 %v4486
  %5353 = vmatpush.msra.mxu0 %v4484
  %5354 = vmatpush.msra.mxu0 %v4482
  %5355 = vmatpush.msra.mxu0 %v4480
  %5356 = vmatpush.msra.mxu0 %v4478
  %5357 = vmatmul.f32.gmra.mxu0 %v5212
  %v5358 = vpop.f32.mrf.mxu0
  %v5359 = vadd.f32 %v5333, %v5358
  %5360 = vmatmul.f32.gmra.mxu0 %v5219
  %v5361 = vpop.f32.mrf.mxu0
  %v5362 = vadd.f32 %v5336, %v5361
  %5363 = vmatmul.f32.gmra.mxu0 %v5225
  %v5364 = vpop.f32.mrf.mxu0
  %v5365 = vadd.f32 %v5339, %v5364
  %5366 = vdwg.mxu0
  %5367 = vmatpush.msra.mxu0 %v4540
  %5368 = vmatpush.msra.mxu0 %v4538
  %5369 = vmatpush.msra.mxu0 %v4536
  %5370 = vmatpush.msra.mxu0 %v4534
  %5371 = vmatpush.msra.mxu0 %v4532
  %5372 = vmatpush.msra.mxu0 %v4530
  %5373 = vmatpush.msra.mxu0 %v4528
  %5374 = vmatpush.msra.mxu0 %v4526
  %5375 = vmatpush.msra.mxu0 %v4524
  %5376 = vmatpush.msra.mxu0 %v4522
  %5377 = vmatpush.msra.mxu0 %v4520
  %5378 = vmatpush.msra.mxu0 %v4518
  %5379 = vmatpush.msra.mxu0 %v4516
  %5380 = vmatpush.msra.mxu0 %v4514
  %5381 = vmatpush.msra.mxu0 %v4512
  %5382 = vmatpush.msra.mxu0 %v4510
  %5383 = vmatmul.f32.gmra.mxu0 %v5215
  %v5384 = vpop.f32.mrf.mxu0
  %v5385 = vadd.f32 %v5359, %v5384
  %5386 = vmatmul.f32.gmra.mxu0 %v5221
  %v5387 = vpop.f32.mrf.mxu0
  %v5388 = vadd.f32 %v5362, %v5387
  %5389 = vmatmul.f32.gmra.mxu0 %v5227
  %v5390 = vpop.f32.mrf.mxu0
  %v5391 = vadd.f32 %v5365, %v5390
  %5392 = vdwg.mxu0
  %5393 = vmatpush.msra.mxu0 %v4378
  %5394 = vmatpush.msra.mxu0 %v4376
  %5395 = vmatpush.msra.mxu0 %v4374
  %5396 = vmatpush.msra.mxu0 %v4372
  %5397 = vmatpush.msra.mxu0 %v4370
  %5398 = vmatpush.msra.mxu0 %v4368
  %5399 = vmatpush.msra.mxu0 %v4366
  %5400 = vmatpush.msra.mxu0 %v4364
  %5401 = vmatpush.msra.mxu0 %v4362
  %5402 = vmatpush.msra.mxu0 %v4360
  %5403 = vmatpush.msra.mxu0 %v4358
  %5404 = vmatpush.msra.mxu0 %v4356
  %5405 = vmatpush.msra.mxu0 %v4354
  %5406 = vmatpush.msra.mxu0 %v4352
  %5407 = vmatpush.msra.mxu0 %v4350
  %5408 = vmatpush.msra.mxu0 %v4348
  %5409 = vmatmul.f32.gmra.mxu0 %v4274
  %v5410 = vpop.f32.mrf.mxu0
  %v5411 = vadd.f32 %v5307, %v5410
  %5412 = vmatmul.f32.gmra.mxu0 %v4277
  %v5413 = vpop.f32.mrf.mxu0
  %v5414 = vadd.f32 %v5310, %v5413
  %5415 = vmatmul.f32.gmra.mxu0 %v4280
  %v5416 = vpop.f32.mrf.mxu0
  %v5417 = vadd.f32 %v5313, %v5416
  %5418 = vdwg.mxu0
  %5419 = vmatpush.msra.mxu0 %v4410
  %5420 = vmatpush.msra.mxu0 %v4408
  %5421 = vmatpush.msra.mxu0 %v4406
  %5422 = vmatpush.msra.mxu0 %v4404
  %5423 = vmatpush.msra.mxu0 %v4402
  %5424 = vmatpush.msra.mxu0 %v4400
  %5425 = vmatpush.msra.mxu0 %v4398
  %5426 = vmatpush.msra.mxu0 %v4396
  %5427 = vmatpush.msra.mxu0 %v4394
  %5428 = vmatpush.msra.mxu0 %v4392
  %5429 = vmatpush.msra.mxu0 %v4390
  %5430 = vmatpush.msra.mxu0 %v4388
  %5431 = vmatpush.msra.mxu0 %v4386
  %5432 = vmatpush.msra.mxu0 %v4384
  %5433 = vmatpush.msra.mxu0 %v4382
  %5434 = vmatpush.msra.mxu0 %v4380
  %5435 = vmatmul.f32.gmra.mxu0 %v4303
  %v5436 = vpop.f32.mrf.mxu0
  %v5437 = vadd.f32 %v5411, %v5436
  %5438 = vmatmul.f32.gmra.mxu0 %v4306
  %v5439 = vpop.f32.mrf.mxu0
  %v5440 = vadd.f32 %v5414, %v5439
  %5441 = vmatmul.f32.gmra.mxu0 %v4309
  %v5442 = vpop.f32.mrf.mxu0
  %v5443 = vadd.f32 %v5417, %v5442
  %5444 = vdwg.mxu0
  %5445 = vmatpush.msra.mxu0 %v4442
  %5446 = vmatpush.msra.mxu0 %v4440
  %5447 = vmatpush.msra.mxu0 %v4438
  %5448 = vmatpush.msra.mxu0 %v4436
  %5449 = vmatpush.msra.mxu0 %v4434
  %5450 = vmatpush.msra.mxu0 %v4432
  %5451 = vmatpush.msra.mxu0 %v4430
  %5452 = vmatpush.msra.mxu0 %v4428
  %5453 = vmatpush.msra.mxu0 %v4426
  %5454 = vmatpush.msra.mxu0 %v4424
  %5455 = vmatpush.msra.mxu0 %v4422
  %5456 = vmatpush.msra.mxu0 %v4420
  %5457 = vmatpush.msra.mxu0 %v4418
  %5458 = vmatpush.msra.mxu0 %v4416
  %5459 = vmatpush.msra.mxu0 %v4414
  %5460 = vmatpush.msra.mxu0 %v4412
  %5461 = vmatmul.f32.gmra.mxu0 %v4332
  %v5462 = vpop.f32.mrf.mxu0
  %v5463 = vadd.f32 %v5437, %v5462
  %5464 = vmatmul.f32.gmra.mxu0 %v4335
  %v5465 = vpop.f32.mrf.mxu0
  %v5466 = vadd.f32 %v5440, %v5465
  %5467 = vmatmul.f32.gmra.mxu0 %v4338
  %v5468 = vpop.f32.mrf.mxu0
  %v5469 = vadd.f32 %v5443, %v5468
  %5470 = vdwg.mxu0
  %5471 = vmatpush.msra.mxu0 %v4379
  %5472 = vmatpush.msra.mxu0 %v4377
  %5473 = vmatpush.msra.mxu0 %v4375
  %5474 = vmatpush.msra.mxu0 %v4373
  %5475 = vmatpush.msra.mxu0 %v4371
  %5476 = vmatpush.msra.mxu0 %v4369
  %5477 = vmatpush.msra.mxu0 %v4367
  %5478 = vmatpush.msra.mxu0 %v4365
  %5479 = vmatpush.msra.mxu0 %v4363
  %5480 = vmatpush.msra.mxu0 %v4361
  %5481 = vmatpush.msra.mxu0 %v4359
  %5482 = vmatpush.msra.mxu0 %v4357
  %5483 = vmatpush.msra.mxu0 %v4355
  %5484 = vmatpush.msra.mxu0 %v4353
  %5485 = vmatpush.msra.mxu0 %v4351
  %5486 = vmatpush.msra.mxu0 %v4349
  %5487 = vmatmul.f32.gmra.mxu0 %v4274
  %v5488 = vpop.f32.mrf.mxu0
  %v5489 = vadd.f32 %v5385, %v5488
  %5490 = vmatmul.f32.gmra.mxu0 %v4277
  %v5491 = vpop.f32.mrf.mxu0
  %v5492 = vadd.f32 %v5388, %v5491
  %5493 = vmatmul.f32.gmra.mxu0 %v4280
  %v5494 = vpop.f32.mrf.mxu0
  %v5495 = vadd.f32 %v5391, %v5494
  %5496 = vdwg.mxu0
  %5497 = vmatpush.msra.mxu0 %v4411
  %5498 = vmatpush.msra.mxu0 %v4409
  %5499 = vmatpush.msra.mxu0 %v4407
  %5500 = vmatpush.msra.mxu0 %v4405
  %5501 = vmatpush.msra.mxu0 %v4403
  %5502 = vmatpush.msra.mxu0 %v4401
  %5503 = vmatpush.msra.mxu0 %v4399
  %5504 = vmatpush.msra.mxu0 %v4397
  %5505 = vmatpush.msra.mxu0 %v4395
  %5506 = vmatpush.msra.mxu0 %v4393
  %5507 = vmatpush.msra.mxu0 %v4391
  %5508 = vmatpush.msra.mxu0 %v4389
  %5509 = vmatpush.msra.mxu0 %v4387
  %5510 = vmatpush.msra.mxu0 %v4385
  %5511 = vmatpush.msra.mxu0 %v4383
  %5512 = vmatpush.msra.mxu0 %v4381
  %5513 = vmatmul.f32.gmra.mxu0 %v4303
  %v5514 = vpop.f32.mrf.mxu0
  %v5515 = vadd.f32 %v5489, %v5514
  %5516 = vmatmul.f32.gmra.mxu0 %v4306
  %v5517 = vpop.f32.mrf.mxu0
  %v5518 = vadd.f32 %v5492, %v5517
  %5519 = vmatmul.f32.gmra.mxu0 %v4309
  %v5520 = vpop.f32.mrf.mxu0
  %v5521 = vadd.f32 %v5495, %v5520
  %5522 = vdwg.mxu0
  %5523 = vmatpush.msra.mxu0 %v4443
  %5524 = vmatpush.msra.mxu0 %v4441
  %5525 = vmatpush.msra.mxu0 %v4439
  %5526 = vmatpush.msra.mxu0 %v4437
  %5527 = vmatpush.msra.mxu0 %v4435
  %5528 = vmatpush.msra.mxu0 %v4433
  %5529 = vmatpush.msra.mxu0 %v4431
  %5530 = vmatpush.msra.mxu0 %v4429
  %5531 = vmatpush.msra.mxu0 %v4427
  %5532 = vmatpush.msra.mxu0 %v4425
  %5533 = vmatpush.msra.mxu0 %v4423
  %5534 = vmatpush.msra.mxu0 %v4421
  %5535 = vmatpush.msra.mxu0 %v4419
  %5536 = vmatpush.msra.mxu0 %v4417
  %5537 = vmatpush.msra.mxu0 %v4415
  %5538 = vmatpush.msra.mxu0 %v4413
  %5539 = vmatmul.f32.gmra.mxu0 %v4332
  %v5540 = vpop.f32.mrf.mxu0
  %v5541 = vadd.f32 %v5515, %v5540
  %5542 = vmatmul.f32.gmra.mxu0 %v4335
  %v5543 = vpop.f32.mrf.mxu0
  %v5544 = vadd.f32 %v5518, %v5543
  %5545 = vmatmul.f32.gmra.mxu0 %v4338
  %v5546 = vpop.f32.mrf.mxu0
  %v5547 = vadd.f32 %v5521, %v5546
  %5548 = vdwg.mxu0
  %v5549 = vrot.slane %v4274, 2
  %v5550 = vrot.slane %v4277, 2
  %v5551 = vsel %vm293, %v5549, %v5550
  %v5552 = vrot.slane %v4303, 2
  %v5553 = vrot.slane %v4306, 2
  %v5554 = vsel %vm293, %v5552, %v5553
  %v5555 = vrot.slane %v4332, 2
  %v5556 = vrot.slane %v4335, 2
  %v5557 = vsel %vm293, %v5555, %v5556
  %v5558 = vrot.slane %v4280, 2
  %v5559 = vsel %vm293, %v5550, %v5558
  %v5560 = vrot.slane %v4309, 2
  %v5561 = vsel %vm293, %v5553, %v5560
  %v5562 = vrot.slane %v4338, 2
  %v5563 = vsel %vm293, %v5556, %v5562
  %v5564 = vrot.slane %v4283, 2
  %v5565 = vsel %vm293, %v5558, %v5564
  %v5566 = vrot.slane %v4312, 2
  %v5567 = vsel %vm293, %v5560, %v5566
  %v5568 = vrot.slane %v4341, 2
  %v5569 = vsel %vm293, %v5562, %v5568
  %5579 = vmatpush.msra.mxu0 %v4926
  %5580 = vmatpush.msra.mxu0 %v4924
  %5581 = vmatpush.msra.mxu0 %v4922
  %5582 = vmatpush.msra.mxu0 %v4920
  %5583 = vmatpush.msra.mxu0 %v4918
  %5584 = vmatpush.msra.mxu0 %v4916
  %5585 = vmatpush.msra.mxu0 %v4914
  %5586 = vmatpush.msra.mxu0 %v4912
  %5587 = vmatpush.msra.mxu0 %v4910
  %5588 = vmatpush.msra.mxu0 %v4908
  %5589 = vmatpush.msra.mxu0 %v4906
  %5590 = vmatpush.msra.mxu0 %v4904
  %5591 = vmatpush.msra.mxu0 %v4902
  %5592 = vmatpush.msra.mxu0 %v4900
  %5593 = vmatpush.msra.mxu0 %v4898
  %5594 = vmatpush.msra.mxu0 %v4896
  %5595 = vmatmul.f32.gmra.mxu0 %v5551
  %v5596 = vpop.f32.mrf.mxu0
  %v5597 = vadd.f32 0.0, %v5596
  %5598 = vmatmul.f32.gmra.mxu0 %v5559
  %v5599 = vpop.f32.mrf.mxu0
  %v5600 = vadd.f32 0.0, %v5599
  %5601 = vmatmul.f32.gmra.mxu0 %v5565
  %v5602 = vpop.f32.mrf.mxu0
  %v5603 = vadd.f32 0.0, %v5602
  %5604 = vdwg.mxu0
  %5605 = vmatpush.msra.mxu0 %v4958
  %5606 = vmatpush.msra.mxu0 %v4956
  %5607 = vmatpush.msra.mxu0 %v4954
  %5608 = vmatpush.msra.mxu0 %v4952
  %5609 = vmatpush.msra.mxu0 %v4950
  %5610 = vmatpush.msra.mxu0 %v4948
  %5611 = vmatpush.msra.mxu0 %v4946
  %5612 = vmatpush.msra.mxu0 %v4944
  %5613 = vmatpush.msra.mxu0 %v4942
  %5614 = vmatpush.msra.mxu0 %v4940
  %5615 = vmatpush.msra.mxu0 %v4938
  %5616 = vmatpush.msra.mxu0 %v4936
  %5617 = vmatpush.msra.mxu0 %v4934
  %5618 = vmatpush.msra.mxu0 %v4932
  %5619 = vmatpush.msra.mxu0 %v4930
  %5620 = vmatpush.msra.mxu0 %v4928
  %5621 = vmatmul.f32.gmra.mxu0 %v5554
  %v5622 = vpop.f32.mrf.mxu0
  %v5623 = vadd.f32 %v5597, %v5622
  %5624 = vmatmul.f32.gmra.mxu0 %v5561
  %v5625 = vpop.f32.mrf.mxu0
  %v5626 = vadd.f32 %v5600, %v5625
  %5627 = vmatmul.f32.gmra.mxu0 %v5567
  %v5628 = vpop.f32.mrf.mxu0
  %v5629 = vadd.f32 %v5603, %v5628
  %5630 = vdwg.mxu0
  %5631 = vmatpush.msra.mxu0 %v4990
  %5632 = vmatpush.msra.mxu0 %v4988
  %5633 = vmatpush.msra.mxu0 %v4986
  %5634 = vmatpush.msra.mxu0 %v4984
  %5635 = vmatpush.msra.mxu0 %v4982
  %5636 = vmatpush.msra.mxu0 %v4980
  %5637 = vmatpush.msra.mxu0 %v4978
  %5638 = vmatpush.msra.mxu0 %v4976
  %5639 = vmatpush.msra.mxu0 %v4974
  %5640 = vmatpush.msra.mxu0 %v4972
  %5641 = vmatpush.msra.mxu0 %v4970
  %5642 = vmatpush.msra.mxu0 %v4968
  %5643 = vmatpush.msra.mxu0 %v4966
  %5644 = vmatpush.msra.mxu0 %v4964
  %5645 = vmatpush.msra.mxu0 %v4962
  %5646 = vmatpush.msra.mxu0 %v4960
  %5647 = vmatmul.f32.gmra.mxu0 %v5557
  %v5648 = vpop.f32.mrf.mxu0
  %v5649 = vadd.f32 %v5623, %v5648
  %5650 = vmatmul.f32.gmra.mxu0 %v5563
  %v5651 = vpop.f32.mrf.mxu0
  %v5652 = vadd.f32 %v5626, %v5651
  %5653 = vmatmul.f32.gmra.mxu0 %v5569
  %v5654 = vpop.f32.mrf.mxu0
  %v5655 = vadd.f32 %v5629, %v5654
  %5656 = vdwg.mxu0
  %5657 = vmatpush.msra.mxu0 %v4927
  %5658 = vmatpush.msra.mxu0 %v4925
  %5659 = vmatpush.msra.mxu0 %v4923
  %5660 = vmatpush.msra.mxu0 %v4921
  %5661 = vmatpush.msra.mxu0 %v4919
  %5662 = vmatpush.msra.mxu0 %v4917
  %5663 = vmatpush.msra.mxu0 %v4915
  %5664 = vmatpush.msra.mxu0 %v4913
  %5665 = vmatpush.msra.mxu0 %v4911
  %5666 = vmatpush.msra.mxu0 %v4909
  %5667 = vmatpush.msra.mxu0 %v4907
  %5668 = vmatpush.msra.mxu0 %v4905
  %5669 = vmatpush.msra.mxu0 %v4903
  %5670 = vmatpush.msra.mxu0 %v4901
  %5671 = vmatpush.msra.mxu0 %v4899
  %5672 = vmatpush.msra.mxu0 %v4897
  %5673 = vmatmul.f32.gmra.mxu0 %v5551
  %v5674 = vpop.f32.mrf.mxu0
  %v5675 = vadd.f32 0.0, %v5674
  %5676 = vmatmul.f32.gmra.mxu0 %v5559
  %v5677 = vpop.f32.mrf.mxu0
  %v5678 = vadd.f32 0.0, %v5677
  %5679 = vmatmul.f32.gmra.mxu0 %v5565
  %v5680 = vpop.f32.mrf.mxu0
  %v5681 = vadd.f32 0.0, %v5680
  %5682 = vdwg.mxu0
  %5683 = vmatpush.msra.mxu0 %v4959
  %5684 = vmatpush.msra.mxu0 %v4957
  %5685 = vmatpush.msra.mxu0 %v4955
  %5686 = vmatpush.msra.mxu0 %v4953
  %5687 = vmatpush.msra.mxu0 %v4951
  %5688 = vmatpush.msra.mxu0 %v4949
  %5689 = vmatpush.msra.mxu0 %v4947
  %5690 = vmatpush.msra.mxu0 %v4945
  %5691 = vmatpush.msra.mxu0 %v4943
  %5692 = vmatpush.msra.mxu0 %v4941
  %5693 = vmatpush.msra.mxu0 %v4939
  %5694 = vmatpush.msra.mxu0 %v4937
  %5695 = vmatpush.msra.mxu0 %v4935
  %5696 = vmatpush.msra.mxu0 %v4933
  %5697 = vmatpush.msra.mxu0 %v4931
  %5698 = vmatpush.msra.mxu0 %v4929
  %5699 = vmatmul.f32.gmra.mxu0 %v5554
  %v5700 = vpop.f32.mrf.mxu0
  %v5701 = vadd.f32 %v5675, %v5700
  %5702 = vmatmul.f32.gmra.mxu0 %v5561
  %v5703 = vpop.f32.mrf.mxu0
  %v5704 = vadd.f32 %v5678, %v5703
  %5705 = vmatmul.f32.gmra.mxu0 %v5567
  %v5706 = vpop.f32.mrf.mxu0
  %v5707 = vadd.f32 %v5681, %v5706
  %5708 = vdwg.mxu0
  %5709 = vmatpush.msra.mxu0 %v4991
  %5710 = vmatpush.msra.mxu0 %v4989
  %5711 = vmatpush.msra.mxu0 %v4987
  %5712 = vmatpush.msra.mxu0 %v4985
  %5713 = vmatpush.msra.mxu0 %v4983
  %5714 = vmatpush.msra.mxu0 %v4981
  %5715 = vmatpush.msra.mxu0 %v4979
  %5716 = vmatpush.msra.mxu0 %v4977
  %5717 = vmatpush.msra.mxu0 %v4975
  %5718 = vmatpush.msra.mxu0 %v4973
  %5719 = vmatpush.msra.mxu0 %v4971
  %5720 = vmatpush.msra.mxu0 %v4969
  %5721 = vmatpush.msra.mxu0 %v4967
  %5722 = vmatpush.msra.mxu0 %v4965
  %5723 = vmatpush.msra.mxu0 %v4963
  %5724 = vmatpush.msra.mxu0 %v4961
  %5725 = vmatmul.f32.gmra.mxu0 %v5557
  %v5726 = vpop.f32.mrf.mxu0
  %v5727 = vadd.f32 %v5701, %v5726
  %5728 = vmatmul.f32.gmra.mxu0 %v5563
  %v5729 = vpop.f32.mrf.mxu0
  %v5730 = vadd.f32 %v5704, %v5729
  %5731 = vmatmul.f32.gmra.mxu0 %v5569
  %v5732 = vpop.f32.mrf.mxu0
  %v5733 = vadd.f32 %v5707, %v5732
  %5734 = vdwg.mxu0
  %v5735 = vadd.f32 %v5463, %v5649
  %v5736 = vadd.f32 %v5541, %v5727
  %v5737 = vadd.f32 %v5466, %v5652
  %v5738 = vadd.f32 %v5544, %v5730
  %v5739 = vadd.f32 %v5469, %v5655
  %v5740 = vadd.f32 %v5547, %v5733
  %v5741 = vadd.f32 %v5735, %v5185
  %v5742 = vadd.f32 %v5736, %v5186
  %v5743 = vadd.f32 %v5737, %v5185
  %v5744 = vadd.f32 %v5738, %v5186
  %v5745 = vadd.f32 %v5739, %v5185
  %v5746 = vadd.f32 %v5740, %v5186
  %v5747 = vadd.f32 %v5189, %v5191
  %v5748 = vadd.f32 %v5747, %v5193
  %v5749 = vrot.slane %v5748, 4
  %v5750 = vadd.f32 %v5748, %v5749
  %v5751 = vrot.slane %v5750, 2
  %v5752 = vadd.f32 %v5750, %v5751
  %v5753 = vrot.slane %v5752, 1
  %v5754 = vadd.f32 %v5752, %v5753
  %v5755 = vadd.f32 %v5190, %v5192
  %v5756 = vadd.f32 %v5755, %v5194
  %v5757 = vrot.slane %v5756, 4
  %v5758 = vadd.f32 %v5756, %v5757
  %v5759 = vrot.slane %v5758, 2
  %v5760 = vadd.f32 %v5758, %v5759
  %v5761 = vrot.slane %v5760, 1
  %v5762 = vadd.f32 %v5760, %v5761
  %v5763 = vmul.f32 %v5189, %v5189
  %v5764 = vmul.f32 %v5190, %v5190
  %v5765 = vmul.f32 %v5191, %v5191
  %v5766 = vmul.f32 %v5192, %v5192
  %v5767 = vmul.f32 %v5193, %v5193
  %v5768 = vmul.f32 %v5194, %v5194
  %v5769 = vadd.f32 %v5763, %v5765
  %v5770 = vadd.f32 %v5769, %v5767
  %v5771 = vrot.slane %v5770, 4
  %v5772 = vadd.f32 %v5770, %v5771
  %v5773 = vrot.slane %v5772, 2
  %v5774 = vadd.f32 %v5772, %v5773
  %v5775 = vrot.slane %v5774, 1
  %v5776 = vadd.f32 %v5774, %v5775
  %v5777 = vadd.f32 %v5764, %v5766
  %v5778 = vadd.f32 %v5777, %v5768
  %v5779 = vrot.slane %v5778, 4
  %v5780 = vadd.f32 %v5778, %v5779
  %v5781 = vrot.slane %v5780, 2
  %v5782 = vadd.f32 %v5780, %v5781
  %v5783 = vrot.slane %v5782, 1
  %v5784 = vadd.f32 %v5782, %v5783
  %v5785 = vadd.f32 %v5741, %v5743
  %v5786 = vadd.f32 %v5785, %v5745
  %v5787 = vrot.slane %v5786, 4
  %v5788 = vadd.f32 %v5786, %v5787
  %v5789 = vrot.slane %v5788, 2
  %v5790 = vadd.f32 %v5788, %v5789
  %v5791 = vrot.slane %v5790, 1
  %v5792 = vadd.f32 %v5790, %v5791
  %v5793 = vadd.f32 %v5742, %v5744
  %v5794 = vadd.f32 %v5793, %v5746
  %v5795 = vrot.slane %v5794, 4
  %v5796 = vadd.f32 %v5794, %v5795
  %v5797 = vrot.slane %v5796, 2
  %v5798 = vadd.f32 %v5796, %v5797
  %v5799 = vrot.slane %v5798, 1
  %v5800 = vadd.f32 %v5798, %v5799
  %v5801 = vadd.f32 %v5754, %v5792
  %v5802 = vadd.f32 %v5762, %v5800
  %v5803 = vmul.f32 %v5741, %v5741
  %v5804 = vmul.f32 %v5742, %v5742
  %v5805 = vmul.f32 %v5743, %v5743
  %v5806 = vmul.f32 %v5744, %v5744
  %v5807 = vmul.f32 %v5745, %v5745
  %v5808 = vmul.f32 %v5746, %v5746
  %v5809 = vadd.f32 %v5803, %v5805
  %v5810 = vadd.f32 %v5809, %v5807
  %v5811 = vrot.slane %v5810, 4
  %v5812 = vadd.f32 %v5810, %v5811
  %v5813 = vrot.slane %v5812, 2
  %v5814 = vadd.f32 %v5812, %v5813
  %v5815 = vrot.slane %v5814, 1
  %v5816 = vadd.f32 %v5814, %v5815
  %v5817 = vadd.f32 %v5804, %v5806
  %v5818 = vadd.f32 %v5817, %v5808
  %v5819 = vrot.slane %v5818, 4
  %v5820 = vadd.f32 %v5818, %v5819
  %v5821 = vrot.slane %v5820, 2
  %v5822 = vadd.f32 %v5820, %v5821
  %v5823 = vrot.slane %v5822, 1
  %v5824 = vadd.f32 %v5822, %v5823
  %v5825 = vadd.f32 %v5776, %v5816
  %v5826 = vadd.f32 %v5784, %v5824
  %v5827 = vmul.f32 %v5801, 0.020833334
  %v5828 = vmul.f32 %v5802, 0.020833334
  %v5829 = vmul.f32 %v5825, 0.020833334
  %v5830 = vmul.f32 %v5826, 0.020833334
  %v5831 = vmul.f32 %v5827, %v5827
  %v5832 = vmul.f32 %v5828, %v5828
  %v5833 = vsub.f32 %v5829, %v5831
  %v5834 = vsub.f32 %v5830, %v5832
  %v5835 = vmax.f32 %v5833, 0.0
  %v5836 = vmax.f32 %v5834, 0.0
  %v5837 = vadd.f32 %v5835, 1e-05
  %v5838 = vadd.f32 %v5836, 1e-05
  %v5839 = vrsqrt.pop %v5837
  %v5840 = vmul.f32 %v5839, %v5837
  %v5841 = vmul.f32 %v5840, %v5839
  %v5842 = vmul.f32 0.5, %v5841
  %v5843 = vsub.f32 1.5, %v5842
  %v5844 = vmul.f32 %v5839, %v5843
  %vm5845 = vweird.f32 %v5837
  %vm5846 = vweird.f32 %v5839
  %vm5847 = vmor %vm5845, %vm5846
  %v5848 = vsel %vm5847, %v5839, %v5844
  %v5849 = vrsqrt.pop %v5838
  %v5850 = vmul.f32 %v5849, %v5838
  %v5851 = vmul.f32 %v5850, %v5849
  %v5852 = vmul.f32 0.5, %v5851
  %v5853 = vsub.f32 1.5, %v5852
  %v5854 = vmul.f32 %v5849, %v5853
  %vm5855 = vweird.f32 %v5838
  %vm5856 = vweird.f32 %v5849
  %vm5857 = vmor %vm5855, %vm5856
  %v5858 = vsel %vm5857, %v5849, %v5854
  %v5861 = vrot.slane %v5858, 7
  %v5862 = vsel %vm994, %v5848, %v5861
  %v5864 = vmul.f32 %v4345, %v5862
  %v5866 = vperm.slane %v5864, 0
  %v5867 = vperm.slane %v5864, 1
  %v5870 = vmul.f32 %v5827, %v5866
  %v5871 = vmul.f32 %v5828, %v5867
  %v5874 = vrot.slane %v5871, 7
  %v5875 = vsel %vm994, %v5870, %v5874
  %v5877 = vsub.f32 %v4347, %v5875
  %v5878 = vmul.f32 %v5189, %v5866
  %v5879 = vmul.f32 %v5190, %v5867
  %v5880 = vmul.f32 %v5191, %v5866
  %v5881 = vmul.f32 %v5192, %v5867
  %v5882 = vmul.f32 %v5193, %v5866
  %v5883 = vmul.f32 %v5194, %v5867
  %v5885 = vperm.slane %v5877, 0
  %v5886 = vperm.slane %v5877, 1
  %v5889 = vadd.f32 %v5878, %v5885
  %v5890 = vadd.f32 %v5879, %v5886
  %v5891 = vadd.f32 %v5880, %v5885
  %v5892 = vadd.f32 %v5881, %v5886
  %v5893 = vadd.f32 %v5882, %v5885
  %v5894 = vadd.f32 %v5883, %v5886
  %v5895 = vmax.f32 %v5889, 0.0
  %v5896 = vmax.f32 %v5890, 0.0
  %v5897 = vmax.f32 %v5891, 0.0
  %v5898 = vmax.f32 %v5892, 0.0
  %v5899 = vmax.f32 %v5893, 0.0
  %v5900 = vmax.f32 %v5894, 0.0
  %v5901 = vmul.f32 %v5741, %v5866
  %v5902 = vmul.f32 %v5742, %v5867
  %v5903 = vmul.f32 %v5743, %v5866
  %v5904 = vmul.f32 %v5744, %v5867
  %v5905 = vmul.f32 %v5745, %v5866
  %v5906 = vmul.f32 %v5746, %v5867
  %v5907 = vadd.f32 %v5901, %v5885
  %v5908 = vadd.f32 %v5902, %v5886
  %v5909 = vadd.f32 %v5903, %v5885
  %v5910 = vadd.f32 %v5904, %v5886
  %v5911 = vadd.f32 %v5905, %v5885
  %v5912 = vadd.f32 %v5906, %v5886
  %v5913 = vmax.f32 %v5907, 0.0
  %v5914 = vmax.f32 %v5908, 0.0
  %v5915 = vmax.f32 %v5909, 0.0
  %v5916 = vmax.f32 %v5910, 0.0
  %v5917 = vmax.f32 %v5911, 0.0
  %v5918 = vmax.f32 %v5912, 0.0
  %5919 = vmatpush.msra.mxu0 0.0
  %5920 = vmatpush.msra.mxu0 0.0
  %5921 = vmatpush.msra.mxu0 0.0
  %5922 = vmatpush.msra.mxu0 0.0
  %5923 = vmatpush.msra.mxu0 0.0
  %5924 = vmatpush.msra.mxu0 0.0
  %5925 = vmatpush.msra.mxu0 0.0
  %5926 = vmatpush.msra.mxu0 0.0
  %5927 = vmatpush.msra.mxu0 0.0
  %5928 = vmatpush.msra.mxu0 0.0
  %5929 = vmatpush.msra.mxu0 0.0
  %5930 = vmatpush.msra.mxu0 0.0
  %5931 = vmatpush.msra.mxu0 0.0
  %5932 = vmatpush.msra.mxu0 %v5899
  %5933 = vmatpush.msra.mxu0 %v5897
  %5934 = vmatpush.msra.mxu0 %v5895
  %5935 = vmatmul.f32.gmra.mxu0 %v4158
  %v5936 = vpop.f32.mrf.mxu0
  %v5937 = vadd.f32 0.0, %v5936
  %5938 = vmatmul.f32.gmra.mxu0 %v4161
  %v5939 = vpop.f32.mrf.mxu0
  %v5940 = vadd.f32 0.0, %v5939
  %5941 = vmatmul.f32.gmra.mxu0 %v4164
  %v5942 = vpop.f32.mrf.mxu0
  %v5943 = vadd.f32 0.0, %v5942
  %5944 = vmatmul.f32.gmra.mxu0 %v4167
  %v5945 = vpop.f32.mrf.mxu0
  %v5946 = vadd.f32 0.0, %v5945
  %5947 = vdwg.mxu0
  %5948 = vmatpush.msra.mxu0 0.0
  %5949 = vmatpush.msra.mxu0 0.0
  %5950 = vmatpush.msra.mxu0 0.0
  %5951 = vmatpush.msra.mxu0 0.0
  %5952 = vmatpush.msra.mxu0 0.0
  %5953 = vmatpush.msra.mxu0 0.0
  %5954 = vmatpush.msra.mxu0 0.0
  %5955 = vmatpush.msra.mxu0 0.0
  %5956 = vmatpush.msra.mxu0 0.0
  %5957 = vmatpush.msra.mxu0 0.0
  %5958 = vmatpush.msra.mxu0 0.0
  %5959 = vmatpush.msra.mxu0 0.0
  %5960 = vmatpush.msra.mxu0 0.0
  %5961 = vmatpush.msra.mxu0 %v5900
  %5962 = vmatpush.msra.mxu0 %v5898
  %5963 = vmatpush.msra.mxu0 %v5896
  %5964 = vmatmul.f32.gmra.mxu0 %v4158
  %v5965 = vpop.f32.mrf.mxu0
  %v5966 = vadd.f32 0.0, %v5965
  %5967 = vmatmul.f32.gmra.mxu0 %v4161
  %v5968 = vpop.f32.mrf.mxu0
  %v5969 = vadd.f32 0.0, %v5968
  %5970 = vmatmul.f32.gmra.mxu0 %v4164
  %v5971 = vpop.f32.mrf.mxu0
  %v5972 = vadd.f32 0.0, %v5971
  %5973 = vmatmul.f32.gmra.mxu0 %v4167
  %v5974 = vpop.f32.mrf.mxu0
  %v5975 = vadd.f32 0.0, %v5974
  %5976 = vdwg.mxu0
  %5977 = vmatpush.msra.mxu0 0.0
  %5978 = vmatpush.msra.mxu0 0.0
  %5979 = vmatpush.msra.mxu0 0.0
  %5980 = vmatpush.msra.mxu0 0.0
  %5981 = vmatpush.msra.mxu0 0.0
  %5982 = vmatpush.msra.mxu0 0.0
  %5983 = vmatpush.msra.mxu0 0.0
  %5984 = vmatpush.msra.mxu0 0.0
  %5985 = vmatpush.msra.mxu0 0.0
  %5986 = vmatpush.msra.mxu0 0.0
  %5987 = vmatpush.msra.mxu0 0.0
  %5988 = vmatpush.msra.mxu0 0.0
  %5989 = vmatpush.msra.mxu0 0.0
  %5990 = vmatpush.msra.mxu0 %v5917
  %5991 = vmatpush.msra.mxu0 %v5915
  %5992 = vmatpush.msra.mxu0 %v5913
  %5993 = vmatmul.f32.gmra.mxu0 %v4158
  %v5994 = vpop.f32.mrf.mxu0
  %v5995 = vadd.f32 0.0, %v5994
  %5996 = vmatmul.f32.gmra.mxu0 %v4161
  %v5997 = vpop.f32.mrf.mxu0
  %v5998 = vadd.f32 0.0, %v5997
  %5999 = vmatmul.f32.gmra.mxu0 %v4164
  %v6000 = vpop.f32.mrf.mxu0
  %v6001 = vadd.f32 0.0, %v6000
  %6002 = vmatmul.f32.gmra.mxu0 %v4167
  %v6003 = vpop.f32.mrf.mxu0
  %v6004 = vadd.f32 0.0, %v6003
  %6005 = vdwg.mxu0
  %6006 = vmatpush.msra.mxu0 0.0
  %6007 = vmatpush.msra.mxu0 0.0
  %6008 = vmatpush.msra.mxu0 0.0
  %6009 = vmatpush.msra.mxu0 0.0
  %6010 = vmatpush.msra.mxu0 0.0
  %6011 = vmatpush.msra.mxu0 0.0
  %6012 = vmatpush.msra.mxu0 0.0
  %6013 = vmatpush.msra.mxu0 0.0
  %6014 = vmatpush.msra.mxu0 0.0
  %6015 = vmatpush.msra.mxu0 0.0
  %6016 = vmatpush.msra.mxu0 0.0
  %6017 = vmatpush.msra.mxu0 0.0
  %6018 = vmatpush.msra.mxu0 0.0
  %6019 = vmatpush.msra.mxu0 %v5918
  %6020 = vmatpush.msra.mxu0 %v5916
  %6021 = vmatpush.msra.mxu0 %v5914
  %6022 = vmatmul.f32.gmra.mxu0 %v4158
  %v6023 = vpop.f32.mrf.mxu0
  %v6024 = vadd.f32 0.0, %v6023
  %6025 = vmatmul.f32.gmra.mxu0 %v4161
  %v6026 = vpop.f32.mrf.mxu0
  %v6027 = vadd.f32 0.0, %v6026
  %6028 = vmatmul.f32.gmra.mxu0 %v4164
  %v6029 = vpop.f32.mrf.mxu0
  %v6030 = vadd.f32 0.0, %v6029
  %6031 = vmatmul.f32.gmra.mxu0 %v4167
  %v6032 = vpop.f32.mrf.mxu0
  %v6033 = vadd.f32 0.0, %v6032
  %6034 = vdwg.mxu0
  %v6035 = vld [vmem:[%s10] ss:$4 sm:$0x3]
  %s6036 = scalar_lea.vmem %s10, 1
  %v6037 = vld [vmem:[%s6036] ss:$4 sm:$0x3]
  %s6038 = scalar_lea.vmem %s10, 2
  %v6039 = vld [vmem:[%s6038] ss:$4 sm:$0x3]
  %v6040 = vld [vmem:[%s9] sm:$0xff]
  %v6041 = vld [vmem:[%s9 + $0x8] sm:$0xff]
  %v6042 = vld [vmem:[%s9 + $0x10] sm:$0xff]
  %v6043 = vld [vmem:[%s9 + $0x18] sm:$0xff]
  %v6044 = vld [vmem:[%s9 + $0x20] sm:$0xff]
  %v6045 = vld [vmem:[%s9 + $0x28] sm:$0xff]
  %v6046 = vld [vmem:[%s9 + $0x30] sm:$0xff]
  %v6047 = vld [vmem:[%s9 + $0x38] sm:$0xff]
  %v6048 = vld [vmem:[%s9 + $0x40] sm:$0xff]
  %v6049 = vld [vmem:[%s9 + $0x48] sm:$0xff]
  %v6050 = vld [vmem:[%s9 + $0x50] sm:$0xff]
  %v6051 = vld [vmem:[%s9 + $0x58] sm:$0xff]
  %v6052 = vld [vmem:[%s9 + $0x60] sm:$0xff]
  %v6053 = vld [vmem:[%s9 + $0x68] sm:$0xff]
  %v6054 = vld [vmem:[%s9 + $0x70] sm:$0xff]
  %v6055 = vld [vmem:[%s9 + $0x78] sm:$0xff]
  %v6056 = vld [vmem:[%s9 + $0x80] sm:$0xff]
  %v6057 = vld [vmem:[%s9 + $0x88] sm:$0xff]
  %v6058 = vld [vmem:[%s9 + $0x90] sm:$0xff]
  %v6059 = vld [vmem:[%s9 + $0x98] sm:$0xff]
  %v6060 = vld [vmem:[%s9 + $0xa0] sm:$0xff]
  %v6061 = vld [vmem:[%s9 + $0xa8] sm:$0xff]
  %v6062 = vld [vmem:[%s9 + $0xb0] sm:$0xff]
  %v6063 = vld [vmem:[%s9 + $0xb8] sm:$0xff]
  %v6064 = vld [vmem:[%s9 + $0xc0] sm:$0xff]
  %v6065 = vld [vmem:[%s9 + $0xc8] sm:$0xff]
  %v6066 = vld [vmem:[%s9 + $0xd0] sm:$0xff]
  %v6067 = vld [vmem:[%s9 + $0xd8] sm:$0xff]
  %v6068 = vld [vmem:[%s9 + $0xe0] sm:$0xff]
  %v6069 = vld [vmem:[%s9 + $0xe8] sm:$0xff]
  %v6070 = vld [vmem:[%s9 + $0xf0] sm:$0xff]
  %v6071 = vld [vmem:[%s9 + $0xf8] sm:$0xff]
  %v6072 = vld [vmem:[%s9 + $0x100] sm:$0xff]
  %v6073 = vld [vmem:[%s9 + $0x108] sm:$0xff]
  %v6074 = vld [vmem:[%s9 + $0x110] sm:$0xff]
  %v6075 = vld [vmem:[%s9 + $0x118] sm:$0xff]
  %v6076 = vld [vmem:[%s9 + $0x120] sm:$0xff]
  %v6077 = vld [vmem:[%s9 + $0x128] sm:$0xff]
  %v6078 = vld [vmem:[%s9 + $0x130] sm:$0xff]
  %v6079 = vld [vmem:[%s9 + $0x138] sm:$0xff]
  %v6080 = vld [vmem:[%s9 + $0x140] sm:$0xff]
  %v6081 = vld [vmem:[%s9 + $0x148] sm:$0xff]
  %v6082 = vld [vmem:[%s9 + $0x150] sm:$0xff]
  %v6083 = vld [vmem:[%s9 + $0x158] sm:$0xff]
  %v6084 = vld [vmem:[%s9 + $0x160] sm:$0xff]
  %v6085 = vld [vmem:[%s9 + $0x168] sm:$0xff]
  %v6086 = vld [vmem:[%s9 + $0x170] sm:$0xff]
  %v6087 = vld [vmem:[%s9 + $0x178] sm:$0xff]
  %v6088 = vld [vmem:[%s9 + $0x180] sm:$0xff]
  %v6089 = vld [vmem:[%s9 + $0x188] sm:$0xff]
  %v6090 = vld [vmem:[%s9 + $0x190] sm:$0xff]
  %v6091 = vld [vmem:[%s9 + $0x198] sm:$0xff]
  %v6092 = vld [vmem:[%s9 + $0x1a0] sm:$0xff]
  %v6093 = vld [vmem:[%s9 + $0x1a8] sm:$0xff]
  %v6094 = vld [vmem:[%s9 + $0x1b0] sm:$0xff]
  %v6095 = vld [vmem:[%s9 + $0x1b8] sm:$0xff]
  %v6096 = vld [vmem:[%s9 + $0x1c0] sm:$0xff]
  %v6097 = vld [vmem:[%s9 + $0x1c8] sm:$0xff]
  %v6098 = vld [vmem:[%s9 + $0x1d0] sm:$0xff]
  %v6099 = vld [vmem:[%s9 + $0x1d8] sm:$0xff]
  %v6100 = vld [vmem:[%s9 + $0x1e0] sm:$0xff]
  %v6101 = vld [vmem:[%s9 + $0x1e8] sm:$0xff]
  %v6102 = vld [vmem:[%s9 + $0x1f0] sm:$0xff]
  %v6103 = vld [vmem:[%s9 + $0x1f8] sm:$0xff]
  %s6104 = scalar_lea.vmem %s9, 512
  %v6105 = vld [vmem:[%s6104] sm:$0xff]
  %v6106 = vld [vmem:[%s6104 + $0x8] sm:$0xff]
  %v6107 = vld [vmem:[%s6104 + $0x10] sm:$0xff]
  %v6108 = vld [vmem:[%s6104 + $0x18] sm:$0xff]
  %v6109 = vld [vmem:[%s6104 + $0x20] sm:$0xff]
  %v6110 = vld [vmem:[%s6104 + $0x28] sm:$0xff]
  %v6111 = vld [vmem:[%s6104 + $0x30] sm:$0xff]
  %v6112 = vld [vmem:[%s6104 + $0x38] sm:$0xff]
  %v6113 = vld [vmem:[%s6104 + $0x40] sm:$0xff]
  %v6114 = vld [vmem:[%s6104 + $0x48] sm:$0xff]
  %v6115 = vld [vmem:[%s6104 + $0x50] sm:$0xff]
  %v6116 = vld [vmem:[%s6104 + $0x58] sm:$0xff]
  %v6117 = vld [vmem:[%s6104 + $0x60] sm:$0xff]
  %v6118 = vld [vmem:[%s6104 + $0x68] sm:$0xff]
  %v6119 = vld [vmem:[%s6104 + $0x70] sm:$0xff]
  %v6120 = vld [vmem:[%s6104 + $0x78] sm:$0xff]
  %v6121 = vld [vmem:[%s6104 + $0x80] sm:$0xff]
  %v6122 = vld [vmem:[%s6104 + $0x88] sm:$0xff]
  %v6123 = vld [vmem:[%s6104 + $0x90] sm:$0xff]
  %v6124 = vld [vmem:[%s6104 + $0x98] sm:$0xff]
  %v6125 = vld [vmem:[%s6104 + $0xa0] sm:$0xff]
  %v6126 = vld [vmem:[%s6104 + $0xa8] sm:$0xff]
  %v6127 = vld [vmem:[%s6104 + $0xb0] sm:$0xff]
  %v6128 = vld [vmem:[%s6104 + $0xb8] sm:$0xff]
  %v6129 = vld [vmem:[%s6104 + $0xc0] sm:$0xff]
  %v6130 = vld [vmem:[%s6104 + $0xc8] sm:$0xff]
  %v6131 = vld [vmem:[%s6104 + $0xd0] sm:$0xff]
  %v6132 = vld [vmem:[%s6104 + $0xd8] sm:$0xff]
  %v6133 = vld [vmem:[%s6104 + $0xe0] sm:$0xff]
  %v6134 = vld [vmem:[%s6104 + $0xe8] sm:$0xff]
  %v6135 = vld [vmem:[%s6104 + $0xf0] sm:$0xff]
  %v6136 = vld [vmem:[%s6104 + $0xf8] sm:$0xff]
  %v6137 = vld [vmem:[%s6104 + $0x100] sm:$0xff]
  %v6138 = vld [vmem:[%s6104 + $0x108] sm:$0xff]
  %v6139 = vld [vmem:[%s6104 + $0x110] sm:$0xff]
  %v6140 = vld [vmem:[%s6104 + $0x118] sm:$0xff]
  %v6141 = vld [vmem:[%s6104 + $0x120] sm:$0xff]
  %v6142 = vld [vmem:[%s6104 + $0x128] sm:$0xff]
  %v6143 = vld [vmem:[%s6104 + $0x130] sm:$0xff]
  %v6144 = vld [vmem:[%s6104 + $0x138] sm:$0xff]
  %v6145 = vld [vmem:[%s6104 + $0x140] sm:$0xff]
  %v6146 = vld [vmem:[%s6104 + $0x148] sm:$0xff]
  %v6147 = vld [vmem:[%s6104 + $0x150] sm:$0xff]
  %v6148 = vld [vmem:[%s6104 + $0x158] sm:$0xff]
  %v6149 = vld [vmem:[%s6104 + $0x160] sm:$0xff]
  %v6150 = vld [vmem:[%s6104 + $0x168] sm:$0xff]
  %v6151 = vld [vmem:[%s6104 + $0x170] sm:$0xff]
  %v6152 = vld [vmem:[%s6104 + $0x178] sm:$0xff]
  %v6153 = vld [vmem:[%s6104 + $0x180] sm:$0xff]
  %v6154 = vld [vmem:[%s6104 + $0x188] sm:$0xff]
  %v6155 = vld [vmem:[%s6104 + $0x190] sm:$0xff]
  %v6156 = vld [vmem:[%s6104 + $0x198] sm:$0xff]
  %v6157 = vld [vmem:[%s6104 + $0x1a0] sm:$0xff]
  %v6158 = vld [vmem:[%s6104 + $0x1a8] sm:$0xff]
  %v6159 = vld [vmem:[%s6104 + $0x1b0] sm:$0xff]
  %v6160 = vld [vmem:[%s6104 + $0x1b8] sm:$0xff]
  %v6161 = vld [vmem:[%s6104 + $0x1c0] sm:$0xff]
  %v6162 = vld [vmem:[%s6104 + $0x1c8] sm:$0xff]
  %v6163 = vld [vmem:[%s6104 + $0x1d0] sm:$0xff]
  %v6164 = vld [vmem:[%s6104 + $0x1d8] sm:$0xff]
  %v6165 = vld [vmem:[%s6104 + $0x1e0] sm:$0xff]
  %v6166 = vld [vmem:[%s6104 + $0x1e8] sm:$0xff]
  %v6167 = vld [vmem:[%s6104 + $0x1f0] sm:$0xff]
  %v6168 = vld [vmem:[%s6104 + $0x1f8] sm:$0xff]
  %v6177 = vrot.slane %v5937, 1
  %v6178 = vrot.slane %v5940, 1
  %v6179 = vsel %vm210, %v6177, %v6178
  %v6180 = vrot.slane %v5966, 1
  %v6181 = vrot.slane %v5969, 1
  %v6182 = vsel %vm210, %v6180, %v6181
  %v6183 = vrot.slane %v5943, 1
  %v6184 = vsel %vm210, %v6178, %v6183
  %v6185 = vrot.slane %v5972, 1
  %v6186 = vsel %vm210, %v6181, %v6185
  %v6187 = vrot.slane %v5946, 1
  %v6188 = vsel %vm210, %v6183, %v6187
  %v6189 = vrot.slane %v5975, 1
  %v6190 = vsel %vm210, %v6185, %v6189
  %6197 = vmatpush.msra.mxu0 %v6135
  %6198 = vmatpush.msra.mxu0 %v6133
  %6199 = vmatpush.msra.mxu0 %v6131
  %6200 = vmatpush.msra.mxu0 %v6129
  %6201 = vmatpush.msra.mxu0 %v6127
  %6202 = vmatpush.msra.mxu0 %v6125
  %6203 = vmatpush.msra.mxu0 %v6123
  %6204 = vmatpush.msra.mxu0 %v6121
  %6205 = vmatpush.msra.mxu0 %v6119
  %6206 = vmatpush.msra.mxu0 %v6117
  %6207 = vmatpush.msra.mxu0 %v6115
  %6208 = vmatpush.msra.mxu0 %v6113
  %6209 = vmatpush.msra.mxu0 %v6111
  %6210 = vmatpush.msra.mxu0 %v6109
  %6211 = vmatpush.msra.mxu0 %v6107
  %6212 = vmatpush.msra.mxu0 %v6105
  %6213 = vmatmul.f32.gmra.mxu0 %v6179
  %v6214 = vpop.f32.mrf.mxu0
  %v6215 = vadd.f32 0.0, %v6214
  %6216 = vmatmul.f32.gmra.mxu0 %v6184
  %v6217 = vpop.f32.mrf.mxu0
  %v6218 = vadd.f32 0.0, %v6217
  %6219 = vmatmul.f32.gmra.mxu0 %v6188
  %v6220 = vpop.f32.mrf.mxu0
  %v6221 = vadd.f32 0.0, %v6220
  %6222 = vdwg.mxu0
  %6223 = vmatpush.msra.mxu0 %v6167
  %6224 = vmatpush.msra.mxu0 %v6165
  %6225 = vmatpush.msra.mxu0 %v6163
  %6226 = vmatpush.msra.mxu0 %v6161
  %6227 = vmatpush.msra.mxu0 %v6159
  %6228 = vmatpush.msra.mxu0 %v6157
  %6229 = vmatpush.msra.mxu0 %v6155
  %6230 = vmatpush.msra.mxu0 %v6153
  %6231 = vmatpush.msra.mxu0 %v6151
  %6232 = vmatpush.msra.mxu0 %v6149
  %6233 = vmatpush.msra.mxu0 %v6147
  %6234 = vmatpush.msra.mxu0 %v6145
  %6235 = vmatpush.msra.mxu0 %v6143
  %6236 = vmatpush.msra.mxu0 %v6141
  %6237 = vmatpush.msra.mxu0 %v6139
  %6238 = vmatpush.msra.mxu0 %v6137
  %6239 = vmatmul.f32.gmra.mxu0 %v6182
  %v6240 = vpop.f32.mrf.mxu0
  %v6241 = vadd.f32 %v6215, %v6240
  %6242 = vmatmul.f32.gmra.mxu0 %v6186
  %v6243 = vpop.f32.mrf.mxu0
  %v6244 = vadd.f32 %v6218, %v6243
  %6245 = vmatmul.f32.gmra.mxu0 %v6190
  %v6246 = vpop.f32.mrf.mxu0
  %v6247 = vadd.f32 %v6221, %v6246
  %6248 = vdwg.mxu0
  %6249 = vmatpush.msra.mxu0 %v6136
  %6250 = vmatpush.msra.mxu0 %v6134
  %6251 = vmatpush.msra.mxu0 %v6132
  %6252 = vmatpush.msra.mxu0 %v6130
  %6253 = vmatpush.msra.mxu0 %v6128
  %6254 = vmatpush.msra.mxu0 %v6126
  %6255 = vmatpush.msra.mxu0 %v6124
  %6256 = vmatpush.msra.mxu0 %v6122
  %6257 = vmatpush.msra.mxu0 %v6120
  %6258 = vmatpush.msra.mxu0 %v6118
  %6259 = vmatpush.msra.mxu0 %v6116
  %6260 = vmatpush.msra.mxu0 %v6114
  %6261 = vmatpush.msra.mxu0 %v6112
  %6262 = vmatpush.msra.mxu0 %v6110
  %6263 = vmatpush.msra.mxu0 %v6108
  %6264 = vmatpush.msra.mxu0 %v6106
  %6265 = vmatmul.f32.gmra.mxu0 %v6179
  %v6266 = vpop.f32.mrf.mxu0
  %v6267 = vadd.f32 0.0, %v6266
  %6268 = vmatmul.f32.gmra.mxu0 %v6184
  %v6269 = vpop.f32.mrf.mxu0
  %v6270 = vadd.f32 0.0, %v6269
  %6271 = vmatmul.f32.gmra.mxu0 %v6188
  %v6272 = vpop.f32.mrf.mxu0
  %v6273 = vadd.f32 0.0, %v6272
  %6274 = vdwg.mxu0
  %6275 = vmatpush.msra.mxu0 %v6168
  %6276 = vmatpush.msra.mxu0 %v6166
  %6277 = vmatpush.msra.mxu0 %v6164
  %6278 = vmatpush.msra.mxu0 %v6162
  %6279 = vmatpush.msra.mxu0 %v6160
  %6280 = vmatpush.msra.mxu0 %v6158
  %6281 = vmatpush.msra.mxu0 %v6156
  %6282 = vmatpush.msra.mxu0 %v6154
  %6283 = vmatpush.msra.mxu0 %v6152
  %6284 = vmatpush.msra.mxu0 %v6150
  %6285 = vmatpush.msra.mxu0 %v6148
  %6286 = vmatpush.msra.mxu0 %v6146
  %6287 = vmatpush.msra.mxu0 %v6144
  %6288 = vmatpush.msra.mxu0 %v6142
  %6289 = vmatpush.msra.mxu0 %v6140
  %6290 = vmatpush.msra.mxu0 %v6138
  %6291 = vmatmul.f32.gmra.mxu0 %v6182
  %v6292 = vpop.f32.mrf.mxu0
  %v6293 = vadd.f32 %v6267, %v6292
  %6294 = vmatmul.f32.gmra.mxu0 %v6186
  %v6295 = vpop.f32.mrf.mxu0
  %v6296 = vadd.f32 %v6270, %v6295
  %6297 = vmatmul.f32.gmra.mxu0 %v6190
  %v6298 = vpop.f32.mrf.mxu0
  %v6299 = vadd.f32 %v6273, %v6298
  %6300 = vdwg.mxu0
  %6301 = vmatpush.msra.mxu0 %v6070
  %6302 = vmatpush.msra.mxu0 %v6068
  %6303 = vmatpush.msra.mxu0 %v6066
  %6304 = vmatpush.msra.mxu0 %v6064
  %6305 = vmatpush.msra.mxu0 %v6062
  %6306 = vmatpush.msra.mxu0 %v6060
  %6307 = vmatpush.msra.mxu0 %v6058
  %6308 = vmatpush.msra.mxu0 %v6056
  %6309 = vmatpush.msra.mxu0 %v6054
  %6310 = vmatpush.msra.mxu0 %v6052
  %6311 = vmatpush.msra.mxu0 %v6050
  %6312 = vmatpush.msra.mxu0 %v6048
  %6313 = vmatpush.msra.mxu0 %v6046
  %6314 = vmatpush.msra.mxu0 %v6044
  %6315 = vmatpush.msra.mxu0 %v6042
  %6316 = vmatpush.msra.mxu0 %v6040
  %6317 = vmatmul.f32.gmra.mxu0 %v5937
  %v6318 = vpop.f32.mrf.mxu0
  %v6319 = vadd.f32 %v6241, %v6318
  %6320 = vmatmul.f32.gmra.mxu0 %v5940
  %v6321 = vpop.f32.mrf.mxu0
  %v6322 = vadd.f32 %v6244, %v6321
  %6323 = vmatmul.f32.gmra.mxu0 %v5943
  %v6324 = vpop.f32.mrf.mxu0
  %v6325 = vadd.f32 %v6247, %v6324
  %6326 = vdwg.mxu0
  %6327 = vmatpush.msra.mxu0 %v6102
  %6328 = vmatpush.msra.mxu0 %v6100
  %6329 = vmatpush.msra.mxu0 %v6098
  %6330 = vmatpush.msra.mxu0 %v6096
  %6331 = vmatpush.msra.mxu0 %v6094
  %6332 = vmatpush.msra.mxu0 %v6092
  %6333 = vmatpush.msra.mxu0 %v6090
  %6334 = vmatpush.msra.mxu0 %v6088
  %6335 = vmatpush.msra.mxu0 %v6086
  %6336 = vmatpush.msra.mxu0 %v6084
  %6337 = vmatpush.msra.mxu0 %v6082
  %6338 = vmatpush.msra.mxu0 %v6080
  %6339 = vmatpush.msra.mxu0 %v6078
  %6340 = vmatpush.msra.mxu0 %v6076
  %6341 = vmatpush.msra.mxu0 %v6074
  %6342 = vmatpush.msra.mxu0 %v6072
  %6343 = vmatmul.f32.gmra.mxu0 %v5966
  %v6344 = vpop.f32.mrf.mxu0
  %v6345 = vadd.f32 %v6319, %v6344
  %6346 = vmatmul.f32.gmra.mxu0 %v5969
  %v6347 = vpop.f32.mrf.mxu0
  %v6348 = vadd.f32 %v6322, %v6347
  %6349 = vmatmul.f32.gmra.mxu0 %v5972
  %v6350 = vpop.f32.mrf.mxu0
  %v6351 = vadd.f32 %v6325, %v6350
  %6352 = vdwg.mxu0
  %6353 = vmatpush.msra.mxu0 %v6071
  %6354 = vmatpush.msra.mxu0 %v6069
  %6355 = vmatpush.msra.mxu0 %v6067
  %6356 = vmatpush.msra.mxu0 %v6065
  %6357 = vmatpush.msra.mxu0 %v6063
  %6358 = vmatpush.msra.mxu0 %v6061
  %6359 = vmatpush.msra.mxu0 %v6059
  %6360 = vmatpush.msra.mxu0 %v6057
  %6361 = vmatpush.msra.mxu0 %v6055
  %6362 = vmatpush.msra.mxu0 %v6053
  %6363 = vmatpush.msra.mxu0 %v6051
  %6364 = vmatpush.msra.mxu0 %v6049
  %6365 = vmatpush.msra.mxu0 %v6047
  %6366 = vmatpush.msra.mxu0 %v6045
  %6367 = vmatpush.msra.mxu0 %v6043
  %6368 = vmatpush.msra.mxu0 %v6041
  %6369 = vmatmul.f32.gmra.mxu0 %v5937
  %v6370 = vpop.f32.mrf.mxu0
  %v6371 = vadd.f32 %v6293, %v6370
  %6372 = vmatmul.f32.gmra.mxu0 %v5940
  %v6373 = vpop.f32.mrf.mxu0
  %v6374 = vadd.f32 %v6296, %v6373
  %6375 = vmatmul.f32.gmra.mxu0 %v5943
  %v6376 = vpop.f32.mrf.mxu0
  %v6377 = vadd.f32 %v6299, %v6376
  %6378 = vdwg.mxu0
  %6379 = vmatpush.msra.mxu0 %v6103
  %6380 = vmatpush.msra.mxu0 %v6101
  %6381 = vmatpush.msra.mxu0 %v6099
  %6382 = vmatpush.msra.mxu0 %v6097
  %6383 = vmatpush.msra.mxu0 %v6095
  %6384 = vmatpush.msra.mxu0 %v6093
  %6385 = vmatpush.msra.mxu0 %v6091
  %6386 = vmatpush.msra.mxu0 %v6089
  %6387 = vmatpush.msra.mxu0 %v6087
  %6388 = vmatpush.msra.mxu0 %v6085
  %6389 = vmatpush.msra.mxu0 %v6083
  %6390 = vmatpush.msra.mxu0 %v6081
  %6391 = vmatpush.msra.mxu0 %v6079
  %6392 = vmatpush.msra.mxu0 %v6077
  %6393 = vmatpush.msra.mxu0 %v6075
  %6394 = vmatpush.msra.mxu0 %v6073
  %6395 = vmatmul.f32.gmra.mxu0 %v5966
  %v6396 = vpop.f32.mrf.mxu0
  %v6397 = vadd.f32 %v6371, %v6396
  %6398 = vmatmul.f32.gmra.mxu0 %v5969
  %v6399 = vpop.f32.mrf.mxu0
  %v6400 = vadd.f32 %v6374, %v6399
  %6401 = vmatmul.f32.gmra.mxu0 %v5972
  %v6402 = vpop.f32.mrf.mxu0
  %v6403 = vadd.f32 %v6377, %v6402
  %6404 = vdwg.mxu0
  %s6405 = scalar_lea.vmem %s9, 1024
  %v6406 = vld [vmem:[%s6405] sm:$0xff]
  %v6407 = vld [vmem:[%s6405 + $0x8] sm:$0xff]
  %v6408 = vld [vmem:[%s6405 + $0x10] sm:$0xff]
  %v6409 = vld [vmem:[%s6405 + $0x18] sm:$0xff]
  %v6410 = vld [vmem:[%s6405 + $0x20] sm:$0xff]
  %v6411 = vld [vmem:[%s6405 + $0x28] sm:$0xff]
  %v6412 = vld [vmem:[%s6405 + $0x30] sm:$0xff]
  %v6413 = vld [vmem:[%s6405 + $0x38] sm:$0xff]
  %v6414 = vld [vmem:[%s6405 + $0x40] sm:$0xff]
  %v6415 = vld [vmem:[%s6405 + $0x48] sm:$0xff]
  %v6416 = vld [vmem:[%s6405 + $0x50] sm:$0xff]
  %v6417 = vld [vmem:[%s6405 + $0x58] sm:$0xff]
  %v6418 = vld [vmem:[%s6405 + $0x60] sm:$0xff]
  %v6419 = vld [vmem:[%s6405 + $0x68] sm:$0xff]
  %v6420 = vld [vmem:[%s6405 + $0x70] sm:$0xff]
  %v6421 = vld [vmem:[%s6405 + $0x78] sm:$0xff]
  %v6422 = vld [vmem:[%s6405 + $0x80] sm:$0xff]
  %v6423 = vld [vmem:[%s6405 + $0x88] sm:$0xff]
  %v6424 = vld [vmem:[%s6405 + $0x90] sm:$0xff]
  %v6425 = vld [vmem:[%s6405 + $0x98] sm:$0xff]
  %v6426 = vld [vmem:[%s6405 + $0xa0] sm:$0xff]
  %v6427 = vld [vmem:[%s6405 + $0xa8] sm:$0xff]
  %v6428 = vld [vmem:[%s6405 + $0xb0] sm:$0xff]
  %v6429 = vld [vmem:[%s6405 + $0xb8] sm:$0xff]
  %v6430 = vld [vmem:[%s6405 + $0xc0] sm:$0xff]
  %v6431 = vld [vmem:[%s6405 + $0xc8] sm:$0xff]
  %v6432 = vld [vmem:[%s6405 + $0xd0] sm:$0xff]
  %v6433 = vld [vmem:[%s6405 + $0xd8] sm:$0xff]
  %v6434 = vld [vmem:[%s6405 + $0xe0] sm:$0xff]
  %v6435 = vld [vmem:[%s6405 + $0xe8] sm:$0xff]
  %v6436 = vld [vmem:[%s6405 + $0xf0] sm:$0xff]
  %v6437 = vld [vmem:[%s6405 + $0xf8] sm:$0xff]
  %v6438 = vld [vmem:[%s6405 + $0x100] sm:$0xff]
  %v6439 = vld [vmem:[%s6405 + $0x108] sm:$0xff]
  %v6440 = vld [vmem:[%s6405 + $0x110] sm:$0xff]
  %v6441 = vld [vmem:[%s6405 + $0x118] sm:$0xff]
  %v6442 = vld [vmem:[%s6405 + $0x120] sm:$0xff]
  %v6443 = vld [vmem:[%s6405 + $0x128] sm:$0xff]
  %v6444 = vld [vmem:[%s6405 + $0x130] sm:$0xff]
  %v6445 = vld [vmem:[%s6405 + $0x138] sm:$0xff]
  %v6446 = vld [vmem:[%s6405 + $0x140] sm:$0xff]
  %v6447 = vld [vmem:[%s6405 + $0x148] sm:$0xff]
  %v6448 = vld [vmem:[%s6405 + $0x150] sm:$0xff]
  %v6449 = vld [vmem:[%s6405 + $0x158] sm:$0xff]
  %v6450 = vld [vmem:[%s6405 + $0x160] sm:$0xff]
  %v6451 = vld [vmem:[%s6405 + $0x168] sm:$0xff]
  %v6452 = vld [vmem:[%s6405 + $0x170] sm:$0xff]
  %v6453 = vld [vmem:[%s6405 + $0x178] sm:$0xff]
  %v6454 = vld [vmem:[%s6405 + $0x180] sm:$0xff]
  %v6455 = vld [vmem:[%s6405 + $0x188] sm:$0xff]
  %v6456 = vld [vmem:[%s6405 + $0x190] sm:$0xff]
  %v6457 = vld [vmem:[%s6405 + $0x198] sm:$0xff]
  %v6458 = vld [vmem:[%s6405 + $0x1a0] sm:$0xff]
  %v6459 = vld [vmem:[%s6405 + $0x1a8] sm:$0xff]
  %v6460 = vld [vmem:[%s6405 + $0x1b0] sm:$0xff]
  %v6461 = vld [vmem:[%s6405 + $0x1b8] sm:$0xff]
  %v6462 = vld [vmem:[%s6405 + $0x1c0] sm:$0xff]
  %v6463 = vld [vmem:[%s6405 + $0x1c8] sm:$0xff]
  %v6464 = vld [vmem:[%s6405 + $0x1d0] sm:$0xff]
  %v6465 = vld [vmem:[%s6405 + $0x1d8] sm:$0xff]
  %v6466 = vld [vmem:[%s6405 + $0x1e0] sm:$0xff]
  %v6467 = vld [vmem:[%s6405 + $0x1e8] sm:$0xff]
  %v6468 = vld [vmem:[%s6405 + $0x1f0] sm:$0xff]
  %v6469 = vld [vmem:[%s6405 + $0x1f8] sm:$0xff]
  %v6470 = vrot.slane %v5937, 2
  %v6471 = vrot.slane %v5940, 2
  %v6472 = vsel %vm293, %v6470, %v6471
  %v6473 = vrot.slane %v5966, 2
  %v6474 = vrot.slane %v5969, 2
  %v6475 = vsel %vm293, %v6473, %v6474
  %v6476 = vrot.slane %v5943, 2
  %v6477 = vsel %vm293, %v6471, %v6476
  %v6478 = vrot.slane %v5972, 2
  %v6479 = vsel %vm293, %v6474, %v6478
  %v6480 = vrot.slane %v5946, 2
  %v6481 = vsel %vm293, %v6476, %v6480
  %v6482 = vrot.slane %v5975, 2
  %v6483 = vsel %vm293, %v6478, %v6482
  %6490 = vmatpush.msra.mxu0 %v6436
  %6491 = vmatpush.msra.mxu0 %v6434
  %6492 = vmatpush.msra.mxu0 %v6432
  %6493 = vmatpush.msra.mxu0 %v6430
  %6494 = vmatpush.msra.mxu0 %v6428
  %6495 = vmatpush.msra.mxu0 %v6426
  %6496 = vmatpush.msra.mxu0 %v6424
  %6497 = vmatpush.msra.mxu0 %v6422
  %6498 = vmatpush.msra.mxu0 %v6420
  %6499 = vmatpush.msra.mxu0 %v6418
  %6500 = vmatpush.msra.mxu0 %v6416
  %6501 = vmatpush.msra.mxu0 %v6414
  %6502 = vmatpush.msra.mxu0 %v6412
  %6503 = vmatpush.msra.mxu0 %v6410
  %6504 = vmatpush.msra.mxu0 %v6408
  %6505 = vmatpush.msra.mxu0 %v6406
  %6506 = vmatmul.f32.gmra.mxu0 %v6472
  %v6507 = vpop.f32.mrf.mxu0
  %v6508 = vadd.f32 0.0, %v6507
  %6509 = vmatmul.f32.gmra.mxu0 %v6477
  %v6510 = vpop.f32.mrf.mxu0
  %v6511 = vadd.f32 0.0, %v6510
  %6512 = vmatmul.f32.gmra.mxu0 %v6481
  %v6513 = vpop.f32.mrf.mxu0
  %v6514 = vadd.f32 0.0, %v6513
  %6515 = vdwg.mxu0
  %6516 = vmatpush.msra.mxu0 %v6468
  %6517 = vmatpush.msra.mxu0 %v6466
  %6518 = vmatpush.msra.mxu0 %v6464
  %6519 = vmatpush.msra.mxu0 %v6462
  %6520 = vmatpush.msra.mxu0 %v6460
  %6521 = vmatpush.msra.mxu0 %v6458
  %6522 = vmatpush.msra.mxu0 %v6456
  %6523 = vmatpush.msra.mxu0 %v6454
  %6524 = vmatpush.msra.mxu0 %v6452
  %6525 = vmatpush.msra.mxu0 %v6450
  %6526 = vmatpush.msra.mxu0 %v6448
  %6527 = vmatpush.msra.mxu0 %v6446
  %6528 = vmatpush.msra.mxu0 %v6444
  %6529 = vmatpush.msra.mxu0 %v6442
  %6530 = vmatpush.msra.mxu0 %v6440
  %6531 = vmatpush.msra.mxu0 %v6438
  %6532 = vmatmul.f32.gmra.mxu0 %v6475
  %v6533 = vpop.f32.mrf.mxu0
  %v6534 = vadd.f32 %v6508, %v6533
  %6535 = vmatmul.f32.gmra.mxu0 %v6479
  %v6536 = vpop.f32.mrf.mxu0
  %v6537 = vadd.f32 %v6511, %v6536
  %6538 = vmatmul.f32.gmra.mxu0 %v6483
  %v6539 = vpop.f32.mrf.mxu0
  %v6540 = vadd.f32 %v6514, %v6539
  %6541 = vdwg.mxu0
  %6542 = vmatpush.msra.mxu0 %v6437
  %6543 = vmatpush.msra.mxu0 %v6435
  %6544 = vmatpush.msra.mxu0 %v6433
  %6545 = vmatpush.msra.mxu0 %v6431
  %6546 = vmatpush.msra.mxu0 %v6429
  %6547 = vmatpush.msra.mxu0 %v6427
  %6548 = vmatpush.msra.mxu0 %v6425
  %6549 = vmatpush.msra.mxu0 %v6423
  %6550 = vmatpush.msra.mxu0 %v6421
  %6551 = vmatpush.msra.mxu0 %v6419
  %6552 = vmatpush.msra.mxu0 %v6417
  %6553 = vmatpush.msra.mxu0 %v6415
  %6554 = vmatpush.msra.mxu0 %v6413
  %6555 = vmatpush.msra.mxu0 %v6411
  %6556 = vmatpush.msra.mxu0 %v6409
  %6557 = vmatpush.msra.mxu0 %v6407
  %6558 = vmatmul.f32.gmra.mxu0 %v6472
  %v6559 = vpop.f32.mrf.mxu0
  %v6560 = vadd.f32 0.0, %v6559
  %6561 = vmatmul.f32.gmra.mxu0 %v6477
  %v6562 = vpop.f32.mrf.mxu0
  %v6563 = vadd.f32 0.0, %v6562
  %6564 = vmatmul.f32.gmra.mxu0 %v6481
  %v6565 = vpop.f32.mrf.mxu0
  %v6566 = vadd.f32 0.0, %v6565
  %6567 = vdwg.mxu0
  %6568 = vmatpush.msra.mxu0 %v6469
  %6569 = vmatpush.msra.mxu0 %v6467
  %6570 = vmatpush.msra.mxu0 %v6465
  %6571 = vmatpush.msra.mxu0 %v6463
  %6572 = vmatpush.msra.mxu0 %v6461
  %6573 = vmatpush.msra.mxu0 %v6459
  %6574 = vmatpush.msra.mxu0 %v6457
  %6575 = vmatpush.msra.mxu0 %v6455
  %6576 = vmatpush.msra.mxu0 %v6453
  %6577 = vmatpush.msra.mxu0 %v6451
  %6578 = vmatpush.msra.mxu0 %v6449
  %6579 = vmatpush.msra.mxu0 %v6447
  %6580 = vmatpush.msra.mxu0 %v6445
  %6581 = vmatpush.msra.mxu0 %v6443
  %6582 = vmatpush.msra.mxu0 %v6441
  %6583 = vmatpush.msra.mxu0 %v6439
  %6584 = vmatmul.f32.gmra.mxu0 %v6475
  %v6585 = vpop.f32.mrf.mxu0
  %v6586 = vadd.f32 %v6560, %v6585
  %6587 = vmatmul.f32.gmra.mxu0 %v6479
  %v6588 = vpop.f32.mrf.mxu0
  %v6589 = vadd.f32 %v6563, %v6588
  %6590 = vmatmul.f32.gmra.mxu0 %v6483
  %v6591 = vpop.f32.mrf.mxu0
  %v6592 = vadd.f32 %v6566, %v6591
  %6593 = vdwg.mxu0
  %v6594 = vadd.f32 %v6345, %v6534
  %v6595 = vadd.f32 %v6397, %v6586
  %v6596 = vadd.f32 %v6348, %v6537
  %v6597 = vadd.f32 %v6400, %v6589
  %v6598 = vadd.f32 %v6351, %v6540
  %v6599 = vadd.f32 %v6403, %v6592
  %v6601 = vperm.slane %v6035, 0
  %v6602 = vperm.slane %v6035, 1
  %v6605 = vadd.f32 %v6594, %v6601
  %v6606 = vadd.f32 %v6595, %v6602
  %v6607 = vadd.f32 %v6596, %v6601
  %v6608 = vadd.f32 %v6597, %v6602
  %v6609 = vadd.f32 %v6598, %v6601
  %v6610 = vadd.f32 %v6599, %v6602
  %v6619 = vrot.slane %v5995, 1
  %v6620 = vrot.slane %v5998, 1
  %v6621 = vsel %vm210, %v6619, %v6620
  %v6622 = vrot.slane %v6024, 1
  %v6623 = vrot.slane %v6027, 1
  %v6624 = vsel %vm210, %v6622, %v6623
  %v6625 = vrot.slane %v6001, 1
  %v6626 = vsel %vm210, %v6620, %v6625
  %v6627 = vrot.slane %v6030, 1
  %v6628 = vsel %vm210, %v6623, %v6627
  %v6629 = vrot.slane %v6004, 1
  %v6630 = vsel %vm210, %v6625, %v6629
  %v6631 = vrot.slane %v6033, 1
  %v6632 = vsel %vm210, %v6627, %v6631
  %6639 = vmatpush.msra.mxu0 %v6135
  %6640 = vmatpush.msra.mxu0 %v6133
  %6641 = vmatpush.msra.mxu0 %v6131
  %6642 = vmatpush.msra.mxu0 %v6129
  %6643 = vmatpush.msra.mxu0 %v6127
  %6644 = vmatpush.msra.mxu0 %v6125
  %6645 = vmatpush.msra.mxu0 %v6123
  %6646 = vmatpush.msra.mxu0 %v6121
  %6647 = vmatpush.msra.mxu0 %v6119
  %6648 = vmatpush.msra.mxu0 %v6117
  %6649 = vmatpush.msra.mxu0 %v6115
  %6650 = vmatpush.msra.mxu0 %v6113
  %6651 = vmatpush.msra.mxu0 %v6111
  %6652 = vmatpush.msra.mxu0 %v6109
  %6653 = vmatpush.msra.mxu0 %v6107
  %6654 = vmatpush.msra.mxu0 %v6105
  %6655 = vmatmul.f32.gmra.mxu0 %v6621
  %v6656 = vpop.f32.mrf.mxu0
  %v6657 = vadd.f32 0.0, %v6656
  %6658 = vmatmul.f32.gmra.mxu0 %v6626
  %v6659 = vpop.f32.mrf.mxu0
  %v6660 = vadd.f32 0.0, %v6659
  %6661 = vmatmul.f32.gmra.mxu0 %v6630
  %v6662 = vpop.f32.mrf.mxu0
  %v6663 = vadd.f32 0.0, %v6662
  %6664 = vdwg.mxu0
  %6665 = vmatpush.msra.mxu0 %v6167
  %6666 = vmatpush.msra.mxu0 %v6165
  %6667 = vmatpush.msra.mxu0 %v6163
  %6668 = vmatpush.msra.mxu0 %v6161
  %6669 = vmatpush.msra.mxu0 %v6159
  %6670 = vmatpush.msra.mxu0 %v6157
  %6671 = vmatpush.msra.mxu0 %v6155
  %6672 = vmatpush.msra.mxu0 %v6153
  %6673 = vmatpush.msra.mxu0 %v6151
  %6674 = vmatpush.msra.mxu0 %v6149
  %6675 = vmatpush.msra.mxu0 %v6147
  %6676 = vmatpush.msra.mxu0 %v6145
  %6677 = vmatpush.msra.mxu0 %v6143
  %6678 = vmatpush.msra.mxu0 %v6141
  %6679 = vmatpush.msra.mxu0 %v6139
  %6680 = vmatpush.msra.mxu0 %v6137
  %6681 = vmatmul.f32.gmra.mxu0 %v6624
  %v6682 = vpop.f32.mrf.mxu0
  %v6683 = vadd.f32 %v6657, %v6682
  %6684 = vmatmul.f32.gmra.mxu0 %v6628
  %v6685 = vpop.f32.mrf.mxu0
  %v6686 = vadd.f32 %v6660, %v6685
  %6687 = vmatmul.f32.gmra.mxu0 %v6632
  %v6688 = vpop.f32.mrf.mxu0
  %v6689 = vadd.f32 %v6663, %v6688
  %6690 = vdwg.mxu0
  %6691 = vmatpush.msra.mxu0 %v6136
  %6692 = vmatpush.msra.mxu0 %v6134
  %6693 = vmatpush.msra.mxu0 %v6132
  %6694 = vmatpush.msra.mxu0 %v6130
  %6695 = vmatpush.msra.mxu0 %v6128
  %6696 = vmatpush.msra.mxu0 %v6126
  %6697 = vmatpush.msra.mxu0 %v6124
  %6698 = vmatpush.msra.mxu0 %v6122
  %6699 = vmatpush.msra.mxu0 %v6120
  %6700 = vmatpush.msra.mxu0 %v6118
  %6701 = vmatpush.msra.mxu0 %v6116
  %6702 = vmatpush.msra.mxu0 %v6114
  %6703 = vmatpush.msra.mxu0 %v6112
  %6704 = vmatpush.msra.mxu0 %v6110
  %6705 = vmatpush.msra.mxu0 %v6108
  %6706 = vmatpush.msra.mxu0 %v6106
  %6707 = vmatmul.f32.gmra.mxu0 %v6621
  %v6708 = vpop.f32.mrf.mxu0
  %v6709 = vadd.f32 0.0, %v6708
  %6710 = vmatmul.f32.gmra.mxu0 %v6626
  %v6711 = vpop.f32.mrf.mxu0
  %v6712 = vadd.f32 0.0, %v6711
  %6713 = vmatmul.f32.gmra.mxu0 %v6630
  %v6714 = vpop.f32.mrf.mxu0
  %v6715 = vadd.f32 0.0, %v6714
  %6716 = vdwg.mxu0
  %6717 = vmatpush.msra.mxu0 %v6168
  %6718 = vmatpush.msra.mxu0 %v6166
  %6719 = vmatpush.msra.mxu0 %v6164
  %6720 = vmatpush.msra.mxu0 %v6162
  %6721 = vmatpush.msra.mxu0 %v6160
  %6722 = vmatpush.msra.mxu0 %v6158
  %6723 = vmatpush.msra.mxu0 %v6156
  %6724 = vmatpush.msra.mxu0 %v6154
  %6725 = vmatpush.msra.mxu0 %v6152
  %6726 = vmatpush.msra.mxu0 %v6150
  %6727 = vmatpush.msra.mxu0 %v6148
  %6728 = vmatpush.msra.mxu0 %v6146
  %6729 = vmatpush.msra.mxu0 %v6144
  %6730 = vmatpush.msra.mxu0 %v6142
  %6731 = vmatpush.msra.mxu0 %v6140
  %6732 = vmatpush.msra.mxu0 %v6138
  %6733 = vmatmul.f32.gmra.mxu0 %v6624
  %v6734 = vpop.f32.mrf.mxu0
  %v6735 = vadd.f32 %v6709, %v6734
  %6736 = vmatmul.f32.gmra.mxu0 %v6628
  %v6737 = vpop.f32.mrf.mxu0
  %v6738 = vadd.f32 %v6712, %v6737
  %6739 = vmatmul.f32.gmra.mxu0 %v6632
  %v6740 = vpop.f32.mrf.mxu0
  %v6741 = vadd.f32 %v6715, %v6740
  %6742 = vdwg.mxu0
  %6743 = vmatpush.msra.mxu0 %v6070
  %6744 = vmatpush.msra.mxu0 %v6068
  %6745 = vmatpush.msra.mxu0 %v6066
  %6746 = vmatpush.msra.mxu0 %v6064
  %6747 = vmatpush.msra.mxu0 %v6062
  %6748 = vmatpush.msra.mxu0 %v6060
  %6749 = vmatpush.msra.mxu0 %v6058
  %6750 = vmatpush.msra.mxu0 %v6056
  %6751 = vmatpush.msra.mxu0 %v6054
  %6752 = vmatpush.msra.mxu0 %v6052
  %6753 = vmatpush.msra.mxu0 %v6050
  %6754 = vmatpush.msra.mxu0 %v6048
  %6755 = vmatpush.msra.mxu0 %v6046
  %6756 = vmatpush.msra.mxu0 %v6044
  %6757 = vmatpush.msra.mxu0 %v6042
  %6758 = vmatpush.msra.mxu0 %v6040
  %6759 = vmatmul.f32.gmra.mxu0 %v5995
  %v6760 = vpop.f32.mrf.mxu0
  %v6761 = vadd.f32 %v6683, %v6760
  %6762 = vmatmul.f32.gmra.mxu0 %v5998
  %v6763 = vpop.f32.mrf.mxu0
  %v6764 = vadd.f32 %v6686, %v6763
  %6765 = vmatmul.f32.gmra.mxu0 %v6001
  %v6766 = vpop.f32.mrf.mxu0
  %v6767 = vadd.f32 %v6689, %v6766
  %6768 = vdwg.mxu0
  %6769 = vmatpush.msra.mxu0 %v6102
  %6770 = vmatpush.msra.mxu0 %v6100
  %6771 = vmatpush.msra.mxu0 %v6098
  %6772 = vmatpush.msra.mxu0 %v6096
  %6773 = vmatpush.msra.mxu0 %v6094
  %6774 = vmatpush.msra.mxu0 %v6092
  %6775 = vmatpush.msra.mxu0 %v6090
  %6776 = vmatpush.msra.mxu0 %v6088
  %6777 = vmatpush.msra.mxu0 %v6086
  %6778 = vmatpush.msra.mxu0 %v6084
  %6779 = vmatpush.msra.mxu0 %v6082
  %6780 = vmatpush.msra.mxu0 %v6080
  %6781 = vmatpush.msra.mxu0 %v6078
  %6782 = vmatpush.msra.mxu0 %v6076
  %6783 = vmatpush.msra.mxu0 %v6074
  %6784 = vmatpush.msra.mxu0 %v6072
  %6785 = vmatmul.f32.gmra.mxu0 %v6024
  %v6786 = vpop.f32.mrf.mxu0
  %v6787 = vadd.f32 %v6761, %v6786
  %6788 = vmatmul.f32.gmra.mxu0 %v6027
  %v6789 = vpop.f32.mrf.mxu0
  %v6790 = vadd.f32 %v6764, %v6789
  %6791 = vmatmul.f32.gmra.mxu0 %v6030
  %v6792 = vpop.f32.mrf.mxu0
  %v6793 = vadd.f32 %v6767, %v6792
  %6794 = vdwg.mxu0
  %6795 = vmatpush.msra.mxu0 %v6071
  %6796 = vmatpush.msra.mxu0 %v6069
  %6797 = vmatpush.msra.mxu0 %v6067
  %6798 = vmatpush.msra.mxu0 %v6065
  %6799 = vmatpush.msra.mxu0 %v6063
  %6800 = vmatpush.msra.mxu0 %v6061
  %6801 = vmatpush.msra.mxu0 %v6059
  %6802 = vmatpush.msra.mxu0 %v6057
  %6803 = vmatpush.msra.mxu0 %v6055
  %6804 = vmatpush.msra.mxu0 %v6053
  %6805 = vmatpush.msra.mxu0 %v6051
  %6806 = vmatpush.msra.mxu0 %v6049
  %6807 = vmatpush.msra.mxu0 %v6047
  %6808 = vmatpush.msra.mxu0 %v6045
  %6809 = vmatpush.msra.mxu0 %v6043
  %6810 = vmatpush.msra.mxu0 %v6041
  %6811 = vmatmul.f32.gmra.mxu0 %v5995
  %v6812 = vpop.f32.mrf.mxu0
  %v6813 = vadd.f32 %v6735, %v6812
  %6814 = vmatmul.f32.gmra.mxu0 %v5998
  %v6815 = vpop.f32.mrf.mxu0
  %v6816 = vadd.f32 %v6738, %v6815
  %6817 = vmatmul.f32.gmra.mxu0 %v6001
  %v6818 = vpop.f32.mrf.mxu0
  %v6819 = vadd.f32 %v6741, %v6818
  %6820 = vdwg.mxu0
  %6821 = vmatpush.msra.mxu0 %v6103
  %6822 = vmatpush.msra.mxu0 %v6101
  %6823 = vmatpush.msra.mxu0 %v6099
  %6824 = vmatpush.msra.mxu0 %v6097
  %6825 = vmatpush.msra.mxu0 %v6095
  %6826 = vmatpush.msra.mxu0 %v6093
  %6827 = vmatpush.msra.mxu0 %v6091
  %6828 = vmatpush.msra.mxu0 %v6089
  %6829 = vmatpush.msra.mxu0 %v6087
  %6830 = vmatpush.msra.mxu0 %v6085
  %6831 = vmatpush.msra.mxu0 %v6083
  %6832 = vmatpush.msra.mxu0 %v6081
  %6833 = vmatpush.msra.mxu0 %v6079
  %6834 = vmatpush.msra.mxu0 %v6077
  %6835 = vmatpush.msra.mxu0 %v6075
  %6836 = vmatpush.msra.mxu0 %v6073
  %6837 = vmatmul.f32.gmra.mxu0 %v6024
  %v6838 = vpop.f32.mrf.mxu0
  %v6839 = vadd.f32 %v6813, %v6838
  %6840 = vmatmul.f32.gmra.mxu0 %v6027
  %v6841 = vpop.f32.mrf.mxu0
  %v6842 = vadd.f32 %v6816, %v6841
  %6843 = vmatmul.f32.gmra.mxu0 %v6030
  %v6844 = vpop.f32.mrf.mxu0
  %v6845 = vadd.f32 %v6819, %v6844
  %6846 = vdwg.mxu0
  %v6847 = vrot.slane %v5995, 2
  %v6848 = vrot.slane %v5998, 2
  %v6849 = vsel %vm293, %v6847, %v6848
  %v6850 = vrot.slane %v6024, 2
  %v6851 = vrot.slane %v6027, 2
  %v6852 = vsel %vm293, %v6850, %v6851
  %v6853 = vrot.slane %v6001, 2
  %v6854 = vsel %vm293, %v6848, %v6853
  %v6855 = vrot.slane %v6030, 2
  %v6856 = vsel %vm293, %v6851, %v6855
  %v6857 = vrot.slane %v6004, 2
  %v6858 = vsel %vm293, %v6853, %v6857
  %v6859 = vrot.slane %v6033, 2
  %v6860 = vsel %vm293, %v6855, %v6859
  %6867 = vmatpush.msra.mxu0 %v6436
  %6868 = vmatpush.msra.mxu0 %v6434
  %6869 = vmatpush.msra.mxu0 %v6432
  %6870 = vmatpush.msra.mxu0 %v6430
  %6871 = vmatpush.msra.mxu0 %v6428
  %6872 = vmatpush.msra.mxu0 %v6426
  %6873 = vmatpush.msra.mxu0 %v6424
  %6874 = vmatpush.msra.mxu0 %v6422
  %6875 = vmatpush.msra.mxu0 %v6420
  %6876 = vmatpush.msra.mxu0 %v6418
  %6877 = vmatpush.msra.mxu0 %v6416
  %6878 = vmatpush.msra.mxu0 %v6414
  %6879 = vmatpush.msra.mxu0 %v6412
  %6880 = vmatpush.msra.mxu0 %v6410
  %6881 = vmatpush.msra.mxu0 %v6408
  %6882 = vmatpush.msra.mxu0 %v6406
  %6883 = vmatmul.f32.gmra.mxu0 %v6849
  %v6884 = vpop.f32.mrf.mxu0
  %v6885 = vadd.f32 0.0, %v6884
  %6886 = vmatmul.f32.gmra.mxu0 %v6854
  %v6887 = vpop.f32.mrf.mxu0
  %v6888 = vadd.f32 0.0, %v6887
  %6889 = vmatmul.f32.gmra.mxu0 %v6858
  %v6890 = vpop.f32.mrf.mxu0
  %v6891 = vadd.f32 0.0, %v6890
  %6892 = vdwg.mxu0
  %6893 = vmatpush.msra.mxu0 %v6468
  %6894 = vmatpush.msra.mxu0 %v6466
  %6895 = vmatpush.msra.mxu0 %v6464
  %6896 = vmatpush.msra.mxu0 %v6462
  %6897 = vmatpush.msra.mxu0 %v6460
  %6898 = vmatpush.msra.mxu0 %v6458
  %6899 = vmatpush.msra.mxu0 %v6456
  %6900 = vmatpush.msra.mxu0 %v6454
  %6901 = vmatpush.msra.mxu0 %v6452
  %6902 = vmatpush.msra.mxu0 %v6450
  %6903 = vmatpush.msra.mxu0 %v6448
  %6904 = vmatpush.msra.mxu0 %v6446
  %6905 = vmatpush.msra.mxu0 %v6444
  %6906 = vmatpush.msra.mxu0 %v6442
  %6907 = vmatpush.msra.mxu0 %v6440
  %6908 = vmatpush.msra.mxu0 %v6438
  %6909 = vmatmul.f32.gmra.mxu0 %v6852
  %v6910 = vpop.f32.mrf.mxu0
  %v6911 = vadd.f32 %v6885, %v6910
  %6912 = vmatmul.f32.gmra.mxu0 %v6856
  %v6913 = vpop.f32.mrf.mxu0
  %v6914 = vadd.f32 %v6888, %v6913
  %6915 = vmatmul.f32.gmra.mxu0 %v6860
  %v6916 = vpop.f32.mrf.mxu0
  %v6917 = vadd.f32 %v6891, %v6916
  %6918 = vdwg.mxu0
  %6919 = vmatpush.msra.mxu0 %v6437
  %6920 = vmatpush.msra.mxu0 %v6435
  %6921 = vmatpush.msra.mxu0 %v6433
  %6922 = vmatpush.msra.mxu0 %v6431
  %6923 = vmatpush.msra.mxu0 %v6429
  %6924 = vmatpush.msra.mxu0 %v6427
  %6925 = vmatpush.msra.mxu0 %v6425
  %6926 = vmatpush.msra.mxu0 %v6423
  %6927 = vmatpush.msra.mxu0 %v6421
  %6928 = vmatpush.msra.mxu0 %v6419
  %6929 = vmatpush.msra.mxu0 %v6417
  %6930 = vmatpush.msra.mxu0 %v6415
  %6931 = vmatpush.msra.mxu0 %v6413
  %6932 = vmatpush.msra.mxu0 %v6411
  %6933 = vmatpush.msra.mxu0 %v6409
  %6934 = vmatpush.msra.mxu0 %v6407
  %6935 = vmatmul.f32.gmra.mxu0 %v6849
  %v6936 = vpop.f32.mrf.mxu0
  %v6937 = vadd.f32 0.0, %v6936
  %6938 = vmatmul.f32.gmra.mxu0 %v6854
  %v6939 = vpop.f32.mrf.mxu0
  %v6940 = vadd.f32 0.0, %v6939
  %6941 = vmatmul.f32.gmra.mxu0 %v6858
  %v6942 = vpop.f32.mrf.mxu0
  %v6943 = vadd.f32 0.0, %v6942
  %6944 = vdwg.mxu0
  %6945 = vmatpush.msra.mxu0 %v6469
  %6946 = vmatpush.msra.mxu0 %v6467
  %6947 = vmatpush.msra.mxu0 %v6465
  %6948 = vmatpush.msra.mxu0 %v6463
  %6949 = vmatpush.msra.mxu0 %v6461
  %6950 = vmatpush.msra.mxu0 %v6459
  %6951 = vmatpush.msra.mxu0 %v6457
  %6952 = vmatpush.msra.mxu0 %v6455
  %6953 = vmatpush.msra.mxu0 %v6453
  %6954 = vmatpush.msra.mxu0 %v6451
  %6955 = vmatpush.msra.mxu0 %v6449
  %6956 = vmatpush.msra.mxu0 %v6447
  %6957 = vmatpush.msra.mxu0 %v6445
  %6958 = vmatpush.msra.mxu0 %v6443
  %6959 = vmatpush.msra.mxu0 %v6441
  %6960 = vmatpush.msra.mxu0 %v6439
  %6961 = vmatmul.f32.gmra.mxu0 %v6852
  %v6962 = vpop.f32.mrf.mxu0
  %v6963 = vadd.f32 %v6937, %v6962
  %6964 = vmatmul.f32.gmra.mxu0 %v6856
  %v6965 = vpop.f32.mrf.mxu0
  %v6966 = vadd.f32 %v6940, %v6965
  %6967 = vmatmul.f32.gmra.mxu0 %v6860
  %v6968 = vpop.f32.mrf.mxu0
  %v6969 = vadd.f32 %v6943, %v6968
  %6970 = vdwg.mxu0
  %v6971 = vadd.f32 %v6787, %v6911
  %v6972 = vadd.f32 %v6839, %v6963
  %v6973 = vadd.f32 %v6790, %v6914
  %v6974 = vadd.f32 %v6842, %v6966
  %v6975 = vadd.f32 %v6793, %v6917
  %v6976 = vadd.f32 %v6845, %v6969
  %v6977 = vadd.f32 %v6971, %v6601
  %v6978 = vadd.f32 %v6972, %v6602
  %v6979 = vadd.f32 %v6973, %v6601
  %v6980 = vadd.f32 %v6974, %v6602
  %v6981 = vadd.f32 %v6975, %v6601
  %v6982 = vadd.f32 %v6976, %v6602
  %v6983 = vadd.f32 %v6605, %v6607
  %v6984 = vadd.f32 %v6983, %v6609
  %v6985 = vrot.slane %v6984, 4
  %v6986 = vadd.f32 %v6984, %v6985
  %v6987 = vrot.slane %v6986, 2
  %v6988 = vadd.f32 %v6986, %v6987
  %v6989 = vrot.slane %v6988, 1
  %v6990 = vadd.f32 %v6988, %v6989
  %v6991 = vadd.f32 %v6606, %v6608
  %v6992 = vadd.f32 %v6991, %v6610
  %v6993 = vrot.slane %v6992, 4
  %v6994 = vadd.f32 %v6992, %v6993
  %v6995 = vrot.slane %v6994, 2
  %v6996 = vadd.f32 %v6994, %v6995
  %v6997 = vrot.slane %v6996, 1
  %v6998 = vadd.f32 %v6996, %v6997
  %v6999 = vmul.f32 %v6605, %v6605
  %v7000 = vmul.f32 %v6606, %v6606
  %v7001 = vmul.f32 %v6607, %v6607
  %v7002 = vmul.f32 %v6608, %v6608
  %v7003 = vmul.f32 %v6609, %v6609
  %v7004 = vmul.f32 %v6610, %v6610
  %v7005 = vadd.f32 %v6999, %v7001
  %v7006 = vadd.f32 %v7005, %v7003
  %v7007 = vrot.slane %v7006, 4
  %v7008 = vadd.f32 %v7006, %v7007
  %v7009 = vrot.slane %v7008, 2
  %v7010 = vadd.f32 %v7008, %v7009
  %v7011 = vrot.slane %v7010, 1
  %v7012 = vadd.f32 %v7010, %v7011
  %v7013 = vadd.f32 %v7000, %v7002
  %v7014 = vadd.f32 %v7013, %v7004
  %v7015 = vrot.slane %v7014, 4
  %v7016 = vadd.f32 %v7014, %v7015
  %v7017 = vrot.slane %v7016, 2
  %v7018 = vadd.f32 %v7016, %v7017
  %v7019 = vrot.slane %v7018, 1
  %v7020 = vadd.f32 %v7018, %v7019
  %v7021 = vadd.f32 %v6977, %v6979
  %v7022 = vadd.f32 %v7021, %v6981
  %v7023 = vrot.slane %v7022, 4
  %v7024 = vadd.f32 %v7022, %v7023
  %v7025 = vrot.slane %v7024, 2
  %v7026 = vadd.f32 %v7024, %v7025
  %v7027 = vrot.slane %v7026, 1
  %v7028 = vadd.f32 %v7026, %v7027
  %v7029 = vadd.f32 %v6978, %v6980
  %v7030 = vadd.f32 %v7029, %v6982
  %v7031 = vrot.slane %v7030, 4
  %v7032 = vadd.f32 %v7030, %v7031
  %v7033 = vrot.slane %v7032, 2
  %v7034 = vadd.f32 %v7032, %v7033
  %v7035 = vrot.slane %v7034, 1
  %v7036 = vadd.f32 %v7034, %v7035
  %v7037 = vadd.f32 %v6990, %v7028
  %v7038 = vadd.f32 %v6998, %v7036
  %v7039 = vmul.f32 %v6977, %v6977
  %v7040 = vmul.f32 %v6978, %v6978
  %v7041 = vmul.f32 %v6979, %v6979
  %v7042 = vmul.f32 %v6980, %v6980
  %v7043 = vmul.f32 %v6981, %v6981
  %v7044 = vmul.f32 %v6982, %v6982
  %v7045 = vadd.f32 %v7039, %v7041
  %v7046 = vadd.f32 %v7045, %v7043
  %v7047 = vrot.slane %v7046, 4
  %v7048 = vadd.f32 %v7046, %v7047
  %v7049 = vrot.slane %v7048, 2
  %v7050 = vadd.f32 %v7048, %v7049
  %v7051 = vrot.slane %v7050, 1
  %v7052 = vadd.f32 %v7050, %v7051
  %v7053 = vadd.f32 %v7040, %v7042
  %v7054 = vadd.f32 %v7053, %v7044
  %v7055 = vrot.slane %v7054, 4
  %v7056 = vadd.f32 %v7054, %v7055
  %v7057 = vrot.slane %v7056, 2
  %v7058 = vadd.f32 %v7056, %v7057
  %v7059 = vrot.slane %v7058, 1
  %v7060 = vadd.f32 %v7058, %v7059
  %v7061 = vadd.f32 %v7012, %v7052
  %v7062 = vadd.f32 %v7020, %v7060
  %v7063 = vmul.f32 %v7037, 0.020833334
  %v7064 = vmul.f32 %v7038, 0.020833334
  %v7065 = vmul.f32 %v7061, 0.020833334
  %v7066 = vmul.f32 %v7062, 0.020833334
  %v7067 = vmul.f32 %v7063, %v7063
  %v7068 = vmul.f32 %v7064, %v7064
  %v7069 = vsub.f32 %v7065, %v7067
  %v7070 = vsub.f32 %v7066, %v7068
  %v7071 = vmax.f32 %v7069, 0.0
  %v7072 = vmax.f32 %v7070, 0.0
  %v7073 = vadd.f32 %v7071, 1e-05
  %v7074 = vadd.f32 %v7072, 1e-05
  %v7075 = vrsqrt.pop %v7073
  %v7076 = vmul.f32 %v7075, %v7073
  %v7077 = vmul.f32 %v7076, %v7075
  %v7078 = vmul.f32 0.5, %v7077
  %v7079 = vsub.f32 1.5, %v7078
  %v7080 = vmul.f32 %v7075, %v7079
  %vm7081 = vweird.f32 %v7073
  %vm7082 = vweird.f32 %v7075
  %vm7083 = vmor %vm7081, %vm7082
  %v7084 = vsel %vm7083, %v7075, %v7080
  %v7085 = vrsqrt.pop %v7074
  %v7086 = vmul.f32 %v7085, %v7074
  %v7087 = vmul.f32 %v7086, %v7085
  %v7088 = vmul.f32 0.5, %v7087
  %v7089 = vsub.f32 1.5, %v7088
  %v7090 = vmul.f32 %v7085, %v7089
  %vm7091 = vweird.f32 %v7074
  %vm7092 = vweird.f32 %v7085
  %vm7093 = vmor %vm7091, %vm7092
  %v7094 = vsel %vm7093, %v7085, %v7090
  %v7097 = vrot.slane %v7094, 7
  %v7098 = vsel %vm994, %v7084, %v7097
  %v7100 = vmul.f32 %v6037, %v7098
  %v7102 = vperm.slane %v7100, 0
  %v7103 = vperm.slane %v7100, 1
  %v7106 = vmul.f32 %v7063, %v7102
  %v7107 = vmul.f32 %v7064, %v7103
  %v7110 = vrot.slane %v7107, 7
  %v7111 = vsel %vm994, %v7106, %v7110
  %v7113 = vsub.f32 %v6039, %v7111
  %v7114 = vmul.f32 %v6605, %v7102
  %v7115 = vmul.f32 %v6606, %v7103
  %v7116 = vmul.f32 %v6607, %v7102
  %v7117 = vmul.f32 %v6608, %v7103
  %v7118 = vmul.f32 %v6609, %v7102
  %v7119 = vmul.f32 %v6610, %v7103
  %v7121 = vperm.slane %v7113, 0
  %v7122 = vperm.slane %v7113, 1
  %v7125 = vadd.f32 %v7114, %v7121
  %v7126 = vadd.f32 %v7115, %v7122
  %v7127 = vadd.f32 %v7116, %v7121
  %v7128 = vadd.f32 %v7117, %v7122
  %v7129 = vadd.f32 %v7118, %v7121
  %v7130 = vadd.f32 %v7119, %v7122
  %v7131 = vmax.f32 %v7125, 0.0
  %v7132 = vmax.f32 %v7126, 0.0
  %v7133 = vmax.f32 %v7127, 0.0
  %v7134 = vmax.f32 %v7128, 0.0
  %v7135 = vmax.f32 %v7129, 0.0
  %v7136 = vmax.f32 %v7130, 0.0
  %v7137 = vmul.f32 %v6977, %v7102
  %v7138 = vmul.f32 %v6978, %v7103
  %v7139 = vmul.f32 %v6979, %v7102
  %v7140 = vmul.f32 %v6980, %v7103
  %v7141 = vmul.f32 %v6981, %v7102
  %v7142 = vmul.f32 %v6982, %v7103
  %v7143 = vadd.f32 %v7137, %v7121
  %v7144 = vadd.f32 %v7138, %v7122
  %v7145 = vadd.f32 %v7139, %v7121
  %v7146 = vadd.f32 %v7140, %v7122
  %v7147 = vadd.f32 %v7141, %v7121
  %v7148 = vadd.f32 %v7142, %v7122
  %v7149 = vmax.f32 %v7143, 0.0
  %v7150 = vmax.f32 %v7144, 0.0
  %v7151 = vmax.f32 %v7145, 0.0
  %v7152 = vmax.f32 %v7146, 0.0
  %v7153 = vmax.f32 %v7147, 0.0
  %v7154 = vmax.f32 %v7148, 0.0
  %v7161 = vrot.slane %v7131, 1
  %v7162 = vrot.slane %v7133, 1
  %v7163 = vsel %vm210, %v7161, %v7162
  %v7164 = vrot.slane %v7132, 1
  %v7165 = vrot.slane %v7134, 1
  %v7166 = vsel %vm210, %v7164, %v7165
  %v7167 = vrot.slane %v7135, 1
  %v7168 = vsel %vm210, %v7162, %v7167
  %v7169 = vrot.slane %v7136, 1
  %v7170 = vsel %vm210, %v7165, %v7169
  %v7177 = vmax.f32 %v7131, %v7163
  %v7178 = vmax.f32 %v7132, %v7166
  %v7179 = vmax.f32 %v7133, %v7168
  %v7180 = vmax.f32 %v7134, %v7170
  %v7181 = vmax.f32 %v7135, %v7167
  %v7182 = vmax.f32 %v7136, %v7169
  %v7183 = vrot.slane %v7131, 2
  %v7184 = vrot.slane %v7133, 2
  %v7185 = vsel %vm293, %v7183, %v7184
  %v7186 = vrot.slane %v7132, 2
  %v7187 = vrot.slane %v7134, 2
  %v7188 = vsel %vm293, %v7186, %v7187
  %v7189 = vrot.slane %v7135, 2
  %v7190 = vsel %vm293, %v7184, %v7189
  %v7191 = vrot.slane %v7136, 2
  %v7192 = vsel %vm293, %v7187, %v7191
  %v7199 = vmax.f32 %v7177, %v7185
  %v7200 = vmax.f32 %v7178, %v7188
  %v7201 = vmax.f32 %v7179, %v7190
  %v7202 = vmax.f32 %v7180, %v7192
  %v7203 = vmax.f32 %v7181, %v7189
  %v7204 = vmax.f32 %v7182, %v7191
  %vm7205 = vcmask 179200
  %v7207 = vsel %vm7205, %v65, 0
  %v7210 = vsel %vm7205, %v66, 0
  %v7213 = vsel %vm293, %v7203, 0
  %v7216 = vsel %vm293, %v7204, 0
  %7218 = vmatpush.msra.mxu0 0.0
  %7219 = vmatpush.msra.mxu0 0.0
  %7220 = vmatpush.msra.mxu0 0.0
  %7221 = vmatpush.msra.mxu0 0.0
  %7222 = vmatpush.msra.mxu0 0.0
  %7223 = vmatpush.msra.mxu0 0.0
  %7224 = vmatpush.msra.mxu0 0.0
  %7225 = vmatpush.msra.mxu0 0.0
  %7226 = vmatpush.msra.mxu0 0.0
  %7227 = vmatpush.msra.mxu0 0.0
  %7228 = vmatpush.msra.mxu0 0.0
  %7229 = vmatpush.msra.mxu0 0.0
  %7230 = vmatpush.msra.mxu0 0.0
  %7231 = vmatpush.msra.mxu0 %v7213
  %7232 = vmatpush.msra.mxu0 %v7201
  %7233 = vmatpush.msra.mxu0 %v7199
  %7234 = vmatmul.f32.gmra.mxu0 %v7207
  %v7235 = vpop.f32.mrf.mxu0
  %v7236 = vadd.f32 0.0, %v7235
  %7237 = vmatmul.f32.gmra.mxu0 %v7210
  %v7238 = vpop.f32.mrf.mxu0
  %v7239 = vadd.f32 0.0, %v7238
  %7240 = vdwg.mxu0
  %7241 = vmatpush.msra.mxu0 0.0
  %7242 = vmatpush.msra.mxu0 0.0
  %7243 = vmatpush.msra.mxu0 0.0
  %7244 = vmatpush.msra.mxu0 0.0
  %7245 = vmatpush.msra.mxu0 0.0
  %7246 = vmatpush.msra.mxu0 0.0
  %7247 = vmatpush.msra.mxu0 0.0
  %7248 = vmatpush.msra.mxu0 0.0
  %7249 = vmatpush.msra.mxu0 0.0
  %7250 = vmatpush.msra.mxu0 0.0
  %7251 = vmatpush.msra.mxu0 0.0
  %7252 = vmatpush.msra.mxu0 0.0
  %7253 = vmatpush.msra.mxu0 0.0
  %7254 = vmatpush.msra.mxu0 %v7216
  %7255 = vmatpush.msra.mxu0 %v7202
  %7256 = vmatpush.msra.mxu0 %v7200
  %7257 = vmatmul.f32.gmra.mxu0 %v7207
  %v7258 = vpop.f32.mrf.mxu0
  %v7259 = vadd.f32 0.0, %v7258
  %7260 = vmatmul.f32.gmra.mxu0 %v7210
  %v7261 = vpop.f32.mrf.mxu0
  %v7262 = vadd.f32 0.0, %v7261
  %7263 = vdwg.mxu0
  %7264 = vst [vmem:[%s15] sm:$0xff] %v7236
  %7265 = vst [vmem:[%s15 + $0x8] sm:$0xff] %v7259
  %7266 = vst [vmem:[%s15 + $0x10] sm:$0x1] %v7239
  %7267 = vst [vmem:[%s15 + $0x18] sm:$0x1] %v7262
  %v7274 = vrot.slane %v7149, 1
  %v7275 = vrot.slane %v7151, 1
  %v7276 = vsel %vm210, %v7274, %v7275
  %v7277 = vrot.slane %v7150, 1
  %v7278 = vrot.slane %v7152, 1
  %v7279 = vsel %vm210, %v7277, %v7278
  %v7280 = vrot.slane %v7153, 1
  %v7281 = vsel %vm210, %v7275, %v7280
  %v7282 = vrot.slane %v7154, 1
  %v7283 = vsel %vm210, %v7278, %v7282
  %v7290 = vmax.f32 %v7149, %v7276
  %v7291 = vmax.f32 %v7150, %v7279
  %v7292 = vmax.f32 %v7151, %v7281
  %v7293 = vmax.f32 %v7152, %v7283
  %v7294 = vmax.f32 %v7153, %v7280
  %v7295 = vmax.f32 %v7154, %v7282
  %v7296 = vrot.slane %v7149, 2
  %v7297 = vrot.slane %v7151, 2
  %v7298 = vsel %vm293, %v7296, %v7297
  %v7299 = vrot.slane %v7150, 2
  %v7300 = vrot.slane %v7152, 2
  %v7301 = vsel %vm293, %v7299, %v7300
  %v7302 = vrot.slane %v7153, 2
  %v7303 = vsel %vm293, %v7297, %v7302
  %v7304 = vrot.slane %v7154, 2
  %v7305 = vsel %vm293, %v7300, %v7304
  %v7312 = vmax.f32 %v7290, %v7298
  %v7313 = vmax.f32 %v7291, %v7301
  %v7314 = vmax.f32 %v7292, %v7303
  %v7315 = vmax.f32 %v7293, %v7305
  %v7316 = vmax.f32 %v7294, %v7302
  %v7317 = vmax.f32 %v7295, %v7304
  %v7319 = vsel %vm293, %v7316, 0
  %v7322 = vsel %vm293, %v7317, 0
  %7324 = vmatpush.msra.mxu0 0.0
  %7325 = vmatpush.msra.mxu0 0.0
  %7326 = vmatpush.msra.mxu0 0.0
  %7327 = vmatpush.msra.mxu0 0.0
  %7328 = vmatpush.msra.mxu0 0.0
  %7329 = vmatpush.msra.mxu0 0.0
  %7330 = vmatpush.msra.mxu0 0.0
  %7331 = vmatpush.msra.mxu0 0.0
  %7332 = vmatpush.msra.mxu0 0.0
  %7333 = vmatpush.msra.mxu0 0.0
  %7334 = vmatpush.msra.mxu0 0.0
  %7335 = vmatpush.msra.mxu0 0.0
  %7336 = vmatpush.msra.mxu0 0.0
  %7337 = vmatpush.msra.mxu0 %v7319
  %7338 = vmatpush.msra.mxu0 %v7314
  %7339 = vmatpush.msra.mxu0 %v7312
  %7340 = vmatmul.f32.gmra.mxu0 %v7207
  %v7341 = vpop.f32.mrf.mxu0
  %v7342 = vadd.f32 0.0, %v7341
  %7343 = vmatmul.f32.gmra.mxu0 %v7210
  %v7344 = vpop.f32.mrf.mxu0
  %v7345 = vadd.f32 0.0, %v7344
  %7346 = vdwg.mxu0
  %7347 = vmatpush.msra.mxu0 0.0
  %7348 = vmatpush.msra.mxu0 0.0
  %7349 = vmatpush.msra.mxu0 0.0
  %7350 = vmatpush.msra.mxu0 0.0
  %7351 = vmatpush.msra.mxu0 0.0
  %7352 = vmatpush.msra.mxu0 0.0
  %7353 = vmatpush.msra.mxu0 0.0
  %7354 = vmatpush.msra.mxu0 0.0
  %7355 = vmatpush.msra.mxu0 0.0
  %7356 = vmatpush.msra.mxu0 0.0
  %7357 = vmatpush.msra.mxu0 0.0
  %7358 = vmatpush.msra.mxu0 0.0
  %7359 = vmatpush.msra.mxu0 0.0
  %7360 = vmatpush.msra.mxu0 %v7322
  %7361 = vmatpush.msra.mxu0 %v7315
  %7362 = vmatpush.msra.mxu0 %v7313
  %7363 = vmatmul.f32.gmra.mxu0 %v7207
  %v7364 = vpop.f32.mrf.mxu0
  %v7365 = vadd.f32 0.0, %v7364
  %7366 = vmatmul.f32.gmra.mxu0 %v7210
  %v7367 = vpop.f32.mrf.mxu0
  %v7368 = vadd.f32 0.0, %v7367
  %7369 = vdwg.mxu0
  %s7370 = scalar_lea.vmem %s15, 32
  %7371 = vst [vmem:[%s7370] sm:$0xff] %v7342
  %7372 = vst [vmem:[%s7370 + $0x8] sm:$0xff] %v7365
  %7373 = vst [vmem:[%s7370 + $0x10] sm:$0x1] %v7345
  %7374 = vst [vmem:[%s7370 + $0x18] sm:$0x1] %v7368
  // Predicated region
  $region62: #{alexnet_1d_forward.1} parent=0 // pred_check
    _
  $region63: #{alexnet_1d_forward.1} parent=0 // pred_check_branch
    %7376 = sbr.rel (0) target = $region65
  $region64: #{alexnet_1d_forward.1} parent=0 // pred_region
    _
  $region65: #{alexnet_1d_forward.1} parent=0 // pred_fallthru
    _
  // Predicated region
  $region66: #{alexnet_1d_forward.1} parent=0 // pred_check
    _
  $region67: #{alexnet_1d_forward.1} parent=0 // pred_check_branch
    %7378 = sbr.rel (0) target = $region69
  $region68: #{alexnet_1d_forward.1} parent=0 // pred_region
    _
  $region69: #{alexnet_1d_forward.1} parent=0 // pred_fallthru
    _

</llo_original>
